<compile_context>
chip_gen: v5e
topology: v5e:2x2
jax: 0.10.0
libtpu: 0.0.40
codegen_flags: <defaults>
</compile_context>

<pallas_src>
import functools

import numpy as np
import jax
import jax.numpy as jnp
from jax.experimental import pallas as pl
from jax.experimental.pallas import tpu as pltpu


# ----------------------------------------------------------------------------
# Pallas kernel: per-split partial sums for the PU loss
#   out block (1, 24, 128) f32, resident across the reduction axis:
#     rows  0: 8  -> sum over positives of softplus(x)
#     rows  8:16  -> sum over positives of x
#     rows 16:24  -> sum over unlabeled  of softplus(x)
# ----------------------------------------------------------------------------
def _pu_partial_kernel(blocks_per_split, tr, dims_ref, x_ref, out_ref):
    s = pl.program_id(0)          # "parallel" split (v7x: one per TensorCore)
    b = pl.program_id(1)          # "arbitrary" reduction axis

    @pl.when(b == 0)
    def _init():
        out_ref[...] = jnp.zeros_like(out_ref)

    n_neg = dims_ref[0]           # unlabeled entries occupy [0, n_neg)
    n = dims_ref[1]               # positives occupy [n_neg, n); padding >= n

    block_elems = tr * 128
    base = (s * blocks_per_split + b) * block_elems   # scalar (int32)
    lo = base
    hi = base + block_elems

    # Block classification from scalars only (no per-element work).
    block_is_pad = lo >= n
    block_is_unl = hi <= n_neg
    block_is_pos = jnp.logical_and(lo >= n_neg, hi <= n)
    block_is_mixed = jnp.logical_not(
        jnp.logical_or(block_is_pad,
                       jnp.logical_or(block_is_unl, block_is_pos)))

    @pl.when(jnp.logical_not(block_is_pad))
    def _compute():
        # bf16/f32 -> f32 on load; all math in f32.
        x = x_ref[...].astype(jnp.float32)
        ax = jnp.abs(x)
        sp = jnp.maximum(x, 0.0) + jnp.log1p(jnp.exp(-ax))   # softplus(x), stable
        # softplus(-x) = softplus(x) - x, recovered in the wrapper from sum(pos*x).

        def fold(v):
            # (tr,128) -> (8,128): sum across whole vregs (VPU adds only, no XLU).
            return jnp.sum(v.reshape(tr // 8, 8, 128), axis=0)

        @pl.when(block_is_unl)          # interior unlabeled block: no masks
        def _unl():
            out_ref[0, 16:24, :] = out_ref[0, 16:24, :] + fold(sp)

        @pl.when(block_is_pos)          # interior positive block: no masks
        def _pos():
            out_ref[0, 0:8, :] = out_ref[0, 0:8, :] + fold(sp)
            out_ref[0, 8:16, :] = out_ref[0, 8:16, :] + fold(x)

        @pl.when(block_is_mixed)        # at most ~2 boundary blocks ever take this
        def _mixed():
            row = jax.lax.broadcasted_iota(jnp.int32, (tr, 128), 0)
            lane = jax.lax.broadcasted_iota(jnp.int32, (tr, 128), 1)
            local = row * 128 + lane            # block-local element index
            neg_cut = n_neg - base              # scalar shift instead of idx = base + local
            pos_cut = n - base
            pos = jnp.logical_and(local >= neg_cut, local < pos_cut)
            unl = local < neg_cut
            zero = jnp.zeros_like(sp)
            out_ref[0, 0:8, :] = out_ref[0, 0:8, :] + fold(jnp.where(pos, sp, zero))
            out_ref[0, 8:16, :] = out_ref[0, 8:16, :] + fold(jnp.where(pos, x, zero))
            out_ref[0, 16:24, :] = out_ref[0, 16:24, :] + fold(jnp.where(unl, sp, zero))


@functools.lru_cache(maxsize=None)
def _build_pu_partial_call(blocks_per_split, tr, num_splits):
    kernel = functools.partial(_pu_partial_kernel, blocks_per_split, tr)
    # TODO(synk): on v7x verify (trace) that the leading "parallel" axis shards
    #             across both TensorCores; if not, switch it to pltpu.CORE_PARALLEL.
    return pl.pallas_call(
        kernel,
        out_shape=jax.ShapeDtypeStruct((num_splits, 24, 128), jnp.float32),
        grid_spec=pltpu.PrefetchScalarGridSpec(
            num_scalar_prefetch=1,          # dims = [n_neg, n] in SMEM
            grid=(num_splits, blocks_per_split),
            in_specs=[
                pl.BlockSpec((tr, 128),
                             lambda s, b, dims: (s * blocks_per_split + b, 0)),
            ],
            out_specs=pl.BlockSpec((1, 24, 128),
                                   lambda s, b, dims: (s, 0, 0)),
        ),
        compiler_params=pltpu.CompilerParams(
            dimension_semantics=("parallel", "arbitrary"),
            vmem_limit_bytes=48 * 1024 * 1024),
    )


# ----------------------------------------------------------------------------
# Per-generation defaults: splits (TensorCores per chip) and shipped dtype.
# ----------------------------------------------------------------------------
@functools.lru_cache(maxsize=1)
def _device_defaults():
    kind = ""
    try:
        kind = jax.devices()[0].device_kind.lower()
    except Exception:
        pass
    two_cores = "v7" in kind          # v7x: 2 TensorCores per chip; v5e/v6e: 1
    num_splits = 2 if two_cores else 1
    # v7x HBM (3.2 TB/s) keeps this kernel VALU-bound even at 4 B/elem: ship f32
    # (no quantization).  v5e/v6e: bf16 halves HBM bytes.
    compute_dtype = jnp.float32 if two_cores else jnp.bfloat16
    return num_splits, compute_dtype


# ----------------------------------------------------------------------------
# Jitted device wrapper: gather -> cast -> kernel -> tiny scalar epilogue.
# Recompiles only per (block bucket, TR, num_splits, dtype); pi / n_neg / n traced.
# ----------------------------------------------------------------------------
@functools.partial(jax.jit,
                   static_argnames=("blocks_per_split", "tr", "num_splits",
                                    "compute_dtype"))
def _pu_loss_device(logits, idx_padded, n_neg, n, pi, *,
                    blocks_per_split, tr, num_splits, compute_dtype):
    total = num_splits * blocks_per_split * tr * 128
    x = jnp.take(logits, idx_padded)                       # on-device gather
    x = x.astype(compute_dtype).reshape(total // 128, 128)  # lane-dense tiles

    dims = jnp.stack([n_neg, n]).astype(jnp.int32)
    call = _build_pu_partial_call(blocks_per_split, tr, num_splits)
    partials = call(dims, x)                                # (num_splits, 24, 128)

    S = partials.reshape(num_splits, 3, 8, 128).sum(axis=(0, 2, 3))  # (3,)
    s_pos_sp, s_pos_x, s_unl_sp = S[0], S[1], S[2]

    n_pos_f = (n - n_neg).astype(jnp.float32)
    n_unl_f = n_neg.astype(jnp.float32)
    # Guard the degenerate empty-positive / empty-unlabeled cases (torch would NaN).
    inv_pos = jnp.where(n_pos_f > 0, 1.0 / jnp.maximum(n_pos_f, 1.0), 0.0)
    inv_unl = jnp.where(n_unl_f > 0, 1.0 / jnp.maximum(n_unl_f, 1.0), 0.0)

    rp_minus = s_pos_sp * inv_pos                   # mean softplus(x_pos)
    rp_plus = (s_pos_sp - s_pos_x) * inv_pos        # mean softplus(-x_pos)
    ru_minus = s_unl_sp * inv_unl                   # mean softplus(x_unl)

    loss_p = pi * rp_plus
    loss_u = jnp.maximum(ru_minus - pi * rp_minus, 0.0)
    return (loss_p + loss_u).astype(jnp.float32)


def _bucket_blocks(nblocks):
    """Smallest value in {2^k, 1.5*2^k} that is >= nblocks (worst pad ~1.33x)."""
    nblocks = max(1, int(nblocks))
    if nblocks == 1:
        return 1
    p = 1 << (nblocks - 1).bit_length()    # next pow2 >= nblocks
    cand = (3 * p) // 4
    return cand if cand >= nblocks else p


def _pu_loss_from_indices(logits, neg_idx, pos_idx, pi, *, tr, num_splits,
                          compute_dtype):
    assert tr % 8 == 0
    n_neg, n_pos = int(neg_idx.size), int(pos_idx.size)
    n = n_neg + n_pos
    elems_per_round = tr * 128 * num_splits
    blocks_per_split = _bucket_blocks(max(1, -(-n // elems_per_round)))
    total = num_splits * blocks_per_split * tr * 128
    assert total < 2 ** 31, "padded element count overflows int32 indexing"

    idx_padded = np.zeros(total, dtype=np.int32)   # padding gathers index 0; masked out
    idx_padded[:n_neg] = neg_idx
    idx_padded[n_neg:n] = pos_idx

    return _pu_loss_device(
        jnp.asarray(logits, jnp.float32), jnp.asarray(idx_padded),
        np.int32(n_neg), np.int32(n), np.float32(pi),
        blocks_per_split=blocks_per_split, tr=tr, num_splits=num_splits,
        compute_dtype=compute_dtype)


# ----------------------------------------------------------------------------
# Host-side selection (mode='all'): builds INTEGER index sets only.
# ----------------------------------------------------------------------------
def get_pos_negs_all_indices(keypoints, nodes, num_inputs):
    nodes = np.asarray(nodes)
    keypoints = np.asarray(keypoints)
    if keypoints.size == 0:
        # torch branch: whole input treated as unlabeled, tgt = zeros
        return np.arange(num_inputs, dtype=np.int64), np.zeros(0, np.int64)
    node_ids, clusters = nodes[0], nodes[-1]
    all_clusters = np.unique(clusters)
    cluster_clicked = np.concatenate([clusters[node_ids == l] for l in keypoints])
    pos_nodes = np.concatenate(
        [np.unique(node_ids[clusters == c]) for c in np.unique(cluster_clicked)])
    neg_clusters = all_clusters[~np.isin(all_clusters, cluster_clicked)]
    if neg_clusters.size > 0:
        neg_nodes = np.concatenate(
            [np.unique(node_ids[clusters == c]) for c in neg_clusters])
    else:
        neg_nodes = np.zeros(0, dtype=np.int64)
    return neg_nodes.astype(np.int64), pos_nodes.astype(np.int64)


def cluster_pu_loss(input_logits, nodes, data, pi=0.25, mode='all',
                    tr=2048, num_splits=None, compute_dtype=None):
    """Forward pass of ClusterPULoss (mode='all') with the hot path in Pallas."""
    assert mode == 'all'  # TODO(synk): other modes need multinomial sampling
    num_inputs = int(input_logits.shape[0])
    assert num_inputs < 2 ** 31, "int32 gather indices require < 2^31 nodes"

    d_splits, d_dtype = _device_defaults()
    if num_splits is None:
        num_splits = d_splits
    if compute_dtype is None:
        compute_dtype = d_dtype

    neg_idx, pos_idx = get_pos_negs_all_indices(
        data['pos_labels'], np.asarray(nodes), num_inputs)
    return _pu_loss_from_indices(input_logits, neg_idx, pos_idx, pi,
                                 tr=tr, num_splits=num_splits,
                                 compute_dtype=compute_dtype)


# ----------------------------------------------------------------------------
# pure-numpy reference (mirrors the torch forward) for a sanity check
# ----------------------------------------------------------------------------
def _ref_loss_from_indices(logits_np, neg_idx, pos_idx, pi, compute_dtype):
    sel = np.concatenate([logits_np[neg_idx], logits_np[pos_idx]]).astype(np.float64)
    if compute_dtype != jnp.float32:
        # Match the kernel's quantization of the shipped logits.
        sel = np.asarray(jnp.asarray(sel, jnp.float32).astype(compute_dtype)
                         .astype(jnp.float32), dtype=np.float64)
    tgt = np.concatenate([np.zeros(int(neg_idx.size)), np.ones(int(pos_idx.size))])

    def softplus(v):
        return np.maximum(v, 0.0) + np.log1p(np.exp(-np.abs(v)))

    in_pos = sel[tgt == 1]
    in_unl = sel[tgt == 0]
    rp_plus = softplus(-in_pos).mean() if in_pos.size else 0.0
    rp_minus = softplus(in_pos).mean() if in_pos.size else 0.0
    ru_minus = softplus(in_unl).mean() if in_unl.size else 0.0
    return np.float32(pi * rp_plus + max(ru_minus - pi * rp_minus, 0.0))


if __name__ == "__main__":
    key = jax.random.PRNGKey(0)
    k1, k2, k3 = jax.random.split(key, 3)

    num_splits, compute_dtype = _device_defaults()

    # --- test 1: full module path (graph selection, mode='all'), small shapes ---
    num_nodes = 64
    num_clusters = 8
    logits = jax.random.normal(k1, (num_nodes,), dtype=jnp.float32)
    clusters = jax.random.randint(k2, (num_nodes,), 0, num_clusters)
    nodes = jnp.stack([jnp.arange(num_nodes, dtype=jnp.int32),
                       clusters.astype(jnp.int32)])
    data = {'pos_labels': [3, 17]}   # clicked keypoint node ids

    loss = cluster_pu_loss(logits, nodes, data, pi=0.25, mode='all')
    loss = jax.block_until_ready(loss)

    neg_idx, pos_idx = get_pos_negs_all_indices(data['pos_labels'],
                                                np.asarray(nodes), num_nodes)
    ref = _ref_loss_from_indices(np.asarray(logits), neg_idx, pos_idx,
                                 pi=0.25, compute_dtype=compute_dtype)
    np.testing.assert_allclose(np.asarray(loss), ref, rtol=1e-4, atol=1e-5)

    # --- test 2: exercise every in-kernel block class (pure-unlabeled,
    #     pure-positive, mixed boundary, all-padding skip) with a small tile ---
    num_inputs2 = 8192
    logits2 = jax.random.normal(k3, (num_inputs2,), dtype=jnp.float32)
    n_neg2, n_pos2 = 3000, 1100
    neg_idx2 = (np.arange(n_neg2, dtype=np.int64) * 3 + 1) % num_inputs2
    pos_idx2 = (np.arange(n_pos2, dtype=np.int64) * 7 + 13) % num_inputs2
    loss2 = _pu_loss_from_indices(logits2, neg_idx2, pos_idx2, 0.25,
                                  tr=8, num_splits=num_splits,
                                  compute_dtype=compute_dtype)
    loss2 = jax.block_until_ready(loss2)
    ref2 = _ref_loss_from_indices(np.asarray(logits2), neg_idx2, pos_idx2,
                                  pi=0.25, compute_dtype=compute_dtype)
    np.testing.assert_allclose(np.asarray(loss2), ref2, rtol=1e-4, atol=1e-5)

    print("KERNEL_OK")
</pallas_src>

<mosaic_0001>
module attributes {stable_mosaic.version = 11 : i64} {
  func.func @_pu_partial_kernel(%arg0: i32, %arg1: i32, %arg2: memref<2xi32, #tpu.memory_space<smem>>, %arg3: memref<2048x128xbf16, #tpu.memory_space<vmem>>, %arg4: memref<1x24x128xf32, #tpu.memory_space<vmem>>) attributes {dimension_semantics = [#tpu.dimension_semantics<parallel>, #tpu.dimension_semantics<arbitrary>], iteration_bounds = array<i64: 1, 1>, scalar_prefetch = 1 : i64, scratch_operands = 0 : i64, tpu.core_type = #tpu.core_type<tc>, window_params = [{transform_indices = @transform_0, window_bounds = array<i64: 2048, 128>}, {transform_indices = @transform_1, window_bounds = array<i64: 1, 24, 128>}]} {
    %c0_i32 = arith.constant 0 : i32
    %0 = arith.cmpi eq, %arg1, %c0_i32 : i32
    %1 = arith.extui %0 : i1 to i32
    %c0_i32_0 = arith.constant 0 : i32
    %2 = arith.cmpi ne, %1, %c0_i32_0 : i32
    scf.if %2 {
      %cst = arith.constant 0.000000e+00 : f32
      %20 = vector.broadcast %cst : f32 to vector<1x24x128xf32>
      %c0_4 = arith.constant 0 : index
      %c0_5 = arith.constant 0 : index
      %c0_6 = arith.constant 0 : index
      %21 = vector.load %arg4[%c0_4, %c0_5, %c0_6] : memref<1x24x128xf32, #tpu.memory_space<vmem>>, vector<1x24x128xf32>
      tpu.vector_store %arg4[%c0_4, %c0_5, %c0_6], %20 {strides = array<i32>} : memref<1x24x128xf32, #tpu.memory_space<vmem>>, vector<1x24x128xf32>,
    } else {
    }
    %c0 = arith.constant 0 : index
    %3 = memref.load %arg2[%c0] : memref<2xi32, #tpu.memory_space<smem>>
    %c1 = arith.constant 1 : index
    %4 = memref.load %arg2[%c1] : memref<2xi32, #tpu.memory_space<smem>>
    %c1_i32 = arith.constant 1 : i32
    %5 = arith.muli %arg0, %c1_i32 : i32
    %6 = arith.addi %5, %arg1 : i32
    %c262144_i32 = arith.constant 262144 : i32
    %7 = arith.muli %6, %c262144_i32 : i32
    %c262144_i32_1 = arith.constant 262144 : i32
    %8 = arith.addi %7, %c262144_i32_1 : i32
    %9 = arith.cmpi sge, %7, %4 : i32
    %10 = arith.cmpi sle, %8, %3 : i32
    %11 = arith.cmpi sge, %7, %3 : i32
    %12 = arith.cmpi sle, %8, %4 : i32
    %13 = arith.andi %11, %12 : i1
    %14 = arith.ori %10, %13 : i1
    %15 = arith.ori %9, %14 : i1
    %true = arith.constant true
    %16 = arith.xori %15, %true : i1
    %true_2 = arith.constant true
    %17 = arith.xori %9, %true_2 : i1
    %18 = arith.extui %17 : i1 to i32
    %c0_i32_3 = arith.constant 0 : i32
    %19 = arith.cmpi ne, %18, %c0_i32_3 : i32
    scf.if %19 {
      %c0_4 = arith.constant 0 : index
      %c0_5 = arith.constant 0 : index
      %20 = vector.load %arg3[%c0_4, %c0_5] : memref<2048x128xbf16, #tpu.memory_space<vmem>>, vector<2048x128xbf16>
      %21 = arith.extf %20 : vector<2048x128xbf16> to vector<2048x128xf32>
      %22 = math.absf %21 : vector<2048x128xf32>
      %cst = arith.constant 0.000000e+00 : f32
      %23 = vector.broadcast %cst : f32 to vector<2048x128xf32>
      %24 = arith.maximumf %21, %23 : vector<2048x128xf32>
      %cst_6 = arith.constant 0.000000e+00 : f32
      %25 = vector.broadcast %cst_6 : f32 to vector<2048x128xf32>
      %26 = arith.subf %25, %22 : vector<2048x128xf32>
      %27 = math.exp %26 : vector<2048x128xf32>
      %28 = math.log1p %27 : vector<2048x128xf32>
      %29 = arith.addf %24, %28 : vector<2048x128xf32>
      %30 = arith.extui %10 : i1 to i32
      %c0_i32_7 = arith.constant 0 : i32
      %31 = arith.cmpi ne, %30, %c0_i32_7 : i32
      scf.if %31 {
        %c0_10 = arith.constant 0 : index
        %c16 = arith.constant 16 : index
        %c0_11 = arith.constant 0 : index
        %36 = vector.load %arg4[%c0_10, %c16, %c0_11] : memref<1x24x128xf32, #tpu.memory_space<vmem>>, vector<1x8x128xf32>
        %37 = vector.shape_cast %36 : vector<1x8x128xf32> to vector<8x128xf32>
        %38 = vector.shape_cast %29 : vector<2048x128xf32> to vector<256x8x128xf32>
        %cst_12 = arith.constant dense<0.000000e+00> : vector<8x128xf32>
        %39 = vector.multi_reduction <add>, %38, %cst_12 [0] : vector<256x8x128xf32> to vector<8x128xf32>
        %40 = arith.addf %37, %39 : vector<8x128xf32>
        %c0_13 = arith.constant 0 : index
        %c16_14 = arith.constant 16 : index
        %c0_15 = arith.constant 0 : index
        %41 = vector.load %arg4[%c0_13, %c16_14, %c0_15] : memref<1x24x128xf32, #tpu.memory_space<vmem>>, vector<1x8x128xf32>
        %42 = vector.shape_cast %41 : vector<1x8x128xf32> to vector<8x128xf32>
        %43 = vector.shape_cast %40 : vector<8x128xf32> to vector<1x8x128xf32>
        tpu.vector_store %arg4[%c0_13, %c16_14, %c0_15], %43 {strides = array<i32>} : memref<1x24x128xf32, #tpu.memory_space<vmem>>, vector<1x8x128xf32>,
      } else {
      }
      %32 = arith.extui %13 : i1 to i32
      %c0_i32_8 = arith.constant 0 : i32
      %33 = arith.cmpi ne, %32, %c0_i32_8 : i32
      scf.if %33 {
        %c0_10 = arith.constant 0 : index
        %c0_11 = arith.constant 0 : index
        %c0_12 = arith.constant 0 : index
        %36 = vector.load %arg4[%c0_10, %c0_11, %c0_12] : memref<1x24x128xf32, #tpu.memory_space<vmem>>, vector<1x8x128xf32>
        %37 = vector.shape_cast %36 : vector<1x8x128xf32> to vector<8x128xf32>
        %38 = vector.shape_cast %29 : vector<2048x128xf32> to vector<256x8x128xf32>
        %cst_13 = arith.constant dense<0.000000e+00> : vector<8x128xf32>
        %39 = vector.multi_reduction <add>, %38, %cst_13 [0] : vector<256x8x128xf32> to vector<8x128xf32>
        %40 = arith.addf %37, %39 : vector<8x128xf32>
        %c0_14 = arith.constant 0 : index
        %c0_15 = arith.constant 0 : index
        %c0_16 = arith.constant 0 : index
        %41 = vector.load %arg4[%c0_14, %c0_15, %c0_16] : memref<1x24x128xf32, #tpu.memory_space<vmem>>, vector<1x8x128xf32>
        %42 = vector.shape_cast %41 : vector<1x8x128xf32> to vector<8x128xf32>
        %43 = vector.shape_cast %40 : vector<8x128xf32> to vector<1x8x128xf32>
        tpu.vector_store %arg4[%c0_14, %c0_15, %c0_16], %43 {strides = array<i32>} : memref<1x24x128xf32, #tpu.memory_space<vmem>>, vector<1x8x128xf32>,
        %c0_17 = arith.constant 0 : index
        %c8 = arith.constant 8 : index
        %c0_18 = arith.constant 0 : index
        %44 = vector.load %arg4[%c0_17, %c8, %c0_18] : memref<1x24x128xf32, #tpu.memory_space<vmem>>, vector<1x8x128xf32>
        %45 = vector.shape_cast %44 : vector<1x8x128xf32> to vector<8x128xf32>
        %46 = vector.shape_cast %21 : vector<2048x128xf32> to vector<256x8x128xf32>
        %cst_19 = arith.constant dense<0.000000e+00> : vector<8x128xf32>
        %47 = vector.multi_reduction <add>, %46, %cst_19 [0] : vector<256x8x128xf32> to vector<8x128xf32>
        %48 = arith.addf %45, %47 : vector<8x128xf32>
        %c0_20 = arith.constant 0 : index
        %c8_21 = arith.constant 8 : index
        %c0_22 = arith.constant 0 : index
        %49 = vector.load %arg4[%c0_20, %c8_21, %c0_22] : memref<1x24x128xf32, #tpu.memory_space<vmem>>, vector<1x8x128xf32>
        %50 = vector.shape_cast %49 : vector<1x8x128xf32> to vector<8x128xf32>
        %51 = vector.shape_cast %48 : vector<8x128xf32> to vector<1x8x128xf32>
        tpu.vector_store %arg4[%c0_20, %c8_21, %c0_22], %51 {strides = array<i32>} : memref<1x24x128xf32, #tpu.memory_space<vmem>>, vector<1x8x128xf32>,
      } else {
      }
      %34 = arith.extui %16 : i1 to i32
      %c0_i32_9 = arith.constant 0 : i32
      %35 = arith.cmpi ne, %34, %c0_i32_9 : i32
      scf.if %35 {
        %36 = tpu.iota {dimensions = array<i32: 0>} : vector<2048x128xi32>
        %37 = tpu.iota {dimensions = array<i32: 1>} : vector<2048x128xi32>
        %c128_i32 = arith.constant 128 : i32
        %38 = vector.broadcast %c128_i32 : i32 to vector<2048x128xi32>
        %39 = arith.muli %36, %38 : vector<2048x128xi32>
        %40 = arith.addi %39, %37 : vector<2048x128xi32>
        %41 = arith.subi %3, %7 : i32
        %42 = arith.subi %4, %7 : i32
        %43 = vector.broadcast %41 : i32 to vector<2048x128xi32>
        %44 = arith.cmpi sge, %40, %43 : vector<2048x128xi32>
        %45 = vector.broadcast %42 : i32 to vector<2048x128xi32>
        %46 = arith.cmpi slt, %40, %45 : vector<2048x128xi32>
        %47 = arith.andi %44, %46 : vector<2048x128xi1>
        %48 = vector.broadcast %41 : i32 to vector<2048x128xi32>
        %49 = arith.cmpi slt, %40, %48 : vector<2048x128xi32>
        %cst_10 = arith.constant 0.000000e+00 : f32
        %50 = vector.broadcast %cst_10 : f32 to vector<2048x128xf32>
        %c0_11 = arith.constant 0 : index
        %c0_12 = arith.constant 0 : index
        %c0_13 = arith.constant 0 : index
        %51 = vector.load %arg4[%c0_11, %c0_12, %c0_13] : memref<1x24x128xf32, #tpu.memory_space<vmem>>, vector<1x8x128xf32>
        %52 = vector.shape_cast %51 : vector<1x8x128xf32> to vector<8x128xf32>
        %53 = arith.select %47, %29, %50 : vector<2048x128xi1>, vector<2048x128xf32>
        %54 = vector.shape_cast %53 : vector<2048x128xf32> to vector<256x8x128xf32>
        %cst_14 = arith.constant dense<0.000000e+00> : vector<8x128xf32>
        %55 = vector.multi_reduction <add>, %54, %cst_14 [0] : vector<256x8x128xf32> to vector<8x128xf32>
        %56 = arith.addf %52, %55 : vector<8x128xf32>
        %c0_15 = arith.constant 0 : index
        %c0_16 = arith.constant 0 : index
        %c0_17 = arith.constant 0 : index
        %57 = vector.load %arg4[%c0_15, %c0_16, %c0_17] : memref<1x24x128xf32, #tpu.memory_space<vmem>>, vector<1x8x128xf32>
        %58 = vector.shape_cast %57 : vector<1x8x128xf32> to vector<8x128xf32>
        %59 = vector.shape_cast %56 : vector<8x128xf32> to vector<1x8x128xf32>
        tpu.vector_store %arg4[%c0_15, %c0_16, %c0_17], %59 {strides = array<i32>} : memref<1x24x128xf32, #tpu.memory_space<vmem>>, vector<1x8x128xf32>,
        %c0_18 = arith.constant 0 : index
        %c8 = arith.constant 8 : index
        %c0_19 = arith.constant 0 : index
        %60 = vector.load %arg4[%c0_18, %c8, %c0_19] : memref<1x24x128xf32, #tpu.memory_space<vmem>>, vector<1x8x128xf32>
        %61 = vector.shape_cast %60 : vector<1x8x128xf32> to vector<8x128xf32>
        %62 = arith.select %47, %21, %50 : vector<2048x128xi1>, vector<2048x128xf32>
        %63 = vector.shape_cast %62 : vector<2048x128xf32> to vector<256x8x128xf32>
        %cst_20 = arith.constant dense<0.000000e+00> : vector<8x128xf32>
        %64 = vector.multi_reduction <add>, %63, %cst_20 [0] : vector<256x8x128xf32> to vector<8x128xf32>
        %65 = arith.addf %61, %64 : vector<8x128xf32>
        %c0_21 = arith.constant 0 : index
        %c8_22 = arith.constant 8 : index
        %c0_23 = arith.constant 0 : index
        %66 = vector.load %arg4[%c0_21, %c8_22, %c0_23] : memref<1x24x128xf32, #tpu.memory_space<vmem>>, vector<1x8x128xf32>
        %67 = vector.shape_cast %66 : vector<1x8x128xf32> to vector<8x128xf32>
        %68 = vector.shape_cast %65 : vector<8x128xf32> to vector<1x8x128xf32>
        tpu.vector_store %arg4[%c0_21, %c8_22, %c0_23], %68 {strides = array<i32>} : memref<1x24x128xf32, #tpu.memory_space<vmem>>, vector<1x8x128xf32>,
        %c0_24 = arith.constant 0 : index
        %c16 = arith.constant 16 : index
        %c0_25 = arith.constant 0 : index
        %69 = vector.load %arg4[%c0_24, %c16, %c0_25] : memref<1x24x128xf32, #tpu.memory_space<vmem>>, vector<1x8x128xf32>
        %70 = vector.shape_cast %69 : vector<1x8x128xf32> to vector<8x128xf32>
        %71 = arith.select %49, %29, %50 : vector<2048x128xi1>, vector<2048x128xf32>
        %72 = vector.shape_cast %71 : vector<2048x128xf32> to vector<256x8x128xf32>
        %cst_26 = arith.constant dense<0.000000e+00> : vector<8x128xf32>
        %73 = vector.multi_reduction <add>, %72, %cst_26 [0] : vector<256x8x128xf32> to vector<8x128xf32>
        %74 = arith.addf %70, %73 : vector<8x128xf32>
        %c0_27 = arith.constant 0 : index
        %c16_28 = arith.constant 16 : index
        %c0_29 = arith.constant 0 : index
        %75 = vector.load %arg4[%c0_27, %c16_28, %c0_29] : memref<1x24x128xf32, #tpu.memory_space<vmem>>, vector<1x8x128xf32>
        %76 = vector.shape_cast %75 : vector<1x8x128xf32> to vector<8x128xf32>
        %77 = vector.shape_cast %74 : vector<8x128xf32> to vector<1x8x128xf32>
        tpu.vector_store %arg4[%c0_27, %c16_28, %c0_29], %77 {strides = array<i32>} : memref<1x24x128xf32, #tpu.memory_space<vmem>>, vector<1x8x128xf32>,
      } else {
      }
    } else {
    }
    return
  }
  func.func @transform_0(%arg0: i32, %arg1: i32, %arg2: memref<2xi32, #tpu.memory_space<smem>>) -> (i32, i32) {
    %c1_i32 = arith.constant 1 : i32
    %0 = arith.muli %arg0, %c1_i32 : i32
    %1 = arith.addi %0, %arg1 : i32
    %c0_i32 = arith.constant 0 : i32
    %c0_i32_0 = arith.constant 0 : i32
    return %1, %c0_i32 : i32, i32
  }
  func.func @transform_1(%arg0: i32, %arg1: i32, %arg2: memref<2xi32, #tpu.memory_space<smem>>) -> (i32, i32, i32) {
    %c0_i32 = arith.constant 0 : i32
    %c0_i32_0 = arith.constant 0 : i32
    %c0_i32_1 = arith.constant 0 : i32
    return %arg0, %c0_i32, %c0_i32_0 : i32, i32, i32
  }
}

</mosaic_0001>

<llo_original>
// kernel: _pu_loss_device.1
$region0: #{_pu_loss_device.1}
  #allocation0 [shape = 'u32[]', space=smem, size = 0x4, offset = 0x4, fixed_abs, tag = 'smem constant byte address 0x4 - core index']
  #allocation1 [shape = 'u32[72,128]{1,0:T(1,128)}', space=vmem, size = 0x9000, scoped, tag = 'internal scratch']
  #allocation2 [shape = 's32[1]{0}', space=sflag, size = 0x4, scoped, tag = 'scoped memory for _pu_loss_device.1']
  #allocation3 [shape = 'u8[512]{0}', space=smem, size = 0x200, scoped, tag = 'prefetched SMEM operand 0']
  %s0 = inlined_call_operand.vmem [shape: s32[2], index: 0, kind: input, shape index: {}]
  %s1 = inlined_call_operand.vmem [shape: bf16[2048,128], index: 1, kind: input, shape index: {}]
  %s2 = inlined_call_operand.vmem [shape: f32[1,24,128], index: 2, kind: output, shape index: {}]
  %s3 = sld [smem:[#allocation0]]
  $region34: #{_pu_loss_device.1} parent=0
    _
  %s5 = ssub.s32 1, %s3
  %s6 = scalar_select 0, %s5, %s3
  %s8 = sshll.u32 %s0, 4
  %s9 = int_to_ptr.vmem [resolvable:$true] %s8
  %11 = dma.vmem_to_smem %s9, 16, [#allocation3], [#allocation2]
  %13 = dma.done [#allocation2], 16
  %14 = sfence
  // Predicated region
  $region2: #{_pu_loss_device.1} parent=0 // pred_check
    _
  $region3: #{_pu_loss_device.1} parent=0 // pred_check_branch
    %16 = sbr.rel (0) target = $region5
  $region4: #{_pu_loss_device.1} parent=0 // pred_region
    %s17 = sadd.s32 0, 0
    %s18 = smul.u32 256, %s17
    %p19 = scmp.lt.s32.totalorder %s18, 255
    %s20 = scalar_select %p19, %s18, 255
    %s21 = smul.addr %s20, 4
    %s22 = scalar_lea.vmem %s1, %s21
    %s23 = sadd.s32 0, 0
    %s24 = smul.u32 256, %s23
  $region5: #{_pu_loss_device.1} parent=0 // pred_fallthru
    _
  %s25 = sadd.s32 0, 0
  %s26 = smul.u32 256, %s25
  %p27 = scmp.lt.s32.totalorder %s26, 255
  %s28 = scalar_select %p27, %s26, 255
  %s29 = smul.addr %s28, 4
  %s30 = scalar_lea.vmem %s1, %s29
  %s31 = sadd.s32 0, 0
  %s32 = smul.u32 256, %s31
  %p33 = scmp.lt.s32.totalorder %s32, 255
  %s34 = scalar_select %p33, %s32, 255
  %s35 = smul.addr %s34, 4
  %s36 = scalar_lea.vmem %s1, %s35
  %s37 = sadd.s32 0, 0
  %s38 = smul.u32 256, %s37
  %p39 = scmp.eq.s32.totalorder 0, 0
  // Predicated region
  $region6: #{_pu_loss_device.1} parent=0 // pred_check
    %p40 = pneg %p39
  $region7: #{_pu_loss_device.1} parent=0 // pred_check_branch
    %42 = sbr.rel (%p40) target = $region9
  $region8: #{_pu_loss_device.1} parent=0 // pred_region
    %43 = vst [vmem:[%s2] sm:$0xff] 0.0
    %44 = vst [vmem:[%s2 + $0x8] sm:$0xff] 0.0
    %45 = vst [vmem:[%s2 + $0x10] sm:$0xff] 0.0
  $region9: #{_pu_loss_device.1} parent=0 // pred_fallthru
    _
  %s46 = sld [smem:[#allocation3]]
  %s47 = sld [smem:[#allocation3 + $0x1]]
  %s48 = sadd.s32 0, 0
  %s49 = smul.u32 %s48, 262144
  %s50 = sadd.s32 %s49, 262144
  %p51 = scmp.ge.s32.totalorder %s49, %s47
  %p52 = scmp.le.s32.totalorder %s50, %s46
  %p53 = scmp.ge.s32.totalorder %s49, %s46
  %p54 = scmp.le.s32.totalorder %s50, %s47
  %p55 = pnand %p53, %p54
  %p56 = pneg %p55
  %p57 = por %p52, %p56
  %p58 = por %p51, %p57
  %p59 = pneg %p58
  %p60 = scmp.lt.s32.totalorder %s49, %s47
  // Predicated region
  $region10: #{_pu_loss_device.1} parent=0 // pred_check
    %p61 = pneg %p60
  $region11: #{_pu_loss_device.1} parent=0 // pred_check_branch
    %63 = sbr.rel (%p61) target = $region13
  $region12: #{_pu_loss_device.1} parent=0 // pred_region
    %v64 = vld [vmem:[%s36] sm:$0xf]
    %v65 = vld [vmem:[%s36 + $0x4] sm:$0xf]
    %v66 = vld [vmem:[%s36 + $0x8] sm:$0xf]
    %v67 = vld [vmem:[%s36 + $0xc] sm:$0xf]
    %v68 = vld [vmem:[%s36 + $0x10] sm:$0xf]
    %v69 = vld [vmem:[%s36 + $0x14] sm:$0xf]
    %v70 = vld [vmem:[%s36 + $0x18] sm:$0xf]
    %v71 = vld [vmem:[%s36 + $0x1c] sm:$0xf]
    %v72 = vld [vmem:[%s36 + $0x20] sm:$0xf]
    %v73 = vld [vmem:[%s36 + $0x24] sm:$0xf]
    %v74 = vld [vmem:[%s36 + $0x28] sm:$0xf]
    %v75 = vld [vmem:[%s36 + $0x2c] sm:$0xf]
    %v76 = vld [vmem:[%s36 + $0x30] sm:$0xf]
    %v77 = vld [vmem:[%s36 + $0x34] sm:$0xf]
    %v78 = vld [vmem:[%s36 + $0x38] sm:$0xf]
    %v79 = vld [vmem:[%s36 + $0x3c] sm:$0xf]
    %v80 = vld [vmem:[%s36 + $0x40] sm:$0xf]
    %v81 = vld [vmem:[%s36 + $0x44] sm:$0xf]
    %v82 = vld [vmem:[%s36 + $0x48] sm:$0xf]
    %v83 = vld [vmem:[%s36 + $0x4c] sm:$0xf]
    %v84 = vld [vmem:[%s36 + $0x50] sm:$0xf]
    %v85 = vld [vmem:[%s36 + $0x54] sm:$0xf]
    %v86 = vld [vmem:[%s36 + $0x58] sm:$0xf]
    %v87 = vld [vmem:[%s36 + $0x5c] sm:$0xf]
    %v88 = vld [vmem:[%s36 + $0x60] sm:$0xf]
    %v89 = vld [vmem:[%s36 + $0x64] sm:$0xf]
    %v90 = vld [vmem:[%s36 + $0x68] sm:$0xf]
    %v91 = vld [vmem:[%s36 + $0x6c] sm:$0xf]
    %v92 = vld [vmem:[%s36 + $0x70] sm:$0xf]
    %v93 = vld [vmem:[%s36 + $0x74] sm:$0xf]
    %v94 = vld [vmem:[%s36 + $0x78] sm:$0xf]
    %v95 = vld [vmem:[%s36 + $0x7c] sm:$0xf]
    %v96 = vld [vmem:[%s36 + $0x80] sm:$0xf]
    %v97 = vld [vmem:[%s36 + $0x84] sm:$0xf]
    %v98 = vld [vmem:[%s36 + $0x88] sm:$0xf]
    %v99 = vld [vmem:[%s36 + $0x8c] sm:$0xf]
    %v100 = vld [vmem:[%s36 + $0x90] sm:$0xf]
    %v101 = vld [vmem:[%s36 + $0x94] sm:$0xf]
    %v102 = vld [vmem:[%s36 + $0x98] sm:$0xf]
    %v103 = vld [vmem:[%s36 + $0x9c] sm:$0xf]
    %v104 = vld [vmem:[%s36 + $0xa0] sm:$0xf]
    %v105 = vld [vmem:[%s36 + $0xa4] sm:$0xf]
    %v106 = vld [vmem:[%s36 + $0xa8] sm:$0xf]
    %v107 = vld [vmem:[%s36 + $0xac] sm:$0xf]
    %v108 = vld [vmem:[%s36 + $0xb0] sm:$0xf]
    %v109 = vld [vmem:[%s36 + $0xb4] sm:$0xf]
    %v110 = vld [vmem:[%s36 + $0xb8] sm:$0xf]
    %v111 = vld [vmem:[%s36 + $0xbc] sm:$0xf]
    %v112 = vld [vmem:[%s36 + $0xc0] sm:$0xf]
    %v113 = vld [vmem:[%s36 + $0xc4] sm:$0xf]
    %v114 = vld [vmem:[%s36 + $0xc8] sm:$0xf]
    %v115 = vld [vmem:[%s36 + $0xcc] sm:$0xf]
    %v116 = vld [vmem:[%s36 + $0xd0] sm:$0xf]
    %v117 = vld [vmem:[%s36 + $0xd4] sm:$0xf]
    %v118 = vld [vmem:[%s36 + $0xd8] sm:$0xf]
    %v119 = vld [vmem:[%s36 + $0xdc] sm:$0xf]
    %v120 = vld [vmem:[%s36 + $0xe0] sm:$0xf]
    %v121 = vld [vmem:[%s36 + $0xe4] sm:$0xf]
    %v122 = vld [vmem:[%s36 + $0xe8] sm:$0xf]
    %v123 = vld [vmem:[%s36 + $0xec] sm:$0xf]
    %v124 = vld [vmem:[%s36 + $0xf0] sm:$0xf]
    %v125 = vld [vmem:[%s36 + $0xf4] sm:$0xf]
    %v126 = vld [vmem:[%s36 + $0xf8] sm:$0xf]
    %v127 = vld [vmem:[%s36 + $0xfc] sm:$0xf]
    %v128 = vld [vmem:[%s36 + $0x100] sm:$0xf]
    %v129 = vld [vmem:[%s36 + $0x104] sm:$0xf]
    %v130 = vld [vmem:[%s36 + $0x108] sm:$0xf]
    %v131 = vld [vmem:[%s36 + $0x10c] sm:$0xf]
    %v132 = vld [vmem:[%s36 + $0x110] sm:$0xf]
    %v133 = vld [vmem:[%s36 + $0x114] sm:$0xf]
    %v134 = vld [vmem:[%s36 + $0x118] sm:$0xf]
    %v135 = vld [vmem:[%s36 + $0x11c] sm:$0xf]
    %v136 = vld [vmem:[%s36 + $0x120] sm:$0xf]
    %v137 = vld [vmem:[%s36 + $0x124] sm:$0xf]
    %v138 = vld [vmem:[%s36 + $0x128] sm:$0xf]
    %v139 = vld [vmem:[%s36 + $0x12c] sm:$0xf]
    %v140 = vld [vmem:[%s36 + $0x130] sm:$0xf]
    %v141 = vld [vmem:[%s36 + $0x134] sm:$0xf]
    %v142 = vld [vmem:[%s36 + $0x138] sm:$0xf]
    %v143 = vld [vmem:[%s36 + $0x13c] sm:$0xf]
    %v144 = vld [vmem:[%s36 + $0x140] sm:$0xf]
    %v145 = vld [vmem:[%s36 + $0x144] sm:$0xf]
    %v146 = vld [vmem:[%s36 + $0x148] sm:$0xf]
    %v147 = vld [vmem:[%s36 + $0x14c] sm:$0xf]
    %v148 = vld [vmem:[%s36 + $0x150] sm:$0xf]
    %v149 = vld [vmem:[%s36 + $0x154] sm:$0xf]
    %v150 = vld [vmem:[%s36 + $0x158] sm:$0xf]
    %v151 = vld [vmem:[%s36 + $0x15c] sm:$0xf]
    %v152 = vld [vmem:[%s36 + $0x160] sm:$0xf]
    %v153 = vld [vmem:[%s36 + $0x164] sm:$0xf]
    %v154 = vld [vmem:[%s36 + $0x168] sm:$0xf]
    %v155 = vld [vmem:[%s36 + $0x16c] sm:$0xf]
    %v156 = vld [vmem:[%s36 + $0x170] sm:$0xf]
    %v157 = vld [vmem:[%s36 + $0x174] sm:$0xf]
    %v158 = vld [vmem:[%s36 + $0x178] sm:$0xf]
    %v159 = vld [vmem:[%s36 + $0x17c] sm:$0xf]
    %v160 = vld [vmem:[%s36 + $0x180] sm:$0xf]
    %v161 = vld [vmem:[%s36 + $0x184] sm:$0xf]
    %v162 = vld [vmem:[%s36 + $0x188] sm:$0xf]
    %v163 = vld [vmem:[%s36 + $0x18c] sm:$0xf]
    %v164 = vld [vmem:[%s36 + $0x190] sm:$0xf]
    %v165 = vld [vmem:[%s36 + $0x194] sm:$0xf]
    %v166 = vld [vmem:[%s36 + $0x198] sm:$0xf]
    %v167 = vld [vmem:[%s36 + $0x19c] sm:$0xf]
    %v168 = vld [vmem:[%s36 + $0x1a0] sm:$0xf]
    %v169 = vld [vmem:[%s36 + $0x1a4] sm:$0xf]
    %v170 = vld [vmem:[%s36 + $0x1a8] sm:$0xf]
    %v171 = vld [vmem:[%s36 + $0x1ac] sm:$0xf]
    %v172 = vld [vmem:[%s36 + $0x1b0] sm:$0xf]
    %v173 = vld [vmem:[%s36 + $0x1b4] sm:$0xf]
    %v174 = vld [vmem:[%s36 + $0x1b8] sm:$0xf]
    %v175 = vld [vmem:[%s36 + $0x1bc] sm:$0xf]
    %v176 = vld [vmem:[%s36 + $0x1c0] sm:$0xf]
    %v177 = vld [vmem:[%s36 + $0x1c4] sm:$0xf]
    %v178 = vld [vmem:[%s36 + $0x1c8] sm:$0xf]
    %v179 = vld [vmem:[%s36 + $0x1cc] sm:$0xf]
    %v180 = vld [vmem:[%s36 + $0x1d0] sm:$0xf]
    %v181 = vld [vmem:[%s36 + $0x1d4] sm:$0xf]
    %v182 = vld [vmem:[%s36 + $0x1d8] sm:$0xf]
    %v183 = vld [vmem:[%s36 + $0x1dc] sm:$0xf]
    %v184 = vld [vmem:[%s36 + $0x1e0] sm:$0xf]
    %v185 = vld [vmem:[%s36 + $0x1e4] sm:$0xf]
    %v186 = vld [vmem:[%s36 + $0x1e8] sm:$0xf]
    %v187 = vld [vmem:[%s36 + $0x1ec] sm:$0xf]
    %v188 = vld [vmem:[%s36 + $0x1f0] sm:$0xf]
    %v189 = vld [vmem:[%s36 + $0x1f4] sm:$0xf]
    %v190 = vld [vmem:[%s36 + $0x1f8] sm:$0xf]
    %v191 = vld [vmem:[%s36 + $0x1fc] sm:$0xf]
    %v192 = vld [vmem:[%s36 + $0x200] sm:$0xf]
    %v193 = vld [vmem:[%s36 + $0x204] sm:$0xf]
    %v194 = vld [vmem:[%s36 + $0x208] sm:$0xf]
    %v195 = vld [vmem:[%s36 + $0x20c] sm:$0xf]
    %v196 = vld [vmem:[%s36 + $0x210] sm:$0xf]
    %v197 = vld [vmem:[%s36 + $0x214] sm:$0xf]
    %v198 = vld [vmem:[%s36 + $0x218] sm:$0xf]
    %v199 = vld [vmem:[%s36 + $0x21c] sm:$0xf]
    %v200 = vld [vmem:[%s36 + $0x220] sm:$0xf]
    %v201 = vld [vmem:[%s36 + $0x224] sm:$0xf]
    %v202 = vld [vmem:[%s36 + $0x228] sm:$0xf]
    %v203 = vld [vmem:[%s36 + $0x22c] sm:$0xf]
    %v204 = vld [vmem:[%s36 + $0x230] sm:$0xf]
    %v205 = vld [vmem:[%s36 + $0x234] sm:$0xf]
    %v206 = vld [vmem:[%s36 + $0x238] sm:$0xf]
    %v207 = vld [vmem:[%s36 + $0x23c] sm:$0xf]
    %v208 = vld [vmem:[%s36 + $0x240] sm:$0xf]
    %v209 = vld [vmem:[%s36 + $0x244] sm:$0xf]
    %v210 = vld [vmem:[%s36 + $0x248] sm:$0xf]
    %v211 = vld [vmem:[%s36 + $0x24c] sm:$0xf]
    %v212 = vld [vmem:[%s36 + $0x250] sm:$0xf]
    %v213 = vld [vmem:[%s36 + $0x254] sm:$0xf]
    %v214 = vld [vmem:[%s36 + $0x258] sm:$0xf]
    %v215 = vld [vmem:[%s36 + $0x25c] sm:$0xf]
    %v216 = vld [vmem:[%s36 + $0x260] sm:$0xf]
    %v217 = vld [vmem:[%s36 + $0x264] sm:$0xf]
    %v218 = vld [vmem:[%s36 + $0x268] sm:$0xf]
    %v219 = vld [vmem:[%s36 + $0x26c] sm:$0xf]
    %v220 = vld [vmem:[%s36 + $0x270] sm:$0xf]
    %v221 = vld [vmem:[%s36 + $0x274] sm:$0xf]
    %v222 = vld [vmem:[%s36 + $0x278] sm:$0xf]
    %v223 = vld [vmem:[%s36 + $0x27c] sm:$0xf]
    %v224 = vld [vmem:[%s36 + $0x280] sm:$0xf]
    %v225 = vld [vmem:[%s36 + $0x284] sm:$0xf]
    %v226 = vld [vmem:[%s36 + $0x288] sm:$0xf]
    %v227 = vld [vmem:[%s36 + $0x28c] sm:$0xf]
    %v228 = vld [vmem:[%s36 + $0x290] sm:$0xf]
    %v229 = vld [vmem:[%s36 + $0x294] sm:$0xf]
    %v230 = vld [vmem:[%s36 + $0x298] sm:$0xf]
    %v231 = vld [vmem:[%s36 + $0x29c] sm:$0xf]
    %v232 = vld [vmem:[%s36 + $0x2a0] sm:$0xf]
    %v233 = vld [vmem:[%s36 + $0x2a4] sm:$0xf]
    %v234 = vld [vmem:[%s36 + $0x2a8] sm:$0xf]
    %v235 = vld [vmem:[%s36 + $0x2ac] sm:$0xf]
    %v236 = vld [vmem:[%s36 + $0x2b0] sm:$0xf]
    %v237 = vld [vmem:[%s36 + $0x2b4] sm:$0xf]
    %v238 = vld [vmem:[%s36 + $0x2b8] sm:$0xf]
    %v239 = vld [vmem:[%s36 + $0x2bc] sm:$0xf]
    %v240 = vld [vmem:[%s36 + $0x2c0] sm:$0xf]
    %v241 = vld [vmem:[%s36 + $0x2c4] sm:$0xf]
    %v242 = vld [vmem:[%s36 + $0x2c8] sm:$0xf]
    %v243 = vld [vmem:[%s36 + $0x2cc] sm:$0xf]
    %v244 = vld [vmem:[%s36 + $0x2d0] sm:$0xf]
    %v245 = vld [vmem:[%s36 + $0x2d4] sm:$0xf]
    %v246 = vld [vmem:[%s36 + $0x2d8] sm:$0xf]
    %v247 = vld [vmem:[%s36 + $0x2dc] sm:$0xf]
    %v248 = vld [vmem:[%s36 + $0x2e0] sm:$0xf]
    %v249 = vld [vmem:[%s36 + $0x2e4] sm:$0xf]
    %v250 = vld [vmem:[%s36 + $0x2e8] sm:$0xf]
    %v251 = vld [vmem:[%s36 + $0x2ec] sm:$0xf]
    %v252 = vld [vmem:[%s36 + $0x2f0] sm:$0xf]
    %v253 = vld [vmem:[%s36 + $0x2f4] sm:$0xf]
    %v254 = vld [vmem:[%s36 + $0x2f8] sm:$0xf]
    %v255 = vld [vmem:[%s36 + $0x2fc] sm:$0xf]
    %v256 = vld [vmem:[%s36 + $0x300] sm:$0xf]
    %v257 = vld [vmem:[%s36 + $0x304] sm:$0xf]
    %v258 = vld [vmem:[%s36 + $0x308] sm:$0xf]
    %v259 = vld [vmem:[%s36 + $0x30c] sm:$0xf]
    %v260 = vld [vmem:[%s36 + $0x310] sm:$0xf]
    %v261 = vld [vmem:[%s36 + $0x314] sm:$0xf]
    %v262 = vld [vmem:[%s36 + $0x318] sm:$0xf]
    %v263 = vld [vmem:[%s36 + $0x31c] sm:$0xf]
    %v264 = vld [vmem:[%s36 + $0x320] sm:$0xf]
    %v265 = vld [vmem:[%s36 + $0x324] sm:$0xf]
    %v266 = vld [vmem:[%s36 + $0x328] sm:$0xf]
    %v267 = vld [vmem:[%s36 + $0x32c] sm:$0xf]
    %v268 = vld [vmem:[%s36 + $0x330] sm:$0xf]
    %v269 = vld [vmem:[%s36 + $0x334] sm:$0xf]
    %v270 = vld [vmem:[%s36 + $0x338] sm:$0xf]
    %v271 = vld [vmem:[%s36 + $0x33c] sm:$0xf]
    %v272 = vld [vmem:[%s36 + $0x340] sm:$0xf]
    %v273 = vld [vmem:[%s36 + $0x344] sm:$0xf]
    %v274 = vld [vmem:[%s36 + $0x348] sm:$0xf]
    %v275 = vld [vmem:[%s36 + $0x34c] sm:$0xf]
    %v276 = vld [vmem:[%s36 + $0x350] sm:$0xf]
    %v277 = vld [vmem:[%s36 + $0x354] sm:$0xf]
    %v278 = vld [vmem:[%s36 + $0x358] sm:$0xf]
    %v279 = vld [vmem:[%s36 + $0x35c] sm:$0xf]
    %v280 = vld [vmem:[%s36 + $0x360] sm:$0xf]
    %v281 = vld [vmem:[%s36 + $0x364] sm:$0xf]
    %v282 = vld [vmem:[%s36 + $0x368] sm:$0xf]
    %v283 = vld [vmem:[%s36 + $0x36c] sm:$0xf]
    %v284 = vld [vmem:[%s36 + $0x370] sm:$0xf]
    %v285 = vld [vmem:[%s36 + $0x374] sm:$0xf]
    %v286 = vld [vmem:[%s36 + $0x378] sm:$0xf]
    %v287 = vld [vmem:[%s36 + $0x37c] sm:$0xf]
    %v288 = vld [vmem:[%s36 + $0x380] sm:$0xf]
    %v289 = vld [vmem:[%s36 + $0x384] sm:$0xf]
    %v290 = vld [vmem:[%s36 + $0x388] sm:$0xf]
    %v291 = vld [vmem:[%s36 + $0x38c] sm:$0xf]
    %v292 = vld [vmem:[%s36 + $0x390] sm:$0xf]
    %v293 = vld [vmem:[%s36 + $0x394] sm:$0xf]
    %v294 = vld [vmem:[%s36 + $0x398] sm:$0xf]
    %v295 = vld [vmem:[%s36 + $0x39c] sm:$0xf]
    %v296 = vld [vmem:[%s36 + $0x3a0] sm:$0xf]
    %v297 = vld [vmem:[%s36 + $0x3a4] sm:$0xf]
    %v298 = vld [vmem:[%s36 + $0x3a8] sm:$0xf]
    %v299 = vld [vmem:[%s36 + $0x3ac] sm:$0xf]
    %v300 = vld [vmem:[%s36 + $0x3b0] sm:$0xf]
    %v301 = vld [vmem:[%s36 + $0x3b4] sm:$0xf]
    %v302 = vld [vmem:[%s36 + $0x3b8] sm:$0xf]
    %v303 = vld [vmem:[%s36 + $0x3bc] sm:$0xf]
    %v304 = vld [vmem:[%s36 + $0x3c0] sm:$0xf]
    %v305 = vld [vmem:[%s36 + $0x3c4] sm:$0xf]
    %v306 = vld [vmem:[%s36 + $0x3c8] sm:$0xf]
    %v307 = vld [vmem:[%s36 + $0x3cc] sm:$0xf]
    %v308 = vld [vmem:[%s36 + $0x3d0] sm:$0xf]
    %v309 = vld [vmem:[%s36 + $0x3d4] sm:$0xf]
    %v310 = vld [vmem:[%s36 + $0x3d8] sm:$0xf]
    %v311 = vld [vmem:[%s36 + $0x3dc] sm:$0xf]
    %v312 = vld [vmem:[%s36 + $0x3e0] sm:$0xf]
    %v313 = vld [vmem:[%s36 + $0x3e4] sm:$0xf]
    %v314 = vld [vmem:[%s36 + $0x3e8] sm:$0xf]
    %v315 = vld [vmem:[%s36 + $0x3ec] sm:$0xf]
    %v316 = vld [vmem:[%s36 + $0x3f0] sm:$0xf]
    %v317 = vld [vmem:[%s36 + $0x3f4] sm:$0xf]
    %v318 = vld [vmem:[%s36 + $0x3f8] sm:$0xf]
    %v319 = vld [vmem:[%s36 + $0x3fc] sm:$0xf]
    %v320 = vunpack.c.l.bf16 %v64
    %v321 = vunpack.c.l.bf16 %v65
    %v322 = vunpack.c.l.bf16 %v66
    %v323 = vunpack.c.l.bf16 %v67
    %v324 = vunpack.c.l.bf16 %v68
    %v325 = vunpack.c.l.bf16 %v69
    %v326 = vunpack.c.l.bf16 %v70
    %v327 = vunpack.c.l.bf16 %v71
    %v328 = vunpack.c.l.bf16 %v72
    %v329 = vunpack.c.l.bf16 %v73
    %v330 = vunpack.c.l.bf16 %v74
    %v331 = vunpack.c.l.bf16 %v75
    %v332 = vunpack.c.l.bf16 %v76
    %v333 = vunpack.c.l.bf16 %v77
    %v334 = vunpack.c.l.bf16 %v78
    %v335 = vunpack.c.l.bf16 %v79
    %v336 = vunpack.c.l.bf16 %v80
    %v337 = vunpack.c.l.bf16 %v81
    %v338 = vunpack.c.l.bf16 %v82
    %v339 = vunpack.c.l.bf16 %v83
    %v340 = vunpack.c.l.bf16 %v84
    %v341 = vunpack.c.l.bf16 %v85
    %v342 = vunpack.c.l.bf16 %v86
    %v343 = vunpack.c.l.bf16 %v87
    %v344 = vunpack.c.l.bf16 %v88
    %v345 = vunpack.c.l.bf16 %v89
    %v346 = vunpack.c.l.bf16 %v90
    %v347 = vunpack.c.l.bf16 %v91
    %v348 = vunpack.c.l.bf16 %v92
    %v349 = vunpack.c.l.bf16 %v93
    %v350 = vunpack.c.l.bf16 %v94
    %v351 = vunpack.c.l.bf16 %v95
    %v352 = vunpack.c.l.bf16 %v96
    %v353 = vunpack.c.l.bf16 %v97
    %v354 = vunpack.c.l.bf16 %v98
    %v355 = vunpack.c.l.bf16 %v99
    %v356 = vunpack.c.l.bf16 %v100
    %v357 = vunpack.c.l.bf16 %v101
    %v358 = vunpack.c.l.bf16 %v102
    %v359 = vunpack.c.l.bf16 %v103
    %v360 = vunpack.c.l.bf16 %v104
    %v361 = vunpack.c.l.bf16 %v105
    %v362 = vunpack.c.l.bf16 %v106
    %v363 = vunpack.c.l.bf16 %v107
    %v364 = vunpack.c.l.bf16 %v108
    %v365 = vunpack.c.l.bf16 %v109
    %v366 = vunpack.c.l.bf16 %v110
    %v367 = vunpack.c.l.bf16 %v111
    %v368 = vunpack.c.l.bf16 %v112
    %v369 = vunpack.c.l.bf16 %v113
    %v370 = vunpack.c.l.bf16 %v114
    %v371 = vunpack.c.l.bf16 %v115
    %v372 = vunpack.c.l.bf16 %v116
    %v373 = vunpack.c.l.bf16 %v117
    %v374 = vunpack.c.l.bf16 %v118
    %v375 = vunpack.c.l.bf16 %v119
    %v376 = vunpack.c.l.bf16 %v120
    %v377 = vunpack.c.l.bf16 %v121
    %v378 = vunpack.c.l.bf16 %v122
    %v379 = vunpack.c.l.bf16 %v123
    %v380 = vunpack.c.l.bf16 %v124
    %v381 = vunpack.c.l.bf16 %v125
    %v382 = vunpack.c.l.bf16 %v126
    %v383 = vunpack.c.l.bf16 %v127
    %v384 = vunpack.c.l.bf16 %v128
    %v385 = vunpack.c.l.bf16 %v129
    %v386 = vunpack.c.l.bf16 %v130
    %v387 = vunpack.c.l.bf16 %v131
    %v388 = vunpack.c.l.bf16 %v132
    %v389 = vunpack.c.l.bf16 %v133
    %v390 = vunpack.c.l.bf16 %v134
    %v391 = vunpack.c.l.bf16 %v135
    %v392 = vunpack.c.l.bf16 %v136
    %v393 = vunpack.c.l.bf16 %v137
    %v394 = vunpack.c.l.bf16 %v138
    %v395 = vunpack.c.l.bf16 %v139
    %v396 = vunpack.c.l.bf16 %v140
    %v397 = vunpack.c.l.bf16 %v141
    %v398 = vunpack.c.l.bf16 %v142
    %v399 = vunpack.c.l.bf16 %v143
    %v400 = vunpack.c.l.bf16 %v144
    %v401 = vunpack.c.l.bf16 %v145
    %v402 = vunpack.c.l.bf16 %v146
    %v403 = vunpack.c.l.bf16 %v147
    %v404 = vunpack.c.l.bf16 %v148
    %v405 = vunpack.c.l.bf16 %v149
    %v406 = vunpack.c.l.bf16 %v150
    %v407 = vunpack.c.l.bf16 %v151
    %v408 = vunpack.c.l.bf16 %v152
    %v409 = vunpack.c.l.bf16 %v153
    %v410 = vunpack.c.l.bf16 %v154
    %v411 = vunpack.c.l.bf16 %v155
    %v412 = vunpack.c.l.bf16 %v156
    %v413 = vunpack.c.l.bf16 %v157
    %v414 = vunpack.c.l.bf16 %v158
    %v415 = vunpack.c.l.bf16 %v159
    %v416 = vunpack.c.l.bf16 %v160
    %v417 = vunpack.c.l.bf16 %v161
    %v418 = vunpack.c.l.bf16 %v162
    %v419 = vunpack.c.l.bf16 %v163
    %v420 = vunpack.c.l.bf16 %v164
    %v421 = vunpack.c.l.bf16 %v165
    %v422 = vunpack.c.l.bf16 %v166
    %v423 = vunpack.c.l.bf16 %v167
    %v424 = vunpack.c.l.bf16 %v168
    %v425 = vunpack.c.l.bf16 %v169
    %v426 = vunpack.c.l.bf16 %v170
    %v427 = vunpack.c.l.bf16 %v171
    %v428 = vunpack.c.l.bf16 %v172
    %v429 = vunpack.c.l.bf16 %v173
    %v430 = vunpack.c.l.bf16 %v174
    %v431 = vunpack.c.l.bf16 %v175
    %v432 = vunpack.c.l.bf16 %v176
    %v433 = vunpack.c.l.bf16 %v177
    %v434 = vunpack.c.l.bf16 %v178
    %v435 = vunpack.c.l.bf16 %v179
    %v436 = vunpack.c.l.bf16 %v180
    %v437 = vunpack.c.l.bf16 %v181
    %v438 = vunpack.c.l.bf16 %v182
    %v439 = vunpack.c.l.bf16 %v183
    %v440 = vunpack.c.l.bf16 %v184
    %v441 = vunpack.c.l.bf16 %v185
    %v442 = vunpack.c.l.bf16 %v186
    %v443 = vunpack.c.l.bf16 %v187
    %v444 = vunpack.c.l.bf16 %v188
    %v445 = vunpack.c.l.bf16 %v189
    %v446 = vunpack.c.l.bf16 %v190
    %v447 = vunpack.c.l.bf16 %v191
    %v448 = vunpack.c.l.bf16 %v192
    %v449 = vunpack.c.l.bf16 %v193
    %v450 = vunpack.c.l.bf16 %v194
    %v451 = vunpack.c.l.bf16 %v195
    %v452 = vunpack.c.l.bf16 %v196
    %v453 = vunpack.c.l.bf16 %v197
    %v454 = vunpack.c.l.bf16 %v198
    %v455 = vunpack.c.l.bf16 %v199
    %v456 = vunpack.c.l.bf16 %v200
    %v457 = vunpack.c.l.bf16 %v201
    %v458 = vunpack.c.l.bf16 %v202
    %v459 = vunpack.c.l.bf16 %v203
    %v460 = vunpack.c.l.bf16 %v204
    %v461 = vunpack.c.l.bf16 %v205
    %v462 = vunpack.c.l.bf16 %v206
    %v463 = vunpack.c.l.bf16 %v207
    %v464 = vunpack.c.l.bf16 %v208
    %v465 = vunpack.c.l.bf16 %v209
    %v466 = vunpack.c.l.bf16 %v210
    %v467 = vunpack.c.l.bf16 %v211
    %v468 = vunpack.c.l.bf16 %v212
    %v469 = vunpack.c.l.bf16 %v213
    %v470 = vunpack.c.l.bf16 %v214
    %v471 = vunpack.c.l.bf16 %v215
    %v472 = vunpack.c.l.bf16 %v216
    %v473 = vunpack.c.l.bf16 %v217
    %v474 = vunpack.c.l.bf16 %v218
    %v475 = vunpack.c.l.bf16 %v219
    %v476 = vunpack.c.l.bf16 %v220
    %v477 = vunpack.c.l.bf16 %v221
    %v478 = vunpack.c.l.bf16 %v222
    %v479 = vunpack.c.l.bf16 %v223
    %v480 = vunpack.c.l.bf16 %v224
    %v481 = vunpack.c.l.bf16 %v225
    %v482 = vunpack.c.l.bf16 %v226
    %v483 = vunpack.c.l.bf16 %v227
    %v484 = vunpack.c.l.bf16 %v228
    %v485 = vunpack.c.l.bf16 %v229
    %v486 = vunpack.c.l.bf16 %v230
    %v487 = vunpack.c.l.bf16 %v231
    %v488 = vunpack.c.l.bf16 %v232
    %v489 = vunpack.c.l.bf16 %v233
    %v490 = vunpack.c.l.bf16 %v234
    %v491 = vunpack.c.l.bf16 %v235
    %v492 = vunpack.c.l.bf16 %v236
    %v493 = vunpack.c.l.bf16 %v237
    %v494 = vunpack.c.l.bf16 %v238
    %v495 = vunpack.c.l.bf16 %v239
    %v496 = vunpack.c.l.bf16 %v240
    %v497 = vunpack.c.l.bf16 %v241
    %v498 = vunpack.c.l.bf16 %v242
    %v499 = vunpack.c.l.bf16 %v243
    %v500 = vunpack.c.l.bf16 %v244
    %v501 = vunpack.c.l.bf16 %v245
    %v502 = vunpack.c.l.bf16 %v246
    %v503 = vunpack.c.l.bf16 %v247
    %v504 = vunpack.c.l.bf16 %v248
    %v505 = vunpack.c.l.bf16 %v249
    %v506 = vunpack.c.l.bf16 %v250
    %v507 = vunpack.c.l.bf16 %v251
    %v508 = vunpack.c.l.bf16 %v252
    %v509 = vunpack.c.l.bf16 %v253
    %v510 = vunpack.c.l.bf16 %v254
    %v511 = vunpack.c.l.bf16 %v255
    %v512 = vunpack.c.l.bf16 %v256
    %v513 = vunpack.c.l.bf16 %v257
    %v514 = vunpack.c.l.bf16 %v258
    %v515 = vunpack.c.l.bf16 %v259
    %v516 = vunpack.c.l.bf16 %v260
    %v517 = vunpack.c.l.bf16 %v261
    %v518 = vunpack.c.l.bf16 %v262
    %v519 = vunpack.c.l.bf16 %v263
    %v520 = vunpack.c.l.bf16 %v264
    %v521 = vunpack.c.l.bf16 %v265
    %v522 = vunpack.c.l.bf16 %v266
    %v523 = vunpack.c.l.bf16 %v267
    %v524 = vunpack.c.l.bf16 %v268
    %v525 = vunpack.c.l.bf16 %v269
    %v526 = vunpack.c.l.bf16 %v270
    %v527 = vunpack.c.l.bf16 %v271
    %v528 = vunpack.c.l.bf16 %v272
    %v529 = vunpack.c.l.bf16 %v273
    %v530 = vunpack.c.l.bf16 %v274
    %v531 = vunpack.c.l.bf16 %v275
    %v532 = vunpack.c.l.bf16 %v276
    %v533 = vunpack.c.l.bf16 %v277
    %v534 = vunpack.c.l.bf16 %v278
    %v535 = vunpack.c.l.bf16 %v279
    %v536 = vunpack.c.l.bf16 %v280
    %v537 = vunpack.c.l.bf16 %v281
    %v538 = vunpack.c.l.bf16 %v282
    %v539 = vunpack.c.l.bf16 %v283
    %v540 = vunpack.c.l.bf16 %v284
    %v541 = vunpack.c.l.bf16 %v285
    %v542 = vunpack.c.l.bf16 %v286
    %v543 = vunpack.c.l.bf16 %v287
    %v544 = vunpack.c.l.bf16 %v288
    %v545 = vunpack.c.l.bf16 %v289
    %v546 = vunpack.c.l.bf16 %v290
    %v547 = vunpack.c.l.bf16 %v291
    %v548 = vunpack.c.l.bf16 %v292
    %v549 = vunpack.c.l.bf16 %v293
    %v550 = vunpack.c.l.bf16 %v294
    %v551 = vunpack.c.l.bf16 %v295
    %v552 = vunpack.c.l.bf16 %v296
    %v553 = vunpack.c.l.bf16 %v297
    %v554 = vunpack.c.l.bf16 %v298
    %v555 = vunpack.c.l.bf16 %v299
    %v556 = vunpack.c.l.bf16 %v300
    %v557 = vunpack.c.l.bf16 %v301
    %v558 = vunpack.c.l.bf16 %v302
    %v559 = vunpack.c.l.bf16 %v303
    %v560 = vunpack.c.l.bf16 %v304
    %v561 = vunpack.c.l.bf16 %v305
    %v562 = vunpack.c.l.bf16 %v306
    %v563 = vunpack.c.l.bf16 %v307
    %v564 = vunpack.c.l.bf16 %v308
    %v565 = vunpack.c.l.bf16 %v309
    %v566 = vunpack.c.l.bf16 %v310
    %v567 = vunpack.c.l.bf16 %v311
    %v568 = vunpack.c.l.bf16 %v312
    %v569 = vunpack.c.l.bf16 %v313
    %v570 = vunpack.c.l.bf16 %v314
    %v571 = vunpack.c.l.bf16 %v315
    %v572 = vunpack.c.l.bf16 %v316
    %v573 = vunpack.c.l.bf16 %v317
    %v574 = vunpack.c.l.bf16 %v318
    %v575 = vunpack.c.l.bf16 %v319
    %v576 = vand.u32 2147483647, %v320
    %v577 = vand.u32 2147483647, %v321
    %v578 = vand.u32 2147483647, %v322
    %v579 = vand.u32 2147483647, %v323
    %v580 = vand.u32 2147483647, %v324
    %v581 = vand.u32 2147483647, %v325
    %v582 = vand.u32 2147483647, %v326
    %v583 = vand.u32 2147483647, %v327
    %v584 = vand.u32 2147483647, %v328
    %v585 = vand.u32 2147483647, %v329
    %v586 = vand.u32 2147483647, %v330
    %v587 = vand.u32 2147483647, %v331
    %v588 = vand.u32 2147483647, %v332
    %v589 = vand.u32 2147483647, %v333
    %v590 = vand.u32 2147483647, %v334
    %v591 = vand.u32 2147483647, %v335
    %v592 = vand.u32 2147483647, %v336
    %v593 = vand.u32 2147483647, %v337
    %v594 = vand.u32 2147483647, %v338
    %v595 = vand.u32 2147483647, %v339
    %v596 = vand.u32 2147483647, %v340
    %v597 = vand.u32 2147483647, %v341
    %v598 = vand.u32 2147483647, %v342
    %v599 = vand.u32 2147483647, %v343
    %v600 = vand.u32 2147483647, %v344
    %v601 = vand.u32 2147483647, %v345
    %v602 = vand.u32 2147483647, %v346
    %v603 = vand.u32 2147483647, %v347
    %v604 = vand.u32 2147483647, %v348
    %v605 = vand.u32 2147483647, %v349
    %v606 = vand.u32 2147483647, %v350
    %v607 = vand.u32 2147483647, %v351
    %v608 = vand.u32 2147483647, %v352
    %v609 = vand.u32 2147483647, %v353
    %v610 = vand.u32 2147483647, %v354
    %v611 = vand.u32 2147483647, %v355
    %v612 = vand.u32 2147483647, %v356
    %v613 = vand.u32 2147483647, %v357
    %v614 = vand.u32 2147483647, %v358
    %v615 = vand.u32 2147483647, %v359
    %v616 = vand.u32 2147483647, %v360
    %v617 = vand.u32 2147483647, %v361
    %v618 = vand.u32 2147483647, %v362
    %v619 = vand.u32 2147483647, %v363
    %v620 = vand.u32 2147483647, %v364
    %v621 = vand.u32 2147483647, %v365
    %v622 = vand.u32 2147483647, %v366
    %v623 = vand.u32 2147483647, %v367
    %v624 = vand.u32 2147483647, %v368
    %v625 = vand.u32 2147483647, %v369
    %v626 = vand.u32 2147483647, %v370
    %v627 = vand.u32 2147483647, %v371
    %v628 = vand.u32 2147483647, %v372
    %v629 = vand.u32 2147483647, %v373
    %v630 = vand.u32 2147483647, %v374
    %v631 = vand.u32 2147483647, %v375
    %v632 = vand.u32 2147483647, %v376
    %v633 = vand.u32 2147483647, %v377
    %v634 = vand.u32 2147483647, %v378
    %v635 = vand.u32 2147483647, %v379
    %v636 = vand.u32 2147483647, %v380
    %v637 = vand.u32 2147483647, %v381
    %v638 = vand.u32 2147483647, %v382
    %v639 = vand.u32 2147483647, %v383
    %v640 = vand.u32 2147483647, %v384
    %v641 = vand.u32 2147483647, %v385
    %v642 = vand.u32 2147483647, %v386
    %v643 = vand.u32 2147483647, %v387
    %v644 = vand.u32 2147483647, %v388
    %v645 = vand.u32 2147483647, %v389
    %v646 = vand.u32 2147483647, %v390
    %v647 = vand.u32 2147483647, %v391
    %v648 = vand.u32 2147483647, %v392
    %v649 = vand.u32 2147483647, %v393
    %v650 = vand.u32 2147483647, %v394
    %v651 = vand.u32 2147483647, %v395
    %v652 = vand.u32 2147483647, %v396
    %v653 = vand.u32 2147483647, %v397
    %v654 = vand.u32 2147483647, %v398
    %v655 = vand.u32 2147483647, %v399
    %v656 = vand.u32 2147483647, %v400
    %v657 = vand.u32 2147483647, %v401
    %v658 = vand.u32 2147483647, %v402
    %v659 = vand.u32 2147483647, %v403
    %v660 = vand.u32 2147483647, %v404
    %v661 = vand.u32 2147483647, %v405
    %v662 = vand.u32 2147483647, %v406
    %v663 = vand.u32 2147483647, %v407
    %v664 = vand.u32 2147483647, %v408
    %v665 = vand.u32 2147483647, %v409
    %v666 = vand.u32 2147483647, %v410
    %v667 = vand.u32 2147483647, %v411
    %v668 = vand.u32 2147483647, %v412
    %v669 = vand.u32 2147483647, %v413
    %v670 = vand.u32 2147483647, %v414
    %v671 = vand.u32 2147483647, %v415
    %v672 = vand.u32 2147483647, %v416
    %v673 = vand.u32 2147483647, %v417
    %v674 = vand.u32 2147483647, %v418
    %v675 = vand.u32 2147483647, %v419
    %v676 = vand.u32 2147483647, %v420
    %v677 = vand.u32 2147483647, %v421
    %v678 = vand.u32 2147483647, %v422
    %v679 = vand.u32 2147483647, %v423
    %v680 = vand.u32 2147483647, %v424
    %v681 = vand.u32 2147483647, %v425
    %v682 = vand.u32 2147483647, %v426
    %v683 = vand.u32 2147483647, %v427
    %v684 = vand.u32 2147483647, %v428
    %v685 = vand.u32 2147483647, %v429
    %v686 = vand.u32 2147483647, %v430
    %v687 = vand.u32 2147483647, %v431
    %v688 = vand.u32 2147483647, %v432
    %v689 = vand.u32 2147483647, %v433
    %v690 = vand.u32 2147483647, %v434
    %v691 = vand.u32 2147483647, %v435
    %v692 = vand.u32 2147483647, %v436
    %v693 = vand.u32 2147483647, %v437
    %v694 = vand.u32 2147483647, %v438
    %v695 = vand.u32 2147483647, %v439
    %v696 = vand.u32 2147483647, %v440
    %v697 = vand.u32 2147483647, %v441
    %v698 = vand.u32 2147483647, %v442
    %v699 = vand.u32 2147483647, %v443
    %v700 = vand.u32 2147483647, %v444
    %v701 = vand.u32 2147483647, %v445
    %v702 = vand.u32 2147483647, %v446
    %v703 = vand.u32 2147483647, %v447
    %v704 = vand.u32 2147483647, %v448
    %v705 = vand.u32 2147483647, %v449
    %v706 = vand.u32 2147483647, %v450
    %v707 = vand.u32 2147483647, %v451
    %v708 = vand.u32 2147483647, %v452
    %v709 = vand.u32 2147483647, %v453
    %v710 = vand.u32 2147483647, %v454
    %v711 = vand.u32 2147483647, %v455
    %v712 = vand.u32 2147483647, %v456
    %v713 = vand.u32 2147483647, %v457
    %v714 = vand.u32 2147483647, %v458
    %v715 = vand.u32 2147483647, %v459
    %v716 = vand.u32 2147483647, %v460
    %v717 = vand.u32 2147483647, %v461
    %v718 = vand.u32 2147483647, %v462
    %v719 = vand.u32 2147483647, %v463
    %v720 = vand.u32 2147483647, %v464
    %v721 = vand.u32 2147483647, %v465
    %v722 = vand.u32 2147483647, %v466
    %v723 = vand.u32 2147483647, %v467
    %v724 = vand.u32 2147483647, %v468
    %v725 = vand.u32 2147483647, %v469
    %v726 = vand.u32 2147483647, %v470
    %v727 = vand.u32 2147483647, %v471
    %v728 = vand.u32 2147483647, %v472
    %v729 = vand.u32 2147483647, %v473
    %v730 = vand.u32 2147483647, %v474
    %v731 = vand.u32 2147483647, %v475
    %v732 = vand.u32 2147483647, %v476
    %v733 = vand.u32 2147483647, %v477
    %v734 = vand.u32 2147483647, %v478
    %v735 = vand.u32 2147483647, %v479
    %v736 = vand.u32 2147483647, %v480
    %v737 = vand.u32 2147483647, %v481
    %v738 = vand.u32 2147483647, %v482
    %v739 = vand.u32 2147483647, %v483
    %v740 = vand.u32 2147483647, %v484
    %v741 = vand.u32 2147483647, %v485
    %v742 = vand.u32 2147483647, %v486
    %v743 = vand.u32 2147483647, %v487
    %v744 = vand.u32 2147483647, %v488
    %v745 = vand.u32 2147483647, %v489
    %v746 = vand.u32 2147483647, %v490
    %v747 = vand.u32 2147483647, %v491
    %v748 = vand.u32 2147483647, %v492
    %v749 = vand.u32 2147483647, %v493
    %v750 = vand.u32 2147483647, %v494
    %v751 = vand.u32 2147483647, %v495
    %v752 = vand.u32 2147483647, %v496
    %v753 = vand.u32 2147483647, %v497
    %v754 = vand.u32 2147483647, %v498
    %v755 = vand.u32 2147483647, %v499
    %v756 = vand.u32 2147483647, %v500
    %v757 = vand.u32 2147483647, %v501
    %v758 = vand.u32 2147483647, %v502
    %v759 = vand.u32 2147483647, %v503
    %v760 = vand.u32 2147483647, %v504
    %v761 = vand.u32 2147483647, %v505
    %v762 = vand.u32 2147483647, %v506
    %v763 = vand.u32 2147483647, %v507
    %v764 = vand.u32 2147483647, %v508
    %v765 = vand.u32 2147483647, %v509
    %v766 = vand.u32 2147483647, %v510
    %v767 = vand.u32 2147483647, %v511
    %v768 = vand.u32 2147483647, %v512
    %v769 = vand.u32 2147483647, %v513
    %v770 = vand.u32 2147483647, %v514
    %v771 = vand.u32 2147483647, %v515
    %v772 = vand.u32 2147483647, %v516
    %v773 = vand.u32 2147483647, %v517
    %v774 = vand.u32 2147483647, %v518
    %v775 = vand.u32 2147483647, %v519
    %v776 = vand.u32 2147483647, %v520
    %v777 = vand.u32 2147483647, %v521
    %v778 = vand.u32 2147483647, %v522
    %v779 = vand.u32 2147483647, %v523
    %v780 = vand.u32 2147483647, %v524
    %v781 = vand.u32 2147483647, %v525
    %v782 = vand.u32 2147483647, %v526
    %v783 = vand.u32 2147483647, %v527
    %v784 = vand.u32 2147483647, %v528
    %v785 = vand.u32 2147483647, %v529
    %v786 = vand.u32 2147483647, %v530
    %v787 = vand.u32 2147483647, %v531
    %v788 = vand.u32 2147483647, %v532
    %v789 = vand.u32 2147483647, %v533
    %v790 = vand.u32 2147483647, %v534
    %v791 = vand.u32 2147483647, %v535
    %v792 = vand.u32 2147483647, %v536
    %v793 = vand.u32 2147483647, %v537
    %v794 = vand.u32 2147483647, %v538
    %v795 = vand.u32 2147483647, %v539
    %v796 = vand.u32 2147483647, %v540
    %v797 = vand.u32 2147483647, %v541
    %v798 = vand.u32 2147483647, %v542
    %v799 = vand.u32 2147483647, %v543
    %v800 = vand.u32 2147483647, %v544
    %v801 = vand.u32 2147483647, %v545
    %v802 = vand.u32 2147483647, %v546
    %v803 = vand.u32 2147483647, %v547
    %v804 = vand.u32 2147483647, %v548
    %v805 = vand.u32 2147483647, %v549
    %v806 = vand.u32 2147483647, %v550
    %v807 = vand.u32 2147483647, %v551
    %v808 = vand.u32 2147483647, %v552
    %v809 = vand.u32 2147483647, %v553
    %v810 = vand.u32 2147483647, %v554
    %v811 = vand.u32 2147483647, %v555
    %v812 = vand.u32 2147483647, %v556
    %v813 = vand.u32 2147483647, %v557
    %v814 = vand.u32 2147483647, %v558
    %v815 = vand.u32 2147483647, %v559
    %v816 = vand.u32 2147483647, %v560
    %v817 = vand.u32 2147483647, %v561
    %v818 = vand.u32 2147483647, %v562
    %v819 = vand.u32 2147483647, %v563
    %v820 = vand.u32 2147483647, %v564
    %v821 = vand.u32 2147483647, %v565
    %v822 = vand.u32 2147483647, %v566
    %v823 = vand.u32 2147483647, %v567
    %v824 = vand.u32 2147483647, %v568
    %v825 = vand.u32 2147483647, %v569
    %v826 = vand.u32 2147483647, %v570
    %v827 = vand.u32 2147483647, %v571
    %v828 = vand.u32 2147483647, %v572
    %v829 = vand.u32 2147483647, %v573
    %v830 = vand.u32 2147483647, %v574
    %v831 = vand.u32 2147483647, %v575
    %v832 = vmax.f32 %v320, 0.0
    %v833 = vmax.f32 %v321, 0.0
    %v834 = vmax.f32 %v322, 0.0
    %v835 = vmax.f32 %v323, 0.0
    %v836 = vmax.f32 %v324, 0.0
    %v837 = vmax.f32 %v325, 0.0
    %v838 = vmax.f32 %v326, 0.0
    %v839 = vmax.f32 %v327, 0.0
    %v840 = vmax.f32 %v328, 0.0
    %v841 = vmax.f32 %v329, 0.0
    %v842 = vmax.f32 %v330, 0.0
    %v843 = vmax.f32 %v331, 0.0
    %v844 = vmax.f32 %v332, 0.0
    %v845 = vmax.f32 %v333, 0.0
    %v846 = vmax.f32 %v334, 0.0
    %v847 = vmax.f32 %v335, 0.0
    %v848 = vmax.f32 %v336, 0.0
    %v849 = vmax.f32 %v337, 0.0
    %v850 = vmax.f32 %v338, 0.0
    %v851 = vmax.f32 %v339, 0.0
    %v852 = vmax.f32 %v340, 0.0
    %v853 = vmax.f32 %v341, 0.0
    %v854 = vmax.f32 %v342, 0.0
    %v855 = vmax.f32 %v343, 0.0
    %v856 = vmax.f32 %v344, 0.0
    %v857 = vmax.f32 %v345, 0.0
    %v858 = vmax.f32 %v346, 0.0
    %v859 = vmax.f32 %v347, 0.0
    %v860 = vmax.f32 %v348, 0.0
    %v861 = vmax.f32 %v349, 0.0
    %v862 = vmax.f32 %v350, 0.0
    %v863 = vmax.f32 %v351, 0.0
    %v864 = vmax.f32 %v352, 0.0
    %v865 = vmax.f32 %v353, 0.0
    %v866 = vmax.f32 %v354, 0.0
    %v867 = vmax.f32 %v355, 0.0
    %v868 = vmax.f32 %v356, 0.0
    %v869 = vmax.f32 %v357, 0.0
    %v870 = vmax.f32 %v358, 0.0
    %v871 = vmax.f32 %v359, 0.0
    %v872 = vmax.f32 %v360, 0.0
    %v873 = vmax.f32 %v361, 0.0
    %v874 = vmax.f32 %v362, 0.0
    %v875 = vmax.f32 %v363, 0.0
    %v876 = vmax.f32 %v364, 0.0
    %v877 = vmax.f32 %v365, 0.0
    %v878 = vmax.f32 %v366, 0.0
    %v879 = vmax.f32 %v367, 0.0
    %v880 = vmax.f32 %v368, 0.0
    %v881 = vmax.f32 %v369, 0.0
    %v882 = vmax.f32 %v370, 0.0
    %v883 = vmax.f32 %v371, 0.0
    %v884 = vmax.f32 %v372, 0.0
    %v885 = vmax.f32 %v373, 0.0
    %v886 = vmax.f32 %v374, 0.0
    %v887 = vmax.f32 %v375, 0.0
    %v888 = vmax.f32 %v376, 0.0
    %v889 = vmax.f32 %v377, 0.0
    %v890 = vmax.f32 %v378, 0.0
    %v891 = vmax.f32 %v379, 0.0
    %v892 = vmax.f32 %v380, 0.0
    %v893 = vmax.f32 %v381, 0.0
    %v894 = vmax.f32 %v382, 0.0
    %v895 = vmax.f32 %v383, 0.0
    %v896 = vmax.f32 %v384, 0.0
    %v897 = vmax.f32 %v385, 0.0
    %v898 = vmax.f32 %v386, 0.0
    %v899 = vmax.f32 %v387, 0.0
    %v900 = vmax.f32 %v388, 0.0
    %v901 = vmax.f32 %v389, 0.0
    %v902 = vmax.f32 %v390, 0.0
    %v903 = vmax.f32 %v391, 0.0
    %v904 = vmax.f32 %v392, 0.0
    %v905 = vmax.f32 %v393, 0.0
    %v906 = vmax.f32 %v394, 0.0
    %v907 = vmax.f32 %v395, 0.0
    %v908 = vmax.f32 %v396, 0.0
    %v909 = vmax.f32 %v397, 0.0
    %v910 = vmax.f32 %v398, 0.0
    %v911 = vmax.f32 %v399, 0.0
    %v912 = vmax.f32 %v400, 0.0
    %v913 = vmax.f32 %v401, 0.0
    %v914 = vmax.f32 %v402, 0.0
    %v915 = vmax.f32 %v403, 0.0
    %v916 = vmax.f32 %v404, 0.0
    %v917 = vmax.f32 %v405, 0.0
    %v918 = vmax.f32 %v406, 0.0
    %v919 = vmax.f32 %v407, 0.0
    %v920 = vmax.f32 %v408, 0.0
    %v921 = vmax.f32 %v409, 0.0
    %v922 = vmax.f32 %v410, 0.0
    %v923 = vmax.f32 %v411, 0.0
    %v924 = vmax.f32 %v412, 0.0
    %v925 = vmax.f32 %v413, 0.0
    %v926 = vmax.f32 %v414, 0.0
    %v927 = vmax.f32 %v415, 0.0
    %v928 = vmax.f32 %v416, 0.0
    %v929 = vmax.f32 %v417, 0.0
    %v930 = vmax.f32 %v418, 0.0
    %v931 = vmax.f32 %v419, 0.0
    %v932 = vmax.f32 %v420, 0.0
    %v933 = vmax.f32 %v421, 0.0
    %v934 = vmax.f32 %v422, 0.0
    %v935 = vmax.f32 %v423, 0.0
    %v936 = vmax.f32 %v424, 0.0
    %v937 = vmax.f32 %v425, 0.0
    %v938 = vmax.f32 %v426, 0.0
    %v939 = vmax.f32 %v427, 0.0
    %v940 = vmax.f32 %v428, 0.0
    %v941 = vmax.f32 %v429, 0.0
    %v942 = vmax.f32 %v430, 0.0
    %v943 = vmax.f32 %v431, 0.0
    %v944 = vmax.f32 %v432, 0.0
    %v945 = vmax.f32 %v433, 0.0
    %v946 = vmax.f32 %v434, 0.0
    %v947 = vmax.f32 %v435, 0.0
    %v948 = vmax.f32 %v436, 0.0
    %v949 = vmax.f32 %v437, 0.0
    %v950 = vmax.f32 %v438, 0.0
    %v951 = vmax.f32 %v439, 0.0
    %v952 = vmax.f32 %v440, 0.0
    %v953 = vmax.f32 %v441, 0.0
    %v954 = vmax.f32 %v442, 0.0
    %v955 = vmax.f32 %v443, 0.0
    %v956 = vmax.f32 %v444, 0.0
    %v957 = vmax.f32 %v445, 0.0
    %v958 = vmax.f32 %v446, 0.0
    %v959 = vmax.f32 %v447, 0.0
    %v960 = vmax.f32 %v448, 0.0
    %v961 = vmax.f32 %v449, 0.0
    %v962 = vmax.f32 %v450, 0.0
    %v963 = vmax.f32 %v451, 0.0
    %v964 = vmax.f32 %v452, 0.0
    %v965 = vmax.f32 %v453, 0.0
    %v966 = vmax.f32 %v454, 0.0
    %v967 = vmax.f32 %v455, 0.0
    %v968 = vmax.f32 %v456, 0.0
    %v969 = vmax.f32 %v457, 0.0
    %v970 = vmax.f32 %v458, 0.0
    %v971 = vmax.f32 %v459, 0.0
    %v972 = vmax.f32 %v460, 0.0
    %v973 = vmax.f32 %v461, 0.0
    %v974 = vmax.f32 %v462, 0.0
    %v975 = vmax.f32 %v463, 0.0
    %v976 = vmax.f32 %v464, 0.0
    %v977 = vmax.f32 %v465, 0.0
    %v978 = vmax.f32 %v466, 0.0
    %v979 = vmax.f32 %v467, 0.0
    %v980 = vmax.f32 %v468, 0.0
    %v981 = vmax.f32 %v469, 0.0
    %v982 = vmax.f32 %v470, 0.0
    %v983 = vmax.f32 %v471, 0.0
    %v984 = vmax.f32 %v472, 0.0
    %v985 = vmax.f32 %v473, 0.0
    %v986 = vmax.f32 %v474, 0.0
    %v987 = vmax.f32 %v475, 0.0
    %v988 = vmax.f32 %v476, 0.0
    %v989 = vmax.f32 %v477, 0.0
    %v990 = vmax.f32 %v478, 0.0
    %v991 = vmax.f32 %v479, 0.0
    %v992 = vmax.f32 %v480, 0.0
    %v993 = vmax.f32 %v481, 0.0
    %v994 = vmax.f32 %v482, 0.0
    %v995 = vmax.f32 %v483, 0.0
    %v996 = vmax.f32 %v484, 0.0
    %v997 = vmax.f32 %v485, 0.0
    %v998 = vmax.f32 %v486, 0.0
    %v999 = vmax.f32 %v487, 0.0
    %v1000 = vmax.f32 %v488, 0.0
    %v1001 = vmax.f32 %v489, 0.0
    %v1002 = vmax.f32 %v490, 0.0
    %v1003 = vmax.f32 %v491, 0.0
    %v1004 = vmax.f32 %v492, 0.0
    %v1005 = vmax.f32 %v493, 0.0
    %v1006 = vmax.f32 %v494, 0.0
    %v1007 = vmax.f32 %v495, 0.0
    %v1008 = vmax.f32 %v496, 0.0
    %v1009 = vmax.f32 %v497, 0.0
    %v1010 = vmax.f32 %v498, 0.0
    %v1011 = vmax.f32 %v499, 0.0
    %v1012 = vmax.f32 %v500, 0.0
    %v1013 = vmax.f32 %v501, 0.0
    %v1014 = vmax.f32 %v502, 0.0
    %v1015 = vmax.f32 %v503, 0.0
    %v1016 = vmax.f32 %v504, 0.0
    %v1017 = vmax.f32 %v505, 0.0
    %v1018 = vmax.f32 %v506, 0.0
    %v1019 = vmax.f32 %v507, 0.0
    %v1020 = vmax.f32 %v508, 0.0
    %v1021 = vmax.f32 %v509, 0.0
    %v1022 = vmax.f32 %v510, 0.0
    %v1023 = vmax.f32 %v511, 0.0
    %v1024 = vmax.f32 %v512, 0.0
    %v1025 = vmax.f32 %v513, 0.0
    %v1026 = vmax.f32 %v514, 0.0
    %v1027 = vmax.f32 %v515, 0.0
    %v1028 = vmax.f32 %v516, 0.0
    %v1029 = vmax.f32 %v517, 0.0
    %v1030 = vmax.f32 %v518, 0.0
    %v1031 = vmax.f32 %v519, 0.0
    %v1032 = vmax.f32 %v520, 0.0
    %v1033 = vmax.f32 %v521, 0.0
    %v1034 = vmax.f32 %v522, 0.0
    %v1035 = vmax.f32 %v523, 0.0
    %v1036 = vmax.f32 %v524, 0.0
    %v1037 = vmax.f32 %v525, 0.0
    %v1038 = vmax.f32 %v526, 0.0
    %v1039 = vmax.f32 %v527, 0.0
    %v1040 = vmax.f32 %v528, 0.0
    %v1041 = vmax.f32 %v529, 0.0
    %v1042 = vmax.f32 %v530, 0.0
    %v1043 = vmax.f32 %v531, 0.0
    %v1044 = vmax.f32 %v532, 0.0
    %v1045 = vmax.f32 %v533, 0.0
    %v1046 = vmax.f32 %v534, 0.0
    %v1047 = vmax.f32 %v535, 0.0
    %v1048 = vmax.f32 %v536, 0.0
    %v1049 = vmax.f32 %v537, 0.0
    %v1050 = vmax.f32 %v538, 0.0
    %v1051 = vmax.f32 %v539, 0.0
    %v1052 = vmax.f32 %v540, 0.0
    %v1053 = vmax.f32 %v541, 0.0
    %v1054 = vmax.f32 %v542, 0.0
    %v1055 = vmax.f32 %v543, 0.0
    %v1056 = vmax.f32 %v544, 0.0
    %v1057 = vmax.f32 %v545, 0.0
    %v1058 = vmax.f32 %v546, 0.0
    %v1059 = vmax.f32 %v547, 0.0
    %v1060 = vmax.f32 %v548, 0.0
    %v1061 = vmax.f32 %v549, 0.0
    %v1062 = vmax.f32 %v550, 0.0
    %v1063 = vmax.f32 %v551, 0.0
    %v1064 = vmax.f32 %v552, 0.0
    %v1065 = vmax.f32 %v553, 0.0
    %v1066 = vmax.f32 %v554, 0.0
    %v1067 = vmax.f32 %v555, 0.0
    %v1068 = vmax.f32 %v556, 0.0
    %v1069 = vmax.f32 %v557, 0.0
    %v1070 = vmax.f32 %v558, 0.0
    %v1071 = vmax.f32 %v559, 0.0
    %v1072 = vmax.f32 %v560, 0.0
    %v1073 = vmax.f32 %v561, 0.0
    %v1074 = vmax.f32 %v562, 0.0
    %v1075 = vmax.f32 %v563, 0.0
    %v1076 = vmax.f32 %v564, 0.0
    %v1077 = vmax.f32 %v565, 0.0
    %v1078 = vmax.f32 %v566, 0.0
    %v1079 = vmax.f32 %v567, 0.0
    %v1080 = vmax.f32 %v568, 0.0
    %v1081 = vmax.f32 %v569, 0.0
    %v1082 = vmax.f32 %v570, 0.0
    %v1083 = vmax.f32 %v571, 0.0
    %v1084 = vmax.f32 %v572, 0.0
    %v1085 = vmax.f32 %v573, 0.0
    %v1086 = vmax.f32 %v574, 0.0
    %v1087 = vmax.f32 %v575, 0.0
    %v1088 = vsub.f32 0.0, %v576
    %v1089 = vsub.f32 0.0, %v577
    %v1090 = vsub.f32 0.0, %v578
    %v1091 = vsub.f32 0.0, %v579
    %v1092 = vsub.f32 0.0, %v580
    %v1093 = vsub.f32 0.0, %v581
    %v1094 = vsub.f32 0.0, %v582
    %v1095 = vsub.f32 0.0, %v583
    %v1096 = vsub.f32 0.0, %v584
    %v1097 = vsub.f32 0.0, %v585
    %v1098 = vsub.f32 0.0, %v586
    %v1099 = vsub.f32 0.0, %v587
    %v1100 = vsub.f32 0.0, %v588
    %v1101 = vsub.f32 0.0, %v589
    %v1102 = vsub.f32 0.0, %v590
    %v1103 = vsub.f32 0.0, %v591
    %v1104 = vsub.f32 0.0, %v592
    %v1105 = vsub.f32 0.0, %v593
    %v1106 = vsub.f32 0.0, %v594
    %v1107 = vsub.f32 0.0, %v595
    %v1108 = vsub.f32 0.0, %v596
    %v1109 = vsub.f32 0.0, %v597
    %v1110 = vsub.f32 0.0, %v598
    %v1111 = vsub.f32 0.0, %v599
    %v1112 = vsub.f32 0.0, %v600
    %v1113 = vsub.f32 0.0, %v601
    %v1114 = vsub.f32 0.0, %v602
    %v1115 = vsub.f32 0.0, %v603
    %v1116 = vsub.f32 0.0, %v604
    %v1117 = vsub.f32 0.0, %v605
    %v1118 = vsub.f32 0.0, %v606
    %v1119 = vsub.f32 0.0, %v607
    %v1120 = vsub.f32 0.0, %v608
    %v1121 = vsub.f32 0.0, %v609
    %v1122 = vsub.f32 0.0, %v610
    %v1123 = vsub.f32 0.0, %v611
    %v1124 = vsub.f32 0.0, %v612
    %v1125 = vsub.f32 0.0, %v613
    %v1126 = vsub.f32 0.0, %v614
    %v1127 = vsub.f32 0.0, %v615
    %v1128 = vsub.f32 0.0, %v616
    %v1129 = vsub.f32 0.0, %v617
    %v1130 = vsub.f32 0.0, %v618
    %v1131 = vsub.f32 0.0, %v619
    %v1132 = vsub.f32 0.0, %v620
    %v1133 = vsub.f32 0.0, %v621
    %v1134 = vsub.f32 0.0, %v622
    %v1135 = vsub.f32 0.0, %v623
    %v1136 = vsub.f32 0.0, %v624
    %v1137 = vsub.f32 0.0, %v625
    %v1138 = vsub.f32 0.0, %v626
    %v1139 = vsub.f32 0.0, %v627
    %v1140 = vsub.f32 0.0, %v628
    %v1141 = vsub.f32 0.0, %v629
    %v1142 = vsub.f32 0.0, %v630
    %v1143 = vsub.f32 0.0, %v631
    %v1144 = vsub.f32 0.0, %v632
    %v1145 = vsub.f32 0.0, %v633
    %v1146 = vsub.f32 0.0, %v634
    %v1147 = vsub.f32 0.0, %v635
    %v1148 = vsub.f32 0.0, %v636
    %v1149 = vsub.f32 0.0, %v637
    %v1150 = vsub.f32 0.0, %v638
    %v1151 = vsub.f32 0.0, %v639
    %v1152 = vsub.f32 0.0, %v640
    %v1153 = vsub.f32 0.0, %v641
    %v1154 = vsub.f32 0.0, %v642
    %v1155 = vsub.f32 0.0, %v643
    %v1156 = vsub.f32 0.0, %v644
    %v1157 = vsub.f32 0.0, %v645
    %v1158 = vsub.f32 0.0, %v646
    %v1159 = vsub.f32 0.0, %v647
    %v1160 = vsub.f32 0.0, %v648
    %v1161 = vsub.f32 0.0, %v649
    %v1162 = vsub.f32 0.0, %v650
    %v1163 = vsub.f32 0.0, %v651
    %v1164 = vsub.f32 0.0, %v652
    %v1165 = vsub.f32 0.0, %v653
    %v1166 = vsub.f32 0.0, %v654
    %v1167 = vsub.f32 0.0, %v655
    %v1168 = vsub.f32 0.0, %v656
    %v1169 = vsub.f32 0.0, %v657
    %v1170 = vsub.f32 0.0, %v658
    %v1171 = vsub.f32 0.0, %v659
    %v1172 = vsub.f32 0.0, %v660
    %v1173 = vsub.f32 0.0, %v661
    %v1174 = vsub.f32 0.0, %v662
    %v1175 = vsub.f32 0.0, %v663
    %v1176 = vsub.f32 0.0, %v664
    %v1177 = vsub.f32 0.0, %v665
    %v1178 = vsub.f32 0.0, %v666
    %v1179 = vsub.f32 0.0, %v667
    %v1180 = vsub.f32 0.0, %v668
    %v1181 = vsub.f32 0.0, %v669
    %v1182 = vsub.f32 0.0, %v670
    %v1183 = vsub.f32 0.0, %v671
    %v1184 = vsub.f32 0.0, %v672
    %v1185 = vsub.f32 0.0, %v673
    %v1186 = vsub.f32 0.0, %v674
    %v1187 = vsub.f32 0.0, %v675
    %v1188 = vsub.f32 0.0, %v676
    %v1189 = vsub.f32 0.0, %v677
    %v1190 = vsub.f32 0.0, %v678
    %v1191 = vsub.f32 0.0, %v679
    %v1192 = vsub.f32 0.0, %v680
    %v1193 = vsub.f32 0.0, %v681
    %v1194 = vsub.f32 0.0, %v682
    %v1195 = vsub.f32 0.0, %v683
    %v1196 = vsub.f32 0.0, %v684
    %v1197 = vsub.f32 0.0, %v685
    %v1198 = vsub.f32 0.0, %v686
    %v1199 = vsub.f32 0.0, %v687
    %v1200 = vsub.f32 0.0, %v688
    %v1201 = vsub.f32 0.0, %v689
    %v1202 = vsub.f32 0.0, %v690
    %v1203 = vsub.f32 0.0, %v691
    %v1204 = vsub.f32 0.0, %v692
    %v1205 = vsub.f32 0.0, %v693
    %v1206 = vsub.f32 0.0, %v694
    %v1207 = vsub.f32 0.0, %v695
    %v1208 = vsub.f32 0.0, %v696
    %v1209 = vsub.f32 0.0, %v697
    %v1210 = vsub.f32 0.0, %v698
    %v1211 = vsub.f32 0.0, %v699
    %v1212 = vsub.f32 0.0, %v700
    %v1213 = vsub.f32 0.0, %v701
    %v1214 = vsub.f32 0.0, %v702
    %v1215 = vsub.f32 0.0, %v703
    %v1216 = vsub.f32 0.0, %v704
    %v1217 = vsub.f32 0.0, %v705
    %v1218 = vsub.f32 0.0, %v706
    %v1219 = vsub.f32 0.0, %v707
    %v1220 = vsub.f32 0.0, %v708
    %v1221 = vsub.f32 0.0, %v709
    %v1222 = vsub.f32 0.0, %v710
    %v1223 = vsub.f32 0.0, %v711
    %v1224 = vsub.f32 0.0, %v712
    %v1225 = vsub.f32 0.0, %v713
    %v1226 = vsub.f32 0.0, %v714
    %v1227 = vsub.f32 0.0, %v715
    %v1228 = vsub.f32 0.0, %v716
    %v1229 = vsub.f32 0.0, %v717
    %v1230 = vsub.f32 0.0, %v718
    %v1231 = vsub.f32 0.0, %v719
    %v1232 = vsub.f32 0.0, %v720
    %v1233 = vsub.f32 0.0, %v721
    %v1234 = vsub.f32 0.0, %v722
    %v1235 = vsub.f32 0.0, %v723
    %v1236 = vsub.f32 0.0, %v724
    %v1237 = vsub.f32 0.0, %v725
    %v1238 = vsub.f32 0.0, %v726
    %v1239 = vsub.f32 0.0, %v727
    %v1240 = vsub.f32 0.0, %v728
    %v1241 = vsub.f32 0.0, %v729
    %v1242 = vsub.f32 0.0, %v730
    %v1243 = vsub.f32 0.0, %v731
    %v1244 = vsub.f32 0.0, %v732
    %v1245 = vsub.f32 0.0, %v733
    %v1246 = vsub.f32 0.0, %v734
    %v1247 = vsub.f32 0.0, %v735
    %v1248 = vsub.f32 0.0, %v736
    %v1249 = vsub.f32 0.0, %v737
    %v1250 = vsub.f32 0.0, %v738
    %v1251 = vsub.f32 0.0, %v739
    %v1252 = vsub.f32 0.0, %v740
    %v1253 = vsub.f32 0.0, %v741
    %v1254 = vsub.f32 0.0, %v742
    %v1255 = vsub.f32 0.0, %v743
    %v1256 = vsub.f32 0.0, %v744
    %v1257 = vsub.f32 0.0, %v745
    %v1258 = vsub.f32 0.0, %v746
    %v1259 = vsub.f32 0.0, %v747
    %v1260 = vsub.f32 0.0, %v748
    %v1261 = vsub.f32 0.0, %v749
    %v1262 = vsub.f32 0.0, %v750
    %v1263 = vsub.f32 0.0, %v751
    %v1264 = vsub.f32 0.0, %v752
    %v1265 = vsub.f32 0.0, %v753
    %v1266 = vsub.f32 0.0, %v754
    %v1267 = vsub.f32 0.0, %v755
    %v1268 = vsub.f32 0.0, %v756
    %v1269 = vsub.f32 0.0, %v757
    %v1270 = vsub.f32 0.0, %v758
    %v1271 = vsub.f32 0.0, %v759
    %v1272 = vsub.f32 0.0, %v760
    %v1273 = vsub.f32 0.0, %v761
    %v1274 = vsub.f32 0.0, %v762
    %v1275 = vsub.f32 0.0, %v763
    %v1276 = vsub.f32 0.0, %v764
    %v1277 = vsub.f32 0.0, %v765
    %v1278 = vsub.f32 0.0, %v766
    %v1279 = vsub.f32 0.0, %v767
    %v1280 = vsub.f32 0.0, %v768
    %v1281 = vsub.f32 0.0, %v769
    %v1282 = vsub.f32 0.0, %v770
    %v1283 = vsub.f32 0.0, %v771
    %v1284 = vsub.f32 0.0, %v772
    %v1285 = vsub.f32 0.0, %v773
    %v1286 = vsub.f32 0.0, %v774
    %v1287 = vsub.f32 0.0, %v775
    %v1288 = vsub.f32 0.0, %v776
    %v1289 = vsub.f32 0.0, %v777
    %v1290 = vsub.f32 0.0, %v778
    %v1291 = vsub.f32 0.0, %v779
    %v1292 = vsub.f32 0.0, %v780
    %v1293 = vsub.f32 0.0, %v781
    %v1294 = vsub.f32 0.0, %v782
    %v1295 = vsub.f32 0.0, %v783
    %v1296 = vsub.f32 0.0, %v784
    %v1297 = vsub.f32 0.0, %v785
    %v1298 = vsub.f32 0.0, %v786
    %v1299 = vsub.f32 0.0, %v787
    %v1300 = vsub.f32 0.0, %v788
    %v1301 = vsub.f32 0.0, %v789
    %v1302 = vsub.f32 0.0, %v790
    %v1303 = vsub.f32 0.0, %v791
    %v1304 = vsub.f32 0.0, %v792
    %v1305 = vsub.f32 0.0, %v793
    %v1306 = vsub.f32 0.0, %v794
    %v1307 = vsub.f32 0.0, %v795
    %v1308 = vsub.f32 0.0, %v796
    %v1309 = vsub.f32 0.0, %v797
    %v1310 = vsub.f32 0.0, %v798
    %v1311 = vsub.f32 0.0, %v799
    %v1312 = vsub.f32 0.0, %v800
    %v1313 = vsub.f32 0.0, %v801
    %v1314 = vsub.f32 0.0, %v802
    %v1315 = vsub.f32 0.0, %v803
    %v1316 = vsub.f32 0.0, %v804
    %v1317 = vsub.f32 0.0, %v805
    %v1318 = vsub.f32 0.0, %v806
    %v1319 = vsub.f32 0.0, %v807
    %v1320 = vsub.f32 0.0, %v808
    %v1321 = vsub.f32 0.0, %v809
    %v1322 = vsub.f32 0.0, %v810
    %v1323 = vsub.f32 0.0, %v811
    %v1324 = vsub.f32 0.0, %v812
    %v1325 = vsub.f32 0.0, %v813
    %v1326 = vsub.f32 0.0, %v814
    %v1327 = vsub.f32 0.0, %v815
    %v1328 = vsub.f32 0.0, %v816
    %v1329 = vsub.f32 0.0, %v817
    %v1330 = vsub.f32 0.0, %v818
    %v1331 = vsub.f32 0.0, %v819
    %v1332 = vsub.f32 0.0, %v820
    %v1333 = vsub.f32 0.0, %v821
    %v1334 = vsub.f32 0.0, %v822
    %v1335 = vsub.f32 0.0, %v823
    %v1336 = vsub.f32 0.0, %v824
    %v1337 = vsub.f32 0.0, %v825
    %v1338 = vsub.f32 0.0, %v826
    %v1339 = vsub.f32 0.0, %v827
    %v1340 = vsub.f32 0.0, %v828
    %v1341 = vsub.f32 0.0, %v829
    %v1342 = vsub.f32 0.0, %v830
    %v1343 = vsub.f32 0.0, %v831
    %v1344 = vmul.f32 %v1088, 1.442695
    %v1345 = vpow.pop %v1344
    %v1346 = vmul.f32 %v1089, 1.442695
    %v1347 = vpow.pop %v1346
    %v1348 = vmul.f32 %v1090, 1.442695
    %v1349 = vpow.pop %v1348
    %v1350 = vmul.f32 %v1091, 1.442695
    %v1351 = vpow.pop %v1350
    %v1352 = vmul.f32 %v1092, 1.442695
    %v1353 = vpow.pop %v1352
    %v1354 = vmul.f32 %v1093, 1.442695
    %v1355 = vpow.pop %v1354
    %v1356 = vmul.f32 %v1094, 1.442695
    %v1357 = vpow.pop %v1356
    %v1358 = vmul.f32 %v1095, 1.442695
    %v1359 = vpow.pop %v1358
    %v1360 = vmul.f32 %v1096, 1.442695
    %v1361 = vpow.pop %v1360
    %v1362 = vmul.f32 %v1097, 1.442695
    %v1363 = vpow.pop %v1362
    %v1364 = vmul.f32 %v1098, 1.442695
    %v1365 = vpow.pop %v1364
    %v1366 = vmul.f32 %v1099, 1.442695
    %v1367 = vpow.pop %v1366
    %v1368 = vmul.f32 %v1100, 1.442695
    %v1369 = vpow.pop %v1368
    %v1370 = vmul.f32 %v1101, 1.442695
    %v1371 = vpow.pop %v1370
    %v1372 = vmul.f32 %v1102, 1.442695
    %v1373 = vpow.pop %v1372
    %v1374 = vmul.f32 %v1103, 1.442695
    %v1375 = vpow.pop %v1374
    %v1376 = vmul.f32 %v1104, 1.442695
    %v1377 = vpow.pop %v1376
    %v1378 = vmul.f32 %v1105, 1.442695
    %v1379 = vpow.pop %v1378
    %v1380 = vmul.f32 %v1106, 1.442695
    %v1381 = vpow.pop %v1380
    %v1382 = vmul.f32 %v1107, 1.442695
    %v1383 = vpow.pop %v1382
    %v1384 = vmul.f32 %v1108, 1.442695
    %v1385 = vpow.pop %v1384
    %v1386 = vmul.f32 %v1109, 1.442695
    %v1387 = vpow.pop %v1386
    %v1388 = vmul.f32 %v1110, 1.442695
    %v1389 = vpow.pop %v1388
    %v1390 = vmul.f32 %v1111, 1.442695
    %v1391 = vpow.pop %v1390
    %v1392 = vmul.f32 %v1112, 1.442695
    %v1393 = vpow.pop %v1392
    %v1394 = vmul.f32 %v1113, 1.442695
    %v1395 = vpow.pop %v1394
    %v1396 = vmul.f32 %v1114, 1.442695
    %v1397 = vpow.pop %v1396
    %v1398 = vmul.f32 %v1115, 1.442695
    %v1399 = vpow.pop %v1398
    %v1400 = vmul.f32 %v1116, 1.442695
    %v1401 = vpow.pop %v1400
    %v1402 = vmul.f32 %v1117, 1.442695
    %v1403 = vpow.pop %v1402
    %v1404 = vmul.f32 %v1118, 1.442695
    %v1405 = vpow.pop %v1404
    %v1406 = vmul.f32 %v1119, 1.442695
    %v1407 = vpow.pop %v1406
    %v1408 = vmul.f32 %v1120, 1.442695
    %v1409 = vpow.pop %v1408
    %v1410 = vmul.f32 %v1121, 1.442695
    %v1411 = vpow.pop %v1410
    %v1412 = vmul.f32 %v1122, 1.442695
    %v1413 = vpow.pop %v1412
    %v1414 = vmul.f32 %v1123, 1.442695
    %v1415 = vpow.pop %v1414
    %v1416 = vmul.f32 %v1124, 1.442695
    %v1417 = vpow.pop %v1416
    %v1418 = vmul.f32 %v1125, 1.442695
    %v1419 = vpow.pop %v1418
    %v1420 = vmul.f32 %v1126, 1.442695
    %v1421 = vpow.pop %v1420
    %v1422 = vmul.f32 %v1127, 1.442695
    %v1423 = vpow.pop %v1422
    %v1424 = vmul.f32 %v1128, 1.442695
    %v1425 = vpow.pop %v1424
    %v1426 = vmul.f32 %v1129, 1.442695
    %v1427 = vpow.pop %v1426
    %v1428 = vmul.f32 %v1130, 1.442695
    %v1429 = vpow.pop %v1428
    %v1430 = vmul.f32 %v1131, 1.442695
    %v1431 = vpow.pop %v1430
    %v1432 = vmul.f32 %v1132, 1.442695
    %v1433 = vpow.pop %v1432
    %v1434 = vmul.f32 %v1133, 1.442695
    %v1435 = vpow.pop %v1434
    %v1436 = vmul.f32 %v1134, 1.442695
    %v1437 = vpow.pop %v1436
    %v1438 = vmul.f32 %v1135, 1.442695
    %v1439 = vpow.pop %v1438
    %v1440 = vmul.f32 %v1136, 1.442695
    %v1441 = vpow.pop %v1440
    %v1442 = vmul.f32 %v1137, 1.442695
    %v1443 = vpow.pop %v1442
    %v1444 = vmul.f32 %v1138, 1.442695
    %v1445 = vpow.pop %v1444
    %v1446 = vmul.f32 %v1139, 1.442695
    %v1447 = vpow.pop %v1446
    %v1448 = vmul.f32 %v1140, 1.442695
    %v1449 = vpow.pop %v1448
    %v1450 = vmul.f32 %v1141, 1.442695
    %v1451 = vpow.pop %v1450
    %v1452 = vmul.f32 %v1142, 1.442695
    %v1453 = vpow.pop %v1452
    %v1454 = vmul.f32 %v1143, 1.442695
    %v1455 = vpow.pop %v1454
    %v1456 = vmul.f32 %v1144, 1.442695
    %v1457 = vpow.pop %v1456
    %v1458 = vmul.f32 %v1145, 1.442695
    %v1459 = vpow.pop %v1458
    %v1460 = vmul.f32 %v1146, 1.442695
    %v1461 = vpow.pop %v1460
    %v1462 = vmul.f32 %v1147, 1.442695
    %v1463 = vpow.pop %v1462
    %v1464 = vmul.f32 %v1148, 1.442695
    %v1465 = vpow.pop %v1464
    %v1466 = vmul.f32 %v1149, 1.442695
    %v1467 = vpow.pop %v1466
    %v1468 = vmul.f32 %v1150, 1.442695
    %v1469 = vpow.pop %v1468
    %v1470 = vmul.f32 %v1151, 1.442695
    %v1471 = vpow.pop %v1470
    %v1472 = vmul.f32 %v1152, 1.442695
    %v1473 = vpow.pop %v1472
    %v1474 = vmul.f32 %v1153, 1.442695
    %v1475 = vpow.pop %v1474
    %v1476 = vmul.f32 %v1154, 1.442695
    %v1477 = vpow.pop %v1476
    %v1478 = vmul.f32 %v1155, 1.442695
    %v1479 = vpow.pop %v1478
    %v1480 = vmul.f32 %v1156, 1.442695
    %v1481 = vpow.pop %v1480
    %v1482 = vmul.f32 %v1157, 1.442695
    %v1483 = vpow.pop %v1482
    %v1484 = vmul.f32 %v1158, 1.442695
    %v1485 = vpow.pop %v1484
    %v1486 = vmul.f32 %v1159, 1.442695
    %v1487 = vpow.pop %v1486
    %v1488 = vmul.f32 %v1160, 1.442695
    %v1489 = vpow.pop %v1488
    %v1490 = vmul.f32 %v1161, 1.442695
    %v1491 = vpow.pop %v1490
    %v1492 = vmul.f32 %v1162, 1.442695
    %v1493 = vpow.pop %v1492
    %v1494 = vmul.f32 %v1163, 1.442695
    %v1495 = vpow.pop %v1494
    %v1496 = vmul.f32 %v1164, 1.442695
    %v1497 = vpow.pop %v1496
    %v1498 = vmul.f32 %v1165, 1.442695
    %v1499 = vpow.pop %v1498
    %v1500 = vmul.f32 %v1166, 1.442695
    %v1501 = vpow.pop %v1500
    %v1502 = vmul.f32 %v1167, 1.442695
    %v1503 = vpow.pop %v1502
    %v1504 = vmul.f32 %v1168, 1.442695
    %v1505 = vpow.pop %v1504
    %v1506 = vmul.f32 %v1169, 1.442695
    %v1507 = vpow.pop %v1506
    %v1508 = vmul.f32 %v1170, 1.442695
    %v1509 = vpow.pop %v1508
    %v1510 = vmul.f32 %v1171, 1.442695
    %v1511 = vpow.pop %v1510
    %v1512 = vmul.f32 %v1172, 1.442695
    %v1513 = vpow.pop %v1512
    %v1514 = vmul.f32 %v1173, 1.442695
    %v1515 = vpow.pop %v1514
    %v1516 = vmul.f32 %v1174, 1.442695
    %v1517 = vpow.pop %v1516
    %v1518 = vmul.f32 %v1175, 1.442695
    %v1519 = vpow.pop %v1518
    %v1520 = vmul.f32 %v1176, 1.442695
    %v1521 = vpow.pop %v1520
    %v1522 = vmul.f32 %v1177, 1.442695
    %v1523 = vpow.pop %v1522
    %v1524 = vmul.f32 %v1178, 1.442695
    %v1525 = vpow.pop %v1524
    %v1526 = vmul.f32 %v1179, 1.442695
    %v1527 = vpow.pop %v1526
    %v1528 = vmul.f32 %v1180, 1.442695
    %v1529 = vpow.pop %v1528
    %v1530 = vmul.f32 %v1181, 1.442695
    %v1531 = vpow.pop %v1530
    %v1532 = vmul.f32 %v1182, 1.442695
    %v1533 = vpow.pop %v1532
    %v1534 = vmul.f32 %v1183, 1.442695
    %v1535 = vpow.pop %v1534
    %v1536 = vmul.f32 %v1184, 1.442695
    %v1537 = vpow.pop %v1536
    %v1538 = vmul.f32 %v1185, 1.442695
    %v1539 = vpow.pop %v1538
    %v1540 = vmul.f32 %v1186, 1.442695
    %v1541 = vpow.pop %v1540
    %v1542 = vmul.f32 %v1187, 1.442695
    %v1543 = vpow.pop %v1542
    %v1544 = vmul.f32 %v1188, 1.442695
    %v1545 = vpow.pop %v1544
    %v1546 = vmul.f32 %v1189, 1.442695
    %v1547 = vpow.pop %v1546
    %v1548 = vmul.f32 %v1190, 1.442695
    %v1549 = vpow.pop %v1548
    %v1550 = vmul.f32 %v1191, 1.442695
    %v1551 = vpow.pop %v1550
    %v1552 = vmul.f32 %v1192, 1.442695
    %v1553 = vpow.pop %v1552
    %v1554 = vmul.f32 %v1193, 1.442695
    %v1555 = vpow.pop %v1554
    %v1556 = vmul.f32 %v1194, 1.442695
    %v1557 = vpow.pop %v1556
    %v1558 = vmul.f32 %v1195, 1.442695
    %v1559 = vpow.pop %v1558
    %v1560 = vmul.f32 %v1196, 1.442695
    %v1561 = vpow.pop %v1560
    %v1562 = vmul.f32 %v1197, 1.442695
    %v1563 = vpow.pop %v1562
    %v1564 = vmul.f32 %v1198, 1.442695
    %v1565 = vpow.pop %v1564
    %v1566 = vmul.f32 %v1199, 1.442695
    %v1567 = vpow.pop %v1566
    %v1568 = vmul.f32 %v1200, 1.442695
    %v1569 = vpow.pop %v1568
    %v1570 = vmul.f32 %v1201, 1.442695
    %v1571 = vpow.pop %v1570
    %v1572 = vmul.f32 %v1202, 1.442695
    %v1573 = vpow.pop %v1572
    %v1574 = vmul.f32 %v1203, 1.442695
    %v1575 = vpow.pop %v1574
    %v1576 = vmul.f32 %v1204, 1.442695
    %v1577 = vpow.pop %v1576
    %v1578 = vmul.f32 %v1205, 1.442695
    %v1579 = vpow.pop %v1578
    %v1580 = vmul.f32 %v1206, 1.442695
    %v1581 = vpow.pop %v1580
    %v1582 = vmul.f32 %v1207, 1.442695
    %v1583 = vpow.pop %v1582
    %v1584 = vmul.f32 %v1208, 1.442695
    %v1585 = vpow.pop %v1584
    %v1586 = vmul.f32 %v1209, 1.442695
    %v1587 = vpow.pop %v1586
    %v1588 = vmul.f32 %v1210, 1.442695
    %v1589 = vpow.pop %v1588
    %v1590 = vmul.f32 %v1211, 1.442695
    %v1591 = vpow.pop %v1590
    %v1592 = vmul.f32 %v1212, 1.442695
    %v1593 = vpow.pop %v1592
    %v1594 = vmul.f32 %v1213, 1.442695
    %v1595 = vpow.pop %v1594
    %v1596 = vmul.f32 %v1214, 1.442695
    %v1597 = vpow.pop %v1596
    %v1598 = vmul.f32 %v1215, 1.442695
    %v1599 = vpow.pop %v1598
    %v1600 = vmul.f32 %v1216, 1.442695
    %v1601 = vpow.pop %v1600
    %v1602 = vmul.f32 %v1217, 1.442695
    %v1603 = vpow.pop %v1602
    %v1604 = vmul.f32 %v1218, 1.442695
    %v1605 = vpow.pop %v1604
    %v1606 = vmul.f32 %v1219, 1.442695
    %v1607 = vpow.pop %v1606
    %v1608 = vmul.f32 %v1220, 1.442695
    %v1609 = vpow.pop %v1608
    %v1610 = vmul.f32 %v1221, 1.442695
    %v1611 = vpow.pop %v1610
    %v1612 = vmul.f32 %v1222, 1.442695
    %v1613 = vpow.pop %v1612
    %v1614 = vmul.f32 %v1223, 1.442695
    %v1615 = vpow.pop %v1614
    %v1616 = vmul.f32 %v1224, 1.442695
    %v1617 = vpow.pop %v1616
    %v1618 = vmul.f32 %v1225, 1.442695
    %v1619 = vpow.pop %v1618
    %v1620 = vmul.f32 %v1226, 1.442695
    %v1621 = vpow.pop %v1620
    %v1622 = vmul.f32 %v1227, 1.442695
    %v1623 = vpow.pop %v1622
    %v1624 = vmul.f32 %v1228, 1.442695
    %v1625 = vpow.pop %v1624
    %v1626 = vmul.f32 %v1229, 1.442695
    %v1627 = vpow.pop %v1626
    %v1628 = vmul.f32 %v1230, 1.442695
    %v1629 = vpow.pop %v1628
    %v1630 = vmul.f32 %v1231, 1.442695
    %v1631 = vpow.pop %v1630
    %v1632 = vmul.f32 %v1232, 1.442695
    %v1633 = vpow.pop %v1632
    %v1634 = vmul.f32 %v1233, 1.442695
    %v1635 = vpow.pop %v1634
    %v1636 = vmul.f32 %v1234, 1.442695
    %v1637 = vpow.pop %v1636
    %v1638 = vmul.f32 %v1235, 1.442695
    %v1639 = vpow.pop %v1638
    %v1640 = vmul.f32 %v1236, 1.442695
    %v1641 = vpow.pop %v1640
    %v1642 = vmul.f32 %v1237, 1.442695
    %v1643 = vpow.pop %v1642
    %v1644 = vmul.f32 %v1238, 1.442695
    %v1645 = vpow.pop %v1644
    %v1646 = vmul.f32 %v1239, 1.442695
    %v1647 = vpow.pop %v1646
    %v1648 = vmul.f32 %v1240, 1.442695
    %v1649 = vpow.pop %v1648
    %v1650 = vmul.f32 %v1241, 1.442695
    %v1651 = vpow.pop %v1650
    %v1652 = vmul.f32 %v1242, 1.442695
    %v1653 = vpow.pop %v1652
    %v1654 = vmul.f32 %v1243, 1.442695
    %v1655 = vpow.pop %v1654
    %v1656 = vmul.f32 %v1244, 1.442695
    %v1657 = vpow.pop %v1656
    %v1658 = vmul.f32 %v1245, 1.442695
    %v1659 = vpow.pop %v1658
    %v1660 = vmul.f32 %v1246, 1.442695
    %v1661 = vpow.pop %v1660
    %v1662 = vmul.f32 %v1247, 1.442695
    %v1663 = vpow.pop %v1662
    %v1664 = vmul.f32 %v1248, 1.442695
    %v1665 = vpow.pop %v1664
    %v1666 = vmul.f32 %v1249, 1.442695
    %v1667 = vpow.pop %v1666
    %v1668 = vmul.f32 %v1250, 1.442695
    %v1669 = vpow.pop %v1668
    %v1670 = vmul.f32 %v1251, 1.442695
    %v1671 = vpow.pop %v1670
    %v1672 = vmul.f32 %v1252, 1.442695
    %v1673 = vpow.pop %v1672
    %v1674 = vmul.f32 %v1253, 1.442695
    %v1675 = vpow.pop %v1674
    %v1676 = vmul.f32 %v1254, 1.442695
    %v1677 = vpow.pop %v1676
    %v1678 = vmul.f32 %v1255, 1.442695
    %v1679 = vpow.pop %v1678
    %v1680 = vmul.f32 %v1256, 1.442695
    %v1681 = vpow.pop %v1680
    %v1682 = vmul.f32 %v1257, 1.442695
    %v1683 = vpow.pop %v1682
    %v1684 = vmul.f32 %v1258, 1.442695
    %v1685 = vpow.pop %v1684
    %v1686 = vmul.f32 %v1259, 1.442695
    %v1687 = vpow.pop %v1686
    %v1688 = vmul.f32 %v1260, 1.442695
    %v1689 = vpow.pop %v1688
    %v1690 = vmul.f32 %v1261, 1.442695
    %v1691 = vpow.pop %v1690
    %v1692 = vmul.f32 %v1262, 1.442695
    %v1693 = vpow.pop %v1692
    %v1694 = vmul.f32 %v1263, 1.442695
    %v1695 = vpow.pop %v1694
    %v1696 = vmul.f32 %v1264, 1.442695
    %v1697 = vpow.pop %v1696
    %v1698 = vmul.f32 %v1265, 1.442695
    %v1699 = vpow.pop %v1698
    %v1700 = vmul.f32 %v1266, 1.442695
    %v1701 = vpow.pop %v1700
    %v1702 = vmul.f32 %v1267, 1.442695
    %v1703 = vpow.pop %v1702
    %v1704 = vmul.f32 %v1268, 1.442695
    %v1705 = vpow.pop %v1704
    %v1706 = vmul.f32 %v1269, 1.442695
    %v1707 = vpow.pop %v1706
    %v1708 = vmul.f32 %v1270, 1.442695
    %v1709 = vpow.pop %v1708
    %v1710 = vmul.f32 %v1271, 1.442695
    %v1711 = vpow.pop %v1710
    %v1712 = vmul.f32 %v1272, 1.442695
    %v1713 = vpow.pop %v1712
    %v1714 = vmul.f32 %v1273, 1.442695
    %v1715 = vpow.pop %v1714
    %v1716 = vmul.f32 %v1274, 1.442695
    %v1717 = vpow.pop %v1716
    %v1718 = vmul.f32 %v1275, 1.442695
    %v1719 = vpow.pop %v1718
    %v1720 = vmul.f32 %v1276, 1.442695
    %v1721 = vpow.pop %v1720
    %v1722 = vmul.f32 %v1277, 1.442695
    %v1723 = vpow.pop %v1722
    %v1724 = vmul.f32 %v1278, 1.442695
    %v1725 = vpow.pop %v1724
    %v1726 = vmul.f32 %v1279, 1.442695
    %v1727 = vpow.pop %v1726
    %v1728 = vmul.f32 %v1280, 1.442695
    %v1729 = vpow.pop %v1728
    %v1730 = vmul.f32 %v1281, 1.442695
    %v1731 = vpow.pop %v1730
    %v1732 = vmul.f32 %v1282, 1.442695
    %v1733 = vpow.pop %v1732
    %v1734 = vmul.f32 %v1283, 1.442695
    %v1735 = vpow.pop %v1734
    %v1736 = vmul.f32 %v1284, 1.442695
    %v1737 = vpow.pop %v1736
    %v1738 = vmul.f32 %v1285, 1.442695
    %v1739 = vpow.pop %v1738
    %v1740 = vmul.f32 %v1286, 1.442695
    %v1741 = vpow.pop %v1740
    %v1742 = vmul.f32 %v1287, 1.442695
    %v1743 = vpow.pop %v1742
    %v1744 = vmul.f32 %v1288, 1.442695
    %v1745 = vpow.pop %v1744
    %v1746 = vmul.f32 %v1289, 1.442695
    %v1747 = vpow.pop %v1746
    %v1748 = vmul.f32 %v1290, 1.442695
    %v1749 = vpow.pop %v1748
    %v1750 = vmul.f32 %v1291, 1.442695
    %v1751 = vpow.pop %v1750
    %v1752 = vmul.f32 %v1292, 1.442695
    %v1753 = vpow.pop %v1752
    %v1754 = vmul.f32 %v1293, 1.442695
    %v1755 = vpow.pop %v1754
    %v1756 = vmul.f32 %v1294, 1.442695
    %v1757 = vpow.pop %v1756
    %v1758 = vmul.f32 %v1295, 1.442695
    %v1759 = vpow.pop %v1758
    %v1760 = vmul.f32 %v1296, 1.442695
    %v1761 = vpow.pop %v1760
    %v1762 = vmul.f32 %v1297, 1.442695
    %v1763 = vpow.pop %v1762
    %v1764 = vmul.f32 %v1298, 1.442695
    %v1765 = vpow.pop %v1764
    %v1766 = vmul.f32 %v1299, 1.442695
    %v1767 = vpow.pop %v1766
    %v1768 = vmul.f32 %v1300, 1.442695
    %v1769 = vpow.pop %v1768
    %v1770 = vmul.f32 %v1301, 1.442695
    %v1771 = vpow.pop %v1770
    %v1772 = vmul.f32 %v1302, 1.442695
    %v1773 = vpow.pop %v1772
    %v1774 = vmul.f32 %v1303, 1.442695
    %v1775 = vpow.pop %v1774
    %v1776 = vmul.f32 %v1304, 1.442695
    %v1777 = vpow.pop %v1776
    %v1778 = vmul.f32 %v1305, 1.442695
    %v1779 = vpow.pop %v1778
    %v1780 = vmul.f32 %v1306, 1.442695
    %v1781 = vpow.pop %v1780
    %v1782 = vmul.f32 %v1307, 1.442695
    %v1783 = vpow.pop %v1782
    %v1784 = vmul.f32 %v1308, 1.442695
    %v1785 = vpow.pop %v1784
    %v1786 = vmul.f32 %v1309, 1.442695
    %v1787 = vpow.pop %v1786
    %v1788 = vmul.f32 %v1310, 1.442695
    %v1789 = vpow.pop %v1788
    %v1790 = vmul.f32 %v1311, 1.442695
    %v1791 = vpow.pop %v1790
    %v1792 = vmul.f32 %v1312, 1.442695
    %v1793 = vpow.pop %v1792
    %v1794 = vmul.f32 %v1313, 1.442695
    %v1795 = vpow.pop %v1794
    %v1796 = vmul.f32 %v1314, 1.442695
    %v1797 = vpow.pop %v1796
    %v1798 = vmul.f32 %v1315, 1.442695
    %v1799 = vpow.pop %v1798
    %v1800 = vmul.f32 %v1316, 1.442695
    %v1801 = vpow.pop %v1800
    %v1802 = vmul.f32 %v1317, 1.442695
    %v1803 = vpow.pop %v1802
    %v1804 = vmul.f32 %v1318, 1.442695
    %v1805 = vpow.pop %v1804
    %v1806 = vmul.f32 %v1319, 1.442695
    %v1807 = vpow.pop %v1806
    %v1808 = vmul.f32 %v1320, 1.442695
    %v1809 = vpow.pop %v1808
    %v1810 = vmul.f32 %v1321, 1.442695
    %v1811 = vpow.pop %v1810
    %v1812 = vmul.f32 %v1322, 1.442695
    %v1813 = vpow.pop %v1812
    %v1814 = vmul.f32 %v1323, 1.442695
    %v1815 = vpow.pop %v1814
    %v1816 = vmul.f32 %v1324, 1.442695
    %v1817 = vpow.pop %v1816
    %v1818 = vmul.f32 %v1325, 1.442695
    %v1819 = vpow.pop %v1818
    %v1820 = vmul.f32 %v1326, 1.442695
    %v1821 = vpow.pop %v1820
    %v1822 = vmul.f32 %v1327, 1.442695
    %v1823 = vpow.pop %v1822
    %v1824 = vmul.f32 %v1328, 1.442695
    %v1825 = vpow.pop %v1824
    %v1826 = vmul.f32 %v1329, 1.442695
    %v1827 = vpow.pop %v1826
    %v1828 = vmul.f32 %v1330, 1.442695
    %v1829 = vpow.pop %v1828
    %v1830 = vmul.f32 %v1331, 1.442695
    %v1831 = vpow.pop %v1830
    %v1832 = vmul.f32 %v1332, 1.442695
    %v1833 = vpow.pop %v1832
    %v1834 = vmul.f32 %v1333, 1.442695
    %v1835 = vpow.pop %v1834
    %v1836 = vmul.f32 %v1334, 1.442695
    %v1837 = vpow.pop %v1836
    %v1838 = vmul.f32 %v1335, 1.442695
    %v1839 = vpow.pop %v1838
    %v1840 = vmul.f32 %v1336, 1.442695
    %v1841 = vpow.pop %v1840
    %v1842 = vmul.f32 %v1337, 1.442695
    %v1843 = vpow.pop %v1842
    %v1844 = vmul.f32 %v1338, 1.442695
    %v1845 = vpow.pop %v1844
    %v1846 = vmul.f32 %v1339, 1.442695
    %v1847 = vpow.pop %v1846
    %v1848 = vmul.f32 %v1340, 1.442695
    %v1849 = vpow.pop %v1848
    %v1850 = vmul.f32 %v1341, 1.442695
    %v1851 = vpow.pop %v1850
    %v1852 = vmul.f32 %v1342, 1.442695
    %v1853 = vpow.pop %v1852
    %v1854 = vmul.f32 %v1343, 1.442695
    %v1855 = vpow.pop %v1854
    %v1856 = vadd.f32 %v1345, 1.0
    %v1857 = vlog2.pop %v1856
    %v1858 = vmul.f32 %v1857, 0.6931472
    %v1859 = vmul.f32 -0.5, %v1345
    %v1860 = vadd.f32 %v1859, 1.0
    %v1861 = vmul.f32 %v1860, %v1345
    %v1862 = vand.u32 2147483647, %v1345
    %vm1863 = vcmp.lt.f32.partialorder %v1862, 0.0004427343
    %v1864 = vsel %vm1863, %v1861, %v1858
    %v1865 = vadd.f32 %v1347, 1.0
    %v1866 = vlog2.pop %v1865
    %v1867 = vmul.f32 %v1866, 0.6931472
    %v1868 = vmul.f32 -0.5, %v1347
    %v1869 = vadd.f32 %v1868, 1.0
    %v1870 = vmul.f32 %v1869, %v1347
    %v1871 = vand.u32 2147483647, %v1347
    %vm1872 = vcmp.lt.f32.partialorder %v1871, 0.0004427343
    %v1873 = vsel %vm1872, %v1870, %v1867
    %v1874 = vadd.f32 %v1349, 1.0
    %v1875 = vlog2.pop %v1874
    %v1876 = vmul.f32 %v1875, 0.6931472
    %v1877 = vmul.f32 -0.5, %v1349
    %v1878 = vadd.f32 %v1877, 1.0
    %v1879 = vmul.f32 %v1878, %v1349
    %v1880 = vand.u32 2147483647, %v1349
    %vm1881 = vcmp.lt.f32.partialorder %v1880, 0.0004427343
    %v1882 = vsel %vm1881, %v1879, %v1876
    %v1883 = vadd.f32 %v1351, 1.0
    %v1884 = vlog2.pop %v1883
    %v1885 = vmul.f32 %v1884, 0.6931472
    %v1886 = vmul.f32 -0.5, %v1351
    %v1887 = vadd.f32 %v1886, 1.0
    %v1888 = vmul.f32 %v1887, %v1351
    %v1889 = vand.u32 2147483647, %v1351
    %vm1890 = vcmp.lt.f32.partialorder %v1889, 0.0004427343
    %v1891 = vsel %vm1890, %v1888, %v1885
    %v1892 = vadd.f32 %v1353, 1.0
    %v1893 = vlog2.pop %v1892
    %v1894 = vmul.f32 %v1893, 0.6931472
    %v1895 = vmul.f32 -0.5, %v1353
    %v1896 = vadd.f32 %v1895, 1.0
    %v1897 = vmul.f32 %v1896, %v1353
    %v1898 = vand.u32 2147483647, %v1353
    %vm1899 = vcmp.lt.f32.partialorder %v1898, 0.0004427343
    %v1900 = vsel %vm1899, %v1897, %v1894
    %v1901 = vadd.f32 %v1355, 1.0
    %v1902 = vlog2.pop %v1901
    %v1903 = vmul.f32 %v1902, 0.6931472
    %v1904 = vmul.f32 -0.5, %v1355
    %v1905 = vadd.f32 %v1904, 1.0
    %v1906 = vmul.f32 %v1905, %v1355
    %v1907 = vand.u32 2147483647, %v1355
    %vm1908 = vcmp.lt.f32.partialorder %v1907, 0.0004427343
    %v1909 = vsel %vm1908, %v1906, %v1903
    %v1910 = vadd.f32 %v1357, 1.0
    %v1911 = vlog2.pop %v1910
    %v1912 = vmul.f32 %v1911, 0.6931472
    %v1913 = vmul.f32 -0.5, %v1357
    %v1914 = vadd.f32 %v1913, 1.0
    %v1915 = vmul.f32 %v1914, %v1357
    %v1916 = vand.u32 2147483647, %v1357
    %vm1917 = vcmp.lt.f32.partialorder %v1916, 0.0004427343
    %v1918 = vsel %vm1917, %v1915, %v1912
    %v1919 = vadd.f32 %v1359, 1.0
    %v1920 = vlog2.pop %v1919
    %v1921 = vmul.f32 %v1920, 0.6931472
    %v1922 = vmul.f32 -0.5, %v1359
    %v1923 = vadd.f32 %v1922, 1.0
    %v1924 = vmul.f32 %v1923, %v1359
    %v1925 = vand.u32 2147483647, %v1359
    %vm1926 = vcmp.lt.f32.partialorder %v1925, 0.0004427343
    %v1927 = vsel %vm1926, %v1924, %v1921
    %v1928 = vadd.f32 %v1361, 1.0
    %v1929 = vlog2.pop %v1928
    %v1930 = vmul.f32 %v1929, 0.6931472
    %v1931 = vmul.f32 -0.5, %v1361
    %v1932 = vadd.f32 %v1931, 1.0
    %v1933 = vmul.f32 %v1932, %v1361
    %v1934 = vand.u32 2147483647, %v1361
    %vm1935 = vcmp.lt.f32.partialorder %v1934, 0.0004427343
    %v1936 = vsel %vm1935, %v1933, %v1930
    %v1937 = vadd.f32 %v1363, 1.0
    %v1938 = vlog2.pop %v1937
    %v1939 = vmul.f32 %v1938, 0.6931472
    %v1940 = vmul.f32 -0.5, %v1363
    %v1941 = vadd.f32 %v1940, 1.0
    %v1942 = vmul.f32 %v1941, %v1363
    %v1943 = vand.u32 2147483647, %v1363
    %vm1944 = vcmp.lt.f32.partialorder %v1943, 0.0004427343
    %v1945 = vsel %vm1944, %v1942, %v1939
    %v1946 = vadd.f32 %v1365, 1.0
    %v1947 = vlog2.pop %v1946
    %v1948 = vmul.f32 %v1947, 0.6931472
    %v1949 = vmul.f32 -0.5, %v1365
    %v1950 = vadd.f32 %v1949, 1.0
    %v1951 = vmul.f32 %v1950, %v1365
    %v1952 = vand.u32 2147483647, %v1365
    %vm1953 = vcmp.lt.f32.partialorder %v1952, 0.0004427343
    %v1954 = vsel %vm1953, %v1951, %v1948
    %v1955 = vadd.f32 %v1367, 1.0
    %v1956 = vlog2.pop %v1955
    %v1957 = vmul.f32 %v1956, 0.6931472
    %v1958 = vmul.f32 -0.5, %v1367
    %v1959 = vadd.f32 %v1958, 1.0
    %v1960 = vmul.f32 %v1959, %v1367
    %v1961 = vand.u32 2147483647, %v1367
    %vm1962 = vcmp.lt.f32.partialorder %v1961, 0.0004427343
    %v1963 = vsel %vm1962, %v1960, %v1957
    %v1964 = vadd.f32 %v1369, 1.0
    %v1965 = vlog2.pop %v1964
    %v1966 = vmul.f32 %v1965, 0.6931472
    %v1967 = vmul.f32 -0.5, %v1369
    %v1968 = vadd.f32 %v1967, 1.0
    %v1969 = vmul.f32 %v1968, %v1369
    %v1970 = vand.u32 2147483647, %v1369
    %vm1971 = vcmp.lt.f32.partialorder %v1970, 0.0004427343
    %v1972 = vsel %vm1971, %v1969, %v1966
    %v1973 = vadd.f32 %v1371, 1.0
    %v1974 = vlog2.pop %v1973
    %v1975 = vmul.f32 %v1974, 0.6931472
    %v1976 = vmul.f32 -0.5, %v1371
    %v1977 = vadd.f32 %v1976, 1.0
    %v1978 = vmul.f32 %v1977, %v1371
    %v1979 = vand.u32 2147483647, %v1371
    %vm1980 = vcmp.lt.f32.partialorder %v1979, 0.0004427343
    %v1981 = vsel %vm1980, %v1978, %v1975
    %v1982 = vadd.f32 %v1373, 1.0
    %v1983 = vlog2.pop %v1982
    %v1984 = vmul.f32 %v1983, 0.6931472
    %v1985 = vmul.f32 -0.5, %v1373
    %v1986 = vadd.f32 %v1985, 1.0
    %v1987 = vmul.f32 %v1986, %v1373
    %v1988 = vand.u32 2147483647, %v1373
    %vm1989 = vcmp.lt.f32.partialorder %v1988, 0.0004427343
    %v1990 = vsel %vm1989, %v1987, %v1984
    %v1991 = vadd.f32 %v1375, 1.0
    %v1992 = vlog2.pop %v1991
    %v1993 = vmul.f32 %v1992, 0.6931472
    %v1994 = vmul.f32 -0.5, %v1375
    %v1995 = vadd.f32 %v1994, 1.0
    %v1996 = vmul.f32 %v1995, %v1375
    %v1997 = vand.u32 2147483647, %v1375
    %vm1998 = vcmp.lt.f32.partialorder %v1997, 0.0004427343
    %v1999 = vsel %vm1998, %v1996, %v1993
    %v2000 = vadd.f32 %v1377, 1.0
    %v2001 = vlog2.pop %v2000
    %v2002 = vmul.f32 %v2001, 0.6931472
    %v2003 = vmul.f32 -0.5, %v1377
    %v2004 = vadd.f32 %v2003, 1.0
    %v2005 = vmul.f32 %v2004, %v1377
    %v2006 = vand.u32 2147483647, %v1377
    %vm2007 = vcmp.lt.f32.partialorder %v2006, 0.0004427343
    %v2008 = vsel %vm2007, %v2005, %v2002
    %v2009 = vadd.f32 %v1379, 1.0
    %v2010 = vlog2.pop %v2009
    %v2011 = vmul.f32 %v2010, 0.6931472
    %v2012 = vmul.f32 -0.5, %v1379
    %v2013 = vadd.f32 %v2012, 1.0
    %v2014 = vmul.f32 %v2013, %v1379
    %v2015 = vand.u32 2147483647, %v1379
    %vm2016 = vcmp.lt.f32.partialorder %v2015, 0.0004427343
    %v2017 = vsel %vm2016, %v2014, %v2011
    %v2018 = vadd.f32 %v1381, 1.0
    %v2019 = vlog2.pop %v2018
    %v2020 = vmul.f32 %v2019, 0.6931472
    %v2021 = vmul.f32 -0.5, %v1381
    %v2022 = vadd.f32 %v2021, 1.0
    %v2023 = vmul.f32 %v2022, %v1381
    %v2024 = vand.u32 2147483647, %v1381
    %vm2025 = vcmp.lt.f32.partialorder %v2024, 0.0004427343
    %v2026 = vsel %vm2025, %v2023, %v2020
    %v2027 = vadd.f32 %v1383, 1.0
    %v2028 = vlog2.pop %v2027
    %v2029 = vmul.f32 %v2028, 0.6931472
    %v2030 = vmul.f32 -0.5, %v1383
    %v2031 = vadd.f32 %v2030, 1.0
    %v2032 = vmul.f32 %v2031, %v1383
    %v2033 = vand.u32 2147483647, %v1383
    %vm2034 = vcmp.lt.f32.partialorder %v2033, 0.0004427343
    %v2035 = vsel %vm2034, %v2032, %v2029
    %v2036 = vadd.f32 %v1385, 1.0
    %v2037 = vlog2.pop %v2036
    %v2038 = vmul.f32 %v2037, 0.6931472
    %v2039 = vmul.f32 -0.5, %v1385
    %v2040 = vadd.f32 %v2039, 1.0
    %v2041 = vmul.f32 %v2040, %v1385
    %v2042 = vand.u32 2147483647, %v1385
    %vm2043 = vcmp.lt.f32.partialorder %v2042, 0.0004427343
    %v2044 = vsel %vm2043, %v2041, %v2038
    %v2045 = vadd.f32 %v1387, 1.0
    %v2046 = vlog2.pop %v2045
    %v2047 = vmul.f32 %v2046, 0.6931472
    %v2048 = vmul.f32 -0.5, %v1387
    %v2049 = vadd.f32 %v2048, 1.0
    %v2050 = vmul.f32 %v2049, %v1387
    %v2051 = vand.u32 2147483647, %v1387
    %vm2052 = vcmp.lt.f32.partialorder %v2051, 0.0004427343
    %v2053 = vsel %vm2052, %v2050, %v2047
    %v2054 = vadd.f32 %v1389, 1.0
    %v2055 = vlog2.pop %v2054
    %v2056 = vmul.f32 %v2055, 0.6931472
    %v2057 = vmul.f32 -0.5, %v1389
    %v2058 = vadd.f32 %v2057, 1.0
    %v2059 = vmul.f32 %v2058, %v1389
    %v2060 = vand.u32 2147483647, %v1389
    %vm2061 = vcmp.lt.f32.partialorder %v2060, 0.0004427343
    %v2062 = vsel %vm2061, %v2059, %v2056
    %v2063 = vadd.f32 %v1391, 1.0
    %v2064 = vlog2.pop %v2063
    %v2065 = vmul.f32 %v2064, 0.6931472
    %v2066 = vmul.f32 -0.5, %v1391
    %v2067 = vadd.f32 %v2066, 1.0
    %v2068 = vmul.f32 %v2067, %v1391
    %v2069 = vand.u32 2147483647, %v1391
    %vm2070 = vcmp.lt.f32.partialorder %v2069, 0.0004427343
    %v2071 = vsel %vm2070, %v2068, %v2065
    %v2072 = vadd.f32 %v1393, 1.0
    %v2073 = vlog2.pop %v2072
    %v2074 = vmul.f32 %v2073, 0.6931472
    %v2075 = vmul.f32 -0.5, %v1393
    %v2076 = vadd.f32 %v2075, 1.0
    %v2077 = vmul.f32 %v2076, %v1393
    %v2078 = vand.u32 2147483647, %v1393
    %vm2079 = vcmp.lt.f32.partialorder %v2078, 0.0004427343
    %v2080 = vsel %vm2079, %v2077, %v2074
    %v2081 = vadd.f32 %v1395, 1.0
    %v2082 = vlog2.pop %v2081
    %v2083 = vmul.f32 %v2082, 0.6931472
    %v2084 = vmul.f32 -0.5, %v1395
    %v2085 = vadd.f32 %v2084, 1.0
    %v2086 = vmul.f32 %v2085, %v1395
    %v2087 = vand.u32 2147483647, %v1395
    %vm2088 = vcmp.lt.f32.partialorder %v2087, 0.0004427343
    %v2089 = vsel %vm2088, %v2086, %v2083
    %v2090 = vadd.f32 %v1397, 1.0
    %v2091 = vlog2.pop %v2090
    %v2092 = vmul.f32 %v2091, 0.6931472
    %v2093 = vmul.f32 -0.5, %v1397
    %v2094 = vadd.f32 %v2093, 1.0
    %v2095 = vmul.f32 %v2094, %v1397
    %v2096 = vand.u32 2147483647, %v1397
    %vm2097 = vcmp.lt.f32.partialorder %v2096, 0.0004427343
    %v2098 = vsel %vm2097, %v2095, %v2092
    %v2099 = vadd.f32 %v1399, 1.0
    %v2100 = vlog2.pop %v2099
    %v2101 = vmul.f32 %v2100, 0.6931472
    %v2102 = vmul.f32 -0.5, %v1399
    %v2103 = vadd.f32 %v2102, 1.0
    %v2104 = vmul.f32 %v2103, %v1399
    %v2105 = vand.u32 2147483647, %v1399
    %vm2106 = vcmp.lt.f32.partialorder %v2105, 0.0004427343
    %v2107 = vsel %vm2106, %v2104, %v2101
    %v2108 = vadd.f32 %v1401, 1.0
    %v2109 = vlog2.pop %v2108
    %v2110 = vmul.f32 %v2109, 0.6931472
    %v2111 = vmul.f32 -0.5, %v1401
    %v2112 = vadd.f32 %v2111, 1.0
    %v2113 = vmul.f32 %v2112, %v1401
    %v2114 = vand.u32 2147483647, %v1401
    %vm2115 = vcmp.lt.f32.partialorder %v2114, 0.0004427343
    %v2116 = vsel %vm2115, %v2113, %v2110
    %v2117 = vadd.f32 %v1403, 1.0
    %v2118 = vlog2.pop %v2117
    %v2119 = vmul.f32 %v2118, 0.6931472
    %v2120 = vmul.f32 -0.5, %v1403
    %v2121 = vadd.f32 %v2120, 1.0
    %v2122 = vmul.f32 %v2121, %v1403
    %v2123 = vand.u32 2147483647, %v1403
    %vm2124 = vcmp.lt.f32.partialorder %v2123, 0.0004427343
    %v2125 = vsel %vm2124, %v2122, %v2119
    %v2126 = vadd.f32 %v1405, 1.0
    %v2127 = vlog2.pop %v2126
    %v2128 = vmul.f32 %v2127, 0.6931472
    %v2129 = vmul.f32 -0.5, %v1405
    %v2130 = vadd.f32 %v2129, 1.0
    %v2131 = vmul.f32 %v2130, %v1405
    %v2132 = vand.u32 2147483647, %v1405
    %vm2133 = vcmp.lt.f32.partialorder %v2132, 0.0004427343
    %v2134 = vsel %vm2133, %v2131, %v2128
    %v2135 = vadd.f32 %v1407, 1.0
    %v2136 = vlog2.pop %v2135
    %v2137 = vmul.f32 %v2136, 0.6931472
    %v2138 = vmul.f32 -0.5, %v1407
    %v2139 = vadd.f32 %v2138, 1.0
    %v2140 = vmul.f32 %v2139, %v1407
    %v2141 = vand.u32 2147483647, %v1407
    %vm2142 = vcmp.lt.f32.partialorder %v2141, 0.0004427343
    %v2143 = vsel %vm2142, %v2140, %v2137
    %v2144 = vadd.f32 %v1409, 1.0
    %v2145 = vlog2.pop %v2144
    %v2146 = vmul.f32 %v2145, 0.6931472
    %v2147 = vmul.f32 -0.5, %v1409
    %v2148 = vadd.f32 %v2147, 1.0
    %v2149 = vmul.f32 %v2148, %v1409
    %v2150 = vand.u32 2147483647, %v1409
    %vm2151 = vcmp.lt.f32.partialorder %v2150, 0.0004427343
    %v2152 = vsel %vm2151, %v2149, %v2146
    %v2153 = vadd.f32 %v1411, 1.0
    %v2154 = vlog2.pop %v2153
    %v2155 = vmul.f32 %v2154, 0.6931472
    %v2156 = vmul.f32 -0.5, %v1411
    %v2157 = vadd.f32 %v2156, 1.0
    %v2158 = vmul.f32 %v2157, %v1411
    %v2159 = vand.u32 2147483647, %v1411
    %vm2160 = vcmp.lt.f32.partialorder %v2159, 0.0004427343
    %v2161 = vsel %vm2160, %v2158, %v2155
    %v2162 = vadd.f32 %v1413, 1.0
    %v2163 = vlog2.pop %v2162
    %v2164 = vmul.f32 %v2163, 0.6931472
    %v2165 = vmul.f32 -0.5, %v1413
    %v2166 = vadd.f32 %v2165, 1.0
    %v2167 = vmul.f32 %v2166, %v1413
    %v2168 = vand.u32 2147483647, %v1413
    %vm2169 = vcmp.lt.f32.partialorder %v2168, 0.0004427343
    %v2170 = vsel %vm2169, %v2167, %v2164
    %v2171 = vadd.f32 %v1415, 1.0
    %v2172 = vlog2.pop %v2171
    %v2173 = vmul.f32 %v2172, 0.6931472
    %v2174 = vmul.f32 -0.5, %v1415
    %v2175 = vadd.f32 %v2174, 1.0
    %v2176 = vmul.f32 %v2175, %v1415
    %v2177 = vand.u32 2147483647, %v1415
    %vm2178 = vcmp.lt.f32.partialorder %v2177, 0.0004427343
    %v2179 = vsel %vm2178, %v2176, %v2173
    %v2180 = vadd.f32 %v1417, 1.0
    %v2181 = vlog2.pop %v2180
    %v2182 = vmul.f32 %v2181, 0.6931472
    %v2183 = vmul.f32 -0.5, %v1417
    %v2184 = vadd.f32 %v2183, 1.0
    %v2185 = vmul.f32 %v2184, %v1417
    %v2186 = vand.u32 2147483647, %v1417
    %vm2187 = vcmp.lt.f32.partialorder %v2186, 0.0004427343
    %v2188 = vsel %vm2187, %v2185, %v2182
    %v2189 = vadd.f32 %v1419, 1.0
    %v2190 = vlog2.pop %v2189
    %v2191 = vmul.f32 %v2190, 0.6931472
    %v2192 = vmul.f32 -0.5, %v1419
    %v2193 = vadd.f32 %v2192, 1.0
    %v2194 = vmul.f32 %v2193, %v1419
    %v2195 = vand.u32 2147483647, %v1419
    %vm2196 = vcmp.lt.f32.partialorder %v2195, 0.0004427343
    %v2197 = vsel %vm2196, %v2194, %v2191
    %v2198 = vadd.f32 %v1421, 1.0
    %v2199 = vlog2.pop %v2198
    %v2200 = vmul.f32 %v2199, 0.6931472
    %v2201 = vmul.f32 -0.5, %v1421
    %v2202 = vadd.f32 %v2201, 1.0
    %v2203 = vmul.f32 %v2202, %v1421
    %v2204 = vand.u32 2147483647, %v1421
    %vm2205 = vcmp.lt.f32.partialorder %v2204, 0.0004427343
    %v2206 = vsel %vm2205, %v2203, %v2200
    %v2207 = vadd.f32 %v1423, 1.0
    %v2208 = vlog2.pop %v2207
    %v2209 = vmul.f32 %v2208, 0.6931472
    %v2210 = vmul.f32 -0.5, %v1423
    %v2211 = vadd.f32 %v2210, 1.0
    %v2212 = vmul.f32 %v2211, %v1423
    %v2213 = vand.u32 2147483647, %v1423
    %vm2214 = vcmp.lt.f32.partialorder %v2213, 0.0004427343
    %v2215 = vsel %vm2214, %v2212, %v2209
    %v2216 = vadd.f32 %v1425, 1.0
    %v2217 = vlog2.pop %v2216
    %v2218 = vmul.f32 %v2217, 0.6931472
    %v2219 = vmul.f32 -0.5, %v1425
    %v2220 = vadd.f32 %v2219, 1.0
    %v2221 = vmul.f32 %v2220, %v1425
    %v2222 = vand.u32 2147483647, %v1425
    %vm2223 = vcmp.lt.f32.partialorder %v2222, 0.0004427343
    %v2224 = vsel %vm2223, %v2221, %v2218
    %v2225 = vadd.f32 %v1427, 1.0
    %v2226 = vlog2.pop %v2225
    %v2227 = vmul.f32 %v2226, 0.6931472
    %v2228 = vmul.f32 -0.5, %v1427
    %v2229 = vadd.f32 %v2228, 1.0
    %v2230 = vmul.f32 %v2229, %v1427
    %v2231 = vand.u32 2147483647, %v1427
    %vm2232 = vcmp.lt.f32.partialorder %v2231, 0.0004427343
    %v2233 = vsel %vm2232, %v2230, %v2227
    %v2234 = vadd.f32 %v1429, 1.0
    %v2235 = vlog2.pop %v2234
    %v2236 = vmul.f32 %v2235, 0.6931472
    %v2237 = vmul.f32 -0.5, %v1429
    %v2238 = vadd.f32 %v2237, 1.0
    %v2239 = vmul.f32 %v2238, %v1429
    %v2240 = vand.u32 2147483647, %v1429
    %vm2241 = vcmp.lt.f32.partialorder %v2240, 0.0004427343
    %v2242 = vsel %vm2241, %v2239, %v2236
    %v2243 = vadd.f32 %v1431, 1.0
    %v2244 = vlog2.pop %v2243
    %v2245 = vmul.f32 %v2244, 0.6931472
    %v2246 = vmul.f32 -0.5, %v1431
    %v2247 = vadd.f32 %v2246, 1.0
    %v2248 = vmul.f32 %v2247, %v1431
    %v2249 = vand.u32 2147483647, %v1431
    %vm2250 = vcmp.lt.f32.partialorder %v2249, 0.0004427343
    %v2251 = vsel %vm2250, %v2248, %v2245
    %v2252 = vadd.f32 %v1433, 1.0
    %v2253 = vlog2.pop %v2252
    %v2254 = vmul.f32 %v2253, 0.6931472
    %v2255 = vmul.f32 -0.5, %v1433
    %v2256 = vadd.f32 %v2255, 1.0
    %v2257 = vmul.f32 %v2256, %v1433
    %v2258 = vand.u32 2147483647, %v1433
    %vm2259 = vcmp.lt.f32.partialorder %v2258, 0.0004427343
    %v2260 = vsel %vm2259, %v2257, %v2254
    %v2261 = vadd.f32 %v1435, 1.0
    %v2262 = vlog2.pop %v2261
    %v2263 = vmul.f32 %v2262, 0.6931472
    %v2264 = vmul.f32 -0.5, %v1435
    %v2265 = vadd.f32 %v2264, 1.0
    %v2266 = vmul.f32 %v2265, %v1435
    %v2267 = vand.u32 2147483647, %v1435
    %vm2268 = vcmp.lt.f32.partialorder %v2267, 0.0004427343
    %v2269 = vsel %vm2268, %v2266, %v2263
    %v2270 = vadd.f32 %v1437, 1.0
    %v2271 = vlog2.pop %v2270
    %v2272 = vmul.f32 %v2271, 0.6931472
    %v2273 = vmul.f32 -0.5, %v1437
    %v2274 = vadd.f32 %v2273, 1.0
    %v2275 = vmul.f32 %v2274, %v1437
    %v2276 = vand.u32 2147483647, %v1437
    %vm2277 = vcmp.lt.f32.partialorder %v2276, 0.0004427343
    %v2278 = vsel %vm2277, %v2275, %v2272
    %v2279 = vadd.f32 %v1439, 1.0
    %v2280 = vlog2.pop %v2279
    %v2281 = vmul.f32 %v2280, 0.6931472
    %v2282 = vmul.f32 -0.5, %v1439
    %v2283 = vadd.f32 %v2282, 1.0
    %v2284 = vmul.f32 %v2283, %v1439
    %v2285 = vand.u32 2147483647, %v1439
    %vm2286 = vcmp.lt.f32.partialorder %v2285, 0.0004427343
    %v2287 = vsel %vm2286, %v2284, %v2281
    %v2288 = vadd.f32 %v1441, 1.0
    %v2289 = vlog2.pop %v2288
    %v2290 = vmul.f32 %v2289, 0.6931472
    %v2291 = vmul.f32 -0.5, %v1441
    %v2292 = vadd.f32 %v2291, 1.0
    %v2293 = vmul.f32 %v2292, %v1441
    %v2294 = vand.u32 2147483647, %v1441
    %vm2295 = vcmp.lt.f32.partialorder %v2294, 0.0004427343
    %v2296 = vsel %vm2295, %v2293, %v2290
    %v2297 = vadd.f32 %v1443, 1.0
    %v2298 = vlog2.pop %v2297
    %v2299 = vmul.f32 %v2298, 0.6931472
    %v2300 = vmul.f32 -0.5, %v1443
    %v2301 = vadd.f32 %v2300, 1.0
    %v2302 = vmul.f32 %v2301, %v1443
    %v2303 = vand.u32 2147483647, %v1443
    %vm2304 = vcmp.lt.f32.partialorder %v2303, 0.0004427343
    %v2305 = vsel %vm2304, %v2302, %v2299
    %v2306 = vadd.f32 %v1445, 1.0
    %v2307 = vlog2.pop %v2306
    %v2308 = vmul.f32 %v2307, 0.6931472
    %v2309 = vmul.f32 -0.5, %v1445
    %v2310 = vadd.f32 %v2309, 1.0
    %v2311 = vmul.f32 %v2310, %v1445
    %v2312 = vand.u32 2147483647, %v1445
    %vm2313 = vcmp.lt.f32.partialorder %v2312, 0.0004427343
    %v2314 = vsel %vm2313, %v2311, %v2308
    %v2315 = vadd.f32 %v1447, 1.0
    %v2316 = vlog2.pop %v2315
    %v2317 = vmul.f32 %v2316, 0.6931472
    %v2318 = vmul.f32 -0.5, %v1447
    %v2319 = vadd.f32 %v2318, 1.0
    %v2320 = vmul.f32 %v2319, %v1447
    %v2321 = vand.u32 2147483647, %v1447
    %vm2322 = vcmp.lt.f32.partialorder %v2321, 0.0004427343
    %v2323 = vsel %vm2322, %v2320, %v2317
    %v2324 = vadd.f32 %v1449, 1.0
    %v2325 = vlog2.pop %v2324
    %v2326 = vmul.f32 %v2325, 0.6931472
    %v2327 = vmul.f32 -0.5, %v1449
    %v2328 = vadd.f32 %v2327, 1.0
    %v2329 = vmul.f32 %v2328, %v1449
    %v2330 = vand.u32 2147483647, %v1449
    %vm2331 = vcmp.lt.f32.partialorder %v2330, 0.0004427343
    %v2332 = vsel %vm2331, %v2329, %v2326
    %v2333 = vadd.f32 %v1451, 1.0
    %v2334 = vlog2.pop %v2333
    %v2335 = vmul.f32 %v2334, 0.6931472
    %v2336 = vmul.f32 -0.5, %v1451
    %v2337 = vadd.f32 %v2336, 1.0
    %v2338 = vmul.f32 %v2337, %v1451
    %v2339 = vand.u32 2147483647, %v1451
    %vm2340 = vcmp.lt.f32.partialorder %v2339, 0.0004427343
    %v2341 = vsel %vm2340, %v2338, %v2335
    %v2342 = vadd.f32 %v1453, 1.0
    %v2343 = vlog2.pop %v2342
    %v2344 = vmul.f32 %v2343, 0.6931472
    %v2345 = vmul.f32 -0.5, %v1453
    %v2346 = vadd.f32 %v2345, 1.0
    %v2347 = vmul.f32 %v2346, %v1453
    %v2348 = vand.u32 2147483647, %v1453
    %vm2349 = vcmp.lt.f32.partialorder %v2348, 0.0004427343
    %v2350 = vsel %vm2349, %v2347, %v2344
    %v2351 = vadd.f32 %v1455, 1.0
    %v2352 = vlog2.pop %v2351
    %v2353 = vmul.f32 %v2352, 0.6931472
    %v2354 = vmul.f32 -0.5, %v1455
    %v2355 = vadd.f32 %v2354, 1.0
    %v2356 = vmul.f32 %v2355, %v1455
    %v2357 = vand.u32 2147483647, %v1455
    %vm2358 = vcmp.lt.f32.partialorder %v2357, 0.0004427343
    %v2359 = vsel %vm2358, %v2356, %v2353
    %v2360 = vadd.f32 %v1457, 1.0
    %v2361 = vlog2.pop %v2360
    %v2362 = vmul.f32 %v2361, 0.6931472
    %v2363 = vmul.f32 -0.5, %v1457
    %v2364 = vadd.f32 %v2363, 1.0
    %v2365 = vmul.f32 %v2364, %v1457
    %v2366 = vand.u32 2147483647, %v1457
    %vm2367 = vcmp.lt.f32.partialorder %v2366, 0.0004427343
    %v2368 = vsel %vm2367, %v2365, %v2362
    %v2369 = vadd.f32 %v1459, 1.0
    %v2370 = vlog2.pop %v2369
    %v2371 = vmul.f32 %v2370, 0.6931472
    %v2372 = vmul.f32 -0.5, %v1459
    %v2373 = vadd.f32 %v2372, 1.0
    %v2374 = vmul.f32 %v2373, %v1459
    %v2375 = vand.u32 2147483647, %v1459
    %vm2376 = vcmp.lt.f32.partialorder %v2375, 0.0004427343
    %v2377 = vsel %vm2376, %v2374, %v2371
    %v2378 = vadd.f32 %v1461, 1.0
    %v2379 = vlog2.pop %v2378
    %v2380 = vmul.f32 %v2379, 0.6931472
    %v2381 = vmul.f32 -0.5, %v1461
    %v2382 = vadd.f32 %v2381, 1.0
    %v2383 = vmul.f32 %v2382, %v1461
    %v2384 = vand.u32 2147483647, %v1461
    %vm2385 = vcmp.lt.f32.partialorder %v2384, 0.0004427343
    %v2386 = vsel %vm2385, %v2383, %v2380
    %v2387 = vadd.f32 %v1463, 1.0
    %v2388 = vlog2.pop %v2387
    %v2389 = vmul.f32 %v2388, 0.6931472
    %v2390 = vmul.f32 -0.5, %v1463
    %v2391 = vadd.f32 %v2390, 1.0
    %v2392 = vmul.f32 %v2391, %v1463
    %v2393 = vand.u32 2147483647, %v1463
    %vm2394 = vcmp.lt.f32.partialorder %v2393, 0.0004427343
    %v2395 = vsel %vm2394, %v2392, %v2389
    %v2396 = vadd.f32 %v1465, 1.0
    %v2397 = vlog2.pop %v2396
    %v2398 = vmul.f32 %v2397, 0.6931472
    %v2399 = vmul.f32 -0.5, %v1465
    %v2400 = vadd.f32 %v2399, 1.0
    %v2401 = vmul.f32 %v2400, %v1465
    %v2402 = vand.u32 2147483647, %v1465
    %vm2403 = vcmp.lt.f32.partialorder %v2402, 0.0004427343
    %v2404 = vsel %vm2403, %v2401, %v2398
    %v2405 = vadd.f32 %v1467, 1.0
    %v2406 = vlog2.pop %v2405
    %v2407 = vmul.f32 %v2406, 0.6931472
    %v2408 = vmul.f32 -0.5, %v1467
    %v2409 = vadd.f32 %v2408, 1.0
    %v2410 = vmul.f32 %v2409, %v1467
    %v2411 = vand.u32 2147483647, %v1467
    %vm2412 = vcmp.lt.f32.partialorder %v2411, 0.0004427343
    %v2413 = vsel %vm2412, %v2410, %v2407
    %v2414 = vadd.f32 %v1469, 1.0
    %v2415 = vlog2.pop %v2414
    %v2416 = vmul.f32 %v2415, 0.6931472
    %v2417 = vmul.f32 -0.5, %v1469
    %v2418 = vadd.f32 %v2417, 1.0
    %v2419 = vmul.f32 %v2418, %v1469
    %v2420 = vand.u32 2147483647, %v1469
    %vm2421 = vcmp.lt.f32.partialorder %v2420, 0.0004427343
    %v2422 = vsel %vm2421, %v2419, %v2416
    %v2423 = vadd.f32 %v1471, 1.0
    %v2424 = vlog2.pop %v2423
    %v2425 = vmul.f32 %v2424, 0.6931472
    %v2426 = vmul.f32 -0.5, %v1471
    %v2427 = vadd.f32 %v2426, 1.0
    %v2428 = vmul.f32 %v2427, %v1471
    %v2429 = vand.u32 2147483647, %v1471
    %vm2430 = vcmp.lt.f32.partialorder %v2429, 0.0004427343
    %v2431 = vsel %vm2430, %v2428, %v2425
    %v2432 = vadd.f32 %v1473, 1.0
    %v2433 = vlog2.pop %v2432
    %v2434 = vmul.f32 %v2433, 0.6931472
    %v2435 = vmul.f32 -0.5, %v1473
    %v2436 = vadd.f32 %v2435, 1.0
    %v2437 = vmul.f32 %v2436, %v1473
    %v2438 = vand.u32 2147483647, %v1473
    %vm2439 = vcmp.lt.f32.partialorder %v2438, 0.0004427343
    %v2440 = vsel %vm2439, %v2437, %v2434
    %v2441 = vadd.f32 %v1475, 1.0
    %v2442 = vlog2.pop %v2441
    %v2443 = vmul.f32 %v2442, 0.6931472
    %v2444 = vmul.f32 -0.5, %v1475
    %v2445 = vadd.f32 %v2444, 1.0
    %v2446 = vmul.f32 %v2445, %v1475
    %v2447 = vand.u32 2147483647, %v1475
    %vm2448 = vcmp.lt.f32.partialorder %v2447, 0.0004427343
    %v2449 = vsel %vm2448, %v2446, %v2443
    %v2450 = vadd.f32 %v1477, 1.0
    %v2451 = vlog2.pop %v2450
    %v2452 = vmul.f32 %v2451, 0.6931472
    %v2453 = vmul.f32 -0.5, %v1477
    %v2454 = vadd.f32 %v2453, 1.0
    %v2455 = vmul.f32 %v2454, %v1477
    %v2456 = vand.u32 2147483647, %v1477
    %vm2457 = vcmp.lt.f32.partialorder %v2456, 0.0004427343
    %v2458 = vsel %vm2457, %v2455, %v2452
    %v2459 = vadd.f32 %v1479, 1.0
    %v2460 = vlog2.pop %v2459
    %v2461 = vmul.f32 %v2460, 0.6931472
    %v2462 = vmul.f32 -0.5, %v1479
    %v2463 = vadd.f32 %v2462, 1.0
    %v2464 = vmul.f32 %v2463, %v1479
    %v2465 = vand.u32 2147483647, %v1479
    %vm2466 = vcmp.lt.f32.partialorder %v2465, 0.0004427343
    %v2467 = vsel %vm2466, %v2464, %v2461
    %v2468 = vadd.f32 %v1481, 1.0
    %v2469 = vlog2.pop %v2468
    %v2470 = vmul.f32 %v2469, 0.6931472
    %v2471 = vmul.f32 -0.5, %v1481
    %v2472 = vadd.f32 %v2471, 1.0
    %v2473 = vmul.f32 %v2472, %v1481
    %v2474 = vand.u32 2147483647, %v1481
    %vm2475 = vcmp.lt.f32.partialorder %v2474, 0.0004427343
    %v2476 = vsel %vm2475, %v2473, %v2470
    %v2477 = vadd.f32 %v1483, 1.0
    %v2478 = vlog2.pop %v2477
    %v2479 = vmul.f32 %v2478, 0.6931472
    %v2480 = vmul.f32 -0.5, %v1483
    %v2481 = vadd.f32 %v2480, 1.0
    %v2482 = vmul.f32 %v2481, %v1483
    %v2483 = vand.u32 2147483647, %v1483
    %vm2484 = vcmp.lt.f32.partialorder %v2483, 0.0004427343
    %v2485 = vsel %vm2484, %v2482, %v2479
    %v2486 = vadd.f32 %v1485, 1.0
    %v2487 = vlog2.pop %v2486
    %v2488 = vmul.f32 %v2487, 0.6931472
    %v2489 = vmul.f32 -0.5, %v1485
    %v2490 = vadd.f32 %v2489, 1.0
    %v2491 = vmul.f32 %v2490, %v1485
    %v2492 = vand.u32 2147483647, %v1485
    %vm2493 = vcmp.lt.f32.partialorder %v2492, 0.0004427343
    %v2494 = vsel %vm2493, %v2491, %v2488
    %v2495 = vadd.f32 %v1487, 1.0
    %v2496 = vlog2.pop %v2495
    %v2497 = vmul.f32 %v2496, 0.6931472
    %v2498 = vmul.f32 -0.5, %v1487
    %v2499 = vadd.f32 %v2498, 1.0
    %v2500 = vmul.f32 %v2499, %v1487
    %v2501 = vand.u32 2147483647, %v1487
    %vm2502 = vcmp.lt.f32.partialorder %v2501, 0.0004427343
    %v2503 = vsel %vm2502, %v2500, %v2497
    %v2504 = vadd.f32 %v1489, 1.0
    %v2505 = vlog2.pop %v2504
    %v2506 = vmul.f32 %v2505, 0.6931472
    %v2507 = vmul.f32 -0.5, %v1489
    %v2508 = vadd.f32 %v2507, 1.0
    %v2509 = vmul.f32 %v2508, %v1489
    %v2510 = vand.u32 2147483647, %v1489
    %vm2511 = vcmp.lt.f32.partialorder %v2510, 0.0004427343
    %v2512 = vsel %vm2511, %v2509, %v2506
    %v2513 = vadd.f32 %v1491, 1.0
    %v2514 = vlog2.pop %v2513
    %v2515 = vmul.f32 %v2514, 0.6931472
    %v2516 = vmul.f32 -0.5, %v1491
    %v2517 = vadd.f32 %v2516, 1.0
    %v2518 = vmul.f32 %v2517, %v1491
    %v2519 = vand.u32 2147483647, %v1491
    %vm2520 = vcmp.lt.f32.partialorder %v2519, 0.0004427343
    %v2521 = vsel %vm2520, %v2518, %v2515
    %v2522 = vadd.f32 %v1493, 1.0
    %v2523 = vlog2.pop %v2522
    %v2524 = vmul.f32 %v2523, 0.6931472
    %v2525 = vmul.f32 -0.5, %v1493
    %v2526 = vadd.f32 %v2525, 1.0
    %v2527 = vmul.f32 %v2526, %v1493
    %v2528 = vand.u32 2147483647, %v1493
    %vm2529 = vcmp.lt.f32.partialorder %v2528, 0.0004427343
    %v2530 = vsel %vm2529, %v2527, %v2524
    %v2531 = vadd.f32 %v1495, 1.0
    %v2532 = vlog2.pop %v2531
    %v2533 = vmul.f32 %v2532, 0.6931472
    %v2534 = vmul.f32 -0.5, %v1495
    %v2535 = vadd.f32 %v2534, 1.0
    %v2536 = vmul.f32 %v2535, %v1495
    %v2537 = vand.u32 2147483647, %v1495
    %vm2538 = vcmp.lt.f32.partialorder %v2537, 0.0004427343
    %v2539 = vsel %vm2538, %v2536, %v2533
    %v2540 = vadd.f32 %v1497, 1.0
    %v2541 = vlog2.pop %v2540
    %v2542 = vmul.f32 %v2541, 0.6931472
    %v2543 = vmul.f32 -0.5, %v1497
    %v2544 = vadd.f32 %v2543, 1.0
    %v2545 = vmul.f32 %v2544, %v1497
    %v2546 = vand.u32 2147483647, %v1497
    %vm2547 = vcmp.lt.f32.partialorder %v2546, 0.0004427343
    %v2548 = vsel %vm2547, %v2545, %v2542
    %v2549 = vadd.f32 %v1499, 1.0
    %v2550 = vlog2.pop %v2549
    %v2551 = vmul.f32 %v2550, 0.6931472
    %v2552 = vmul.f32 -0.5, %v1499
    %v2553 = vadd.f32 %v2552, 1.0
    %v2554 = vmul.f32 %v2553, %v1499
    %v2555 = vand.u32 2147483647, %v1499
    %vm2556 = vcmp.lt.f32.partialorder %v2555, 0.0004427343
    %v2557 = vsel %vm2556, %v2554, %v2551
    %v2558 = vadd.f32 %v1501, 1.0
    %v2559 = vlog2.pop %v2558
    %v2560 = vmul.f32 %v2559, 0.6931472
    %v2561 = vmul.f32 -0.5, %v1501
    %v2562 = vadd.f32 %v2561, 1.0
    %v2563 = vmul.f32 %v2562, %v1501
    %v2564 = vand.u32 2147483647, %v1501
    %vm2565 = vcmp.lt.f32.partialorder %v2564, 0.0004427343
    %v2566 = vsel %vm2565, %v2563, %v2560
    %v2567 = vadd.f32 %v1503, 1.0
    %v2568 = vlog2.pop %v2567
    %v2569 = vmul.f32 %v2568, 0.6931472
    %v2570 = vmul.f32 -0.5, %v1503
    %v2571 = vadd.f32 %v2570, 1.0
    %v2572 = vmul.f32 %v2571, %v1503
    %v2573 = vand.u32 2147483647, %v1503
    %vm2574 = vcmp.lt.f32.partialorder %v2573, 0.0004427343
    %v2575 = vsel %vm2574, %v2572, %v2569
    %v2576 = vadd.f32 %v1505, 1.0
    %v2577 = vlog2.pop %v2576
    %v2578 = vmul.f32 %v2577, 0.6931472
    %v2579 = vmul.f32 -0.5, %v1505
    %v2580 = vadd.f32 %v2579, 1.0
    %v2581 = vmul.f32 %v2580, %v1505
    %v2582 = vand.u32 2147483647, %v1505
    %vm2583 = vcmp.lt.f32.partialorder %v2582, 0.0004427343
    %v2584 = vsel %vm2583, %v2581, %v2578
    %v2585 = vadd.f32 %v1507, 1.0
    %v2586 = vlog2.pop %v2585
    %v2587 = vmul.f32 %v2586, 0.6931472
    %v2588 = vmul.f32 -0.5, %v1507
    %v2589 = vadd.f32 %v2588, 1.0
    %v2590 = vmul.f32 %v2589, %v1507
    %v2591 = vand.u32 2147483647, %v1507
    %vm2592 = vcmp.lt.f32.partialorder %v2591, 0.0004427343
    %v2593 = vsel %vm2592, %v2590, %v2587
    %v2594 = vadd.f32 %v1509, 1.0
    %v2595 = vlog2.pop %v2594
    %v2596 = vmul.f32 %v2595, 0.6931472
    %v2597 = vmul.f32 -0.5, %v1509
    %v2598 = vadd.f32 %v2597, 1.0
    %v2599 = vmul.f32 %v2598, %v1509
    %v2600 = vand.u32 2147483647, %v1509
    %vm2601 = vcmp.lt.f32.partialorder %v2600, 0.0004427343
    %v2602 = vsel %vm2601, %v2599, %v2596
    %v2603 = vadd.f32 %v1511, 1.0
    %v2604 = vlog2.pop %v2603
    %v2605 = vmul.f32 %v2604, 0.6931472
    %v2606 = vmul.f32 -0.5, %v1511
    %v2607 = vadd.f32 %v2606, 1.0
    %v2608 = vmul.f32 %v2607, %v1511
    %v2609 = vand.u32 2147483647, %v1511
    %vm2610 = vcmp.lt.f32.partialorder %v2609, 0.0004427343
    %v2611 = vsel %vm2610, %v2608, %v2605
    %v2612 = vadd.f32 %v1513, 1.0
    %v2613 = vlog2.pop %v2612
    %v2614 = vmul.f32 %v2613, 0.6931472
    %v2615 = vmul.f32 -0.5, %v1513
    %v2616 = vadd.f32 %v2615, 1.0
    %v2617 = vmul.f32 %v2616, %v1513
    %v2618 = vand.u32 2147483647, %v1513
    %vm2619 = vcmp.lt.f32.partialorder %v2618, 0.0004427343
    %v2620 = vsel %vm2619, %v2617, %v2614
    %v2621 = vadd.f32 %v1515, 1.0
    %v2622 = vlog2.pop %v2621
    %v2623 = vmul.f32 %v2622, 0.6931472
    %v2624 = vmul.f32 -0.5, %v1515
    %v2625 = vadd.f32 %v2624, 1.0
    %v2626 = vmul.f32 %v2625, %v1515
    %v2627 = vand.u32 2147483647, %v1515
    %vm2628 = vcmp.lt.f32.partialorder %v2627, 0.0004427343
    %v2629 = vsel %vm2628, %v2626, %v2623
    %v2630 = vadd.f32 %v1517, 1.0
    %v2631 = vlog2.pop %v2630
    %v2632 = vmul.f32 %v2631, 0.6931472
    %v2633 = vmul.f32 -0.5, %v1517
    %v2634 = vadd.f32 %v2633, 1.0
    %v2635 = vmul.f32 %v2634, %v1517
    %v2636 = vand.u32 2147483647, %v1517
    %vm2637 = vcmp.lt.f32.partialorder %v2636, 0.0004427343
    %v2638 = vsel %vm2637, %v2635, %v2632
    %v2639 = vadd.f32 %v1519, 1.0
    %v2640 = vlog2.pop %v2639
    %v2641 = vmul.f32 %v2640, 0.6931472
    %v2642 = vmul.f32 -0.5, %v1519
    %v2643 = vadd.f32 %v2642, 1.0
    %v2644 = vmul.f32 %v2643, %v1519
    %v2645 = vand.u32 2147483647, %v1519
    %vm2646 = vcmp.lt.f32.partialorder %v2645, 0.0004427343
    %v2647 = vsel %vm2646, %v2644, %v2641
    %v2648 = vadd.f32 %v1521, 1.0
    %v2649 = vlog2.pop %v2648
    %v2650 = vmul.f32 %v2649, 0.6931472
    %v2651 = vmul.f32 -0.5, %v1521
    %v2652 = vadd.f32 %v2651, 1.0
    %v2653 = vmul.f32 %v2652, %v1521
    %v2654 = vand.u32 2147483647, %v1521
    %vm2655 = vcmp.lt.f32.partialorder %v2654, 0.0004427343
    %v2656 = vsel %vm2655, %v2653, %v2650
    %v2657 = vadd.f32 %v1523, 1.0
    %v2658 = vlog2.pop %v2657
    %v2659 = vmul.f32 %v2658, 0.6931472
    %v2660 = vmul.f32 -0.5, %v1523
    %v2661 = vadd.f32 %v2660, 1.0
    %v2662 = vmul.f32 %v2661, %v1523
    %v2663 = vand.u32 2147483647, %v1523
    %vm2664 = vcmp.lt.f32.partialorder %v2663, 0.0004427343
    %v2665 = vsel %vm2664, %v2662, %v2659
    %v2666 = vadd.f32 %v1525, 1.0
    %v2667 = vlog2.pop %v2666
    %v2668 = vmul.f32 %v2667, 0.6931472
    %v2669 = vmul.f32 -0.5, %v1525
    %v2670 = vadd.f32 %v2669, 1.0
    %v2671 = vmul.f32 %v2670, %v1525
    %v2672 = vand.u32 2147483647, %v1525
    %vm2673 = vcmp.lt.f32.partialorder %v2672, 0.0004427343
    %v2674 = vsel %vm2673, %v2671, %v2668
    %v2675 = vadd.f32 %v1527, 1.0
    %v2676 = vlog2.pop %v2675
    %v2677 = vmul.f32 %v2676, 0.6931472
    %v2678 = vmul.f32 -0.5, %v1527
    %v2679 = vadd.f32 %v2678, 1.0
    %v2680 = vmul.f32 %v2679, %v1527
    %v2681 = vand.u32 2147483647, %v1527
    %vm2682 = vcmp.lt.f32.partialorder %v2681, 0.0004427343
    %v2683 = vsel %vm2682, %v2680, %v2677
    %v2684 = vadd.f32 %v1529, 1.0
    %v2685 = vlog2.pop %v2684
    %v2686 = vmul.f32 %v2685, 0.6931472
    %v2687 = vmul.f32 -0.5, %v1529
    %v2688 = vadd.f32 %v2687, 1.0
    %v2689 = vmul.f32 %v2688, %v1529
    %v2690 = vand.u32 2147483647, %v1529
    %vm2691 = vcmp.lt.f32.partialorder %v2690, 0.0004427343
    %v2692 = vsel %vm2691, %v2689, %v2686
    %v2693 = vadd.f32 %v1531, 1.0
    %v2694 = vlog2.pop %v2693
    %v2695 = vmul.f32 %v2694, 0.6931472
    %v2696 = vmul.f32 -0.5, %v1531
    %v2697 = vadd.f32 %v2696, 1.0
    %v2698 = vmul.f32 %v2697, %v1531
    %v2699 = vand.u32 2147483647, %v1531
    %vm2700 = vcmp.lt.f32.partialorder %v2699, 0.0004427343
    %v2701 = vsel %vm2700, %v2698, %v2695
    %v2702 = vadd.f32 %v1533, 1.0
    %v2703 = vlog2.pop %v2702
    %v2704 = vmul.f32 %v2703, 0.6931472
    %v2705 = vmul.f32 -0.5, %v1533
    %v2706 = vadd.f32 %v2705, 1.0
    %v2707 = vmul.f32 %v2706, %v1533
    %v2708 = vand.u32 2147483647, %v1533
    %vm2709 = vcmp.lt.f32.partialorder %v2708, 0.0004427343
    %v2710 = vsel %vm2709, %v2707, %v2704
    %v2711 = vadd.f32 %v1535, 1.0
    %v2712 = vlog2.pop %v2711
    %v2713 = vmul.f32 %v2712, 0.6931472
    %v2714 = vmul.f32 -0.5, %v1535
    %v2715 = vadd.f32 %v2714, 1.0
    %v2716 = vmul.f32 %v2715, %v1535
    %v2717 = vand.u32 2147483647, %v1535
    %vm2718 = vcmp.lt.f32.partialorder %v2717, 0.0004427343
    %v2719 = vsel %vm2718, %v2716, %v2713
    %v2720 = vadd.f32 %v1537, 1.0
    %v2721 = vlog2.pop %v2720
    %v2722 = vmul.f32 %v2721, 0.6931472
    %v2723 = vmul.f32 -0.5, %v1537
    %v2724 = vadd.f32 %v2723, 1.0
    %v2725 = vmul.f32 %v2724, %v1537
    %v2726 = vand.u32 2147483647, %v1537
    %vm2727 = vcmp.lt.f32.partialorder %v2726, 0.0004427343
    %v2728 = vsel %vm2727, %v2725, %v2722
    %v2729 = vadd.f32 %v1539, 1.0
    %v2730 = vlog2.pop %v2729
    %v2731 = vmul.f32 %v2730, 0.6931472
    %v2732 = vmul.f32 -0.5, %v1539
    %v2733 = vadd.f32 %v2732, 1.0
    %v2734 = vmul.f32 %v2733, %v1539
    %v2735 = vand.u32 2147483647, %v1539
    %vm2736 = vcmp.lt.f32.partialorder %v2735, 0.0004427343
    %v2737 = vsel %vm2736, %v2734, %v2731
    %v2738 = vadd.f32 %v1541, 1.0
    %v2739 = vlog2.pop %v2738
    %v2740 = vmul.f32 %v2739, 0.6931472
    %v2741 = vmul.f32 -0.5, %v1541
    %v2742 = vadd.f32 %v2741, 1.0
    %v2743 = vmul.f32 %v2742, %v1541
    %v2744 = vand.u32 2147483647, %v1541
    %vm2745 = vcmp.lt.f32.partialorder %v2744, 0.0004427343
    %v2746 = vsel %vm2745, %v2743, %v2740
    %v2747 = vadd.f32 %v1543, 1.0
    %v2748 = vlog2.pop %v2747
    %v2749 = vmul.f32 %v2748, 0.6931472
    %v2750 = vmul.f32 -0.5, %v1543
    %v2751 = vadd.f32 %v2750, 1.0
    %v2752 = vmul.f32 %v2751, %v1543
    %v2753 = vand.u32 2147483647, %v1543
    %vm2754 = vcmp.lt.f32.partialorder %v2753, 0.0004427343
    %v2755 = vsel %vm2754, %v2752, %v2749
    %v2756 = vadd.f32 %v1545, 1.0
    %v2757 = vlog2.pop %v2756
    %v2758 = vmul.f32 %v2757, 0.6931472
    %v2759 = vmul.f32 -0.5, %v1545
    %v2760 = vadd.f32 %v2759, 1.0
    %v2761 = vmul.f32 %v2760, %v1545
    %v2762 = vand.u32 2147483647, %v1545
    %vm2763 = vcmp.lt.f32.partialorder %v2762, 0.0004427343
    %v2764 = vsel %vm2763, %v2761, %v2758
    %v2765 = vadd.f32 %v1547, 1.0
    %v2766 = vlog2.pop %v2765
    %v2767 = vmul.f32 %v2766, 0.6931472
    %v2768 = vmul.f32 -0.5, %v1547
    %v2769 = vadd.f32 %v2768, 1.0
    %v2770 = vmul.f32 %v2769, %v1547
    %v2771 = vand.u32 2147483647, %v1547
    %vm2772 = vcmp.lt.f32.partialorder %v2771, 0.0004427343
    %v2773 = vsel %vm2772, %v2770, %v2767
    %v2774 = vadd.f32 %v1549, 1.0
    %v2775 = vlog2.pop %v2774
    %v2776 = vmul.f32 %v2775, 0.6931472
    %v2777 = vmul.f32 -0.5, %v1549
    %v2778 = vadd.f32 %v2777, 1.0
    %v2779 = vmul.f32 %v2778, %v1549
    %v2780 = vand.u32 2147483647, %v1549
    %vm2781 = vcmp.lt.f32.partialorder %v2780, 0.0004427343
    %v2782 = vsel %vm2781, %v2779, %v2776
    %v2783 = vadd.f32 %v1551, 1.0
    %v2784 = vlog2.pop %v2783
    %v2785 = vmul.f32 %v2784, 0.6931472
    %v2786 = vmul.f32 -0.5, %v1551
    %v2787 = vadd.f32 %v2786, 1.0
    %v2788 = vmul.f32 %v2787, %v1551
    %v2789 = vand.u32 2147483647, %v1551
    %vm2790 = vcmp.lt.f32.partialorder %v2789, 0.0004427343
    %v2791 = vsel %vm2790, %v2788, %v2785
    %v2792 = vadd.f32 %v1553, 1.0
    %v2793 = vlog2.pop %v2792
    %v2794 = vmul.f32 %v2793, 0.6931472
    %v2795 = vmul.f32 -0.5, %v1553
    %v2796 = vadd.f32 %v2795, 1.0
    %v2797 = vmul.f32 %v2796, %v1553
    %v2798 = vand.u32 2147483647, %v1553
    %vm2799 = vcmp.lt.f32.partialorder %v2798, 0.0004427343
    %v2800 = vsel %vm2799, %v2797, %v2794
    %v2801 = vadd.f32 %v1555, 1.0
    %v2802 = vlog2.pop %v2801
    %v2803 = vmul.f32 %v2802, 0.6931472
    %v2804 = vmul.f32 -0.5, %v1555
    %v2805 = vadd.f32 %v2804, 1.0
    %v2806 = vmul.f32 %v2805, %v1555
    %v2807 = vand.u32 2147483647, %v1555
    %vm2808 = vcmp.lt.f32.partialorder %v2807, 0.0004427343
    %v2809 = vsel %vm2808, %v2806, %v2803
    %v2810 = vadd.f32 %v1557, 1.0
    %v2811 = vlog2.pop %v2810
    %v2812 = vmul.f32 %v2811, 0.6931472
    %v2813 = vmul.f32 -0.5, %v1557
    %v2814 = vadd.f32 %v2813, 1.0
    %v2815 = vmul.f32 %v2814, %v1557
    %v2816 = vand.u32 2147483647, %v1557
    %vm2817 = vcmp.lt.f32.partialorder %v2816, 0.0004427343
    %v2818 = vsel %vm2817, %v2815, %v2812
    %v2819 = vadd.f32 %v1559, 1.0
    %v2820 = vlog2.pop %v2819
    %v2821 = vmul.f32 %v2820, 0.6931472
    %v2822 = vmul.f32 -0.5, %v1559
    %v2823 = vadd.f32 %v2822, 1.0
    %v2824 = vmul.f32 %v2823, %v1559
    %v2825 = vand.u32 2147483647, %v1559
    %vm2826 = vcmp.lt.f32.partialorder %v2825, 0.0004427343
    %v2827 = vsel %vm2826, %v2824, %v2821
    %v2828 = vadd.f32 %v1561, 1.0
    %v2829 = vlog2.pop %v2828
    %v2830 = vmul.f32 %v2829, 0.6931472
    %v2831 = vmul.f32 -0.5, %v1561
    %v2832 = vadd.f32 %v2831, 1.0
    %v2833 = vmul.f32 %v2832, %v1561
    %v2834 = vand.u32 2147483647, %v1561
    %vm2835 = vcmp.lt.f32.partialorder %v2834, 0.0004427343
    %v2836 = vsel %vm2835, %v2833, %v2830
    %v2837 = vadd.f32 %v1563, 1.0
    %v2838 = vlog2.pop %v2837
    %v2839 = vmul.f32 %v2838, 0.6931472
    %v2840 = vmul.f32 -0.5, %v1563
    %v2841 = vadd.f32 %v2840, 1.0
    %v2842 = vmul.f32 %v2841, %v1563
    %v2843 = vand.u32 2147483647, %v1563
    %vm2844 = vcmp.lt.f32.partialorder %v2843, 0.0004427343
    %v2845 = vsel %vm2844, %v2842, %v2839
    %v2846 = vadd.f32 %v1565, 1.0
    %v2847 = vlog2.pop %v2846
    %v2848 = vmul.f32 %v2847, 0.6931472
    %v2849 = vmul.f32 -0.5, %v1565
    %v2850 = vadd.f32 %v2849, 1.0
    %v2851 = vmul.f32 %v2850, %v1565
    %v2852 = vand.u32 2147483647, %v1565
    %vm2853 = vcmp.lt.f32.partialorder %v2852, 0.0004427343
    %v2854 = vsel %vm2853, %v2851, %v2848
    %v2855 = vadd.f32 %v1567, 1.0
    %v2856 = vlog2.pop %v2855
    %v2857 = vmul.f32 %v2856, 0.6931472
    %v2858 = vmul.f32 -0.5, %v1567
    %v2859 = vadd.f32 %v2858, 1.0
    %v2860 = vmul.f32 %v2859, %v1567
    %v2861 = vand.u32 2147483647, %v1567
    %vm2862 = vcmp.lt.f32.partialorder %v2861, 0.0004427343
    %v2863 = vsel %vm2862, %v2860, %v2857
    %v2864 = vadd.f32 %v1569, 1.0
    %v2865 = vlog2.pop %v2864
    %v2866 = vmul.f32 %v2865, 0.6931472
    %v2867 = vmul.f32 -0.5, %v1569
    %v2868 = vadd.f32 %v2867, 1.0
    %v2869 = vmul.f32 %v2868, %v1569
    %v2870 = vand.u32 2147483647, %v1569
    %vm2871 = vcmp.lt.f32.partialorder %v2870, 0.0004427343
    %v2872 = vsel %vm2871, %v2869, %v2866
    %v2873 = vadd.f32 %v1571, 1.0
    %v2874 = vlog2.pop %v2873
    %v2875 = vmul.f32 %v2874, 0.6931472
    %v2876 = vmul.f32 -0.5, %v1571
    %v2877 = vadd.f32 %v2876, 1.0
    %v2878 = vmul.f32 %v2877, %v1571
    %v2879 = vand.u32 2147483647, %v1571
    %vm2880 = vcmp.lt.f32.partialorder %v2879, 0.0004427343
    %v2881 = vsel %vm2880, %v2878, %v2875
    %v2882 = vadd.f32 %v1573, 1.0
    %v2883 = vlog2.pop %v2882
    %v2884 = vmul.f32 %v2883, 0.6931472
    %v2885 = vmul.f32 -0.5, %v1573
    %v2886 = vadd.f32 %v2885, 1.0
    %v2887 = vmul.f32 %v2886, %v1573
    %v2888 = vand.u32 2147483647, %v1573
    %vm2889 = vcmp.lt.f32.partialorder %v2888, 0.0004427343
    %v2890 = vsel %vm2889, %v2887, %v2884
    %v2891 = vadd.f32 %v1575, 1.0
    %v2892 = vlog2.pop %v2891
    %v2893 = vmul.f32 %v2892, 0.6931472
    %v2894 = vmul.f32 -0.5, %v1575
    %v2895 = vadd.f32 %v2894, 1.0
    %v2896 = vmul.f32 %v2895, %v1575
    %v2897 = vand.u32 2147483647, %v1575
    %vm2898 = vcmp.lt.f32.partialorder %v2897, 0.0004427343
    %v2899 = vsel %vm2898, %v2896, %v2893
    %v2900 = vadd.f32 %v1577, 1.0
    %v2901 = vlog2.pop %v2900
    %v2902 = vmul.f32 %v2901, 0.6931472
    %v2903 = vmul.f32 -0.5, %v1577
    %v2904 = vadd.f32 %v2903, 1.0
    %v2905 = vmul.f32 %v2904, %v1577
    %v2906 = vand.u32 2147483647, %v1577
    %vm2907 = vcmp.lt.f32.partialorder %v2906, 0.0004427343
    %v2908 = vsel %vm2907, %v2905, %v2902
    %v2909 = vadd.f32 %v1579, 1.0
    %v2910 = vlog2.pop %v2909
    %v2911 = vmul.f32 %v2910, 0.6931472
    %v2912 = vmul.f32 -0.5, %v1579
    %v2913 = vadd.f32 %v2912, 1.0
    %v2914 = vmul.f32 %v2913, %v1579
    %v2915 = vand.u32 2147483647, %v1579
    %vm2916 = vcmp.lt.f32.partialorder %v2915, 0.0004427343
    %v2917 = vsel %vm2916, %v2914, %v2911
    %v2918 = vadd.f32 %v1581, 1.0
    %v2919 = vlog2.pop %v2918
    %v2920 = vmul.f32 %v2919, 0.6931472
    %v2921 = vmul.f32 -0.5, %v1581
    %v2922 = vadd.f32 %v2921, 1.0
    %v2923 = vmul.f32 %v2922, %v1581
    %v2924 = vand.u32 2147483647, %v1581
    %vm2925 = vcmp.lt.f32.partialorder %v2924, 0.0004427343
    %v2926 = vsel %vm2925, %v2923, %v2920
    %v2927 = vadd.f32 %v1583, 1.0
    %v2928 = vlog2.pop %v2927
    %v2929 = vmul.f32 %v2928, 0.6931472
    %v2930 = vmul.f32 -0.5, %v1583
    %v2931 = vadd.f32 %v2930, 1.0
    %v2932 = vmul.f32 %v2931, %v1583
    %v2933 = vand.u32 2147483647, %v1583
    %vm2934 = vcmp.lt.f32.partialorder %v2933, 0.0004427343
    %v2935 = vsel %vm2934, %v2932, %v2929
    %v2936 = vadd.f32 %v1585, 1.0
    %v2937 = vlog2.pop %v2936
    %v2938 = vmul.f32 %v2937, 0.6931472
    %v2939 = vmul.f32 -0.5, %v1585
    %v2940 = vadd.f32 %v2939, 1.0
    %v2941 = vmul.f32 %v2940, %v1585
    %v2942 = vand.u32 2147483647, %v1585
    %vm2943 = vcmp.lt.f32.partialorder %v2942, 0.0004427343
    %v2944 = vsel %vm2943, %v2941, %v2938
    %v2945 = vadd.f32 %v1587, 1.0
    %v2946 = vlog2.pop %v2945
    %v2947 = vmul.f32 %v2946, 0.6931472
    %v2948 = vmul.f32 -0.5, %v1587
    %v2949 = vadd.f32 %v2948, 1.0
    %v2950 = vmul.f32 %v2949, %v1587
    %v2951 = vand.u32 2147483647, %v1587
    %vm2952 = vcmp.lt.f32.partialorder %v2951, 0.0004427343
    %v2953 = vsel %vm2952, %v2950, %v2947
    %v2954 = vadd.f32 %v1589, 1.0
    %v2955 = vlog2.pop %v2954
    %v2956 = vmul.f32 %v2955, 0.6931472
    %v2957 = vmul.f32 -0.5, %v1589
    %v2958 = vadd.f32 %v2957, 1.0
    %v2959 = vmul.f32 %v2958, %v1589
    %v2960 = vand.u32 2147483647, %v1589
    %vm2961 = vcmp.lt.f32.partialorder %v2960, 0.0004427343
    %v2962 = vsel %vm2961, %v2959, %v2956
    %v2963 = vadd.f32 %v1591, 1.0
    %v2964 = vlog2.pop %v2963
    %v2965 = vmul.f32 %v2964, 0.6931472
    %v2966 = vmul.f32 -0.5, %v1591
    %v2967 = vadd.f32 %v2966, 1.0
    %v2968 = vmul.f32 %v2967, %v1591
    %v2969 = vand.u32 2147483647, %v1591
    %vm2970 = vcmp.lt.f32.partialorder %v2969, 0.0004427343
    %v2971 = vsel %vm2970, %v2968, %v2965
    %v2972 = vadd.f32 %v1593, 1.0
    %v2973 = vlog2.pop %v2972
    %v2974 = vmul.f32 %v2973, 0.6931472
    %v2975 = vmul.f32 -0.5, %v1593
    %v2976 = vadd.f32 %v2975, 1.0
    %v2977 = vmul.f32 %v2976, %v1593
    %v2978 = vand.u32 2147483647, %v1593
    %vm2979 = vcmp.lt.f32.partialorder %v2978, 0.0004427343
    %v2980 = vsel %vm2979, %v2977, %v2974
    %v2981 = vadd.f32 %v1595, 1.0
    %v2982 = vlog2.pop %v2981
    %v2983 = vmul.f32 %v2982, 0.6931472
    %v2984 = vmul.f32 -0.5, %v1595
    %v2985 = vadd.f32 %v2984, 1.0
    %v2986 = vmul.f32 %v2985, %v1595
    %v2987 = vand.u32 2147483647, %v1595
    %vm2988 = vcmp.lt.f32.partialorder %v2987, 0.0004427343
    %v2989 = vsel %vm2988, %v2986, %v2983
    %v2990 = vadd.f32 %v1597, 1.0
    %v2991 = vlog2.pop %v2990
    %v2992 = vmul.f32 %v2991, 0.6931472
    %v2993 = vmul.f32 -0.5, %v1597
    %v2994 = vadd.f32 %v2993, 1.0
    %v2995 = vmul.f32 %v2994, %v1597
    %v2996 = vand.u32 2147483647, %v1597
    %vm2997 = vcmp.lt.f32.partialorder %v2996, 0.0004427343
    %v2998 = vsel %vm2997, %v2995, %v2992
    %v2999 = vadd.f32 %v1599, 1.0
    %v3000 = vlog2.pop %v2999
    %v3001 = vmul.f32 %v3000, 0.6931472
    %v3002 = vmul.f32 -0.5, %v1599
    %v3003 = vadd.f32 %v3002, 1.0
    %v3004 = vmul.f32 %v3003, %v1599
    %v3005 = vand.u32 2147483647, %v1599
    %vm3006 = vcmp.lt.f32.partialorder %v3005, 0.0004427343
    %v3007 = vsel %vm3006, %v3004, %v3001
    %v3008 = vadd.f32 %v1601, 1.0
    %v3009 = vlog2.pop %v3008
    %v3010 = vmul.f32 %v3009, 0.6931472
    %v3011 = vmul.f32 -0.5, %v1601
    %v3012 = vadd.f32 %v3011, 1.0
    %v3013 = vmul.f32 %v3012, %v1601
    %v3014 = vand.u32 2147483647, %v1601
    %vm3015 = vcmp.lt.f32.partialorder %v3014, 0.0004427343
    %v3016 = vsel %vm3015, %v3013, %v3010
    %v3017 = vadd.f32 %v1603, 1.0
    %v3018 = vlog2.pop %v3017
    %v3019 = vmul.f32 %v3018, 0.6931472
    %v3020 = vmul.f32 -0.5, %v1603
    %v3021 = vadd.f32 %v3020, 1.0
    %v3022 = vmul.f32 %v3021, %v1603
    %v3023 = vand.u32 2147483647, %v1603
    %vm3024 = vcmp.lt.f32.partialorder %v3023, 0.0004427343
    %v3025 = vsel %vm3024, %v3022, %v3019
    %v3026 = vadd.f32 %v1605, 1.0
    %v3027 = vlog2.pop %v3026
    %v3028 = vmul.f32 %v3027, 0.6931472
    %v3029 = vmul.f32 -0.5, %v1605
    %v3030 = vadd.f32 %v3029, 1.0
    %v3031 = vmul.f32 %v3030, %v1605
    %v3032 = vand.u32 2147483647, %v1605
    %vm3033 = vcmp.lt.f32.partialorder %v3032, 0.0004427343
    %v3034 = vsel %vm3033, %v3031, %v3028
    %v3035 = vadd.f32 %v1607, 1.0
    %v3036 = vlog2.pop %v3035
    %v3037 = vmul.f32 %v3036, 0.6931472
    %v3038 = vmul.f32 -0.5, %v1607
    %v3039 = vadd.f32 %v3038, 1.0
    %v3040 = vmul.f32 %v3039, %v1607
    %v3041 = vand.u32 2147483647, %v1607
    %vm3042 = vcmp.lt.f32.partialorder %v3041, 0.0004427343
    %v3043 = vsel %vm3042, %v3040, %v3037
    %v3044 = vadd.f32 %v1609, 1.0
    %v3045 = vlog2.pop %v3044
    %v3046 = vmul.f32 %v3045, 0.6931472
    %v3047 = vmul.f32 -0.5, %v1609
    %v3048 = vadd.f32 %v3047, 1.0
    %v3049 = vmul.f32 %v3048, %v1609
    %v3050 = vand.u32 2147483647, %v1609
    %vm3051 = vcmp.lt.f32.partialorder %v3050, 0.0004427343
    %v3052 = vsel %vm3051, %v3049, %v3046
    %v3053 = vadd.f32 %v1611, 1.0
    %v3054 = vlog2.pop %v3053
    %v3055 = vmul.f32 %v3054, 0.6931472
    %v3056 = vmul.f32 -0.5, %v1611
    %v3057 = vadd.f32 %v3056, 1.0
    %v3058 = vmul.f32 %v3057, %v1611
    %v3059 = vand.u32 2147483647, %v1611
    %vm3060 = vcmp.lt.f32.partialorder %v3059, 0.0004427343
    %v3061 = vsel %vm3060, %v3058, %v3055
    %v3062 = vadd.f32 %v1613, 1.0
    %v3063 = vlog2.pop %v3062
    %v3064 = vmul.f32 %v3063, 0.6931472
    %v3065 = vmul.f32 -0.5, %v1613
    %v3066 = vadd.f32 %v3065, 1.0
    %v3067 = vmul.f32 %v3066, %v1613
    %v3068 = vand.u32 2147483647, %v1613
    %vm3069 = vcmp.lt.f32.partialorder %v3068, 0.0004427343
    %v3070 = vsel %vm3069, %v3067, %v3064
    %v3071 = vadd.f32 %v1615, 1.0
    %v3072 = vlog2.pop %v3071
    %v3073 = vmul.f32 %v3072, 0.6931472
    %v3074 = vmul.f32 -0.5, %v1615
    %v3075 = vadd.f32 %v3074, 1.0
    %v3076 = vmul.f32 %v3075, %v1615
    %v3077 = vand.u32 2147483647, %v1615
    %vm3078 = vcmp.lt.f32.partialorder %v3077, 0.0004427343
    %v3079 = vsel %vm3078, %v3076, %v3073
    %v3080 = vadd.f32 %v1617, 1.0
    %v3081 = vlog2.pop %v3080
    %v3082 = vmul.f32 %v3081, 0.6931472
    %v3083 = vmul.f32 -0.5, %v1617
    %v3084 = vadd.f32 %v3083, 1.0
    %v3085 = vmul.f32 %v3084, %v1617
    %v3086 = vand.u32 2147483647, %v1617
    %vm3087 = vcmp.lt.f32.partialorder %v3086, 0.0004427343
    %v3088 = vsel %vm3087, %v3085, %v3082
    %v3089 = vadd.f32 %v1619, 1.0
    %v3090 = vlog2.pop %v3089
    %v3091 = vmul.f32 %v3090, 0.6931472
    %v3092 = vmul.f32 -0.5, %v1619
    %v3093 = vadd.f32 %v3092, 1.0
    %v3094 = vmul.f32 %v3093, %v1619
    %v3095 = vand.u32 2147483647, %v1619
    %vm3096 = vcmp.lt.f32.partialorder %v3095, 0.0004427343
    %v3097 = vsel %vm3096, %v3094, %v3091
    %v3098 = vadd.f32 %v1621, 1.0
    %v3099 = vlog2.pop %v3098
    %v3100 = vmul.f32 %v3099, 0.6931472
    %v3101 = vmul.f32 -0.5, %v1621
    %v3102 = vadd.f32 %v3101, 1.0
    %v3103 = vmul.f32 %v3102, %v1621
    %v3104 = vand.u32 2147483647, %v1621
    %vm3105 = vcmp.lt.f32.partialorder %v3104, 0.0004427343
    %v3106 = vsel %vm3105, %v3103, %v3100
    %v3107 = vadd.f32 %v1623, 1.0
    %v3108 = vlog2.pop %v3107
    %v3109 = vmul.f32 %v3108, 0.6931472
    %v3110 = vmul.f32 -0.5, %v1623
    %v3111 = vadd.f32 %v3110, 1.0
    %v3112 = vmul.f32 %v3111, %v1623
    %v3113 = vand.u32 2147483647, %v1623
    %vm3114 = vcmp.lt.f32.partialorder %v3113, 0.0004427343
    %v3115 = vsel %vm3114, %v3112, %v3109
    %v3116 = vadd.f32 %v1625, 1.0
    %v3117 = vlog2.pop %v3116
    %v3118 = vmul.f32 %v3117, 0.6931472
    %v3119 = vmul.f32 -0.5, %v1625
    %v3120 = vadd.f32 %v3119, 1.0
    %v3121 = vmul.f32 %v3120, %v1625
    %v3122 = vand.u32 2147483647, %v1625
    %vm3123 = vcmp.lt.f32.partialorder %v3122, 0.0004427343
    %v3124 = vsel %vm3123, %v3121, %v3118
    %v3125 = vadd.f32 %v1627, 1.0
    %v3126 = vlog2.pop %v3125
    %v3127 = vmul.f32 %v3126, 0.6931472
    %v3128 = vmul.f32 -0.5, %v1627
    %v3129 = vadd.f32 %v3128, 1.0
    %v3130 = vmul.f32 %v3129, %v1627
    %v3131 = vand.u32 2147483647, %v1627
    %vm3132 = vcmp.lt.f32.partialorder %v3131, 0.0004427343
    %v3133 = vsel %vm3132, %v3130, %v3127
    %v3134 = vadd.f32 %v1629, 1.0
    %v3135 = vlog2.pop %v3134
    %v3136 = vmul.f32 %v3135, 0.6931472
    %v3137 = vmul.f32 -0.5, %v1629
    %v3138 = vadd.f32 %v3137, 1.0
    %v3139 = vmul.f32 %v3138, %v1629
    %v3140 = vand.u32 2147483647, %v1629
    %vm3141 = vcmp.lt.f32.partialorder %v3140, 0.0004427343
    %v3142 = vsel %vm3141, %v3139, %v3136
    %v3143 = vadd.f32 %v1631, 1.0
    %v3144 = vlog2.pop %v3143
    %v3145 = vmul.f32 %v3144, 0.6931472
    %v3146 = vmul.f32 -0.5, %v1631
    %v3147 = vadd.f32 %v3146, 1.0
    %v3148 = vmul.f32 %v3147, %v1631
    %v3149 = vand.u32 2147483647, %v1631
    %vm3150 = vcmp.lt.f32.partialorder %v3149, 0.0004427343
    %v3151 = vsel %vm3150, %v3148, %v3145
    %v3152 = vadd.f32 %v1633, 1.0
    %v3153 = vlog2.pop %v3152
    %v3154 = vmul.f32 %v3153, 0.6931472
    %v3155 = vmul.f32 -0.5, %v1633
    %v3156 = vadd.f32 %v3155, 1.0
    %v3157 = vmul.f32 %v3156, %v1633
    %v3158 = vand.u32 2147483647, %v1633
    %vm3159 = vcmp.lt.f32.partialorder %v3158, 0.0004427343
    %v3160 = vsel %vm3159, %v3157, %v3154
    %v3161 = vadd.f32 %v1635, 1.0
    %v3162 = vlog2.pop %v3161
    %v3163 = vmul.f32 %v3162, 0.6931472
    %v3164 = vmul.f32 -0.5, %v1635
    %v3165 = vadd.f32 %v3164, 1.0
    %v3166 = vmul.f32 %v3165, %v1635
    %v3167 = vand.u32 2147483647, %v1635
    %vm3168 = vcmp.lt.f32.partialorder %v3167, 0.0004427343
    %v3169 = vsel %vm3168, %v3166, %v3163
    %v3170 = vadd.f32 %v1637, 1.0
    %v3171 = vlog2.pop %v3170
    %v3172 = vmul.f32 %v3171, 0.6931472
    %v3173 = vmul.f32 -0.5, %v1637
    %v3174 = vadd.f32 %v3173, 1.0
    %v3175 = vmul.f32 %v3174, %v1637
    %v3176 = vand.u32 2147483647, %v1637
    %vm3177 = vcmp.lt.f32.partialorder %v3176, 0.0004427343
    %v3178 = vsel %vm3177, %v3175, %v3172
    %v3179 = vadd.f32 %v1639, 1.0
    %v3180 = vlog2.pop %v3179
    %v3181 = vmul.f32 %v3180, 0.6931472
    %v3182 = vmul.f32 -0.5, %v1639
    %v3183 = vadd.f32 %v3182, 1.0
    %v3184 = vmul.f32 %v3183, %v1639
    %v3185 = vand.u32 2147483647, %v1639
    %vm3186 = vcmp.lt.f32.partialorder %v3185, 0.0004427343
    %v3187 = vsel %vm3186, %v3184, %v3181
    %v3188 = vadd.f32 %v1641, 1.0
    %v3189 = vlog2.pop %v3188
    %v3190 = vmul.f32 %v3189, 0.6931472
    %v3191 = vmul.f32 -0.5, %v1641
    %v3192 = vadd.f32 %v3191, 1.0
    %v3193 = vmul.f32 %v3192, %v1641
    %v3194 = vand.u32 2147483647, %v1641
    %vm3195 = vcmp.lt.f32.partialorder %v3194, 0.0004427343
    %v3196 = vsel %vm3195, %v3193, %v3190
    %v3197 = vadd.f32 %v1643, 1.0
    %v3198 = vlog2.pop %v3197
    %v3199 = vmul.f32 %v3198, 0.6931472
    %v3200 = vmul.f32 -0.5, %v1643
    %v3201 = vadd.f32 %v3200, 1.0
    %v3202 = vmul.f32 %v3201, %v1643
    %v3203 = vand.u32 2147483647, %v1643
    %vm3204 = vcmp.lt.f32.partialorder %v3203, 0.0004427343
    %v3205 = vsel %vm3204, %v3202, %v3199
    %v3206 = vadd.f32 %v1645, 1.0
    %v3207 = vlog2.pop %v3206
    %v3208 = vmul.f32 %v3207, 0.6931472
    %v3209 = vmul.f32 -0.5, %v1645
    %v3210 = vadd.f32 %v3209, 1.0
    %v3211 = vmul.f32 %v3210, %v1645
    %v3212 = vand.u32 2147483647, %v1645
    %vm3213 = vcmp.lt.f32.partialorder %v3212, 0.0004427343
    %v3214 = vsel %vm3213, %v3211, %v3208
    %v3215 = vadd.f32 %v1647, 1.0
    %v3216 = vlog2.pop %v3215
    %v3217 = vmul.f32 %v3216, 0.6931472
    %v3218 = vmul.f32 -0.5, %v1647
    %v3219 = vadd.f32 %v3218, 1.0
    %v3220 = vmul.f32 %v3219, %v1647
    %v3221 = vand.u32 2147483647, %v1647
    %vm3222 = vcmp.lt.f32.partialorder %v3221, 0.0004427343
    %v3223 = vsel %vm3222, %v3220, %v3217
    %v3224 = vadd.f32 %v1649, 1.0
    %v3225 = vlog2.pop %v3224
    %v3226 = vmul.f32 %v3225, 0.6931472
    %v3227 = vmul.f32 -0.5, %v1649
    %v3228 = vadd.f32 %v3227, 1.0
    %v3229 = vmul.f32 %v3228, %v1649
    %v3230 = vand.u32 2147483647, %v1649
    %vm3231 = vcmp.lt.f32.partialorder %v3230, 0.0004427343
    %v3232 = vsel %vm3231, %v3229, %v3226
    %v3233 = vadd.f32 %v1651, 1.0
    %v3234 = vlog2.pop %v3233
    %v3235 = vmul.f32 %v3234, 0.6931472
    %v3236 = vmul.f32 -0.5, %v1651
    %v3237 = vadd.f32 %v3236, 1.0
    %v3238 = vmul.f32 %v3237, %v1651
    %v3239 = vand.u32 2147483647, %v1651
    %vm3240 = vcmp.lt.f32.partialorder %v3239, 0.0004427343
    %v3241 = vsel %vm3240, %v3238, %v3235
    %v3242 = vadd.f32 %v1653, 1.0
    %v3243 = vlog2.pop %v3242
    %v3244 = vmul.f32 %v3243, 0.6931472
    %v3245 = vmul.f32 -0.5, %v1653
    %v3246 = vadd.f32 %v3245, 1.0
    %v3247 = vmul.f32 %v3246, %v1653
    %v3248 = vand.u32 2147483647, %v1653
    %vm3249 = vcmp.lt.f32.partialorder %v3248, 0.0004427343
    %v3250 = vsel %vm3249, %v3247, %v3244
    %v3251 = vadd.f32 %v1655, 1.0
    %v3252 = vlog2.pop %v3251
    %v3253 = vmul.f32 %v3252, 0.6931472
    %v3254 = vmul.f32 -0.5, %v1655
    %v3255 = vadd.f32 %v3254, 1.0
    %v3256 = vmul.f32 %v3255, %v1655
    %v3257 = vand.u32 2147483647, %v1655
    %vm3258 = vcmp.lt.f32.partialorder %v3257, 0.0004427343
    %v3259 = vsel %vm3258, %v3256, %v3253
    %v3260 = vadd.f32 %v1657, 1.0
    %v3261 = vlog2.pop %v3260
    %v3262 = vmul.f32 %v3261, 0.6931472
    %v3263 = vmul.f32 -0.5, %v1657
    %v3264 = vadd.f32 %v3263, 1.0
    %v3265 = vmul.f32 %v3264, %v1657
    %v3266 = vand.u32 2147483647, %v1657
    %vm3267 = vcmp.lt.f32.partialorder %v3266, 0.0004427343
    %v3268 = vsel %vm3267, %v3265, %v3262
    %v3269 = vadd.f32 %v1659, 1.0
    %v3270 = vlog2.pop %v3269
    %v3271 = vmul.f32 %v3270, 0.6931472
    %v3272 = vmul.f32 -0.5, %v1659
    %v3273 = vadd.f32 %v3272, 1.0
    %v3274 = vmul.f32 %v3273, %v1659
    %v3275 = vand.u32 2147483647, %v1659
    %vm3276 = vcmp.lt.f32.partialorder %v3275, 0.0004427343
    %v3277 = vsel %vm3276, %v3274, %v3271
    %v3278 = vadd.f32 %v1661, 1.0
    %v3279 = vlog2.pop %v3278
    %v3280 = vmul.f32 %v3279, 0.6931472
    %v3281 = vmul.f32 -0.5, %v1661
    %v3282 = vadd.f32 %v3281, 1.0
    %v3283 = vmul.f32 %v3282, %v1661
    %v3284 = vand.u32 2147483647, %v1661
    %vm3285 = vcmp.lt.f32.partialorder %v3284, 0.0004427343
    %v3286 = vsel %vm3285, %v3283, %v3280
    %v3287 = vadd.f32 %v1663, 1.0
    %v3288 = vlog2.pop %v3287
    %v3289 = vmul.f32 %v3288, 0.6931472
    %v3290 = vmul.f32 -0.5, %v1663
    %v3291 = vadd.f32 %v3290, 1.0
    %v3292 = vmul.f32 %v3291, %v1663
    %v3293 = vand.u32 2147483647, %v1663
    %vm3294 = vcmp.lt.f32.partialorder %v3293, 0.0004427343
    %v3295 = vsel %vm3294, %v3292, %v3289
    %v3296 = vadd.f32 %v1665, 1.0
    %v3297 = vlog2.pop %v3296
    %v3298 = vmul.f32 %v3297, 0.6931472
    %v3299 = vmul.f32 -0.5, %v1665
    %v3300 = vadd.f32 %v3299, 1.0
    %v3301 = vmul.f32 %v3300, %v1665
    %v3302 = vand.u32 2147483647, %v1665
    %vm3303 = vcmp.lt.f32.partialorder %v3302, 0.0004427343
    %v3304 = vsel %vm3303, %v3301, %v3298
    %v3305 = vadd.f32 %v1667, 1.0
    %v3306 = vlog2.pop %v3305
    %v3307 = vmul.f32 %v3306, 0.6931472
    %v3308 = vmul.f32 -0.5, %v1667
    %v3309 = vadd.f32 %v3308, 1.0
    %v3310 = vmul.f32 %v3309, %v1667
    %v3311 = vand.u32 2147483647, %v1667
    %vm3312 = vcmp.lt.f32.partialorder %v3311, 0.0004427343
    %v3313 = vsel %vm3312, %v3310, %v3307
    %v3314 = vadd.f32 %v1669, 1.0
    %v3315 = vlog2.pop %v3314
    %v3316 = vmul.f32 %v3315, 0.6931472
    %v3317 = vmul.f32 -0.5, %v1669
    %v3318 = vadd.f32 %v3317, 1.0
    %v3319 = vmul.f32 %v3318, %v1669
    %v3320 = vand.u32 2147483647, %v1669
    %vm3321 = vcmp.lt.f32.partialorder %v3320, 0.0004427343
    %v3322 = vsel %vm3321, %v3319, %v3316
    %v3323 = vadd.f32 %v1671, 1.0
    %v3324 = vlog2.pop %v3323
    %v3325 = vmul.f32 %v3324, 0.6931472
    %v3326 = vmul.f32 -0.5, %v1671
    %v3327 = vadd.f32 %v3326, 1.0
    %v3328 = vmul.f32 %v3327, %v1671
    %v3329 = vand.u32 2147483647, %v1671
    %vm3330 = vcmp.lt.f32.partialorder %v3329, 0.0004427343
    %v3331 = vsel %vm3330, %v3328, %v3325
    %v3332 = vadd.f32 %v1673, 1.0
    %v3333 = vlog2.pop %v3332
    %v3334 = vmul.f32 %v3333, 0.6931472
    %v3335 = vmul.f32 -0.5, %v1673
    %v3336 = vadd.f32 %v3335, 1.0
    %v3337 = vmul.f32 %v3336, %v1673
    %v3338 = vand.u32 2147483647, %v1673
    %vm3339 = vcmp.lt.f32.partialorder %v3338, 0.0004427343
    %v3340 = vsel %vm3339, %v3337, %v3334
    %v3341 = vadd.f32 %v1675, 1.0
    %v3342 = vlog2.pop %v3341
    %v3343 = vmul.f32 %v3342, 0.6931472
    %v3344 = vmul.f32 -0.5, %v1675
    %v3345 = vadd.f32 %v3344, 1.0
    %v3346 = vmul.f32 %v3345, %v1675
    %v3347 = vand.u32 2147483647, %v1675
    %vm3348 = vcmp.lt.f32.partialorder %v3347, 0.0004427343
    %v3349 = vsel %vm3348, %v3346, %v3343
    %v3350 = vadd.f32 %v1677, 1.0
    %v3351 = vlog2.pop %v3350
    %v3352 = vmul.f32 %v3351, 0.6931472
    %v3353 = vmul.f32 -0.5, %v1677
    %v3354 = vadd.f32 %v3353, 1.0
    %v3355 = vmul.f32 %v3354, %v1677
    %v3356 = vand.u32 2147483647, %v1677
    %vm3357 = vcmp.lt.f32.partialorder %v3356, 0.0004427343
    %v3358 = vsel %vm3357, %v3355, %v3352
    %v3359 = vadd.f32 %v1679, 1.0
    %v3360 = vlog2.pop %v3359
    %v3361 = vmul.f32 %v3360, 0.6931472
    %v3362 = vmul.f32 -0.5, %v1679
    %v3363 = vadd.f32 %v3362, 1.0
    %v3364 = vmul.f32 %v3363, %v1679
    %v3365 = vand.u32 2147483647, %v1679
    %vm3366 = vcmp.lt.f32.partialorder %v3365, 0.0004427343
    %v3367 = vsel %vm3366, %v3364, %v3361
    %v3368 = vadd.f32 %v1681, 1.0
    %v3369 = vlog2.pop %v3368
    %v3370 = vmul.f32 %v3369, 0.6931472
    %v3371 = vmul.f32 -0.5, %v1681
    %v3372 = vadd.f32 %v3371, 1.0
    %v3373 = vmul.f32 %v3372, %v1681
    %v3374 = vand.u32 2147483647, %v1681
    %vm3375 = vcmp.lt.f32.partialorder %v3374, 0.0004427343
    %v3376 = vsel %vm3375, %v3373, %v3370
    %v3377 = vadd.f32 %v1683, 1.0
    %v3378 = vlog2.pop %v3377
    %v3379 = vmul.f32 %v3378, 0.6931472
    %v3380 = vmul.f32 -0.5, %v1683
    %v3381 = vadd.f32 %v3380, 1.0
    %v3382 = vmul.f32 %v3381, %v1683
    %v3383 = vand.u32 2147483647, %v1683
    %vm3384 = vcmp.lt.f32.partialorder %v3383, 0.0004427343
    %v3385 = vsel %vm3384, %v3382, %v3379
    %v3386 = vadd.f32 %v1685, 1.0
    %v3387 = vlog2.pop %v3386
    %v3388 = vmul.f32 %v3387, 0.6931472
    %v3389 = vmul.f32 -0.5, %v1685
    %v3390 = vadd.f32 %v3389, 1.0
    %v3391 = vmul.f32 %v3390, %v1685
    %v3392 = vand.u32 2147483647, %v1685
    %vm3393 = vcmp.lt.f32.partialorder %v3392, 0.0004427343
    %v3394 = vsel %vm3393, %v3391, %v3388
    %v3395 = vadd.f32 %v1687, 1.0
    %v3396 = vlog2.pop %v3395
    %v3397 = vmul.f32 %v3396, 0.6931472
    %v3398 = vmul.f32 -0.5, %v1687
    %v3399 = vadd.f32 %v3398, 1.0
    %v3400 = vmul.f32 %v3399, %v1687
    %v3401 = vand.u32 2147483647, %v1687
    %vm3402 = vcmp.lt.f32.partialorder %v3401, 0.0004427343
    %v3403 = vsel %vm3402, %v3400, %v3397
    %v3404 = vadd.f32 %v1689, 1.0
    %v3405 = vlog2.pop %v3404
    %v3406 = vmul.f32 %v3405, 0.6931472
    %v3407 = vmul.f32 -0.5, %v1689
    %v3408 = vadd.f32 %v3407, 1.0
    %v3409 = vmul.f32 %v3408, %v1689
    %v3410 = vand.u32 2147483647, %v1689
    %vm3411 = vcmp.lt.f32.partialorder %v3410, 0.0004427343
    %v3412 = vsel %vm3411, %v3409, %v3406
    %v3413 = vadd.f32 %v1691, 1.0
    %v3414 = vlog2.pop %v3413
    %v3415 = vmul.f32 %v3414, 0.6931472
    %v3416 = vmul.f32 -0.5, %v1691
    %v3417 = vadd.f32 %v3416, 1.0
    %v3418 = vmul.f32 %v3417, %v1691
    %v3419 = vand.u32 2147483647, %v1691
    %vm3420 = vcmp.lt.f32.partialorder %v3419, 0.0004427343
    %v3421 = vsel %vm3420, %v3418, %v3415
    %v3422 = vadd.f32 %v1693, 1.0
    %v3423 = vlog2.pop %v3422
    %v3424 = vmul.f32 %v3423, 0.6931472
    %v3425 = vmul.f32 -0.5, %v1693
    %v3426 = vadd.f32 %v3425, 1.0
    %v3427 = vmul.f32 %v3426, %v1693
    %v3428 = vand.u32 2147483647, %v1693
    %vm3429 = vcmp.lt.f32.partialorder %v3428, 0.0004427343
    %v3430 = vsel %vm3429, %v3427, %v3424
    %v3431 = vadd.f32 %v1695, 1.0
    %v3432 = vlog2.pop %v3431
    %v3433 = vmul.f32 %v3432, 0.6931472
    %v3434 = vmul.f32 -0.5, %v1695
    %v3435 = vadd.f32 %v3434, 1.0
    %v3436 = vmul.f32 %v3435, %v1695
    %v3437 = vand.u32 2147483647, %v1695
    %vm3438 = vcmp.lt.f32.partialorder %v3437, 0.0004427343
    %v3439 = vsel %vm3438, %v3436, %v3433
    %v3440 = vadd.f32 %v1697, 1.0
    %v3441 = vlog2.pop %v3440
    %v3442 = vmul.f32 %v3441, 0.6931472
    %v3443 = vmul.f32 -0.5, %v1697
    %v3444 = vadd.f32 %v3443, 1.0
    %v3445 = vmul.f32 %v3444, %v1697
    %v3446 = vand.u32 2147483647, %v1697
    %vm3447 = vcmp.lt.f32.partialorder %v3446, 0.0004427343
    %v3448 = vsel %vm3447, %v3445, %v3442
    %v3449 = vadd.f32 %v1699, 1.0
    %v3450 = vlog2.pop %v3449
    %v3451 = vmul.f32 %v3450, 0.6931472
    %v3452 = vmul.f32 -0.5, %v1699
    %v3453 = vadd.f32 %v3452, 1.0
    %v3454 = vmul.f32 %v3453, %v1699
    %v3455 = vand.u32 2147483647, %v1699
    %vm3456 = vcmp.lt.f32.partialorder %v3455, 0.0004427343
    %v3457 = vsel %vm3456, %v3454, %v3451
    %v3458 = vadd.f32 %v1701, 1.0
    %v3459 = vlog2.pop %v3458
    %v3460 = vmul.f32 %v3459, 0.6931472
    %v3461 = vmul.f32 -0.5, %v1701
    %v3462 = vadd.f32 %v3461, 1.0
    %v3463 = vmul.f32 %v3462, %v1701
    %v3464 = vand.u32 2147483647, %v1701
    %vm3465 = vcmp.lt.f32.partialorder %v3464, 0.0004427343
    %v3466 = vsel %vm3465, %v3463, %v3460
    %v3467 = vadd.f32 %v1703, 1.0
    %v3468 = vlog2.pop %v3467
    %v3469 = vmul.f32 %v3468, 0.6931472
    %v3470 = vmul.f32 -0.5, %v1703
    %v3471 = vadd.f32 %v3470, 1.0
    %v3472 = vmul.f32 %v3471, %v1703
    %v3473 = vand.u32 2147483647, %v1703
    %vm3474 = vcmp.lt.f32.partialorder %v3473, 0.0004427343
    %v3475 = vsel %vm3474, %v3472, %v3469
    %v3476 = vadd.f32 %v1705, 1.0
    %v3477 = vlog2.pop %v3476
    %v3478 = vmul.f32 %v3477, 0.6931472
    %v3479 = vmul.f32 -0.5, %v1705
    %v3480 = vadd.f32 %v3479, 1.0
    %v3481 = vmul.f32 %v3480, %v1705
    %v3482 = vand.u32 2147483647, %v1705
    %vm3483 = vcmp.lt.f32.partialorder %v3482, 0.0004427343
    %v3484 = vsel %vm3483, %v3481, %v3478
    %v3485 = vadd.f32 %v1707, 1.0
    %v3486 = vlog2.pop %v3485
    %v3487 = vmul.f32 %v3486, 0.6931472
    %v3488 = vmul.f32 -0.5, %v1707
    %v3489 = vadd.f32 %v3488, 1.0
    %v3490 = vmul.f32 %v3489, %v1707
    %v3491 = vand.u32 2147483647, %v1707
    %vm3492 = vcmp.lt.f32.partialorder %v3491, 0.0004427343
    %v3493 = vsel %vm3492, %v3490, %v3487
    %v3494 = vadd.f32 %v1709, 1.0
    %v3495 = vlog2.pop %v3494
    %v3496 = vmul.f32 %v3495, 0.6931472
    %v3497 = vmul.f32 -0.5, %v1709
    %v3498 = vadd.f32 %v3497, 1.0
    %v3499 = vmul.f32 %v3498, %v1709
    %v3500 = vand.u32 2147483647, %v1709
    %vm3501 = vcmp.lt.f32.partialorder %v3500, 0.0004427343
    %v3502 = vsel %vm3501, %v3499, %v3496
    %v3503 = vadd.f32 %v1711, 1.0
    %v3504 = vlog2.pop %v3503
    %v3505 = vmul.f32 %v3504, 0.6931472
    %v3506 = vmul.f32 -0.5, %v1711
    %v3507 = vadd.f32 %v3506, 1.0
    %v3508 = vmul.f32 %v3507, %v1711
    %v3509 = vand.u32 2147483647, %v1711
    %vm3510 = vcmp.lt.f32.partialorder %v3509, 0.0004427343
    %v3511 = vsel %vm3510, %v3508, %v3505
    %v3512 = vadd.f32 %v1713, 1.0
    %v3513 = vlog2.pop %v3512
    %v3514 = vmul.f32 %v3513, 0.6931472
    %v3515 = vmul.f32 -0.5, %v1713
    %v3516 = vadd.f32 %v3515, 1.0
    %v3517 = vmul.f32 %v3516, %v1713
    %v3518 = vand.u32 2147483647, %v1713
    %vm3519 = vcmp.lt.f32.partialorder %v3518, 0.0004427343
    %v3520 = vsel %vm3519, %v3517, %v3514
    %v3521 = vadd.f32 %v1715, 1.0
    %v3522 = vlog2.pop %v3521
    %v3523 = vmul.f32 %v3522, 0.6931472
    %v3524 = vmul.f32 -0.5, %v1715
    %v3525 = vadd.f32 %v3524, 1.0
    %v3526 = vmul.f32 %v3525, %v1715
    %v3527 = vand.u32 2147483647, %v1715
    %vm3528 = vcmp.lt.f32.partialorder %v3527, 0.0004427343
    %v3529 = vsel %vm3528, %v3526, %v3523
    %v3530 = vadd.f32 %v1717, 1.0
    %v3531 = vlog2.pop %v3530
    %v3532 = vmul.f32 %v3531, 0.6931472
    %v3533 = vmul.f32 -0.5, %v1717
    %v3534 = vadd.f32 %v3533, 1.0
    %v3535 = vmul.f32 %v3534, %v1717
    %v3536 = vand.u32 2147483647, %v1717
    %vm3537 = vcmp.lt.f32.partialorder %v3536, 0.0004427343
    %v3538 = vsel %vm3537, %v3535, %v3532
    %v3539 = vadd.f32 %v1719, 1.0
    %v3540 = vlog2.pop %v3539
    %v3541 = vmul.f32 %v3540, 0.6931472
    %v3542 = vmul.f32 -0.5, %v1719
    %v3543 = vadd.f32 %v3542, 1.0
    %v3544 = vmul.f32 %v3543, %v1719
    %v3545 = vand.u32 2147483647, %v1719
    %vm3546 = vcmp.lt.f32.partialorder %v3545, 0.0004427343
    %v3547 = vsel %vm3546, %v3544, %v3541
    %v3548 = vadd.f32 %v1721, 1.0
    %v3549 = vlog2.pop %v3548
    %v3550 = vmul.f32 %v3549, 0.6931472
    %v3551 = vmul.f32 -0.5, %v1721
    %v3552 = vadd.f32 %v3551, 1.0
    %v3553 = vmul.f32 %v3552, %v1721
    %v3554 = vand.u32 2147483647, %v1721
    %vm3555 = vcmp.lt.f32.partialorder %v3554, 0.0004427343
    %v3556 = vsel %vm3555, %v3553, %v3550
    %v3557 = vadd.f32 %v1723, 1.0
    %v3558 = vlog2.pop %v3557
    %v3559 = vmul.f32 %v3558, 0.6931472
    %v3560 = vmul.f32 -0.5, %v1723
    %v3561 = vadd.f32 %v3560, 1.0
    %v3562 = vmul.f32 %v3561, %v1723
    %v3563 = vand.u32 2147483647, %v1723
    %vm3564 = vcmp.lt.f32.partialorder %v3563, 0.0004427343
    %v3565 = vsel %vm3564, %v3562, %v3559
    %v3566 = vadd.f32 %v1725, 1.0
    %v3567 = vlog2.pop %v3566
    %v3568 = vmul.f32 %v3567, 0.6931472
    %v3569 = vmul.f32 -0.5, %v1725
    %v3570 = vadd.f32 %v3569, 1.0
    %v3571 = vmul.f32 %v3570, %v1725
    %v3572 = vand.u32 2147483647, %v1725
    %vm3573 = vcmp.lt.f32.partialorder %v3572, 0.0004427343
    %v3574 = vsel %vm3573, %v3571, %v3568
    %v3575 = vadd.f32 %v1727, 1.0
    %v3576 = vlog2.pop %v3575
    %v3577 = vmul.f32 %v3576, 0.6931472
    %v3578 = vmul.f32 -0.5, %v1727
    %v3579 = vadd.f32 %v3578, 1.0
    %v3580 = vmul.f32 %v3579, %v1727
    %v3581 = vand.u32 2147483647, %v1727
    %vm3582 = vcmp.lt.f32.partialorder %v3581, 0.0004427343
    %v3583 = vsel %vm3582, %v3580, %v3577
    %v3584 = vadd.f32 %v1729, 1.0
    %v3585 = vlog2.pop %v3584
    %v3586 = vmul.f32 %v3585, 0.6931472
    %v3587 = vmul.f32 -0.5, %v1729
    %v3588 = vadd.f32 %v3587, 1.0
    %v3589 = vmul.f32 %v3588, %v1729
    %v3590 = vand.u32 2147483647, %v1729
    %vm3591 = vcmp.lt.f32.partialorder %v3590, 0.0004427343
    %v3592 = vsel %vm3591, %v3589, %v3586
    %v3593 = vadd.f32 %v1731, 1.0
    %v3594 = vlog2.pop %v3593
    %v3595 = vmul.f32 %v3594, 0.6931472
    %v3596 = vmul.f32 -0.5, %v1731
    %v3597 = vadd.f32 %v3596, 1.0
    %v3598 = vmul.f32 %v3597, %v1731
    %v3599 = vand.u32 2147483647, %v1731
    %vm3600 = vcmp.lt.f32.partialorder %v3599, 0.0004427343
    %v3601 = vsel %vm3600, %v3598, %v3595
    %v3602 = vadd.f32 %v1733, 1.0
    %v3603 = vlog2.pop %v3602
    %v3604 = vmul.f32 %v3603, 0.6931472
    %v3605 = vmul.f32 -0.5, %v1733
    %v3606 = vadd.f32 %v3605, 1.0
    %v3607 = vmul.f32 %v3606, %v1733
    %v3608 = vand.u32 2147483647, %v1733
    %vm3609 = vcmp.lt.f32.partialorder %v3608, 0.0004427343
    %v3610 = vsel %vm3609, %v3607, %v3604
    %v3611 = vadd.f32 %v1735, 1.0
    %v3612 = vlog2.pop %v3611
    %v3613 = vmul.f32 %v3612, 0.6931472
    %v3614 = vmul.f32 -0.5, %v1735
    %v3615 = vadd.f32 %v3614, 1.0
    %v3616 = vmul.f32 %v3615, %v1735
    %v3617 = vand.u32 2147483647, %v1735
    %vm3618 = vcmp.lt.f32.partialorder %v3617, 0.0004427343
    %v3619 = vsel %vm3618, %v3616, %v3613
    %v3620 = vadd.f32 %v1737, 1.0
    %v3621 = vlog2.pop %v3620
    %v3622 = vmul.f32 %v3621, 0.6931472
    %v3623 = vmul.f32 -0.5, %v1737
    %v3624 = vadd.f32 %v3623, 1.0
    %v3625 = vmul.f32 %v3624, %v1737
    %v3626 = vand.u32 2147483647, %v1737
    %vm3627 = vcmp.lt.f32.partialorder %v3626, 0.0004427343
    %v3628 = vsel %vm3627, %v3625, %v3622
    %v3629 = vadd.f32 %v1739, 1.0
    %v3630 = vlog2.pop %v3629
    %v3631 = vmul.f32 %v3630, 0.6931472
    %v3632 = vmul.f32 -0.5, %v1739
    %v3633 = vadd.f32 %v3632, 1.0
    %v3634 = vmul.f32 %v3633, %v1739
    %v3635 = vand.u32 2147483647, %v1739
    %vm3636 = vcmp.lt.f32.partialorder %v3635, 0.0004427343
    %v3637 = vsel %vm3636, %v3634, %v3631
    %v3638 = vadd.f32 %v1741, 1.0
    %v3639 = vlog2.pop %v3638
    %v3640 = vmul.f32 %v3639, 0.6931472
    %v3641 = vmul.f32 -0.5, %v1741
    %v3642 = vadd.f32 %v3641, 1.0
    %v3643 = vmul.f32 %v3642, %v1741
    %v3644 = vand.u32 2147483647, %v1741
    %vm3645 = vcmp.lt.f32.partialorder %v3644, 0.0004427343
    %v3646 = vsel %vm3645, %v3643, %v3640
    %v3647 = vadd.f32 %v1743, 1.0
    %v3648 = vlog2.pop %v3647
    %v3649 = vmul.f32 %v3648, 0.6931472
    %v3650 = vmul.f32 -0.5, %v1743
    %v3651 = vadd.f32 %v3650, 1.0
    %v3652 = vmul.f32 %v3651, %v1743
    %v3653 = vand.u32 2147483647, %v1743
    %vm3654 = vcmp.lt.f32.partialorder %v3653, 0.0004427343
    %v3655 = vsel %vm3654, %v3652, %v3649
    %v3656 = vadd.f32 %v1745, 1.0
    %v3657 = vlog2.pop %v3656
    %v3658 = vmul.f32 %v3657, 0.6931472
    %v3659 = vmul.f32 -0.5, %v1745
    %v3660 = vadd.f32 %v3659, 1.0
    %v3661 = vmul.f32 %v3660, %v1745
    %v3662 = vand.u32 2147483647, %v1745
    %vm3663 = vcmp.lt.f32.partialorder %v3662, 0.0004427343
    %v3664 = vsel %vm3663, %v3661, %v3658
    %v3665 = vadd.f32 %v1747, 1.0
    %v3666 = vlog2.pop %v3665
    %v3667 = vmul.f32 %v3666, 0.6931472
    %v3668 = vmul.f32 -0.5, %v1747
    %v3669 = vadd.f32 %v3668, 1.0
    %v3670 = vmul.f32 %v3669, %v1747
    %v3671 = vand.u32 2147483647, %v1747
    %vm3672 = vcmp.lt.f32.partialorder %v3671, 0.0004427343
    %v3673 = vsel %vm3672, %v3670, %v3667
    %v3674 = vadd.f32 %v1749, 1.0
    %v3675 = vlog2.pop %v3674
    %v3676 = vmul.f32 %v3675, 0.6931472
    %v3677 = vmul.f32 -0.5, %v1749
    %v3678 = vadd.f32 %v3677, 1.0
    %v3679 = vmul.f32 %v3678, %v1749
    %v3680 = vand.u32 2147483647, %v1749
    %vm3681 = vcmp.lt.f32.partialorder %v3680, 0.0004427343
    %v3682 = vsel %vm3681, %v3679, %v3676
    %v3683 = vadd.f32 %v1751, 1.0
    %v3684 = vlog2.pop %v3683
    %v3685 = vmul.f32 %v3684, 0.6931472
    %v3686 = vmul.f32 -0.5, %v1751
    %v3687 = vadd.f32 %v3686, 1.0
    %v3688 = vmul.f32 %v3687, %v1751
    %v3689 = vand.u32 2147483647, %v1751
    %vm3690 = vcmp.lt.f32.partialorder %v3689, 0.0004427343
    %v3691 = vsel %vm3690, %v3688, %v3685
    %v3692 = vadd.f32 %v1753, 1.0
    %v3693 = vlog2.pop %v3692
    %v3694 = vmul.f32 %v3693, 0.6931472
    %v3695 = vmul.f32 -0.5, %v1753
    %v3696 = vadd.f32 %v3695, 1.0
    %v3697 = vmul.f32 %v3696, %v1753
    %v3698 = vand.u32 2147483647, %v1753
    %vm3699 = vcmp.lt.f32.partialorder %v3698, 0.0004427343
    %v3700 = vsel %vm3699, %v3697, %v3694
    %v3701 = vadd.f32 %v1755, 1.0
    %v3702 = vlog2.pop %v3701
    %v3703 = vmul.f32 %v3702, 0.6931472
    %v3704 = vmul.f32 -0.5, %v1755
    %v3705 = vadd.f32 %v3704, 1.0
    %v3706 = vmul.f32 %v3705, %v1755
    %v3707 = vand.u32 2147483647, %v1755
    %vm3708 = vcmp.lt.f32.partialorder %v3707, 0.0004427343
    %v3709 = vsel %vm3708, %v3706, %v3703
    %v3710 = vadd.f32 %v1757, 1.0
    %v3711 = vlog2.pop %v3710
    %v3712 = vmul.f32 %v3711, 0.6931472
    %v3713 = vmul.f32 -0.5, %v1757
    %v3714 = vadd.f32 %v3713, 1.0
    %v3715 = vmul.f32 %v3714, %v1757
    %v3716 = vand.u32 2147483647, %v1757
    %vm3717 = vcmp.lt.f32.partialorder %v3716, 0.0004427343
    %v3718 = vsel %vm3717, %v3715, %v3712
    %v3719 = vadd.f32 %v1759, 1.0
    %v3720 = vlog2.pop %v3719
    %v3721 = vmul.f32 %v3720, 0.6931472
    %v3722 = vmul.f32 -0.5, %v1759
    %v3723 = vadd.f32 %v3722, 1.0
    %v3724 = vmul.f32 %v3723, %v1759
    %v3725 = vand.u32 2147483647, %v1759
    %vm3726 = vcmp.lt.f32.partialorder %v3725, 0.0004427343
    %v3727 = vsel %vm3726, %v3724, %v3721
    %v3728 = vadd.f32 %v1761, 1.0
    %v3729 = vlog2.pop %v3728
    %v3730 = vmul.f32 %v3729, 0.6931472
    %v3731 = vmul.f32 -0.5, %v1761
    %v3732 = vadd.f32 %v3731, 1.0
    %v3733 = vmul.f32 %v3732, %v1761
    %v3734 = vand.u32 2147483647, %v1761
    %vm3735 = vcmp.lt.f32.partialorder %v3734, 0.0004427343
    %v3736 = vsel %vm3735, %v3733, %v3730
    %v3737 = vadd.f32 %v1763, 1.0
    %v3738 = vlog2.pop %v3737
    %v3739 = vmul.f32 %v3738, 0.6931472
    %v3740 = vmul.f32 -0.5, %v1763
    %v3741 = vadd.f32 %v3740, 1.0
    %v3742 = vmul.f32 %v3741, %v1763
    %v3743 = vand.u32 2147483647, %v1763
    %vm3744 = vcmp.lt.f32.partialorder %v3743, 0.0004427343
    %v3745 = vsel %vm3744, %v3742, %v3739
    %v3746 = vadd.f32 %v1765, 1.0
    %v3747 = vlog2.pop %v3746
    %v3748 = vmul.f32 %v3747, 0.6931472
    %v3749 = vmul.f32 -0.5, %v1765
    %v3750 = vadd.f32 %v3749, 1.0
    %v3751 = vmul.f32 %v3750, %v1765
    %v3752 = vand.u32 2147483647, %v1765
    %vm3753 = vcmp.lt.f32.partialorder %v3752, 0.0004427343
    %v3754 = vsel %vm3753, %v3751, %v3748
    %v3755 = vadd.f32 %v1767, 1.0
    %v3756 = vlog2.pop %v3755
    %v3757 = vmul.f32 %v3756, 0.6931472
    %v3758 = vmul.f32 -0.5, %v1767
    %v3759 = vadd.f32 %v3758, 1.0
    %v3760 = vmul.f32 %v3759, %v1767
    %v3761 = vand.u32 2147483647, %v1767
    %vm3762 = vcmp.lt.f32.partialorder %v3761, 0.0004427343
    %v3763 = vsel %vm3762, %v3760, %v3757
    %v3764 = vadd.f32 %v1769, 1.0
    %v3765 = vlog2.pop %v3764
    %v3766 = vmul.f32 %v3765, 0.6931472
    %v3767 = vmul.f32 -0.5, %v1769
    %v3768 = vadd.f32 %v3767, 1.0
    %v3769 = vmul.f32 %v3768, %v1769
    %v3770 = vand.u32 2147483647, %v1769
    %vm3771 = vcmp.lt.f32.partialorder %v3770, 0.0004427343
    %v3772 = vsel %vm3771, %v3769, %v3766
    %v3773 = vadd.f32 %v1771, 1.0
    %v3774 = vlog2.pop %v3773
    %v3775 = vmul.f32 %v3774, 0.6931472
    %v3776 = vmul.f32 -0.5, %v1771
    %v3777 = vadd.f32 %v3776, 1.0
    %v3778 = vmul.f32 %v3777, %v1771
    %v3779 = vand.u32 2147483647, %v1771
    %vm3780 = vcmp.lt.f32.partialorder %v3779, 0.0004427343
    %v3781 = vsel %vm3780, %v3778, %v3775
    %v3782 = vadd.f32 %v1773, 1.0
    %v3783 = vlog2.pop %v3782
    %v3784 = vmul.f32 %v3783, 0.6931472
    %v3785 = vmul.f32 -0.5, %v1773
    %v3786 = vadd.f32 %v3785, 1.0
    %v3787 = vmul.f32 %v3786, %v1773
    %v3788 = vand.u32 2147483647, %v1773
    %vm3789 = vcmp.lt.f32.partialorder %v3788, 0.0004427343
    %v3790 = vsel %vm3789, %v3787, %v3784
    %v3791 = vadd.f32 %v1775, 1.0
    %v3792 = vlog2.pop %v3791
    %v3793 = vmul.f32 %v3792, 0.6931472
    %v3794 = vmul.f32 -0.5, %v1775
    %v3795 = vadd.f32 %v3794, 1.0
    %v3796 = vmul.f32 %v3795, %v1775
    %v3797 = vand.u32 2147483647, %v1775
    %vm3798 = vcmp.lt.f32.partialorder %v3797, 0.0004427343
    %v3799 = vsel %vm3798, %v3796, %v3793
    %v3800 = vadd.f32 %v1777, 1.0
    %v3801 = vlog2.pop %v3800
    %v3802 = vmul.f32 %v3801, 0.6931472
    %v3803 = vmul.f32 -0.5, %v1777
    %v3804 = vadd.f32 %v3803, 1.0
    %v3805 = vmul.f32 %v3804, %v1777
    %v3806 = vand.u32 2147483647, %v1777
    %vm3807 = vcmp.lt.f32.partialorder %v3806, 0.0004427343
    %v3808 = vsel %vm3807, %v3805, %v3802
    %v3809 = vadd.f32 %v1779, 1.0
    %v3810 = vlog2.pop %v3809
    %v3811 = vmul.f32 %v3810, 0.6931472
    %v3812 = vmul.f32 -0.5, %v1779
    %v3813 = vadd.f32 %v3812, 1.0
    %v3814 = vmul.f32 %v3813, %v1779
    %v3815 = vand.u32 2147483647, %v1779
    %vm3816 = vcmp.lt.f32.partialorder %v3815, 0.0004427343
    %v3817 = vsel %vm3816, %v3814, %v3811
    %v3818 = vadd.f32 %v1781, 1.0
    %v3819 = vlog2.pop %v3818
    %v3820 = vmul.f32 %v3819, 0.6931472
    %v3821 = vmul.f32 -0.5, %v1781
    %v3822 = vadd.f32 %v3821, 1.0
    %v3823 = vmul.f32 %v3822, %v1781
    %v3824 = vand.u32 2147483647, %v1781
    %vm3825 = vcmp.lt.f32.partialorder %v3824, 0.0004427343
    %v3826 = vsel %vm3825, %v3823, %v3820
    %v3827 = vadd.f32 %v1783, 1.0
    %v3828 = vlog2.pop %v3827
    %v3829 = vmul.f32 %v3828, 0.6931472
    %v3830 = vmul.f32 -0.5, %v1783
    %v3831 = vadd.f32 %v3830, 1.0
    %v3832 = vmul.f32 %v3831, %v1783
    %v3833 = vand.u32 2147483647, %v1783
    %vm3834 = vcmp.lt.f32.partialorder %v3833, 0.0004427343
    %v3835 = vsel %vm3834, %v3832, %v3829
    %v3836 = vadd.f32 %v1785, 1.0
    %v3837 = vlog2.pop %v3836
    %v3838 = vmul.f32 %v3837, 0.6931472
    %v3839 = vmul.f32 -0.5, %v1785
    %v3840 = vadd.f32 %v3839, 1.0
    %v3841 = vmul.f32 %v3840, %v1785
    %v3842 = vand.u32 2147483647, %v1785
    %vm3843 = vcmp.lt.f32.partialorder %v3842, 0.0004427343
    %v3844 = vsel %vm3843, %v3841, %v3838
    %v3845 = vadd.f32 %v1787, 1.0
    %v3846 = vlog2.pop %v3845
    %v3847 = vmul.f32 %v3846, 0.6931472
    %v3848 = vmul.f32 -0.5, %v1787
    %v3849 = vadd.f32 %v3848, 1.0
    %v3850 = vmul.f32 %v3849, %v1787
    %v3851 = vand.u32 2147483647, %v1787
    %vm3852 = vcmp.lt.f32.partialorder %v3851, 0.0004427343
    %v3853 = vsel %vm3852, %v3850, %v3847
    %v3854 = vadd.f32 %v1789, 1.0
    %v3855 = vlog2.pop %v3854
    %v3856 = vmul.f32 %v3855, 0.6931472
    %v3857 = vmul.f32 -0.5, %v1789
    %v3858 = vadd.f32 %v3857, 1.0
    %v3859 = vmul.f32 %v3858, %v1789
    %v3860 = vand.u32 2147483647, %v1789
    %vm3861 = vcmp.lt.f32.partialorder %v3860, 0.0004427343
    %v3862 = vsel %vm3861, %v3859, %v3856
    %v3863 = vadd.f32 %v1791, 1.0
    %v3864 = vlog2.pop %v3863
    %v3865 = vmul.f32 %v3864, 0.6931472
    %v3866 = vmul.f32 -0.5, %v1791
    %v3867 = vadd.f32 %v3866, 1.0
    %v3868 = vmul.f32 %v3867, %v1791
    %v3869 = vand.u32 2147483647, %v1791
    %vm3870 = vcmp.lt.f32.partialorder %v3869, 0.0004427343
    %v3871 = vsel %vm3870, %v3868, %v3865
    %v3872 = vadd.f32 %v1793, 1.0
    %v3873 = vlog2.pop %v3872
    %v3874 = vmul.f32 %v3873, 0.6931472
    %v3875 = vmul.f32 -0.5, %v1793
    %v3876 = vadd.f32 %v3875, 1.0
    %v3877 = vmul.f32 %v3876, %v1793
    %v3878 = vand.u32 2147483647, %v1793
    %vm3879 = vcmp.lt.f32.partialorder %v3878, 0.0004427343
    %v3880 = vsel %vm3879, %v3877, %v3874
    %v3881 = vadd.f32 %v1795, 1.0
    %v3882 = vlog2.pop %v3881
    %v3883 = vmul.f32 %v3882, 0.6931472
    %v3884 = vmul.f32 -0.5, %v1795
    %v3885 = vadd.f32 %v3884, 1.0
    %v3886 = vmul.f32 %v3885, %v1795
    %v3887 = vand.u32 2147483647, %v1795
    %vm3888 = vcmp.lt.f32.partialorder %v3887, 0.0004427343
    %v3889 = vsel %vm3888, %v3886, %v3883
    %v3890 = vadd.f32 %v1797, 1.0
    %v3891 = vlog2.pop %v3890
    %v3892 = vmul.f32 %v3891, 0.6931472
    %v3893 = vmul.f32 -0.5, %v1797
    %v3894 = vadd.f32 %v3893, 1.0
    %v3895 = vmul.f32 %v3894, %v1797
    %v3896 = vand.u32 2147483647, %v1797
    %vm3897 = vcmp.lt.f32.partialorder %v3896, 0.0004427343
    %v3898 = vsel %vm3897, %v3895, %v3892
    %v3899 = vadd.f32 %v1799, 1.0
    %v3900 = vlog2.pop %v3899
    %v3901 = vmul.f32 %v3900, 0.6931472
    %v3902 = vmul.f32 -0.5, %v1799
    %v3903 = vadd.f32 %v3902, 1.0
    %v3904 = vmul.f32 %v3903, %v1799
    %v3905 = vand.u32 2147483647, %v1799
    %vm3906 = vcmp.lt.f32.partialorder %v3905, 0.0004427343
    %v3907 = vsel %vm3906, %v3904, %v3901
    %v3908 = vadd.f32 %v1801, 1.0
    %v3909 = vlog2.pop %v3908
    %v3910 = vmul.f32 %v3909, 0.6931472
    %v3911 = vmul.f32 -0.5, %v1801
    %v3912 = vadd.f32 %v3911, 1.0
    %v3913 = vmul.f32 %v3912, %v1801
    %v3914 = vand.u32 2147483647, %v1801
    %vm3915 = vcmp.lt.f32.partialorder %v3914, 0.0004427343
    %v3916 = vsel %vm3915, %v3913, %v3910
    %v3917 = vadd.f32 %v1803, 1.0
    %v3918 = vlog2.pop %v3917
    %v3919 = vmul.f32 %v3918, 0.6931472
    %v3920 = vmul.f32 -0.5, %v1803
    %v3921 = vadd.f32 %v3920, 1.0
    %v3922 = vmul.f32 %v3921, %v1803
    %v3923 = vand.u32 2147483647, %v1803
    %vm3924 = vcmp.lt.f32.partialorder %v3923, 0.0004427343
    %v3925 = vsel %vm3924, %v3922, %v3919
    %v3926 = vadd.f32 %v1805, 1.0
    %v3927 = vlog2.pop %v3926
    %v3928 = vmul.f32 %v3927, 0.6931472
    %v3929 = vmul.f32 -0.5, %v1805
    %v3930 = vadd.f32 %v3929, 1.0
    %v3931 = vmul.f32 %v3930, %v1805
    %v3932 = vand.u32 2147483647, %v1805
    %vm3933 = vcmp.lt.f32.partialorder %v3932, 0.0004427343
    %v3934 = vsel %vm3933, %v3931, %v3928
    %v3935 = vadd.f32 %v1807, 1.0
    %v3936 = vlog2.pop %v3935
    %v3937 = vmul.f32 %v3936, 0.6931472
    %v3938 = vmul.f32 -0.5, %v1807
    %v3939 = vadd.f32 %v3938, 1.0
    %v3940 = vmul.f32 %v3939, %v1807
    %v3941 = vand.u32 2147483647, %v1807
    %vm3942 = vcmp.lt.f32.partialorder %v3941, 0.0004427343
    %v3943 = vsel %vm3942, %v3940, %v3937
    %v3944 = vadd.f32 %v1809, 1.0
    %v3945 = vlog2.pop %v3944
    %v3946 = vmul.f32 %v3945, 0.6931472
    %v3947 = vmul.f32 -0.5, %v1809
    %v3948 = vadd.f32 %v3947, 1.0
    %v3949 = vmul.f32 %v3948, %v1809
    %v3950 = vand.u32 2147483647, %v1809
    %vm3951 = vcmp.lt.f32.partialorder %v3950, 0.0004427343
    %v3952 = vsel %vm3951, %v3949, %v3946
    %v3953 = vadd.f32 %v1811, 1.0
    %v3954 = vlog2.pop %v3953
    %v3955 = vmul.f32 %v3954, 0.6931472
    %v3956 = vmul.f32 -0.5, %v1811
    %v3957 = vadd.f32 %v3956, 1.0
    %v3958 = vmul.f32 %v3957, %v1811
    %v3959 = vand.u32 2147483647, %v1811
    %vm3960 = vcmp.lt.f32.partialorder %v3959, 0.0004427343
    %v3961 = vsel %vm3960, %v3958, %v3955
    %v3962 = vadd.f32 %v1813, 1.0
    %v3963 = vlog2.pop %v3962
    %v3964 = vmul.f32 %v3963, 0.6931472
    %v3965 = vmul.f32 -0.5, %v1813
    %v3966 = vadd.f32 %v3965, 1.0
    %v3967 = vmul.f32 %v3966, %v1813
    %v3968 = vand.u32 2147483647, %v1813
    %vm3969 = vcmp.lt.f32.partialorder %v3968, 0.0004427343
    %v3970 = vsel %vm3969, %v3967, %v3964
    %v3971 = vadd.f32 %v1815, 1.0
    %v3972 = vlog2.pop %v3971
    %v3973 = vmul.f32 %v3972, 0.6931472
    %v3974 = vmul.f32 -0.5, %v1815
    %v3975 = vadd.f32 %v3974, 1.0
    %v3976 = vmul.f32 %v3975, %v1815
    %v3977 = vand.u32 2147483647, %v1815
    %vm3978 = vcmp.lt.f32.partialorder %v3977, 0.0004427343
    %v3979 = vsel %vm3978, %v3976, %v3973
    %v3980 = vadd.f32 %v1817, 1.0
    %v3981 = vlog2.pop %v3980
    %v3982 = vmul.f32 %v3981, 0.6931472
    %v3983 = vmul.f32 -0.5, %v1817
    %v3984 = vadd.f32 %v3983, 1.0
    %v3985 = vmul.f32 %v3984, %v1817
    %v3986 = vand.u32 2147483647, %v1817
    %vm3987 = vcmp.lt.f32.partialorder %v3986, 0.0004427343
    %v3988 = vsel %vm3987, %v3985, %v3982
    %v3989 = vadd.f32 %v1819, 1.0
    %v3990 = vlog2.pop %v3989
    %v3991 = vmul.f32 %v3990, 0.6931472
    %v3992 = vmul.f32 -0.5, %v1819
    %v3993 = vadd.f32 %v3992, 1.0
    %v3994 = vmul.f32 %v3993, %v1819
    %v3995 = vand.u32 2147483647, %v1819
    %vm3996 = vcmp.lt.f32.partialorder %v3995, 0.0004427343
    %v3997 = vsel %vm3996, %v3994, %v3991
    %v3998 = vadd.f32 %v1821, 1.0
    %v3999 = vlog2.pop %v3998
    %v4000 = vmul.f32 %v3999, 0.6931472
    %v4001 = vmul.f32 -0.5, %v1821
    %v4002 = vadd.f32 %v4001, 1.0
    %v4003 = vmul.f32 %v4002, %v1821
    %v4004 = vand.u32 2147483647, %v1821
    %vm4005 = vcmp.lt.f32.partialorder %v4004, 0.0004427343
    %v4006 = vsel %vm4005, %v4003, %v4000
    %v4007 = vadd.f32 %v1823, 1.0
    %v4008 = vlog2.pop %v4007
    %v4009 = vmul.f32 %v4008, 0.6931472
    %v4010 = vmul.f32 -0.5, %v1823
    %v4011 = vadd.f32 %v4010, 1.0
    %v4012 = vmul.f32 %v4011, %v1823
    %v4013 = vand.u32 2147483647, %v1823
    %vm4014 = vcmp.lt.f32.partialorder %v4013, 0.0004427343
    %v4015 = vsel %vm4014, %v4012, %v4009
    %v4016 = vadd.f32 %v1825, 1.0
    %v4017 = vlog2.pop %v4016
    %v4018 = vmul.f32 %v4017, 0.6931472
    %v4019 = vmul.f32 -0.5, %v1825
    %v4020 = vadd.f32 %v4019, 1.0
    %v4021 = vmul.f32 %v4020, %v1825
    %v4022 = vand.u32 2147483647, %v1825
    %vm4023 = vcmp.lt.f32.partialorder %v4022, 0.0004427343
    %v4024 = vsel %vm4023, %v4021, %v4018
    %v4025 = vadd.f32 %v1827, 1.0
    %v4026 = vlog2.pop %v4025
    %v4027 = vmul.f32 %v4026, 0.6931472
    %v4028 = vmul.f32 -0.5, %v1827
    %v4029 = vadd.f32 %v4028, 1.0
    %v4030 = vmul.f32 %v4029, %v1827
    %v4031 = vand.u32 2147483647, %v1827
    %vm4032 = vcmp.lt.f32.partialorder %v4031, 0.0004427343
    %v4033 = vsel %vm4032, %v4030, %v4027
    %v4034 = vadd.f32 %v1829, 1.0
    %v4035 = vlog2.pop %v4034
    %v4036 = vmul.f32 %v4035, 0.6931472
    %v4037 = vmul.f32 -0.5, %v1829
    %v4038 = vadd.f32 %v4037, 1.0
    %v4039 = vmul.f32 %v4038, %v1829
    %v4040 = vand.u32 2147483647, %v1829
    %vm4041 = vcmp.lt.f32.partialorder %v4040, 0.0004427343
    %v4042 = vsel %vm4041, %v4039, %v4036
    %v4043 = vadd.f32 %v1831, 1.0
    %v4044 = vlog2.pop %v4043
    %v4045 = vmul.f32 %v4044, 0.6931472
    %v4046 = vmul.f32 -0.5, %v1831
    %v4047 = vadd.f32 %v4046, 1.0
    %v4048 = vmul.f32 %v4047, %v1831
    %v4049 = vand.u32 2147483647, %v1831
    %vm4050 = vcmp.lt.f32.partialorder %v4049, 0.0004427343
    %v4051 = vsel %vm4050, %v4048, %v4045
    %v4052 = vadd.f32 %v1833, 1.0
    %v4053 = vlog2.pop %v4052
    %v4054 = vmul.f32 %v4053, 0.6931472
    %v4055 = vmul.f32 -0.5, %v1833
    %v4056 = vadd.f32 %v4055, 1.0
    %v4057 = vmul.f32 %v4056, %v1833
    %v4058 = vand.u32 2147483647, %v1833
    %vm4059 = vcmp.lt.f32.partialorder %v4058, 0.0004427343
    %v4060 = vsel %vm4059, %v4057, %v4054
    %v4061 = vadd.f32 %v1835, 1.0
    %v4062 = vlog2.pop %v4061
    %v4063 = vmul.f32 %v4062, 0.6931472
    %v4064 = vmul.f32 -0.5, %v1835
    %v4065 = vadd.f32 %v4064, 1.0
    %v4066 = vmul.f32 %v4065, %v1835
    %v4067 = vand.u32 2147483647, %v1835
    %vm4068 = vcmp.lt.f32.partialorder %v4067, 0.0004427343
    %v4069 = vsel %vm4068, %v4066, %v4063
    %v4070 = vadd.f32 %v1837, 1.0
    %v4071 = vlog2.pop %v4070
    %v4072 = vmul.f32 %v4071, 0.6931472
    %v4073 = vmul.f32 -0.5, %v1837
    %v4074 = vadd.f32 %v4073, 1.0
    %v4075 = vmul.f32 %v4074, %v1837
    %v4076 = vand.u32 2147483647, %v1837
    %vm4077 = vcmp.lt.f32.partialorder %v4076, 0.0004427343
    %v4078 = vsel %vm4077, %v4075, %v4072
    %v4079 = vadd.f32 %v1839, 1.0
    %v4080 = vlog2.pop %v4079
    %v4081 = vmul.f32 %v4080, 0.6931472
    %v4082 = vmul.f32 -0.5, %v1839
    %v4083 = vadd.f32 %v4082, 1.0
    %v4084 = vmul.f32 %v4083, %v1839
    %v4085 = vand.u32 2147483647, %v1839
    %vm4086 = vcmp.lt.f32.partialorder %v4085, 0.0004427343
    %v4087 = vsel %vm4086, %v4084, %v4081
    %v4088 = vadd.f32 %v1841, 1.0
    %v4089 = vlog2.pop %v4088
    %v4090 = vmul.f32 %v4089, 0.6931472
    %v4091 = vmul.f32 -0.5, %v1841
    %v4092 = vadd.f32 %v4091, 1.0
    %v4093 = vmul.f32 %v4092, %v1841
    %v4094 = vand.u32 2147483647, %v1841
    %vm4095 = vcmp.lt.f32.partialorder %v4094, 0.0004427343
    %v4096 = vsel %vm4095, %v4093, %v4090
    %v4097 = vadd.f32 %v1843, 1.0
    %v4098 = vlog2.pop %v4097
    %v4099 = vmul.f32 %v4098, 0.6931472
    %v4100 = vmul.f32 -0.5, %v1843
    %v4101 = vadd.f32 %v4100, 1.0
    %v4102 = vmul.f32 %v4101, %v1843
    %v4103 = vand.u32 2147483647, %v1843
    %vm4104 = vcmp.lt.f32.partialorder %v4103, 0.0004427343
    %v4105 = vsel %vm4104, %v4102, %v4099
    %v4106 = vadd.f32 %v1845, 1.0
    %v4107 = vlog2.pop %v4106
    %v4108 = vmul.f32 %v4107, 0.6931472
    %v4109 = vmul.f32 -0.5, %v1845
    %v4110 = vadd.f32 %v4109, 1.0
    %v4111 = vmul.f32 %v4110, %v1845
    %v4112 = vand.u32 2147483647, %v1845
    %vm4113 = vcmp.lt.f32.partialorder %v4112, 0.0004427343
    %v4114 = vsel %vm4113, %v4111, %v4108
    %v4115 = vadd.f32 %v1847, 1.0
    %v4116 = vlog2.pop %v4115
    %v4117 = vmul.f32 %v4116, 0.6931472
    %v4118 = vmul.f32 -0.5, %v1847
    %v4119 = vadd.f32 %v4118, 1.0
    %v4120 = vmul.f32 %v4119, %v1847
    %v4121 = vand.u32 2147483647, %v1847
    %vm4122 = vcmp.lt.f32.partialorder %v4121, 0.0004427343
    %v4123 = vsel %vm4122, %v4120, %v4117
    %v4124 = vadd.f32 %v1849, 1.0
    %v4125 = vlog2.pop %v4124
    %v4126 = vmul.f32 %v4125, 0.6931472
    %v4127 = vmul.f32 -0.5, %v1849
    %v4128 = vadd.f32 %v4127, 1.0
    %v4129 = vmul.f32 %v4128, %v1849
    %v4130 = vand.u32 2147483647, %v1849
    %vm4131 = vcmp.lt.f32.partialorder %v4130, 0.0004427343
    %v4132 = vsel %vm4131, %v4129, %v4126
    %v4133 = vadd.f32 %v1851, 1.0
    %v4134 = vlog2.pop %v4133
    %v4135 = vmul.f32 %v4134, 0.6931472
    %v4136 = vmul.f32 -0.5, %v1851
    %v4137 = vadd.f32 %v4136, 1.0
    %v4138 = vmul.f32 %v4137, %v1851
    %v4139 = vand.u32 2147483647, %v1851
    %vm4140 = vcmp.lt.f32.partialorder %v4139, 0.0004427343
    %v4141 = vsel %vm4140, %v4138, %v4135
    %v4142 = vadd.f32 %v1853, 1.0
    %v4143 = vlog2.pop %v4142
    %v4144 = vmul.f32 %v4143, 0.6931472
    %v4145 = vmul.f32 -0.5, %v1853
    %v4146 = vadd.f32 %v4145, 1.0
    %v4147 = vmul.f32 %v4146, %v1853
    %v4148 = vand.u32 2147483647, %v1853
    %vm4149 = vcmp.lt.f32.partialorder %v4148, 0.0004427343
    %v4150 = vsel %vm4149, %v4147, %v4144
    %v4151 = vadd.f32 %v1855, 1.0
    %v4152 = vlog2.pop %v4151
    %v4153 = vmul.f32 %v4152, 0.6931472
    %v4154 = vmul.f32 -0.5, %v1855
    %v4155 = vadd.f32 %v4154, 1.0
    %v4156 = vmul.f32 %v4155, %v1855
    %v4157 = vand.u32 2147483647, %v1855
    %vm4158 = vcmp.lt.f32.partialorder %v4157, 0.0004427343
    %v4159 = vsel %vm4158, %v4156, %v4153
    %v4160 = vadd.f32 %v832, %v1864
    %v4161 = vadd.f32 %v833, %v1873
    %v4162 = vadd.f32 %v834, %v1882
    %v4163 = vadd.f32 %v835, %v1891
    %v4164 = vadd.f32 %v836, %v1900
    %v4165 = vadd.f32 %v837, %v1909
    %v4166 = vadd.f32 %v838, %v1918
    %v4167 = vadd.f32 %v839, %v1927
    %v4168 = vadd.f32 %v840, %v1936
    %v4169 = vadd.f32 %v841, %v1945
    %v4170 = vadd.f32 %v842, %v1954
    %v4171 = vadd.f32 %v843, %v1963
    %v4172 = vadd.f32 %v844, %v1972
    %v4173 = vadd.f32 %v845, %v1981
    %v4174 = vadd.f32 %v846, %v1990
    %v4175 = vadd.f32 %v847, %v1999
    %v4176 = vadd.f32 %v848, %v2008
    %v4177 = vadd.f32 %v849, %v2017
    %v4178 = vadd.f32 %v850, %v2026
    %v4179 = vadd.f32 %v851, %v2035
    %v4180 = vadd.f32 %v852, %v2044
    %v4181 = vadd.f32 %v853, %v2053
    %v4182 = vadd.f32 %v854, %v2062
    %v4183 = vadd.f32 %v855, %v2071
    %v4184 = vadd.f32 %v856, %v2080
    %v4185 = vadd.f32 %v857, %v2089
    %v4186 = vadd.f32 %v858, %v2098
    %v4187 = vadd.f32 %v859, %v2107
    %v4188 = vadd.f32 %v860, %v2116
    %v4189 = vadd.f32 %v861, %v2125
    %v4190 = vadd.f32 %v862, %v2134
    %v4191 = vadd.f32 %v863, %v2143
    %v4192 = vadd.f32 %v864, %v2152
    %v4193 = vadd.f32 %v865, %v2161
    %v4194 = vadd.f32 %v866, %v2170
    %v4195 = vadd.f32 %v867, %v2179
    %v4196 = vadd.f32 %v868, %v2188
    %v4197 = vadd.f32 %v869, %v2197
    %v4198 = vadd.f32 %v870, %v2206
    %v4199 = vadd.f32 %v871, %v2215
    %v4200 = vadd.f32 %v872, %v2224
    %v4201 = vadd.f32 %v873, %v2233
    %v4202 = vadd.f32 %v874, %v2242
    %v4203 = vadd.f32 %v875, %v2251
    %v4204 = vadd.f32 %v876, %v2260
    %v4205 = vadd.f32 %v877, %v2269
    %v4206 = vadd.f32 %v878, %v2278
    %v4207 = vadd.f32 %v879, %v2287
    %v4208 = vadd.f32 %v880, %v2296
    %v4209 = vadd.f32 %v881, %v2305
    %v4210 = vadd.f32 %v882, %v2314
    %v4211 = vadd.f32 %v883, %v2323
    %v4212 = vadd.f32 %v884, %v2332
    %v4213 = vadd.f32 %v885, %v2341
    %v4214 = vadd.f32 %v886, %v2350
    %v4215 = vadd.f32 %v887, %v2359
    %v4216 = vadd.f32 %v888, %v2368
    %v4217 = vadd.f32 %v889, %v2377
    %v4218 = vadd.f32 %v890, %v2386
    %v4219 = vadd.f32 %v891, %v2395
    %v4220 = vadd.f32 %v892, %v2404
    %v4221 = vadd.f32 %v893, %v2413
    %v4222 = vadd.f32 %v894, %v2422
    %v4223 = vadd.f32 %v895, %v2431
    %v4224 = vadd.f32 %v896, %v2440
    %v4225 = vadd.f32 %v897, %v2449
    %v4226 = vadd.f32 %v898, %v2458
    %v4227 = vadd.f32 %v899, %v2467
    %v4228 = vadd.f32 %v900, %v2476
    %v4229 = vadd.f32 %v901, %v2485
    %v4230 = vadd.f32 %v902, %v2494
    %v4231 = vadd.f32 %v903, %v2503
    %v4232 = vadd.f32 %v904, %v2512
    %v4233 = vadd.f32 %v905, %v2521
    %v4234 = vadd.f32 %v906, %v2530
    %v4235 = vadd.f32 %v907, %v2539
    %v4236 = vadd.f32 %v908, %v2548
    %v4237 = vadd.f32 %v909, %v2557
    %v4238 = vadd.f32 %v910, %v2566
    %v4239 = vadd.f32 %v911, %v2575
    %v4240 = vadd.f32 %v912, %v2584
    %v4241 = vadd.f32 %v913, %v2593
    %v4242 = vadd.f32 %v914, %v2602
    %v4243 = vadd.f32 %v915, %v2611
    %v4244 = vadd.f32 %v916, %v2620
    %v4245 = vadd.f32 %v917, %v2629
    %v4246 = vadd.f32 %v918, %v2638
    %v4247 = vadd.f32 %v919, %v2647
    %v4248 = vadd.f32 %v920, %v2656
    %v4249 = vadd.f32 %v921, %v2665
    %v4250 = vadd.f32 %v922, %v2674
    %v4251 = vadd.f32 %v923, %v2683
    %v4252 = vadd.f32 %v924, %v2692
    %v4253 = vadd.f32 %v925, %v2701
    %v4254 = vadd.f32 %v926, %v2710
    %v4255 = vadd.f32 %v927, %v2719
    %v4256 = vadd.f32 %v928, %v2728
    %v4257 = vadd.f32 %v929, %v2737
    %v4258 = vadd.f32 %v930, %v2746
    %v4259 = vadd.f32 %v931, %v2755
    %v4260 = vadd.f32 %v932, %v2764
    %v4261 = vadd.f32 %v933, %v2773
    %v4262 = vadd.f32 %v934, %v2782
    %v4263 = vadd.f32 %v935, %v2791
    %v4264 = vadd.f32 %v936, %v2800
    %v4265 = vadd.f32 %v937, %v2809
    %v4266 = vadd.f32 %v938, %v2818
    %v4267 = vadd.f32 %v939, %v2827
    %v4268 = vadd.f32 %v940, %v2836
    %v4269 = vadd.f32 %v941, %v2845
    %v4270 = vadd.f32 %v942, %v2854
    %v4271 = vadd.f32 %v943, %v2863
    %v4272 = vadd.f32 %v944, %v2872
    %v4273 = vadd.f32 %v945, %v2881
    %v4274 = vadd.f32 %v946, %v2890
    %v4275 = vadd.f32 %v947, %v2899
    %v4276 = vadd.f32 %v948, %v2908
    %v4277 = vadd.f32 %v949, %v2917
    %v4278 = vadd.f32 %v950, %v2926
    %v4279 = vadd.f32 %v951, %v2935
    %v4280 = vadd.f32 %v952, %v2944
    %v4281 = vadd.f32 %v953, %v2953
    %v4282 = vadd.f32 %v954, %v2962
    %v4283 = vadd.f32 %v955, %v2971
    %v4284 = vadd.f32 %v956, %v2980
    %v4285 = vadd.f32 %v957, %v2989
    %v4286 = vadd.f32 %v958, %v2998
    %v4287 = vadd.f32 %v959, %v3007
    %v4288 = vadd.f32 %v960, %v3016
    %v4289 = vadd.f32 %v961, %v3025
    %v4290 = vadd.f32 %v962, %v3034
    %v4291 = vadd.f32 %v963, %v3043
    %v4292 = vadd.f32 %v964, %v3052
    %v4293 = vadd.f32 %v965, %v3061
    %v4294 = vadd.f32 %v966, %v3070
    %v4295 = vadd.f32 %v967, %v3079
    %v4296 = vadd.f32 %v968, %v3088
    %v4297 = vadd.f32 %v969, %v3097
    %v4298 = vadd.f32 %v970, %v3106
    %v4299 = vadd.f32 %v971, %v3115
    %v4300 = vadd.f32 %v972, %v3124
    %v4301 = vadd.f32 %v973, %v3133
    %v4302 = vadd.f32 %v974, %v3142
    %v4303 = vadd.f32 %v975, %v3151
    %v4304 = vadd.f32 %v976, %v3160
    %v4305 = vadd.f32 %v977, %v3169
    %v4306 = vadd.f32 %v978, %v3178
    %v4307 = vadd.f32 %v979, %v3187
    %v4308 = vadd.f32 %v980, %v3196
    %v4309 = vadd.f32 %v981, %v3205
    %v4310 = vadd.f32 %v982, %v3214
    %v4311 = vadd.f32 %v983, %v3223
    %v4312 = vadd.f32 %v984, %v3232
    %v4313 = vadd.f32 %v985, %v3241
    %v4314 = vadd.f32 %v986, %v3250
    %v4315 = vadd.f32 %v987, %v3259
    %v4316 = vadd.f32 %v988, %v3268
    %v4317 = vadd.f32 %v989, %v3277
    %v4318 = vadd.f32 %v990, %v3286
    %v4319 = vadd.f32 %v991, %v3295
    %v4320 = vadd.f32 %v992, %v3304
    %v4321 = vadd.f32 %v993, %v3313
    %v4322 = vadd.f32 %v994, %v3322
    %v4323 = vadd.f32 %v995, %v3331
    %v4324 = vadd.f32 %v996, %v3340
    %v4325 = vadd.f32 %v997, %v3349
    %v4326 = vadd.f32 %v998, %v3358
    %v4327 = vadd.f32 %v999, %v3367
    %v4328 = vadd.f32 %v1000, %v3376
    %v4329 = vadd.f32 %v1001, %v3385
    %v4330 = vadd.f32 %v1002, %v3394
    %v4331 = vadd.f32 %v1003, %v3403
    %v4332 = vadd.f32 %v1004, %v3412
    %v4333 = vadd.f32 %v1005, %v3421
    %v4334 = vadd.f32 %v1006, %v3430
    %v4335 = vadd.f32 %v1007, %v3439
    %v4336 = vadd.f32 %v1008, %v3448
    %v4337 = vadd.f32 %v1009, %v3457
    %v4338 = vadd.f32 %v1010, %v3466
    %v4339 = vadd.f32 %v1011, %v3475
    %v4340 = vadd.f32 %v1012, %v3484
    %v4341 = vadd.f32 %v1013, %v3493
    %v4342 = vadd.f32 %v1014, %v3502
    %v4343 = vadd.f32 %v1015, %v3511
    %v4344 = vadd.f32 %v1016, %v3520
    %v4345 = vadd.f32 %v1017, %v3529
    %v4346 = vadd.f32 %v1018, %v3538
    %v4347 = vadd.f32 %v1019, %v3547
    %v4348 = vadd.f32 %v1020, %v3556
    %v4349 = vadd.f32 %v1021, %v3565
    %v4350 = vadd.f32 %v1022, %v3574
    %v4351 = vadd.f32 %v1023, %v3583
    %v4352 = vadd.f32 %v1024, %v3592
    %v4353 = vadd.f32 %v1025, %v3601
    %v4354 = vadd.f32 %v1026, %v3610
    %v4355 = vadd.f32 %v1027, %v3619
    %v4356 = vadd.f32 %v1028, %v3628
    %v4357 = vadd.f32 %v1029, %v3637
    %v4358 = vadd.f32 %v1030, %v3646
    %v4359 = vadd.f32 %v1031, %v3655
    %v4360 = vadd.f32 %v1032, %v3664
    %v4361 = vadd.f32 %v1033, %v3673
    %v4362 = vadd.f32 %v1034, %v3682
    %v4363 = vadd.f32 %v1035, %v3691
    %v4364 = vadd.f32 %v1036, %v3700
    %v4365 = vadd.f32 %v1037, %v3709
    %v4366 = vadd.f32 %v1038, %v3718
    %v4367 = vadd.f32 %v1039, %v3727
    %v4368 = vadd.f32 %v1040, %v3736
    %v4369 = vadd.f32 %v1041, %v3745
    %v4370 = vadd.f32 %v1042, %v3754
    %v4371 = vadd.f32 %v1043, %v3763
    %v4372 = vadd.f32 %v1044, %v3772
    %v4373 = vadd.f32 %v1045, %v3781
    %v4374 = vadd.f32 %v1046, %v3790
    %v4375 = vadd.f32 %v1047, %v3799
    %v4376 = vadd.f32 %v1048, %v3808
    %v4377 = vadd.f32 %v1049, %v3817
    %v4378 = vadd.f32 %v1050, %v3826
    %v4379 = vadd.f32 %v1051, %v3835
    %v4380 = vadd.f32 %v1052, %v3844
    %v4381 = vadd.f32 %v1053, %v3853
    %v4382 = vadd.f32 %v1054, %v3862
    %v4383 = vadd.f32 %v1055, %v3871
    %v4384 = vadd.f32 %v1056, %v3880
    %v4385 = vadd.f32 %v1057, %v3889
    %v4386 = vadd.f32 %v1058, %v3898
    %v4387 = vadd.f32 %v1059, %v3907
    %v4388 = vadd.f32 %v1060, %v3916
    %v4389 = vadd.f32 %v1061, %v3925
    %v4390 = vadd.f32 %v1062, %v3934
    %v4391 = vadd.f32 %v1063, %v3943
    %v4392 = vadd.f32 %v1064, %v3952
    %v4393 = vadd.f32 %v1065, %v3961
    %v4394 = vadd.f32 %v1066, %v3970
    %v4395 = vadd.f32 %v1067, %v3979
    %v4396 = vadd.f32 %v1068, %v3988
    %v4397 = vadd.f32 %v1069, %v3997
    %v4398 = vadd.f32 %v1070, %v4006
    %v4399 = vadd.f32 %v1071, %v4015
    %v4400 = vadd.f32 %v1072, %v4024
    %v4401 = vadd.f32 %v1073, %v4033
    %v4402 = vadd.f32 %v1074, %v4042
    %v4403 = vadd.f32 %v1075, %v4051
    %v4404 = vadd.f32 %v1076, %v4060
    %v4405 = vadd.f32 %v1077, %v4069
    %v4406 = vadd.f32 %v1078, %v4078
    %v4407 = vadd.f32 %v1079, %v4087
    %v4408 = vadd.f32 %v1080, %v4096
    %v4409 = vadd.f32 %v1081, %v4105
    %v4410 = vadd.f32 %v1082, %v4114
    %v4411 = vadd.f32 %v1083, %v4123
    %v4412 = vadd.f32 %v1084, %v4132
    %v4413 = vadd.f32 %v1085, %v4141
    %v4414 = vadd.f32 %v1086, %v4150
    %v4415 = vadd.f32 %v1087, %v4159
    // Predicated region
    $region14: #{_pu_loss_device.1} parent=12 // pred_check
      %p4416 = pneg %p52
    $region15: #{_pu_loss_device.1} parent=12 // pred_check_branch
      %4418 = sbr.rel (%p4416) target = $region17
    $region16: #{_pu_loss_device.1} parent=12 // pred_region
      %v4419 = vld [vmem:[%s2 + $0x10] sm:$0xff]
      %v4420 = vadd.f32 %v4160, %v4161
      %v4421 = vadd.f32 %v4420, %v4162
      %v4422 = vadd.f32 %v4421, %v4163
      %v4423 = vadd.f32 %v4422, %v4164
      %v4424 = vadd.f32 %v4423, %v4165
      %v4425 = vadd.f32 %v4424, %v4166
      %v4426 = vadd.f32 %v4425, %v4167
      %v4427 = vadd.f32 %v4426, %v4168
      %v4428 = vadd.f32 %v4427, %v4169
      %v4429 = vadd.f32 %v4428, %v4170
      %v4430 = vadd.f32 %v4429, %v4171
      %v4431 = vadd.f32 %v4430, %v4172
      %v4432 = vadd.f32 %v4431, %v4173
      %v4433 = vadd.f32 %v4432, %v4174
      %v4434 = vadd.f32 %v4433, %v4175
      %v4435 = vadd.f32 %v4434, %v4176
      %v4436 = vadd.f32 %v4435, %v4177
      %v4437 = vadd.f32 %v4436, %v4178
      %v4438 = vadd.f32 %v4437, %v4179
      %v4439 = vadd.f32 %v4438, %v4180
      %v4440 = vadd.f32 %v4439, %v4181
      %v4441 = vadd.f32 %v4440, %v4182
      %v4442 = vadd.f32 %v4441, %v4183
      %v4443 = vadd.f32 %v4442, %v4184
      %v4444 = vadd.f32 %v4443, %v4185
      %v4445 = vadd.f32 %v4444, %v4186
      %v4446 = vadd.f32 %v4445, %v4187
      %v4447 = vadd.f32 %v4446, %v4188
      %v4448 = vadd.f32 %v4447, %v4189
      %v4449 = vadd.f32 %v4448, %v4190
      %v4450 = vadd.f32 %v4449, %v4191
      %v4451 = vadd.f32 %v4450, %v4192
      %v4452 = vadd.f32 %v4451, %v4193
      %v4453 = vadd.f32 %v4452, %v4194
      %v4454 = vadd.f32 %v4453, %v4195
      %v4455 = vadd.f32 %v4454, %v4196
      %v4456 = vadd.f32 %v4455, %v4197
      %v4457 = vadd.f32 %v4456, %v4198
      %v4458 = vadd.f32 %v4457, %v4199
      %v4459 = vadd.f32 %v4458, %v4200
      %v4460 = vadd.f32 %v4459, %v4201
      %v4461 = vadd.f32 %v4460, %v4202
      %v4462 = vadd.f32 %v4461, %v4203
      %v4463 = vadd.f32 %v4462, %v4204
      %v4464 = vadd.f32 %v4463, %v4205
      %v4465 = vadd.f32 %v4464, %v4206
      %v4466 = vadd.f32 %v4465, %v4207
      %v4467 = vadd.f32 %v4466, %v4208
      %v4468 = vadd.f32 %v4467, %v4209
      %v4469 = vadd.f32 %v4468, %v4210
      %v4470 = vadd.f32 %v4469, %v4211
      %v4471 = vadd.f32 %v4470, %v4212
      %v4472 = vadd.f32 %v4471, %v4213
      %v4473 = vadd.f32 %v4472, %v4214
      %v4474 = vadd.f32 %v4473, %v4215
      %v4475 = vadd.f32 %v4474, %v4216
      %v4476 = vadd.f32 %v4475, %v4217
      %v4477 = vadd.f32 %v4476, %v4218
      %v4478 = vadd.f32 %v4477, %v4219
      %v4479 = vadd.f32 %v4478, %v4220
      %v4480 = vadd.f32 %v4479, %v4221
      %v4481 = vadd.f32 %v4480, %v4222
      %v4482 = vadd.f32 %v4481, %v4223
      %v4483 = vadd.f32 %v4482, %v4224
      %v4484 = vadd.f32 %v4483, %v4225
      %v4485 = vadd.f32 %v4484, %v4226
      %v4486 = vadd.f32 %v4485, %v4227
      %v4487 = vadd.f32 %v4486, %v4228
      %v4488 = vadd.f32 %v4487, %v4229
      %v4489 = vadd.f32 %v4488, %v4230
      %v4490 = vadd.f32 %v4489, %v4231
      %v4491 = vadd.f32 %v4490, %v4232
      %v4492 = vadd.f32 %v4491, %v4233
      %v4493 = vadd.f32 %v4492, %v4234
      %v4494 = vadd.f32 %v4493, %v4235
      %v4495 = vadd.f32 %v4494, %v4236
      %v4496 = vadd.f32 %v4495, %v4237
      %v4497 = vadd.f32 %v4496, %v4238
      %v4498 = vadd.f32 %v4497, %v4239
      %v4499 = vadd.f32 %v4498, %v4240
      %v4500 = vadd.f32 %v4499, %v4241
      %v4501 = vadd.f32 %v4500, %v4242
      %v4502 = vadd.f32 %v4501, %v4243
      %v4503 = vadd.f32 %v4502, %v4244
      %v4504 = vadd.f32 %v4503, %v4245
      %v4505 = vadd.f32 %v4504, %v4246
      %v4506 = vadd.f32 %v4505, %v4247
      %v4507 = vadd.f32 %v4506, %v4248
      %v4508 = vadd.f32 %v4507, %v4249
      %v4509 = vadd.f32 %v4508, %v4250
      %v4510 = vadd.f32 %v4509, %v4251
      %v4511 = vadd.f32 %v4510, %v4252
      %v4512 = vadd.f32 %v4511, %v4253
      %v4513 = vadd.f32 %v4512, %v4254
      %v4514 = vadd.f32 %v4513, %v4255
      %v4515 = vadd.f32 %v4514, %v4256
      %v4516 = vadd.f32 %v4515, %v4257
      %v4517 = vadd.f32 %v4516, %v4258
      %v4518 = vadd.f32 %v4517, %v4259
      %v4519 = vadd.f32 %v4518, %v4260
      %v4520 = vadd.f32 %v4519, %v4261
      %v4521 = vadd.f32 %v4520, %v4262
      %v4522 = vadd.f32 %v4521, %v4263
      %v4523 = vadd.f32 %v4522, %v4264
      %v4524 = vadd.f32 %v4523, %v4265
      %v4525 = vadd.f32 %v4524, %v4266
      %v4526 = vadd.f32 %v4525, %v4267
      %v4527 = vadd.f32 %v4526, %v4268
      %v4528 = vadd.f32 %v4527, %v4269
      %v4529 = vadd.f32 %v4528, %v4270
      %v4530 = vadd.f32 %v4529, %v4271
      %v4531 = vadd.f32 %v4530, %v4272
      %v4532 = vadd.f32 %v4531, %v4273
      %v4533 = vadd.f32 %v4532, %v4274
      %v4534 = vadd.f32 %v4533, %v4275
      %v4535 = vadd.f32 %v4534, %v4276
      %v4536 = vadd.f32 %v4535, %v4277
      %v4537 = vadd.f32 %v4536, %v4278
      %v4538 = vadd.f32 %v4537, %v4279
      %v4539 = vadd.f32 %v4538, %v4280
      %v4540 = vadd.f32 %v4539, %v4281
      %v4541 = vadd.f32 %v4540, %v4282
      %v4542 = vadd.f32 %v4541, %v4283
      %v4543 = vadd.f32 %v4542, %v4284
      %v4544 = vadd.f32 %v4543, %v4285
      %v4545 = vadd.f32 %v4544, %v4286
      %v4546 = vadd.f32 %v4545, %v4287
      %v4547 = vadd.f32 %v4546, %v4288
      %v4548 = vadd.f32 %v4547, %v4289
      %v4549 = vadd.f32 %v4548, %v4290
      %v4550 = vadd.f32 %v4549, %v4291
      %v4551 = vadd.f32 %v4550, %v4292
      %v4552 = vadd.f32 %v4551, %v4293
      %v4553 = vadd.f32 %v4552, %v4294
      %v4554 = vadd.f32 %v4553, %v4295
      %v4555 = vadd.f32 %v4554, %v4296
      %v4556 = vadd.f32 %v4555, %v4297
      %v4557 = vadd.f32 %v4556, %v4298
      %v4558 = vadd.f32 %v4557, %v4299
      %v4559 = vadd.f32 %v4558, %v4300
      %v4560 = vadd.f32 %v4559, %v4301
      %v4561 = vadd.f32 %v4560, %v4302
      %v4562 = vadd.f32 %v4561, %v4303
      %v4563 = vadd.f32 %v4562, %v4304
      %v4564 = vadd.f32 %v4563, %v4305
      %v4565 = vadd.f32 %v4564, %v4306
      %v4566 = vadd.f32 %v4565, %v4307
      %v4567 = vadd.f32 %v4566, %v4308
      %v4568 = vadd.f32 %v4567, %v4309
      %v4569 = vadd.f32 %v4568, %v4310
      %v4570 = vadd.f32 %v4569, %v4311
      %v4571 = vadd.f32 %v4570, %v4312
      %v4572 = vadd.f32 %v4571, %v4313
      %v4573 = vadd.f32 %v4572, %v4314
      %v4574 = vadd.f32 %v4573, %v4315
      %v4575 = vadd.f32 %v4574, %v4316
      %v4576 = vadd.f32 %v4575, %v4317
      %v4577 = vadd.f32 %v4576, %v4318
      %v4578 = vadd.f32 %v4577, %v4319
      %v4579 = vadd.f32 %v4578, %v4320
      %v4580 = vadd.f32 %v4579, %v4321
      %v4581 = vadd.f32 %v4580, %v4322
      %v4582 = vadd.f32 %v4581, %v4323
      %v4583 = vadd.f32 %v4582, %v4324
      %v4584 = vadd.f32 %v4583, %v4325
      %v4585 = vadd.f32 %v4584, %v4326
      %v4586 = vadd.f32 %v4585, %v4327
      %v4587 = vadd.f32 %v4586, %v4328
      %v4588 = vadd.f32 %v4587, %v4329
      %v4589 = vadd.f32 %v4588, %v4330
      %v4590 = vadd.f32 %v4589, %v4331
      %v4591 = vadd.f32 %v4590, %v4332
      %v4592 = vadd.f32 %v4591, %v4333
      %v4593 = vadd.f32 %v4592, %v4334
      %v4594 = vadd.f32 %v4593, %v4335
      %v4595 = vadd.f32 %v4594, %v4336
      %v4596 = vadd.f32 %v4595, %v4337
      %v4597 = vadd.f32 %v4596, %v4338
      %v4598 = vadd.f32 %v4597, %v4339
      %v4599 = vadd.f32 %v4598, %v4340
      %v4600 = vadd.f32 %v4599, %v4341
      %v4601 = vadd.f32 %v4600, %v4342
      %v4602 = vadd.f32 %v4601, %v4343
      %v4603 = vadd.f32 %v4602, %v4344
      %v4604 = vadd.f32 %v4603, %v4345
      %v4605 = vadd.f32 %v4604, %v4346
      %v4606 = vadd.f32 %v4605, %v4347
      %v4607 = vadd.f32 %v4606, %v4348
      %v4608 = vadd.f32 %v4607, %v4349
      %v4609 = vadd.f32 %v4608, %v4350
      %v4610 = vadd.f32 %v4609, %v4351
      %v4611 = vadd.f32 %v4610, %v4352
      %v4612 = vadd.f32 %v4611, %v4353
      %v4613 = vadd.f32 %v4612, %v4354
      %v4614 = vadd.f32 %v4613, %v4355
      %v4615 = vadd.f32 %v4614, %v4356
      %v4616 = vadd.f32 %v4615, %v4357
      %v4617 = vadd.f32 %v4616, %v4358
      %v4618 = vadd.f32 %v4617, %v4359
      %v4619 = vadd.f32 %v4618, %v4360
      %v4620 = vadd.f32 %v4619, %v4361
      %v4621 = vadd.f32 %v4620, %v4362
      %v4622 = vadd.f32 %v4621, %v4363
      %v4623 = vadd.f32 %v4622, %v4364
      %v4624 = vadd.f32 %v4623, %v4365
      %v4625 = vadd.f32 %v4624, %v4366
      %v4626 = vadd.f32 %v4625, %v4367
      %v4627 = vadd.f32 %v4626, %v4368
      %v4628 = vadd.f32 %v4627, %v4369
      %v4629 = vadd.f32 %v4628, %v4370
      %v4630 = vadd.f32 %v4629, %v4371
      %v4631 = vadd.f32 %v4630, %v4372
      %v4632 = vadd.f32 %v4631, %v4373
      %v4633 = vadd.f32 %v4632, %v4374
      %v4634 = vadd.f32 %v4633, %v4375
      %v4635 = vadd.f32 %v4634, %v4376
      %v4636 = vadd.f32 %v4635, %v4377
      %v4637 = vadd.f32 %v4636, %v4378
      %v4638 = vadd.f32 %v4637, %v4379
      %v4639 = vadd.f32 %v4638, %v4380
      %v4640 = vadd.f32 %v4639, %v4381
      %v4641 = vadd.f32 %v4640, %v4382
      %v4642 = vadd.f32 %v4641, %v4383
      %v4643 = vadd.f32 %v4642, %v4384
      %v4644 = vadd.f32 %v4643, %v4385
      %v4645 = vadd.f32 %v4644, %v4386
      %v4646 = vadd.f32 %v4645, %v4387
      %v4647 = vadd.f32 %v4646, %v4388
      %v4648 = vadd.f32 %v4647, %v4389
      %v4649 = vadd.f32 %v4648, %v4390
      %v4650 = vadd.f32 %v4649, %v4391
      %v4651 = vadd.f32 %v4650, %v4392
      %v4652 = vadd.f32 %v4651, %v4393
      %v4653 = vadd.f32 %v4652, %v4394
      %v4654 = vadd.f32 %v4653, %v4395
      %v4655 = vadd.f32 %v4654, %v4396
      %v4656 = vadd.f32 %v4655, %v4397
      %v4657 = vadd.f32 %v4656, %v4398
      %v4658 = vadd.f32 %v4657, %v4399
      %v4659 = vadd.f32 %v4658, %v4400
      %v4660 = vadd.f32 %v4659, %v4401
      %v4661 = vadd.f32 %v4660, %v4402
      %v4662 = vadd.f32 %v4661, %v4403
      %v4663 = vadd.f32 %v4662, %v4404
      %v4664 = vadd.f32 %v4663, %v4405
      %v4665 = vadd.f32 %v4664, %v4406
      %v4666 = vadd.f32 %v4665, %v4407
      %v4667 = vadd.f32 %v4666, %v4408
      %v4668 = vadd.f32 %v4667, %v4409
      %v4669 = vadd.f32 %v4668, %v4410
      %v4670 = vadd.f32 %v4669, %v4411
      %v4671 = vadd.f32 %v4670, %v4412
      %v4672 = vadd.f32 %v4671, %v4413
      %v4673 = vadd.f32 %v4672, %v4414
      %v4674 = vadd.f32 %v4673, %v4415
      %v4675 = vadd.f32 %v4419, %v4674
      %4676 = vst [vmem:[%s2 + $0x10] sm:$0xff] %v4675
    $region17: #{_pu_loss_device.1} parent=12 // pred_fallthru
      _
    // Predicated region
    $region18: #{_pu_loss_device.1} parent=12 // pred_check
      _
    $region19: #{_pu_loss_device.1} parent=12 // pred_check_branch
      %4678 = sbr.rel (%p55) target = $region21
    $region20: #{_pu_loss_device.1} parent=12 // pred_region
      %v4679 = vld [vmem:[%s2] sm:$0xff]
      %v4680 = vadd.f32 %v4160, %v4161
      %v4681 = vadd.f32 %v4680, %v4162
      %v4682 = vadd.f32 %v4681, %v4163
      %v4683 = vadd.f32 %v4682, %v4164
      %v4684 = vadd.f32 %v4683, %v4165
      %v4685 = vadd.f32 %v4684, %v4166
      %v4686 = vadd.f32 %v4685, %v4167
      %v4687 = vadd.f32 %v4686, %v4168
      %v4688 = vadd.f32 %v4687, %v4169
      %v4689 = vadd.f32 %v4688, %v4170
      %v4690 = vadd.f32 %v4689, %v4171
      %v4691 = vadd.f32 %v4690, %v4172
      %v4692 = vadd.f32 %v4691, %v4173
      %v4693 = vadd.f32 %v4692, %v4174
      %v4694 = vadd.f32 %v4693, %v4175
      %v4695 = vadd.f32 %v4694, %v4176
      %v4696 = vadd.f32 %v4695, %v4177
      %v4697 = vadd.f32 %v4696, %v4178
      %v4698 = vadd.f32 %v4697, %v4179
      %v4699 = vadd.f32 %v4698, %v4180
      %v4700 = vadd.f32 %v4699, %v4181
      %v4701 = vadd.f32 %v4700, %v4182
      %v4702 = vadd.f32 %v4701, %v4183
      %v4703 = vadd.f32 %v4702, %v4184
      %v4704 = vadd.f32 %v4703, %v4185
      %v4705 = vadd.f32 %v4704, %v4186
      %v4706 = vadd.f32 %v4705, %v4187
      %v4707 = vadd.f32 %v4706, %v4188
      %v4708 = vadd.f32 %v4707, %v4189
      %v4709 = vadd.f32 %v4708, %v4190
      %v4710 = vadd.f32 %v4709, %v4191
      %v4711 = vadd.f32 %v4710, %v4192
      %v4712 = vadd.f32 %v4711, %v4193
      %v4713 = vadd.f32 %v4712, %v4194
      %v4714 = vadd.f32 %v4713, %v4195
      %v4715 = vadd.f32 %v4714, %v4196
      %v4716 = vadd.f32 %v4715, %v4197
      %v4717 = vadd.f32 %v4716, %v4198
      %v4718 = vadd.f32 %v4717, %v4199
      %v4719 = vadd.f32 %v4718, %v4200
      %v4720 = vadd.f32 %v4719, %v4201
      %v4721 = vadd.f32 %v4720, %v4202
      %v4722 = vadd.f32 %v4721, %v4203
      %v4723 = vadd.f32 %v4722, %v4204
      %v4724 = vadd.f32 %v4723, %v4205
      %v4725 = vadd.f32 %v4724, %v4206
      %v4726 = vadd.f32 %v4725, %v4207
      %v4727 = vadd.f32 %v4726, %v4208
      %v4728 = vadd.f32 %v4727, %v4209
      %v4729 = vadd.f32 %v4728, %v4210
      %v4730 = vadd.f32 %v4729, %v4211
      %v4731 = vadd.f32 %v4730, %v4212
      %v4732 = vadd.f32 %v4731, %v4213
      %v4733 = vadd.f32 %v4732, %v4214
      %v4734 = vadd.f32 %v4733, %v4215
      %v4735 = vadd.f32 %v4734, %v4216
      %v4736 = vadd.f32 %v4735, %v4217
      %v4737 = vadd.f32 %v4736, %v4218
      %v4738 = vadd.f32 %v4737, %v4219
      %v4739 = vadd.f32 %v4738, %v4220
      %v4740 = vadd.f32 %v4739, %v4221
      %v4741 = vadd.f32 %v4740, %v4222
      %v4742 = vadd.f32 %v4741, %v4223
      %v4743 = vadd.f32 %v4742, %v4224
      %v4744 = vadd.f32 %v4743, %v4225
      %v4745 = vadd.f32 %v4744, %v4226
      %v4746 = vadd.f32 %v4745, %v4227
      %v4747 = vadd.f32 %v4746, %v4228
      %v4748 = vadd.f32 %v4747, %v4229
      %v4749 = vadd.f32 %v4748, %v4230
      %v4750 = vadd.f32 %v4749, %v4231
      %v4751 = vadd.f32 %v4750, %v4232
      %v4752 = vadd.f32 %v4751, %v4233
      %v4753 = vadd.f32 %v4752, %v4234
      %v4754 = vadd.f32 %v4753, %v4235
      %v4755 = vadd.f32 %v4754, %v4236
      %v4756 = vadd.f32 %v4755, %v4237
      %v4757 = vadd.f32 %v4756, %v4238
      %v4758 = vadd.f32 %v4757, %v4239
      %v4759 = vadd.f32 %v4758, %v4240
      %v4760 = vadd.f32 %v4759, %v4241
      %v4761 = vadd.f32 %v4760, %v4242
      %v4762 = vadd.f32 %v4761, %v4243
      %v4763 = vadd.f32 %v4762, %v4244
      %v4764 = vadd.f32 %v4763, %v4245
      %v4765 = vadd.f32 %v4764, %v4246
      %v4766 = vadd.f32 %v4765, %v4247
      %v4767 = vadd.f32 %v4766, %v4248
      %v4768 = vadd.f32 %v4767, %v4249
      %v4769 = vadd.f32 %v4768, %v4250
      %v4770 = vadd.f32 %v4769, %v4251
      %v4771 = vadd.f32 %v4770, %v4252
      %v4772 = vadd.f32 %v4771, %v4253
      %v4773 = vadd.f32 %v4772, %v4254
      %v4774 = vadd.f32 %v4773, %v4255
      %v4775 = vadd.f32 %v4774, %v4256
      %v4776 = vadd.f32 %v4775, %v4257
      %v4777 = vadd.f32 %v4776, %v4258
      %v4778 = vadd.f32 %v4777, %v4259
      %v4779 = vadd.f32 %v4778, %v4260
      %v4780 = vadd.f32 %v4779, %v4261
      %v4781 = vadd.f32 %v4780, %v4262
      %v4782 = vadd.f32 %v4781, %v4263
      %v4783 = vadd.f32 %v4782, %v4264
      %v4784 = vadd.f32 %v4783, %v4265
      %v4785 = vadd.f32 %v4784, %v4266
      %v4786 = vadd.f32 %v4785, %v4267
      %v4787 = vadd.f32 %v4786, %v4268
      %v4788 = vadd.f32 %v4787, %v4269
      %v4789 = vadd.f32 %v4788, %v4270
      %v4790 = vadd.f32 %v4789, %v4271
      %v4791 = vadd.f32 %v4790, %v4272
      %v4792 = vadd.f32 %v4791, %v4273
      %v4793 = vadd.f32 %v4792, %v4274
      %v4794 = vadd.f32 %v4793, %v4275
      %v4795 = vadd.f32 %v4794, %v4276
      %v4796 = vadd.f32 %v4795, %v4277
      %v4797 = vadd.f32 %v4796, %v4278
      %v4798 = vadd.f32 %v4797, %v4279
      %v4799 = vadd.f32 %v4798, %v4280
      %v4800 = vadd.f32 %v4799, %v4281
      %v4801 = vadd.f32 %v4800, %v4282
      %v4802 = vadd.f32 %v4801, %v4283
      %v4803 = vadd.f32 %v4802, %v4284
      %v4804 = vadd.f32 %v4803, %v4285
      %v4805 = vadd.f32 %v4804, %v4286
      %v4806 = vadd.f32 %v4805, %v4287
      %v4807 = vadd.f32 %v4806, %v4288
      %v4808 = vadd.f32 %v4807, %v4289
      %v4809 = vadd.f32 %v4808, %v4290
      %v4810 = vadd.f32 %v4809, %v4291
      %v4811 = vadd.f32 %v4810, %v4292
      %v4812 = vadd.f32 %v4811, %v4293
      %v4813 = vadd.f32 %v4812, %v4294
      %v4814 = vadd.f32 %v4813, %v4295
      %v4815 = vadd.f32 %v4814, %v4296
      %v4816 = vadd.f32 %v4815, %v4297
      %v4817 = vadd.f32 %v4816, %v4298
      %v4818 = vadd.f32 %v4817, %v4299
      %v4819 = vadd.f32 %v4818, %v4300
      %v4820 = vadd.f32 %v4819, %v4301
      %v4821 = vadd.f32 %v4820, %v4302
      %v4822 = vadd.f32 %v4821, %v4303
      %v4823 = vadd.f32 %v4822, %v4304
      %v4824 = vadd.f32 %v4823, %v4305
      %v4825 = vadd.f32 %v4824, %v4306
      %v4826 = vadd.f32 %v4825, %v4307
      %v4827 = vadd.f32 %v4826, %v4308
      %v4828 = vadd.f32 %v4827, %v4309
      %v4829 = vadd.f32 %v4828, %v4310
      %v4830 = vadd.f32 %v4829, %v4311
      %v4831 = vadd.f32 %v4830, %v4312
      %v4832 = vadd.f32 %v4831, %v4313
      %v4833 = vadd.f32 %v4832, %v4314
      %v4834 = vadd.f32 %v4833, %v4315
      %v4835 = vadd.f32 %v4834, %v4316
      %v4836 = vadd.f32 %v4835, %v4317
      %v4837 = vadd.f32 %v4836, %v4318
      %v4838 = vadd.f32 %v4837, %v4319
      %v4839 = vadd.f32 %v4838, %v4320
      %v4840 = vadd.f32 %v4839, %v4321
      %v4841 = vadd.f32 %v4840, %v4322
      %v4842 = vadd.f32 %v4841, %v4323
      %v4843 = vadd.f32 %v4842, %v4324
      %v4844 = vadd.f32 %v4843, %v4325
      %v4845 = vadd.f32 %v4844, %v4326
      %v4846 = vadd.f32 %v4845, %v4327
      %v4847 = vadd.f32 %v4846, %v4328
      %v4848 = vadd.f32 %v4847, %v4329
      %v4849 = vadd.f32 %v4848, %v4330
      %v4850 = vadd.f32 %v4849, %v4331
      %v4851 = vadd.f32 %v4850, %v4332
      %v4852 = vadd.f32 %v4851, %v4333
      %v4853 = vadd.f32 %v4852, %v4334
      %v4854 = vadd.f32 %v4853, %v4335
      %v4855 = vadd.f32 %v4854, %v4336
      %v4856 = vadd.f32 %v4855, %v4337
      %v4857 = vadd.f32 %v4856, %v4338
      %v4858 = vadd.f32 %v4857, %v4339
      %v4859 = vadd.f32 %v4858, %v4340
      %v4860 = vadd.f32 %v4859, %v4341
      %v4861 = vadd.f32 %v4860, %v4342
      %v4862 = vadd.f32 %v4861, %v4343
      %v4863 = vadd.f32 %v4862, %v4344
      %v4864 = vadd.f32 %v4863, %v4345
      %v4865 = vadd.f32 %v4864, %v4346
      %v4866 = vadd.f32 %v4865, %v4347
      %v4867 = vadd.f32 %v4866, %v4348
      %v4868 = vadd.f32 %v4867, %v4349
      %v4869 = vadd.f32 %v4868, %v4350
      %v4870 = vadd.f32 %v4869, %v4351
      %v4871 = vadd.f32 %v4870, %v4352
      %v4872 = vadd.f32 %v4871, %v4353
      %v4873 = vadd.f32 %v4872, %v4354
      %v4874 = vadd.f32 %v4873, %v4355
      %v4875 = vadd.f32 %v4874, %v4356
      %v4876 = vadd.f32 %v4875, %v4357
      %v4877 = vadd.f32 %v4876, %v4358
      %v4878 = vadd.f32 %v4877, %v4359
      %v4879 = vadd.f32 %v4878, %v4360
      %v4880 = vadd.f32 %v4879, %v4361
      %v4881 = vadd.f32 %v4880, %v4362
      %v4882 = vadd.f32 %v4881, %v4363
      %v4883 = vadd.f32 %v4882, %v4364
      %v4884 = vadd.f32 %v4883, %v4365
      %v4885 = vadd.f32 %v4884, %v4366
      %v4886 = vadd.f32 %v4885, %v4367
      %v4887 = vadd.f32 %v4886, %v4368
      %v4888 = vadd.f32 %v4887, %v4369
      %v4889 = vadd.f32 %v4888, %v4370
      %v4890 = vadd.f32 %v4889, %v4371
      %v4891 = vadd.f32 %v4890, %v4372
      %v4892 = vadd.f32 %v4891, %v4373
      %v4893 = vadd.f32 %v4892, %v4374
      %v4894 = vadd.f32 %v4893, %v4375
      %v4895 = vadd.f32 %v4894, %v4376
      %v4896 = vadd.f32 %v4895, %v4377
      %v4897 = vadd.f32 %v4896, %v4378
      %v4898 = vadd.f32 %v4897, %v4379
      %v4899 = vadd.f32 %v4898, %v4380
      %v4900 = vadd.f32 %v4899, %v4381
      %v4901 = vadd.f32 %v4900, %v4382
      %v4902 = vadd.f32 %v4901, %v4383
      %v4903 = vadd.f32 %v4902, %v4384
      %v4904 = vadd.f32 %v4903, %v4385
      %v4905 = vadd.f32 %v4904, %v4386
      %v4906 = vadd.f32 %v4905, %v4387
      %v4907 = vadd.f32 %v4906, %v4388
      %v4908 = vadd.f32 %v4907, %v4389
      %v4909 = vadd.f32 %v4908, %v4390
      %v4910 = vadd.f32 %v4909, %v4391
      %v4911 = vadd.f32 %v4910, %v4392
      %v4912 = vadd.f32 %v4911, %v4393
      %v4913 = vadd.f32 %v4912, %v4394
      %v4914 = vadd.f32 %v4913, %v4395
      %v4915 = vadd.f32 %v4914, %v4396
      %v4916 = vadd.f32 %v4915, %v4397
      %v4917 = vadd.f32 %v4916, %v4398
      %v4918 = vadd.f32 %v4917, %v4399
      %v4919 = vadd.f32 %v4918, %v4400
      %v4920 = vadd.f32 %v4919, %v4401
      %v4921 = vadd.f32 %v4920, %v4402
      %v4922 = vadd.f32 %v4921, %v4403
      %v4923 = vadd.f32 %v4922, %v4404
      %v4924 = vadd.f32 %v4923, %v4405
      %v4925 = vadd.f32 %v4924, %v4406
      %v4926 = vadd.f32 %v4925, %v4407
      %v4927 = vadd.f32 %v4926, %v4408
      %v4928 = vadd.f32 %v4927, %v4409
      %v4929 = vadd.f32 %v4928, %v4410
      %v4930 = vadd.f32 %v4929, %v4411
      %v4931 = vadd.f32 %v4930, %v4412
      %v4932 = vadd.f32 %v4931, %v4413
      %v4933 = vadd.f32 %v4932, %v4414
      %v4934 = vadd.f32 %v4933, %v4415
      %v4935 = vadd.f32 %v4679, %v4934
      %4936 = vst [vmem:[%s2] sm:$0xff] %v4935
      %v4937 = vld [vmem:[%s2 + $0x8] sm:$0xff]
      %v4938 = vadd.f32 %v320, %v321
      %v4939 = vadd.f32 %v4938, %v322
      %v4940 = vadd.f32 %v4939, %v323
      %v4941 = vadd.f32 %v4940, %v324
      %v4942 = vadd.f32 %v4941, %v325
      %v4943 = vadd.f32 %v4942, %v326
      %v4944 = vadd.f32 %v4943, %v327
      %v4945 = vadd.f32 %v4944, %v328
      %v4946 = vadd.f32 %v4945, %v329
      %v4947 = vadd.f32 %v4946, %v330
      %v4948 = vadd.f32 %v4947, %v331
      %v4949 = vadd.f32 %v4948, %v332
      %v4950 = vadd.f32 %v4949, %v333
      %v4951 = vadd.f32 %v4950, %v334
      %v4952 = vadd.f32 %v4951, %v335
      %v4953 = vadd.f32 %v4952, %v336
      %v4954 = vadd.f32 %v4953, %v337
      %v4955 = vadd.f32 %v4954, %v338
      %v4956 = vadd.f32 %v4955, %v339
      %v4957 = vadd.f32 %v4956, %v340
      %v4958 = vadd.f32 %v4957, %v341
      %v4959 = vadd.f32 %v4958, %v342
      %v4960 = vadd.f32 %v4959, %v343
      %v4961 = vadd.f32 %v4960, %v344
      %v4962 = vadd.f32 %v4961, %v345
      %v4963 = vadd.f32 %v4962, %v346
      %v4964 = vadd.f32 %v4963, %v347
      %v4965 = vadd.f32 %v4964, %v348
      %v4966 = vadd.f32 %v4965, %v349
      %v4967 = vadd.f32 %v4966, %v350
      %v4968 = vadd.f32 %v4967, %v351
      %v4969 = vadd.f32 %v4968, %v352
      %v4970 = vadd.f32 %v4969, %v353
      %v4971 = vadd.f32 %v4970, %v354
      %v4972 = vadd.f32 %v4971, %v355
      %v4973 = vadd.f32 %v4972, %v356
      %v4974 = vadd.f32 %v4973, %v357
      %v4975 = vadd.f32 %v4974, %v358
      %v4976 = vadd.f32 %v4975, %v359
      %v4977 = vadd.f32 %v4976, %v360
      %v4978 = vadd.f32 %v4977, %v361
      %v4979 = vadd.f32 %v4978, %v362
      %v4980 = vadd.f32 %v4979, %v363
      %v4981 = vadd.f32 %v4980, %v364
      %v4982 = vadd.f32 %v4981, %v365
      %v4983 = vadd.f32 %v4982, %v366
      %v4984 = vadd.f32 %v4983, %v367
      %v4985 = vadd.f32 %v4984, %v368
      %v4986 = vadd.f32 %v4985, %v369
      %v4987 = vadd.f32 %v4986, %v370
      %v4988 = vadd.f32 %v4987, %v371
      %v4989 = vadd.f32 %v4988, %v372
      %v4990 = vadd.f32 %v4989, %v373
      %v4991 = vadd.f32 %v4990, %v374
      %v4992 = vadd.f32 %v4991, %v375
      %v4993 = vadd.f32 %v4992, %v376
      %v4994 = vadd.f32 %v4993, %v377
      %v4995 = vadd.f32 %v4994, %v378
      %v4996 = vadd.f32 %v4995, %v379
      %v4997 = vadd.f32 %v4996, %v380
      %v4998 = vadd.f32 %v4997, %v381
      %v4999 = vadd.f32 %v4998, %v382
      %v5000 = vadd.f32 %v4999, %v383
      %v5001 = vadd.f32 %v5000, %v384
      %v5002 = vadd.f32 %v5001, %v385
      %v5003 = vadd.f32 %v5002, %v386
      %v5004 = vadd.f32 %v5003, %v387
      %v5005 = vadd.f32 %v5004, %v388
      %v5006 = vadd.f32 %v5005, %v389
      %v5007 = vadd.f32 %v5006, %v390
      %v5008 = vadd.f32 %v5007, %v391
      %v5009 = vadd.f32 %v5008, %v392
      %v5010 = vadd.f32 %v5009, %v393
      %v5011 = vadd.f32 %v5010, %v394
      %v5012 = vadd.f32 %v5011, %v395
      %v5013 = vadd.f32 %v5012, %v396
      %v5014 = vadd.f32 %v5013, %v397
      %v5015 = vadd.f32 %v5014, %v398
      %v5016 = vadd.f32 %v5015, %v399
      %v5017 = vadd.f32 %v5016, %v400
      %v5018 = vadd.f32 %v5017, %v401
      %v5019 = vadd.f32 %v5018, %v402
      %v5020 = vadd.f32 %v5019, %v403
      %v5021 = vadd.f32 %v5020, %v404
      %v5022 = vadd.f32 %v5021, %v405
      %v5023 = vadd.f32 %v5022, %v406
      %v5024 = vadd.f32 %v5023, %v407
      %v5025 = vadd.f32 %v5024, %v408
      %v5026 = vadd.f32 %v5025, %v409
      %v5027 = vadd.f32 %v5026, %v410
      %v5028 = vadd.f32 %v5027, %v411
      %v5029 = vadd.f32 %v5028, %v412
      %v5030 = vadd.f32 %v5029, %v413
      %v5031 = vadd.f32 %v5030, %v414
      %v5032 = vadd.f32 %v5031, %v415
      %v5033 = vadd.f32 %v5032, %v416
      %v5034 = vadd.f32 %v5033, %v417
      %v5035 = vadd.f32 %v5034, %v418
      %v5036 = vadd.f32 %v5035, %v419
      %v5037 = vadd.f32 %v5036, %v420
      %v5038 = vadd.f32 %v5037, %v421
      %v5039 = vadd.f32 %v5038, %v422
      %v5040 = vadd.f32 %v5039, %v423
      %v5041 = vadd.f32 %v5040, %v424
      %v5042 = vadd.f32 %v5041, %v425
      %v5043 = vadd.f32 %v5042, %v426
      %v5044 = vadd.f32 %v5043, %v427
      %v5045 = vadd.f32 %v5044, %v428
      %v5046 = vadd.f32 %v5045, %v429
      %v5047 = vadd.f32 %v5046, %v430
      %v5048 = vadd.f32 %v5047, %v431
      %v5049 = vadd.f32 %v5048, %v432
      %v5050 = vadd.f32 %v5049, %v433
      %v5051 = vadd.f32 %v5050, %v434
      %v5052 = vadd.f32 %v5051, %v435
      %v5053 = vadd.f32 %v5052, %v436
      %v5054 = vadd.f32 %v5053, %v437
      %v5055 = vadd.f32 %v5054, %v438
      %v5056 = vadd.f32 %v5055, %v439
      %v5057 = vadd.f32 %v5056, %v440
      %v5058 = vadd.f32 %v5057, %v441
      %v5059 = vadd.f32 %v5058, %v442
      %v5060 = vadd.f32 %v5059, %v443
      %v5061 = vadd.f32 %v5060, %v444
      %v5062 = vadd.f32 %v5061, %v445
      %v5063 = vadd.f32 %v5062, %v446
      %v5064 = vadd.f32 %v5063, %v447
      %v5065 = vadd.f32 %v5064, %v448
      %v5066 = vadd.f32 %v5065, %v449
      %v5067 = vadd.f32 %v5066, %v450
      %v5068 = vadd.f32 %v5067, %v451
      %v5069 = vadd.f32 %v5068, %v452
      %v5070 = vadd.f32 %v5069, %v453
      %v5071 = vadd.f32 %v5070, %v454
      %v5072 = vadd.f32 %v5071, %v455
      %v5073 = vadd.f32 %v5072, %v456
      %v5074 = vadd.f32 %v5073, %v457
      %v5075 = vadd.f32 %v5074, %v458
      %v5076 = vadd.f32 %v5075, %v459
      %v5077 = vadd.f32 %v5076, %v460
      %v5078 = vadd.f32 %v5077, %v461
      %v5079 = vadd.f32 %v5078, %v462
      %v5080 = vadd.f32 %v5079, %v463
      %v5081 = vadd.f32 %v5080, %v464
      %v5082 = vadd.f32 %v5081, %v465
      %v5083 = vadd.f32 %v5082, %v466
      %v5084 = vadd.f32 %v5083, %v467
      %v5085 = vadd.f32 %v5084, %v468
      %v5086 = vadd.f32 %v5085, %v469
      %v5087 = vadd.f32 %v5086, %v470
      %v5088 = vadd.f32 %v5087, %v471
      %v5089 = vadd.f32 %v5088, %v472
      %v5090 = vadd.f32 %v5089, %v473
      %v5091 = vadd.f32 %v5090, %v474
      %v5092 = vadd.f32 %v5091, %v475
      %v5093 = vadd.f32 %v5092, %v476
      %v5094 = vadd.f32 %v5093, %v477
      %v5095 = vadd.f32 %v5094, %v478
      %v5096 = vadd.f32 %v5095, %v479
      %v5097 = vadd.f32 %v5096, %v480
      %v5098 = vadd.f32 %v5097, %v481
      %v5099 = vadd.f32 %v5098, %v482
      %v5100 = vadd.f32 %v5099, %v483
      %v5101 = vadd.f32 %v5100, %v484
      %v5102 = vadd.f32 %v5101, %v485
      %v5103 = vadd.f32 %v5102, %v486
      %v5104 = vadd.f32 %v5103, %v487
      %v5105 = vadd.f32 %v5104, %v488
      %v5106 = vadd.f32 %v5105, %v489
      %v5107 = vadd.f32 %v5106, %v490
      %v5108 = vadd.f32 %v5107, %v491
      %v5109 = vadd.f32 %v5108, %v492
      %v5110 = vadd.f32 %v5109, %v493
      %v5111 = vadd.f32 %v5110, %v494
      %v5112 = vadd.f32 %v5111, %v495
      %v5113 = vadd.f32 %v5112, %v496
      %v5114 = vadd.f32 %v5113, %v497
      %v5115 = vadd.f32 %v5114, %v498
      %v5116 = vadd.f32 %v5115, %v499
      %v5117 = vadd.f32 %v5116, %v500
      %v5118 = vadd.f32 %v5117, %v501
      %v5119 = vadd.f32 %v5118, %v502
      %v5120 = vadd.f32 %v5119, %v503
      %v5121 = vadd.f32 %v5120, %v504
      %v5122 = vadd.f32 %v5121, %v505
      %v5123 = vadd.f32 %v5122, %v506
      %v5124 = vadd.f32 %v5123, %v507
      %v5125 = vadd.f32 %v5124, %v508
      %v5126 = vadd.f32 %v5125, %v509
      %v5127 = vadd.f32 %v5126, %v510
      %v5128 = vadd.f32 %v5127, %v511
      %v5129 = vadd.f32 %v5128, %v512
      %v5130 = vadd.f32 %v5129, %v513
      %v5131 = vadd.f32 %v5130, %v514
      %v5132 = vadd.f32 %v5131, %v515
      %v5133 = vadd.f32 %v5132, %v516
      %v5134 = vadd.f32 %v5133, %v517
      %v5135 = vadd.f32 %v5134, %v518
      %v5136 = vadd.f32 %v5135, %v519
      %v5137 = vadd.f32 %v5136, %v520
      %v5138 = vadd.f32 %v5137, %v521
      %v5139 = vadd.f32 %v5138, %v522
      %v5140 = vadd.f32 %v5139, %v523
      %v5141 = vadd.f32 %v5140, %v524
      %v5142 = vadd.f32 %v5141, %v525
      %v5143 = vadd.f32 %v5142, %v526
      %v5144 = vadd.f32 %v5143, %v527
      %v5145 = vadd.f32 %v5144, %v528
      %v5146 = vadd.f32 %v5145, %v529
      %v5147 = vadd.f32 %v5146, %v530
      %v5148 = vadd.f32 %v5147, %v531
      %v5149 = vadd.f32 %v5148, %v532
      %v5150 = vadd.f32 %v5149, %v533
      %v5151 = vadd.f32 %v5150, %v534
      %v5152 = vadd.f32 %v5151, %v535
      %v5153 = vadd.f32 %v5152, %v536
      %v5154 = vadd.f32 %v5153, %v537
      %v5155 = vadd.f32 %v5154, %v538
      %v5156 = vadd.f32 %v5155, %v539
      %v5157 = vadd.f32 %v5156, %v540
      %v5158 = vadd.f32 %v5157, %v541
      %v5159 = vadd.f32 %v5158, %v542
      %v5160 = vadd.f32 %v5159, %v543
      %v5161 = vadd.f32 %v5160, %v544
      %v5162 = vadd.f32 %v5161, %v545
      %v5163 = vadd.f32 %v5162, %v546
      %v5164 = vadd.f32 %v5163, %v547
      %v5165 = vadd.f32 %v5164, %v548
      %v5166 = vadd.f32 %v5165, %v549
      %v5167 = vadd.f32 %v5166, %v550
      %v5168 = vadd.f32 %v5167, %v551
      %v5169 = vadd.f32 %v5168, %v552
      %v5170 = vadd.f32 %v5169, %v553
      %v5171 = vadd.f32 %v5170, %v554
      %v5172 = vadd.f32 %v5171, %v555
      %v5173 = vadd.f32 %v5172, %v556
      %v5174 = vadd.f32 %v5173, %v557
      %v5175 = vadd.f32 %v5174, %v558
      %v5176 = vadd.f32 %v5175, %v559
      %v5177 = vadd.f32 %v5176, %v560
      %v5178 = vadd.f32 %v5177, %v561
      %v5179 = vadd.f32 %v5178, %v562
      %v5180 = vadd.f32 %v5179, %v563
      %v5181 = vadd.f32 %v5180, %v564
      %v5182 = vadd.f32 %v5181, %v565
      %v5183 = vadd.f32 %v5182, %v566
      %v5184 = vadd.f32 %v5183, %v567
      %v5185 = vadd.f32 %v5184, %v568
      %v5186 = vadd.f32 %v5185, %v569
      %v5187 = vadd.f32 %v5186, %v570
      %v5188 = vadd.f32 %v5187, %v571
      %v5189 = vadd.f32 %v5188, %v572
      %v5190 = vadd.f32 %v5189, %v573
      %v5191 = vadd.f32 %v5190, %v574
      %v5192 = vadd.f32 %v5191, %v575
      %v5193 = vadd.f32 %v4937, %v5192
      %5194 = vst [vmem:[%s2 + $0x8] sm:$0xff] %v5193
    $region21: #{_pu_loss_device.1} parent=12 // pred_fallthru
      _
    // Predicated region
    $region22: #{_pu_loss_device.1} parent=12 // pred_check
      _
    $region23: #{_pu_loss_device.1} parent=12 // pred_check_branch
      %5196 = sbr.rel (%p58) target = $region25
    $region24: #{_pu_loss_device.1} parent=12 // pred_region
      %v5197 = vlaneseq
      %v5198 = vshrl.u32 %v5197, 7
      %v5199 = vadd.s32 %v5198, 8
      %v5200 = vadd.s32 %v5198, 16
      %v5201 = vadd.s32 %v5198, 24
      %v5202 = vadd.s32 %v5198, 32
      %v5203 = vadd.s32 %v5198, 40
      %v5204 = vadd.s32 %v5198, 48
      %v5205 = vadd.s32 %v5198, 56
      %v5206 = vadd.s32 %v5198, 64
      %v5207 = vadd.s32 %v5198, 72
      %v5208 = vadd.s32 %v5198, 80
      %v5209 = vadd.s32 %v5198, 88
      %v5210 = vadd.s32 %v5198, 96
      %v5211 = vadd.s32 %v5198, 104
      %v5212 = vadd.s32 %v5198, 112
      %v5213 = vadd.s32 %v5198, 120
      %v5214 = vadd.s32 %v5198, 128
      %v5215 = vadd.s32 %v5198, 136
      %v5216 = vadd.s32 %v5198, 144
      %v5217 = vadd.s32 %v5198, 152
      %v5218 = vadd.s32 %v5198, 160
      %v5219 = vadd.s32 %v5198, 168
      %v5220 = vadd.s32 %v5198, 176
      %v5221 = vadd.s32 %v5198, 184
      %v5222 = vadd.s32 %v5198, 192
      %v5223 = vadd.s32 %v5198, 200
      %v5224 = vadd.s32 %v5198, 208
      %v5225 = vadd.s32 %v5198, 216
      %v5226 = vadd.s32 %v5198, 224
      %v5227 = vadd.s32 %v5198, 232
      %v5228 = vadd.s32 %v5198, 240
      %v5229 = vadd.s32 %v5198, 248
      %v5230 = vadd.s32 %v5198, 256
      %v5231 = vadd.s32 %v5198, 264
      %v5232 = vadd.s32 %v5198, 272
      %v5233 = vadd.s32 %v5198, 280
      %v5234 = vadd.s32 %v5198, 288
      %v5235 = vadd.s32 %v5198, 296
      %v5236 = vadd.s32 %v5198, 304
      %v5237 = vadd.s32 %v5198, 312
      %v5238 = vadd.s32 %v5198, 320
      %v5239 = vadd.s32 %v5198, 328
      %v5240 = vadd.s32 %v5198, 336
      %v5241 = vadd.s32 %v5198, 344
      %v5242 = vadd.s32 %v5198, 352
      %v5243 = vadd.s32 %v5198, 360
      %v5244 = vadd.s32 %v5198, 368
      %v5245 = vadd.s32 %v5198, 376
      %v5246 = vadd.s32 %v5198, 384
      %v5247 = vadd.s32 %v5198, 392
      %v5248 = vadd.s32 %v5198, 400
      %v5249 = vadd.s32 %v5198, 408
      %v5250 = vadd.s32 %v5198, 416
      %v5251 = vadd.s32 %v5198, 424
      %v5252 = vadd.s32 %v5198, 432
      %v5253 = vadd.s32 %v5198, 440
      %v5254 = vadd.s32 %v5198, 448
      %v5255 = vadd.s32 %v5198, 456
      %v5256 = vadd.s32 %v5198, 464
      %v5257 = vadd.s32 %v5198, 472
      %v5258 = vadd.s32 %v5198, 480
      %v5259 = vadd.s32 %v5198, 488
      %v5260 = vadd.s32 %v5198, 496
      %v5261 = vadd.s32 %v5198, 504
      %v5262 = vadd.s32 %v5198, 512
      %v5263 = vadd.s32 %v5198, 520
      %v5264 = vadd.s32 %v5198, 528
      %v5265 = vadd.s32 %v5198, 536
      %v5266 = vadd.s32 %v5198, 544
      %v5267 = vadd.s32 %v5198, 552
      %v5268 = vadd.s32 %v5198, 560
      %v5269 = vadd.s32 %v5198, 568
      %v5270 = vadd.s32 %v5198, 576
      %v5271 = vadd.s32 %v5198, 584
      %v5272 = vadd.s32 %v5198, 592
      %v5273 = vadd.s32 %v5198, 600
      %v5274 = vadd.s32 %v5198, 608
      %v5275 = vadd.s32 %v5198, 616
      %v5276 = vadd.s32 %v5198, 624
      %v5277 = vadd.s32 %v5198, 632
      %v5278 = vadd.s32 %v5198, 640
      %v5279 = vadd.s32 %v5198, 648
      %v5280 = vadd.s32 %v5198, 656
      %v5281 = vadd.s32 %v5198, 664
      %v5282 = vadd.s32 %v5198, 672
      %v5283 = vadd.s32 %v5198, 680
      %v5284 = vadd.s32 %v5198, 688
      %v5285 = vadd.s32 %v5198, 696
      %v5286 = vadd.s32 %v5198, 704
      %v5287 = vadd.s32 %v5198, 712
      %v5288 = vadd.s32 %v5198, 720
      %v5289 = vadd.s32 %v5198, 728
      %v5290 = vadd.s32 %v5198, 736
      %v5291 = vadd.s32 %v5198, 744
      %v5292 = vadd.s32 %v5198, 752
      %v5293 = vadd.s32 %v5198, 760
      %v5294 = vadd.s32 %v5198, 768
      %v5295 = vadd.s32 %v5198, 776
      %v5296 = vadd.s32 %v5198, 784
      %v5297 = vadd.s32 %v5198, 792
      %v5298 = vadd.s32 %v5198, 800
      %v5299 = vadd.s32 %v5198, 808
      %v5300 = vadd.s32 %v5198, 816
      %v5301 = vadd.s32 %v5198, 824
      %v5302 = vadd.s32 %v5198, 832
      %v5303 = vadd.s32 %v5198, 840
      %v5304 = vadd.s32 %v5198, 848
      %v5305 = vadd.s32 %v5198, 856
      %v5306 = vadd.s32 %v5198, 864
      %v5307 = vadd.s32 %v5198, 872
      %v5308 = vadd.s32 %v5198, 880
      %v5309 = vadd.s32 %v5198, 888
      %v5310 = vadd.s32 %v5198, 896
      %v5311 = vadd.s32 %v5198, 904
      %v5312 = vadd.s32 %v5198, 912
      %v5313 = vadd.s32 %v5198, 920
      %v5314 = vadd.s32 %v5198, 928
      %v5315 = vadd.s32 %v5198, 936
      %v5316 = vadd.s32 %v5198, 944
      %v5317 = vadd.s32 %v5198, 952
      %v5318 = vadd.s32 %v5198, 960
      %v5319 = vadd.s32 %v5198, 968
      %v5320 = vadd.s32 %v5198, 976
      %v5321 = vadd.s32 %v5198, 984
      %v5322 = vadd.s32 %v5198, 992
      %v5323 = vadd.s32 %v5198, 1000
      %v5324 = vadd.s32 %v5198, 1008
      %v5325 = vadd.s32 %v5198, 1016
      %v5326 = vadd.s32 %v5198, 1024
      %v5327 = vadd.s32 %v5198, 1032
      %v5328 = vadd.s32 %v5198, 1040
      %v5329 = vadd.s32 %v5198, 1048
      %v5330 = vadd.s32 %v5198, 1056
      %v5331 = vadd.s32 %v5198, 1064
      %v5332 = vadd.s32 %v5198, 1072
      %v5333 = vadd.s32 %v5198, 1080
      %v5334 = vadd.s32 %v5198, 1088
      %v5335 = vadd.s32 %v5198, 1096
      %v5336 = vadd.s32 %v5198, 1104
      %v5337 = vadd.s32 %v5198, 1112
      %v5338 = vadd.s32 %v5198, 1120
      %v5339 = vadd.s32 %v5198, 1128
      %v5340 = vadd.s32 %v5198, 1136
      %v5341 = vadd.s32 %v5198, 1144
      %v5342 = vadd.s32 %v5198, 1152
      %v5343 = vadd.s32 %v5198, 1160
      %v5344 = vadd.s32 %v5198, 1168
      %v5345 = vadd.s32 %v5198, 1176
      %v5346 = vadd.s32 %v5198, 1184
      %v5347 = vadd.s32 %v5198, 1192
      %v5348 = vadd.s32 %v5198, 1200
      %v5349 = vadd.s32 %v5198, 1208
      %v5350 = vadd.s32 %v5198, 1216
      %v5351 = vadd.s32 %v5198, 1224
      %v5352 = vadd.s32 %v5198, 1232
      %v5353 = vadd.s32 %v5198, 1240
      %v5354 = vadd.s32 %v5198, 1248
      %v5355 = vadd.s32 %v5198, 1256
      %v5356 = vadd.s32 %v5198, 1264
      %v5357 = vadd.s32 %v5198, 1272
      %v5358 = vadd.s32 %v5198, 1280
      %v5359 = vadd.s32 %v5198, 1288
      %v5360 = vadd.s32 %v5198, 1296
      %v5361 = vadd.s32 %v5198, 1304
      %v5362 = vadd.s32 %v5198, 1312
      %v5363 = vadd.s32 %v5198, 1320
      %v5364 = vadd.s32 %v5198, 1328
      %v5365 = vadd.s32 %v5198, 1336
      %v5366 = vadd.s32 %v5198, 1344
      %v5367 = vadd.s32 %v5198, 1352
      %v5368 = vadd.s32 %v5198, 1360
      %v5369 = vadd.s32 %v5198, 1368
      %v5370 = vadd.s32 %v5198, 1376
      %v5371 = vadd.s32 %v5198, 1384
      %v5372 = vadd.s32 %v5198, 1392
      %v5373 = vadd.s32 %v5198, 1400
      %v5374 = vadd.s32 %v5198, 1408
      %v5375 = vadd.s32 %v5198, 1416
      %v5376 = vadd.s32 %v5198, 1424
      %v5377 = vadd.s32 %v5198, 1432
      %v5378 = vadd.s32 %v5198, 1440
      %v5379 = vadd.s32 %v5198, 1448
      %v5380 = vadd.s32 %v5198, 1456
      %v5381 = vadd.s32 %v5198, 1464
      %v5382 = vadd.s32 %v5198, 1472
      %v5383 = vadd.s32 %v5198, 1480
      %v5384 = vadd.s32 %v5198, 1488
      %v5385 = vadd.s32 %v5198, 1496
      %v5386 = vadd.s32 %v5198, 1504
      %v5387 = vadd.s32 %v5198, 1512
      %v5388 = vadd.s32 %v5198, 1520
      %v5389 = vadd.s32 %v5198, 1528
      %v5390 = vadd.s32 %v5198, 1536
      %v5391 = vadd.s32 %v5198, 1544
      %v5392 = vadd.s32 %v5198, 1552
      %v5393 = vadd.s32 %v5198, 1560
      %v5394 = vadd.s32 %v5198, 1568
      %v5395 = vadd.s32 %v5198, 1576
      %v5396 = vadd.s32 %v5198, 1584
      %v5397 = vadd.s32 %v5198, 1592
      %v5398 = vadd.s32 %v5198, 1600
      %v5399 = vadd.s32 %v5198, 1608
      %v5400 = vadd.s32 %v5198, 1616
      %v5401 = vadd.s32 %v5198, 1624
      %v5402 = vadd.s32 %v5198, 1632
      %v5403 = vadd.s32 %v5198, 1640
      %v5404 = vadd.s32 %v5198, 1648
      %v5405 = vadd.s32 %v5198, 1656
      %v5406 = vadd.s32 %v5198, 1664
      %v5407 = vadd.s32 %v5198, 1672
      %v5408 = vadd.s32 %v5198, 1680
      %v5409 = vadd.s32 %v5198, 1688
      %v5410 = vadd.s32 %v5198, 1696
      %v5411 = vadd.s32 %v5198, 1704
      %v5412 = vadd.s32 %v5198, 1712
      %v5413 = vadd.s32 %v5198, 1720
      %v5414 = vadd.s32 %v5198, 1728
      %v5415 = vadd.s32 %v5198, 1736
      %v5416 = vadd.s32 %v5198, 1744
      %v5417 = vadd.s32 %v5198, 1752
      %v5418 = vadd.s32 %v5198, 1760
      %v5419 = vadd.s32 %v5198, 1768
      %v5420 = vadd.s32 %v5198, 1776
      %v5421 = vadd.s32 %v5198, 1784
      %v5422 = vadd.s32 %v5198, 1792
      %v5423 = vadd.s32 %v5198, 1800
      %v5424 = vadd.s32 %v5198, 1808
      %v5425 = vadd.s32 %v5198, 1816
      %v5426 = vadd.s32 %v5198, 1824
      %v5427 = vadd.s32 %v5198, 1832
      %v5428 = vadd.s32 %v5198, 1840
      %v5429 = vadd.s32 %v5198, 1848
      %v5430 = vadd.s32 %v5198, 1856
      %v5431 = vadd.s32 %v5198, 1864
      %v5432 = vadd.s32 %v5198, 1872
      %v5433 = vadd.s32 %v5198, 1880
      %v5434 = vadd.s32 %v5198, 1888
      %v5435 = vadd.s32 %v5198, 1896
      %v5436 = vadd.s32 %v5198, 1904
      %v5437 = vadd.s32 %v5198, 1912
      %v5438 = vadd.s32 %v5198, 1920
      %v5439 = vadd.s32 %v5198, 1928
      %v5440 = vadd.s32 %v5198, 1936
      %v5441 = vadd.s32 %v5198, 1944
      %v5442 = vadd.s32 %v5198, 1952
      %v5443 = vadd.s32 %v5198, 1960
      %v5444 = vadd.s32 %v5198, 1968
      %v5445 = vadd.s32 %v5198, 1976
      %v5446 = vadd.s32 %v5198, 1984
      %v5447 = vadd.s32 %v5198, 1992
      %v5448 = vadd.s32 %v5198, 2000
      %v5449 = vadd.s32 %v5198, 2008
      %v5450 = vadd.s32 %v5198, 2016
      %v5451 = vadd.s32 %v5198, 2024
      %v5452 = vadd.s32 %v5198, 2032
      %v5453 = vadd.s32 %v5198, 2040
      %v5454 = vlaneseq
      %v5455 = vand.u32 %v5454, 127
      %v5456 = vmul.u32 %v5198, 128
      %v5457 = vmul.u32 %v5199, 128
      %v5458 = vmul.u32 %v5200, 128
      %v5459 = vmul.u32 %v5201, 128
      %v5460 = vmul.u32 %v5202, 128
      %v5461 = vmul.u32 %v5203, 128
      %v5462 = vmul.u32 %v5204, 128
      %v5463 = vmul.u32 %v5205, 128
      %v5464 = vmul.u32 %v5206, 128
      %v5465 = vmul.u32 %v5207, 128
      %v5466 = vmul.u32 %v5208, 128
      %v5467 = vmul.u32 %v5209, 128
      %v5468 = vmul.u32 %v5210, 128
      %v5469 = vmul.u32 %v5211, 128
      %v5470 = vmul.u32 %v5212, 128
      %v5471 = vmul.u32 %v5213, 128
      %v5472 = vmul.u32 %v5214, 128
      %v5473 = vmul.u32 %v5215, 128
      %v5474 = vmul.u32 %v5216, 128
      %v5475 = vmul.u32 %v5217, 128
      %v5476 = vmul.u32 %v5218, 128
      %v5477 = vmul.u32 %v5219, 128
      %v5478 = vmul.u32 %v5220, 128
      %v5479 = vmul.u32 %v5221, 128
      %v5480 = vmul.u32 %v5222, 128
      %v5481 = vmul.u32 %v5223, 128
      %v5482 = vmul.u32 %v5224, 128
      %v5483 = vmul.u32 %v5225, 128
      %v5484 = vmul.u32 %v5226, 128
      %v5485 = vmul.u32 %v5227, 128
      %v5486 = vmul.u32 %v5228, 128
      %v5487 = vmul.u32 %v5229, 128
      %v5488 = vmul.u32 %v5230, 128
      %v5489 = vmul.u32 %v5231, 128
      %v5490 = vmul.u32 %v5232, 128
      %v5491 = vmul.u32 %v5233, 128
      %v5492 = vmul.u32 %v5234, 128
      %v5493 = vmul.u32 %v5235, 128
      %v5494 = vmul.u32 %v5236, 128
      %v5495 = vmul.u32 %v5237, 128
      %v5496 = vmul.u32 %v5238, 128
      %v5497 = vmul.u32 %v5239, 128
      %v5498 = vmul.u32 %v5240, 128
      %v5499 = vmul.u32 %v5241, 128
      %v5500 = vmul.u32 %v5242, 128
      %v5501 = vmul.u32 %v5243, 128
      %v5502 = vmul.u32 %v5244, 128
      %v5503 = vmul.u32 %v5245, 128
      %v5504 = vmul.u32 %v5246, 128
      %v5505 = vmul.u32 %v5247, 128
      %v5506 = vmul.u32 %v5248, 128
      %v5507 = vmul.u32 %v5249, 128
      %v5508 = vmul.u32 %v5250, 128
      %v5509 = vmul.u32 %v5251, 128
      %v5510 = vmul.u32 %v5252, 128
      %v5511 = vmul.u32 %v5253, 128
      %v5512 = vmul.u32 %v5254, 128
      %v5513 = vmul.u32 %v5255, 128
      %v5514 = vmul.u32 %v5256, 128
      %v5515 = vmul.u32 %v5257, 128
      %v5516 = vmul.u32 %v5258, 128
      %v5517 = vmul.u32 %v5259, 128
      %v5518 = vmul.u32 %v5260, 128
      %v5519 = vmul.u32 %v5261, 128
      %v5520 = vmul.u32 %v5262, 128
      %v5521 = vmul.u32 %v5263, 128
      %v5522 = vmul.u32 %v5264, 128
      %v5523 = vmul.u32 %v5265, 128
      %v5524 = vmul.u32 %v5266, 128
      %v5525 = vmul.u32 %v5267, 128
      %v5526 = vmul.u32 %v5268, 128
      %v5527 = vmul.u32 %v5269, 128
      %v5528 = vmul.u32 %v5270, 128
      %v5529 = vmul.u32 %v5271, 128
      %v5530 = vmul.u32 %v5272, 128
      %v5531 = vmul.u32 %v5273, 128
      %v5532 = vmul.u32 %v5274, 128
      %v5533 = vmul.u32 %v5275, 128
      %v5534 = vmul.u32 %v5276, 128
      %v5535 = vmul.u32 %v5277, 128
      %v5536 = vmul.u32 %v5278, 128
      %v5537 = vmul.u32 %v5279, 128
      %v5538 = vmul.u32 %v5280, 128
      %v5539 = vmul.u32 %v5281, 128
      %v5540 = vmul.u32 %v5282, 128
      %v5541 = vmul.u32 %v5283, 128
      %v5542 = vmul.u32 %v5284, 128
      %v5543 = vmul.u32 %v5285, 128
      %v5544 = vmul.u32 %v5286, 128
      %v5545 = vmul.u32 %v5287, 128
      %v5546 = vmul.u32 %v5288, 128
      %v5547 = vmul.u32 %v5289, 128
      %v5548 = vmul.u32 %v5290, 128
      %v5549 = vmul.u32 %v5291, 128
      %v5550 = vmul.u32 %v5292, 128
      %v5551 = vmul.u32 %v5293, 128
      %v5552 = vmul.u32 %v5294, 128
      %v5553 = vmul.u32 %v5295, 128
      %v5554 = vmul.u32 %v5296, 128
      %v5555 = vmul.u32 %v5297, 128
      %v5556 = vmul.u32 %v5298, 128
      %v5557 = vmul.u32 %v5299, 128
      %v5558 = vmul.u32 %v5300, 128
      %v5559 = vmul.u32 %v5301, 128
      %v5560 = vmul.u32 %v5302, 128
      %v5561 = vmul.u32 %v5303, 128
      %v5562 = vmul.u32 %v5304, 128
      %v5563 = vmul.u32 %v5305, 128
      %v5564 = vmul.u32 %v5306, 128
      %v5565 = vmul.u32 %v5307, 128
      %v5566 = vmul.u32 %v5308, 128
      %v5567 = vmul.u32 %v5309, 128
      %v5568 = vmul.u32 %v5310, 128
      %v5569 = vmul.u32 %v5311, 128
      %v5570 = vmul.u32 %v5312, 128
      %v5571 = vmul.u32 %v5313, 128
      %v5572 = vmul.u32 %v5314, 128
      %v5573 = vmul.u32 %v5315, 128
      %v5574 = vmul.u32 %v5316, 128
      %v5575 = vmul.u32 %v5317, 128
      %v5576 = vmul.u32 %v5318, 128
      %v5577 = vmul.u32 %v5319, 128
      %v5578 = vmul.u32 %v5320, 128
      %v5579 = vmul.u32 %v5321, 128
      %v5580 = vmul.u32 %v5322, 128
      %v5581 = vmul.u32 %v5323, 128
      %v5582 = vmul.u32 %v5324, 128
      %v5583 = vmul.u32 %v5325, 128
      %v5584 = vmul.u32 %v5326, 128
      %v5585 = vmul.u32 %v5327, 128
      %v5586 = vmul.u32 %v5328, 128
      %v5587 = vmul.u32 %v5329, 128
      %v5588 = vmul.u32 %v5330, 128
      %v5589 = vmul.u32 %v5331, 128
      %v5590 = vmul.u32 %v5332, 128
      %v5591 = vmul.u32 %v5333, 128
      %v5592 = vmul.u32 %v5334, 128
      %v5593 = vmul.u32 %v5335, 128
      %v5594 = vmul.u32 %v5336, 128
      %v5595 = vmul.u32 %v5337, 128
      %v5596 = vmul.u32 %v5338, 128
      %v5597 = vmul.u32 %v5339, 128
      %v5598 = vmul.u32 %v5340, 128
      %v5599 = vmul.u32 %v5341, 128
      %v5600 = vmul.u32 %v5342, 128
      %v5601 = vmul.u32 %v5343, 128
      %v5602 = vmul.u32 %v5344, 128
      %v5603 = vmul.u32 %v5345, 128
      %v5604 = vmul.u32 %v5346, 128
      %v5605 = vmul.u32 %v5347, 128
      %v5606 = vmul.u32 %v5348, 128
      %v5607 = vmul.u32 %v5349, 128
      %v5608 = vmul.u32 %v5350, 128
      %v5609 = vmul.u32 %v5351, 128
      %v5610 = vmul.u32 %v5352, 128
      %v5611 = vmul.u32 %v5353, 128
      %v5612 = vmul.u32 %v5354, 128
      %v5613 = vmul.u32 %v5355, 128
      %v5614 = vmul.u32 %v5356, 128
      %v5615 = vmul.u32 %v5357, 128
      %v5616 = vmul.u32 %v5358, 128
      %v5617 = vmul.u32 %v5359, 128
      %v5618 = vmul.u32 %v5360, 128
      %v5619 = vmul.u32 %v5361, 128
      %v5620 = vmul.u32 %v5362, 128
      %v5621 = vmul.u32 %v5363, 128
      %v5622 = vmul.u32 %v5364, 128
      %v5623 = vmul.u32 %v5365, 128
      %v5624 = vmul.u32 %v5366, 128
      %v5625 = vmul.u32 %v5367, 128
      %v5626 = vmul.u32 %v5368, 128
      %v5627 = vmul.u32 %v5369, 128
      %v5628 = vmul.u32 %v5370, 128
      %v5629 = vmul.u32 %v5371, 128
      %v5630 = vmul.u32 %v5372, 128
      %v5631 = vmul.u32 %v5373, 128
      %v5632 = vmul.u32 %v5374, 128
      %v5633 = vmul.u32 %v5375, 128
      %v5634 = vmul.u32 %v5376, 128
      %v5635 = vmul.u32 %v5377, 128
      %v5636 = vmul.u32 %v5378, 128
      %v5637 = vmul.u32 %v5379, 128
      %v5638 = vmul.u32 %v5380, 128
      %v5639 = vmul.u32 %v5381, 128
      %v5640 = vmul.u32 %v5382, 128
      %v5641 = vmul.u32 %v5383, 128
      %v5642 = vmul.u32 %v5384, 128
      %v5643 = vmul.u32 %v5385, 128
      %v5644 = vmul.u32 %v5386, 128
      %v5645 = vmul.u32 %v5387, 128
      %v5646 = vmul.u32 %v5388, 128
      %v5647 = vmul.u32 %v5389, 128
      %v5648 = vmul.u32 %v5390, 128
      %v5649 = vmul.u32 %v5391, 128
      %v5650 = vmul.u32 %v5392, 128
      %v5651 = vmul.u32 %v5393, 128
      %v5652 = vmul.u32 %v5394, 128
      %v5653 = vmul.u32 %v5395, 128
      %v5654 = vmul.u32 %v5396, 128
      %v5655 = vmul.u32 %v5397, 128
      %v5656 = vmul.u32 %v5398, 128
      %v5657 = vmul.u32 %v5399, 128
      %v5658 = vmul.u32 %v5400, 128
      %v5659 = vmul.u32 %v5401, 128
      %v5660 = vmul.u32 %v5402, 128
      %v5661 = vmul.u32 %v5403, 128
      %v5662 = vmul.u32 %v5404, 128
      %v5663 = vmul.u32 %v5405, 128
      %v5664 = vmul.u32 %v5406, 128
      %v5665 = vmul.u32 %v5407, 128
      %v5666 = vmul.u32 %v5408, 128
      %v5667 = vmul.u32 %v5409, 128
      %v5668 = vmul.u32 %v5410, 128
      %v5669 = vmul.u32 %v5411, 128
      %v5670 = vmul.u32 %v5412, 128
      %v5671 = vmul.u32 %v5413, 128
      %v5672 = vmul.u32 %v5414, 128
      %v5673 = vmul.u32 %v5415, 128
      %v5674 = vmul.u32 %v5416, 128
      %v5675 = vmul.u32 %v5417, 128
      %v5676 = vmul.u32 %v5418, 128
      %v5677 = vmul.u32 %v5419, 128
      %v5678 = vmul.u32 %v5420, 128
      %v5679 = vmul.u32 %v5421, 128
      %v5680 = vmul.u32 %v5422, 128
      %v5681 = vmul.u32 %v5423, 128
      %v5682 = vmul.u32 %v5424, 128
      %v5683 = vmul.u32 %v5425, 128
      %v5684 = vmul.u32 %v5426, 128
      %v5685 = vmul.u32 %v5427, 128
      %v5686 = vmul.u32 %v5428, 128
      %v5687 = vmul.u32 %v5429, 128
      %v5688 = vmul.u32 %v5430, 128
      %v5689 = vmul.u32 %v5431, 128
      %v5690 = vmul.u32 %v5432, 128
      %v5691 = vmul.u32 %v5433, 128
      %v5692 = vmul.u32 %v5434, 128
      %v5693 = vmul.u32 %v5435, 128
      %v5694 = vmul.u32 %v5436, 128
      %v5695 = vmul.u32 %v5437, 128
      %v5696 = vmul.u32 %v5438, 128
      %v5697 = vmul.u32 %v5439, 128
      %v5698 = vmul.u32 %v5440, 128
      %v5699 = vmul.u32 %v5441, 128
      %v5700 = vmul.u32 %v5442, 128
      %v5701 = vmul.u32 %v5443, 128
      %v5702 = vmul.u32 %v5444, 128
      %v5703 = vmul.u32 %v5445, 128
      %v5704 = vmul.u32 %v5446, 128
      %v5705 = vmul.u32 %v5447, 128
      %v5706 = vmul.u32 %v5448, 128
      %v5707 = vmul.u32 %v5449, 128
      %v5708 = vmul.u32 %v5450, 128
      %v5709 = vmul.u32 %v5451, 128
      %v5710 = vmul.u32 %v5452, 128
      %v5711 = vmul.u32 %v5453, 128
      %v5712 = vadd.s32 %v5456, %v5455
      %v5713 = vadd.s32 %v5457, %v5455
      %v5714 = vadd.s32 %v5458, %v5455
      %v5715 = vadd.s32 %v5459, %v5455
      %v5716 = vadd.s32 %v5460, %v5455
      %v5717 = vadd.s32 %v5461, %v5455
      %v5718 = vadd.s32 %v5462, %v5455
      %v5719 = vadd.s32 %v5463, %v5455
      %v5720 = vadd.s32 %v5464, %v5455
      %v5721 = vadd.s32 %v5465, %v5455
      %v5722 = vadd.s32 %v5466, %v5455
      %v5723 = vadd.s32 %v5467, %v5455
      %v5724 = vadd.s32 %v5468, %v5455
      %v5725 = vadd.s32 %v5469, %v5455
      %v5726 = vadd.s32 %v5470, %v5455
      %v5727 = vadd.s32 %v5471, %v5455
      %v5728 = vadd.s32 %v5472, %v5455
      %v5729 = vadd.s32 %v5473, %v5455
      %v5730 = vadd.s32 %v5474, %v5455
      %v5731 = vadd.s32 %v5475, %v5455
      %v5732 = vadd.s32 %v5476, %v5455
      %v5733 = vadd.s32 %v5477, %v5455
      %v5734 = vadd.s32 %v5478, %v5455
      %v5735 = vadd.s32 %v5479, %v5455
      %v5736 = vadd.s32 %v5480, %v5455
      %v5737 = vadd.s32 %v5481, %v5455
      %v5738 = vadd.s32 %v5482, %v5455
      %v5739 = vadd.s32 %v5483, %v5455
      %v5740 = vadd.s32 %v5484, %v5455
      %v5741 = vadd.s32 %v5485, %v5455
      %v5742 = vadd.s32 %v5486, %v5455
      %v5743 = vadd.s32 %v5487, %v5455
      %v5744 = vadd.s32 %v5488, %v5455
      %v5745 = vadd.s32 %v5489, %v5455
      %v5746 = vadd.s32 %v5490, %v5455
      %v5747 = vadd.s32 %v5491, %v5455
      %v5748 = vadd.s32 %v5492, %v5455
      %v5749 = vadd.s32 %v5493, %v5455
      %v5750 = vadd.s32 %v5494, %v5455
      %v5751 = vadd.s32 %v5495, %v5455
      %v5752 = vadd.s32 %v5496, %v5455
      %v5753 = vadd.s32 %v5497, %v5455
      %v5754 = vadd.s32 %v5498, %v5455
      %v5755 = vadd.s32 %v5499, %v5455
      %v5756 = vadd.s32 %v5500, %v5455
      %v5757 = vadd.s32 %v5501, %v5455
      %v5758 = vadd.s32 %v5502, %v5455
      %v5759 = vadd.s32 %v5503, %v5455
      %v5760 = vadd.s32 %v5504, %v5455
      %v5761 = vadd.s32 %v5505, %v5455
      %v5762 = vadd.s32 %v5506, %v5455
      %v5763 = vadd.s32 %v5507, %v5455
      %v5764 = vadd.s32 %v5508, %v5455
      %v5765 = vadd.s32 %v5509, %v5455
      %v5766 = vadd.s32 %v5510, %v5455
      %v5767 = vadd.s32 %v5511, %v5455
      %v5768 = vadd.s32 %v5512, %v5455
      %v5769 = vadd.s32 %v5513, %v5455
      %v5770 = vadd.s32 %v5514, %v5455
      %v5771 = vadd.s32 %v5515, %v5455
      %v5772 = vadd.s32 %v5516, %v5455
      %v5773 = vadd.s32 %v5517, %v5455
      %v5774 = vadd.s32 %v5518, %v5455
      %v5775 = vadd.s32 %v5519, %v5455
      %v5776 = vadd.s32 %v5520, %v5455
      %v5777 = vadd.s32 %v5521, %v5455
      %v5778 = vadd.s32 %v5522, %v5455
      %v5779 = vadd.s32 %v5523, %v5455
      %v5780 = vadd.s32 %v5524, %v5455
      %v5781 = vadd.s32 %v5525, %v5455
      %v5782 = vadd.s32 %v5526, %v5455
      %v5783 = vadd.s32 %v5527, %v5455
      %v5784 = vadd.s32 %v5528, %v5455
      %v5785 = vadd.s32 %v5529, %v5455
      %v5786 = vadd.s32 %v5530, %v5455
      %v5787 = vadd.s32 %v5531, %v5455
      %v5788 = vadd.s32 %v5532, %v5455
      %v5789 = vadd.s32 %v5533, %v5455
      %v5790 = vadd.s32 %v5534, %v5455
      %v5791 = vadd.s32 %v5535, %v5455
      %v5792 = vadd.s32 %v5536, %v5455
      %v5793 = vadd.s32 %v5537, %v5455
      %v5794 = vadd.s32 %v5538, %v5455
      %v5795 = vadd.s32 %v5539, %v5455
      %v5796 = vadd.s32 %v5540, %v5455
      %v5797 = vadd.s32 %v5541, %v5455
      %v5798 = vadd.s32 %v5542, %v5455
      %v5799 = vadd.s32 %v5543, %v5455
      %v5800 = vadd.s32 %v5544, %v5455
      %v5801 = vadd.s32 %v5545, %v5455
      %v5802 = vadd.s32 %v5546, %v5455
      %v5803 = vadd.s32 %v5547, %v5455
      %v5804 = vadd.s32 %v5548, %v5455
      %v5805 = vadd.s32 %v5549, %v5455
      %v5806 = vadd.s32 %v5550, %v5455
      %v5807 = vadd.s32 %v5551, %v5455
      %v5808 = vadd.s32 %v5552, %v5455
      %v5809 = vadd.s32 %v5553, %v5455
      %v5810 = vadd.s32 %v5554, %v5455
      %v5811 = vadd.s32 %v5555, %v5455
      %v5812 = vadd.s32 %v5556, %v5455
      %v5813 = vadd.s32 %v5557, %v5455
      %v5814 = vadd.s32 %v5558, %v5455
      %v5815 = vadd.s32 %v5559, %v5455
      %v5816 = vadd.s32 %v5560, %v5455
      %v5817 = vadd.s32 %v5561, %v5455
      %v5818 = vadd.s32 %v5562, %v5455
      %v5819 = vadd.s32 %v5563, %v5455
      %v5820 = vadd.s32 %v5564, %v5455
      %v5821 = vadd.s32 %v5565, %v5455
      %v5822 = vadd.s32 %v5566, %v5455
      %v5823 = vadd.s32 %v5567, %v5455
      %v5824 = vadd.s32 %v5568, %v5455
      %v5825 = vadd.s32 %v5569, %v5455
      %v5826 = vadd.s32 %v5570, %v5455
      %v5827 = vadd.s32 %v5571, %v5455
      %v5828 = vadd.s32 %v5572, %v5455
      %v5829 = vadd.s32 %v5573, %v5455
      %v5830 = vadd.s32 %v5574, %v5455
      %v5831 = vadd.s32 %v5575, %v5455
      %v5832 = vadd.s32 %v5576, %v5455
      %v5833 = vadd.s32 %v5577, %v5455
      %v5834 = vadd.s32 %v5578, %v5455
      %v5835 = vadd.s32 %v5579, %v5455
      %v5836 = vadd.s32 %v5580, %v5455
      %v5837 = vadd.s32 %v5581, %v5455
      %v5838 = vadd.s32 %v5582, %v5455
      %v5839 = vadd.s32 %v5583, %v5455
      %v5840 = vadd.s32 %v5584, %v5455
      %v5841 = vadd.s32 %v5585, %v5455
      %v5842 = vadd.s32 %v5586, %v5455
      %v5843 = vadd.s32 %v5587, %v5455
      %v5844 = vadd.s32 %v5588, %v5455
      %v5845 = vadd.s32 %v5589, %v5455
      %v5846 = vadd.s32 %v5590, %v5455
      %v5847 = vadd.s32 %v5591, %v5455
      %v5848 = vadd.s32 %v5592, %v5455
      %v5849 = vadd.s32 %v5593, %v5455
      %v5850 = vadd.s32 %v5594, %v5455
      %v5851 = vadd.s32 %v5595, %v5455
      %v5852 = vadd.s32 %v5596, %v5455
      %v5853 = vadd.s32 %v5597, %v5455
      %v5854 = vadd.s32 %v5598, %v5455
      %v5855 = vadd.s32 %v5599, %v5455
      %v5856 = vadd.s32 %v5600, %v5455
      %v5857 = vadd.s32 %v5601, %v5455
      %v5858 = vadd.s32 %v5602, %v5455
      %v5859 = vadd.s32 %v5603, %v5455
      %v5860 = vadd.s32 %v5604, %v5455
      %v5861 = vadd.s32 %v5605, %v5455
      %v5862 = vadd.s32 %v5606, %v5455
      %v5863 = vadd.s32 %v5607, %v5455
      %v5864 = vadd.s32 %v5608, %v5455
      %v5865 = vadd.s32 %v5609, %v5455
      %v5866 = vadd.s32 %v5610, %v5455
      %v5867 = vadd.s32 %v5611, %v5455
      %v5868 = vadd.s32 %v5612, %v5455
      %v5869 = vadd.s32 %v5613, %v5455
      %v5870 = vadd.s32 %v5614, %v5455
      %v5871 = vadd.s32 %v5615, %v5455
      %v5872 = vadd.s32 %v5616, %v5455
      %v5873 = vadd.s32 %v5617, %v5455
      %v5874 = vadd.s32 %v5618, %v5455
      %v5875 = vadd.s32 %v5619, %v5455
      %v5876 = vadd.s32 %v5620, %v5455
      %v5877 = vadd.s32 %v5621, %v5455
      %v5878 = vadd.s32 %v5622, %v5455
      %v5879 = vadd.s32 %v5623, %v5455
      %v5880 = vadd.s32 %v5624, %v5455
      %v5881 = vadd.s32 %v5625, %v5455
      %v5882 = vadd.s32 %v5626, %v5455
      %v5883 = vadd.s32 %v5627, %v5455
      %v5884 = vadd.s32 %v5628, %v5455
      %v5885 = vadd.s32 %v5629, %v5455
      %v5886 = vadd.s32 %v5630, %v5455
      %v5887 = vadd.s32 %v5631, %v5455
      %v5888 = vadd.s32 %v5632, %v5455
      %v5889 = vadd.s32 %v5633, %v5455
      %v5890 = vadd.s32 %v5634, %v5455
      %v5891 = vadd.s32 %v5635, %v5455
      %v5892 = vadd.s32 %v5636, %v5455
      %v5893 = vadd.s32 %v5637, %v5455
      %v5894 = vadd.s32 %v5638, %v5455
      %v5895 = vadd.s32 %v5639, %v5455
      %v5896 = vadd.s32 %v5640, %v5455
      %v5897 = vadd.s32 %v5641, %v5455
      %v5898 = vadd.s32 %v5642, %v5455
      %v5899 = vadd.s32 %v5643, %v5455
      %v5900 = vadd.s32 %v5644, %v5455
      %v5901 = vadd.s32 %v5645, %v5455
      %v5902 = vadd.s32 %v5646, %v5455
      %v5903 = vadd.s32 %v5647, %v5455
      %v5904 = vadd.s32 %v5648, %v5455
      %v5905 = vadd.s32 %v5649, %v5455
      %v5906 = vadd.s32 %v5650, %v5455
      %v5907 = vadd.s32 %v5651, %v5455
      %v5908 = vadd.s32 %v5652, %v5455
      %v5909 = vadd.s32 %v5653, %v5455
      %v5910 = vadd.s32 %v5654, %v5455
      %v5911 = vadd.s32 %v5655, %v5455
      %v5912 = vadd.s32 %v5656, %v5455
      %v5913 = vadd.s32 %v5657, %v5455
      %v5914 = vadd.s32 %v5658, %v5455
      %v5915 = vadd.s32 %v5659, %v5455
      %v5916 = vadd.s32 %v5660, %v5455
      %v5917 = vadd.s32 %v5661, %v5455
      %v5918 = vadd.s32 %v5662, %v5455
      %v5919 = vadd.s32 %v5663, %v5455
      %v5920 = vadd.s32 %v5664, %v5455
      %v5921 = vadd.s32 %v5665, %v5455
      %v5922 = vadd.s32 %v5666, %v5455
      %v5923 = vadd.s32 %v5667, %v5455
      %v5924 = vadd.s32 %v5668, %v5455
      %v5925 = vadd.s32 %v5669, %v5455
      %v5926 = vadd.s32 %v5670, %v5455
      %v5927 = vadd.s32 %v5671, %v5455
      %v5928 = vadd.s32 %v5672, %v5455
      %v5929 = vadd.s32 %v5673, %v5455
      %v5930 = vadd.s32 %v5674, %v5455
      %v5931 = vadd.s32 %v5675, %v5455
      %v5932 = vadd.s32 %v5676, %v5455
      %v5933 = vadd.s32 %v5677, %v5455
      %v5934 = vadd.s32 %v5678, %v5455
      %v5935 = vadd.s32 %v5679, %v5455
      %v5936 = vadd.s32 %v5680, %v5455
      %v5937 = vadd.s32 %v5681, %v5455
      %v5938 = vadd.s32 %v5682, %v5455
      %v5939 = vadd.s32 %v5683, %v5455
      %v5940 = vadd.s32 %v5684, %v5455
      %v5941 = vadd.s32 %v5685, %v5455
      %v5942 = vadd.s32 %v5686, %v5455
      %v5943 = vadd.s32 %v5687, %v5455
      %v5944 = vadd.s32 %v5688, %v5455
      %v5945 = vadd.s32 %v5689, %v5455
      %v5946 = vadd.s32 %v5690, %v5455
      %v5947 = vadd.s32 %v5691, %v5455
      %v5948 = vadd.s32 %v5692, %v5455
      %v5949 = vadd.s32 %v5693, %v5455
      %v5950 = vadd.s32 %v5694, %v5455
      %v5951 = vadd.s32 %v5695, %v5455
      %v5952 = vadd.s32 %v5696, %v5455
      %v5953 = vadd.s32 %v5697, %v5455
      %v5954 = vadd.s32 %v5698, %v5455
      %v5955 = vadd.s32 %v5699, %v5455
      %v5956 = vadd.s32 %v5700, %v5455
      %v5957 = vadd.s32 %v5701, %v5455
      %v5958 = vadd.s32 %v5702, %v5455
      %v5959 = vadd.s32 %v5703, %v5455
      %v5960 = vadd.s32 %v5704, %v5455
      %v5961 = vadd.s32 %v5705, %v5455
      %v5962 = vadd.s32 %v5706, %v5455
      %v5963 = vadd.s32 %v5707, %v5455
      %v5964 = vadd.s32 %v5708, %v5455
      %v5965 = vadd.s32 %v5709, %v5455
      %v5966 = vadd.s32 %v5710, %v5455
      %v5967 = vadd.s32 %v5711, %v5455
      %s5968 = ssub.s32 %s46, %s49
      %s5969 = ssub.s32 %s47, %s49
      %v5970 = vstv %s5968
      %vm5971 = vcmp.ge.s32.totalorder %v5712, %v5970
      %vm5972 = vcmp.ge.s32.totalorder %v5713, %v5970
      %vm5973 = vcmp.ge.s32.totalorder %v5714, %v5970
      %vm5974 = vcmp.ge.s32.totalorder %v5715, %v5970
      %vm5975 = vcmp.ge.s32.totalorder %v5716, %v5970
      %vm5976 = vcmp.ge.s32.totalorder %v5717, %v5970
      %vm5977 = vcmp.ge.s32.totalorder %v5718, %v5970
      %vm5978 = vcmp.ge.s32.totalorder %v5719, %v5970
      %vm5979 = vcmp.ge.s32.totalorder %v5720, %v5970
      %vm5980 = vcmp.ge.s32.totalorder %v5721, %v5970
      %vm5981 = vcmp.ge.s32.totalorder %v5722, %v5970
      %vm5982 = vcmp.ge.s32.totalorder %v5723, %v5970
      %vm5983 = vcmp.ge.s32.totalorder %v5724, %v5970
      %vm5984 = vcmp.ge.s32.totalorder %v5725, %v5970
      %vm5985 = vcmp.ge.s32.totalorder %v5726, %v5970
      %vm5986 = vcmp.ge.s32.totalorder %v5727, %v5970
      %vm5987 = vcmp.ge.s32.totalorder %v5728, %v5970
      %vm5988 = vcmp.ge.s32.totalorder %v5729, %v5970
      %vm5989 = vcmp.ge.s32.totalorder %v5730, %v5970
      %vm5990 = vcmp.ge.s32.totalorder %v5731, %v5970
      %vm5991 = vcmp.ge.s32.totalorder %v5732, %v5970
      %vm5992 = vcmp.ge.s32.totalorder %v5733, %v5970
      %vm5993 = vcmp.ge.s32.totalorder %v5734, %v5970
      %vm5994 = vcmp.ge.s32.totalorder %v5735, %v5970
      %vm5995 = vcmp.ge.s32.totalorder %v5736, %v5970
      %vm5996 = vcmp.ge.s32.totalorder %v5737, %v5970
      %vm5997 = vcmp.ge.s32.totalorder %v5738, %v5970
      %vm5998 = vcmp.ge.s32.totalorder %v5739, %v5970
      %vm5999 = vcmp.ge.s32.totalorder %v5740, %v5970
      %vm6000 = vcmp.ge.s32.totalorder %v5741, %v5970
      %vm6001 = vcmp.ge.s32.totalorder %v5742, %v5970
      %vm6002 = vcmp.ge.s32.totalorder %v5743, %v5970
      %vm6003 = vcmp.ge.s32.totalorder %v5744, %v5970
      %vm6004 = vcmp.ge.s32.totalorder %v5745, %v5970
      %vm6005 = vcmp.ge.s32.totalorder %v5746, %v5970
      %vm6006 = vcmp.ge.s32.totalorder %v5747, %v5970
      %vm6007 = vcmp.ge.s32.totalorder %v5748, %v5970
      %vm6008 = vcmp.ge.s32.totalorder %v5749, %v5970
      %vm6009 = vcmp.ge.s32.totalorder %v5750, %v5970
      %vm6010 = vcmp.ge.s32.totalorder %v5751, %v5970
      %vm6011 = vcmp.ge.s32.totalorder %v5752, %v5970
      %vm6012 = vcmp.ge.s32.totalorder %v5753, %v5970
      %vm6013 = vcmp.ge.s32.totalorder %v5754, %v5970
      %vm6014 = vcmp.ge.s32.totalorder %v5755, %v5970
      %vm6015 = vcmp.ge.s32.totalorder %v5756, %v5970
      %vm6016 = vcmp.ge.s32.totalorder %v5757, %v5970
      %vm6017 = vcmp.ge.s32.totalorder %v5758, %v5970
      %vm6018 = vcmp.ge.s32.totalorder %v5759, %v5970
      %vm6019 = vcmp.ge.s32.totalorder %v5760, %v5970
      %vm6020 = vcmp.ge.s32.totalorder %v5761, %v5970
      %vm6021 = vcmp.ge.s32.totalorder %v5762, %v5970
      %vm6022 = vcmp.ge.s32.totalorder %v5763, %v5970
      %vm6023 = vcmp.ge.s32.totalorder %v5764, %v5970
      %vm6024 = vcmp.ge.s32.totalorder %v5765, %v5970
      %vm6025 = vcmp.ge.s32.totalorder %v5766, %v5970
      %vm6026 = vcmp.ge.s32.totalorder %v5767, %v5970
      %vm6027 = vcmp.ge.s32.totalorder %v5768, %v5970
      %vm6028 = vcmp.ge.s32.totalorder %v5769, %v5970
      %vm6029 = vcmp.ge.s32.totalorder %v5770, %v5970
      %vm6030 = vcmp.ge.s32.totalorder %v5771, %v5970
      %vm6031 = vcmp.ge.s32.totalorder %v5772, %v5970
      %vm6032 = vcmp.ge.s32.totalorder %v5773, %v5970
      %vm6033 = vcmp.ge.s32.totalorder %v5774, %v5970
      %vm6034 = vcmp.ge.s32.totalorder %v5775, %v5970
      %vm6035 = vcmp.ge.s32.totalorder %v5776, %v5970
      %vm6036 = vcmp.ge.s32.totalorder %v5777, %v5970
      %vm6037 = vcmp.ge.s32.totalorder %v5778, %v5970
      %vm6038 = vcmp.ge.s32.totalorder %v5779, %v5970
      %vm6039 = vcmp.ge.s32.totalorder %v5780, %v5970
      %vm6040 = vcmp.ge.s32.totalorder %v5781, %v5970
      %vm6041 = vcmp.ge.s32.totalorder %v5782, %v5970
      %vm6042 = vcmp.ge.s32.totalorder %v5783, %v5970
      %vm6043 = vcmp.ge.s32.totalorder %v5784, %v5970
      %vm6044 = vcmp.ge.s32.totalorder %v5785, %v5970
      %vm6045 = vcmp.ge.s32.totalorder %v5786, %v5970
      %vm6046 = vcmp.ge.s32.totalorder %v5787, %v5970
      %vm6047 = vcmp.ge.s32.totalorder %v5788, %v5970
      %vm6048 = vcmp.ge.s32.totalorder %v5789, %v5970
      %vm6049 = vcmp.ge.s32.totalorder %v5790, %v5970
      %vm6050 = vcmp.ge.s32.totalorder %v5791, %v5970
      %vm6051 = vcmp.ge.s32.totalorder %v5792, %v5970
      %vm6052 = vcmp.ge.s32.totalorder %v5793, %v5970
      %vm6053 = vcmp.ge.s32.totalorder %v5794, %v5970
      %vm6054 = vcmp.ge.s32.totalorder %v5795, %v5970
      %vm6055 = vcmp.ge.s32.totalorder %v5796, %v5970
      %vm6056 = vcmp.ge.s32.totalorder %v5797, %v5970
      %vm6057 = vcmp.ge.s32.totalorder %v5798, %v5970
      %vm6058 = vcmp.ge.s32.totalorder %v5799, %v5970
      %vm6059 = vcmp.ge.s32.totalorder %v5800, %v5970
      %vm6060 = vcmp.ge.s32.totalorder %v5801, %v5970
      %vm6061 = vcmp.ge.s32.totalorder %v5802, %v5970
      %vm6062 = vcmp.ge.s32.totalorder %v5803, %v5970
      %vm6063 = vcmp.ge.s32.totalorder %v5804, %v5970
      %vm6064 = vcmp.ge.s32.totalorder %v5805, %v5970
      %vm6065 = vcmp.ge.s32.totalorder %v5806, %v5970
      %vm6066 = vcmp.ge.s32.totalorder %v5807, %v5970
      %vm6067 = vcmp.ge.s32.totalorder %v5808, %v5970
      %vm6068 = vcmp.ge.s32.totalorder %v5809, %v5970
      %vm6069 = vcmp.ge.s32.totalorder %v5810, %v5970
      %vm6070 = vcmp.ge.s32.totalorder %v5811, %v5970
      %vm6071 = vcmp.ge.s32.totalorder %v5812, %v5970
      %vm6072 = vcmp.ge.s32.totalorder %v5813, %v5970
      %vm6073 = vcmp.ge.s32.totalorder %v5814, %v5970
      %vm6074 = vcmp.ge.s32.totalorder %v5815, %v5970
      %vm6075 = vcmp.ge.s32.totalorder %v5816, %v5970
      %vm6076 = vcmp.ge.s32.totalorder %v5817, %v5970
      %vm6077 = vcmp.ge.s32.totalorder %v5818, %v5970
      %vm6078 = vcmp.ge.s32.totalorder %v5819, %v5970
      %vm6079 = vcmp.ge.s32.totalorder %v5820, %v5970
      %vm6080 = vcmp.ge.s32.totalorder %v5821, %v5970
      %vm6081 = vcmp.ge.s32.totalorder %v5822, %v5970
      %vm6082 = vcmp.ge.s32.totalorder %v5823, %v5970
      %vm6083 = vcmp.ge.s32.totalorder %v5824, %v5970
      %vm6084 = vcmp.ge.s32.totalorder %v5825, %v5970
      %vm6085 = vcmp.ge.s32.totalorder %v5826, %v5970
      %vm6086 = vcmp.ge.s32.totalorder %v5827, %v5970
      %vm6087 = vcmp.ge.s32.totalorder %v5828, %v5970
      %vm6088 = vcmp.ge.s32.totalorder %v5829, %v5970
      %vm6089 = vcmp.ge.s32.totalorder %v5830, %v5970
      %vm6090 = vcmp.ge.s32.totalorder %v5831, %v5970
      %vm6091 = vcmp.ge.s32.totalorder %v5832, %v5970
      %vm6092 = vcmp.ge.s32.totalorder %v5833, %v5970
      %vm6093 = vcmp.ge.s32.totalorder %v5834, %v5970
      %vm6094 = vcmp.ge.s32.totalorder %v5835, %v5970
      %vm6095 = vcmp.ge.s32.totalorder %v5836, %v5970
      %vm6096 = vcmp.ge.s32.totalorder %v5837, %v5970
      %vm6097 = vcmp.ge.s32.totalorder %v5838, %v5970
      %vm6098 = vcmp.ge.s32.totalorder %v5839, %v5970
      %vm6099 = vcmp.ge.s32.totalorder %v5840, %v5970
      %vm6100 = vcmp.ge.s32.totalorder %v5841, %v5970
      %vm6101 = vcmp.ge.s32.totalorder %v5842, %v5970
      %vm6102 = vcmp.ge.s32.totalorder %v5843, %v5970
      %vm6103 = vcmp.ge.s32.totalorder %v5844, %v5970
      %vm6104 = vcmp.ge.s32.totalorder %v5845, %v5970
      %vm6105 = vcmp.ge.s32.totalorder %v5846, %v5970
      %vm6106 = vcmp.ge.s32.totalorder %v5847, %v5970
      %vm6107 = vcmp.ge.s32.totalorder %v5848, %v5970
      %vm6108 = vcmp.ge.s32.totalorder %v5849, %v5970
      %vm6109 = vcmp.ge.s32.totalorder %v5850, %v5970
      %vm6110 = vcmp.ge.s32.totalorder %v5851, %v5970
      %vm6111 = vcmp.ge.s32.totalorder %v5852, %v5970
      %vm6112 = vcmp.ge.s32.totalorder %v5853, %v5970
      %vm6113 = vcmp.ge.s32.totalorder %v5854, %v5970
      %vm6114 = vcmp.ge.s32.totalorder %v5855, %v5970
      %vm6115 = vcmp.ge.s32.totalorder %v5856, %v5970
      %vm6116 = vcmp.ge.s32.totalorder %v5857, %v5970
      %vm6117 = vcmp.ge.s32.totalorder %v5858, %v5970
      %vm6118 = vcmp.ge.s32.totalorder %v5859, %v5970
      %vm6119 = vcmp.ge.s32.totalorder %v5860, %v5970
      %vm6120 = vcmp.ge.s32.totalorder %v5861, %v5970
      %vm6121 = vcmp.ge.s32.totalorder %v5862, %v5970
      %vm6122 = vcmp.ge.s32.totalorder %v5863, %v5970
      %vm6123 = vcmp.ge.s32.totalorder %v5864, %v5970
      %vm6124 = vcmp.ge.s32.totalorder %v5865, %v5970
      %vm6125 = vcmp.ge.s32.totalorder %v5866, %v5970
      %vm6126 = vcmp.ge.s32.totalorder %v5867, %v5970
      %vm6127 = vcmp.ge.s32.totalorder %v5868, %v5970
      %vm6128 = vcmp.ge.s32.totalorder %v5869, %v5970
      %vm6129 = vcmp.ge.s32.totalorder %v5870, %v5970
      %vm6130 = vcmp.ge.s32.totalorder %v5871, %v5970
      %vm6131 = vcmp.ge.s32.totalorder %v5872, %v5970
      %vm6132 = vcmp.ge.s32.totalorder %v5873, %v5970
      %vm6133 = vcmp.ge.s32.totalorder %v5874, %v5970
      %vm6134 = vcmp.ge.s32.totalorder %v5875, %v5970
      %vm6135 = vcmp.ge.s32.totalorder %v5876, %v5970
      %vm6136 = vcmp.ge.s32.totalorder %v5877, %v5970
      %vm6137 = vcmp.ge.s32.totalorder %v5878, %v5970
      %vm6138 = vcmp.ge.s32.totalorder %v5879, %v5970
      %vm6139 = vcmp.ge.s32.totalorder %v5880, %v5970
      %vm6140 = vcmp.ge.s32.totalorder %v5881, %v5970
      %vm6141 = vcmp.ge.s32.totalorder %v5882, %v5970
      %vm6142 = vcmp.ge.s32.totalorder %v5883, %v5970
      %vm6143 = vcmp.ge.s32.totalorder %v5884, %v5970
      %vm6144 = vcmp.ge.s32.totalorder %v5885, %v5970
      %vm6145 = vcmp.ge.s32.totalorder %v5886, %v5970
      %vm6146 = vcmp.ge.s32.totalorder %v5887, %v5970
      %vm6147 = vcmp.ge.s32.totalorder %v5888, %v5970
      %vm6148 = vcmp.ge.s32.totalorder %v5889, %v5970
      %vm6149 = vcmp.ge.s32.totalorder %v5890, %v5970
      %vm6150 = vcmp.ge.s32.totalorder %v5891, %v5970
      %vm6151 = vcmp.ge.s32.totalorder %v5892, %v5970
      %vm6152 = vcmp.ge.s32.totalorder %v5893, %v5970
      %vm6153 = vcmp.ge.s32.totalorder %v5894, %v5970
      %vm6154 = vcmp.ge.s32.totalorder %v5895, %v5970
      %vm6155 = vcmp.ge.s32.totalorder %v5896, %v5970
      %vm6156 = vcmp.ge.s32.totalorder %v5897, %v5970
      %vm6157 = vcmp.ge.s32.totalorder %v5898, %v5970
      %vm6158 = vcmp.ge.s32.totalorder %v5899, %v5970
      %vm6159 = vcmp.ge.s32.totalorder %v5900, %v5970
      %vm6160 = vcmp.ge.s32.totalorder %v5901, %v5970
      %vm6161 = vcmp.ge.s32.totalorder %v5902, %v5970
      %vm6162 = vcmp.ge.s32.totalorder %v5903, %v5970
      %vm6163 = vcmp.ge.s32.totalorder %v5904, %v5970
      %vm6164 = vcmp.ge.s32.totalorder %v5905, %v5970
      %vm6165 = vcmp.ge.s32.totalorder %v5906, %v5970
      %vm6166 = vcmp.ge.s32.totalorder %v5907, %v5970
      %vm6167 = vcmp.ge.s32.totalorder %v5908, %v5970
      %vm6168 = vcmp.ge.s32.totalorder %v5909, %v5970
      %vm6169 = vcmp.ge.s32.totalorder %v5910, %v5970
      %vm6170 = vcmp.ge.s32.totalorder %v5911, %v5970
      %vm6171 = vcmp.ge.s32.totalorder %v5912, %v5970
      %vm6172 = vcmp.ge.s32.totalorder %v5913, %v5970
      %vm6173 = vcmp.ge.s32.totalorder %v5914, %v5970
      %vm6174 = vcmp.ge.s32.totalorder %v5915, %v5970
      %vm6175 = vcmp.ge.s32.totalorder %v5916, %v5970
      %vm6176 = vcmp.ge.s32.totalorder %v5917, %v5970
      %vm6177 = vcmp.ge.s32.totalorder %v5918, %v5970
      %vm6178 = vcmp.ge.s32.totalorder %v5919, %v5970
      %vm6179 = vcmp.ge.s32.totalorder %v5920, %v5970
      %vm6180 = vcmp.ge.s32.totalorder %v5921, %v5970
      %vm6181 = vcmp.ge.s32.totalorder %v5922, %v5970
      %vm6182 = vcmp.ge.s32.totalorder %v5923, %v5970
      %vm6183 = vcmp.ge.s32.totalorder %v5924, %v5970
      %vm6184 = vcmp.ge.s32.totalorder %v5925, %v5970
      %vm6185 = vcmp.ge.s32.totalorder %v5926, %v5970
      %vm6186 = vcmp.ge.s32.totalorder %v5927, %v5970
      %vm6187 = vcmp.ge.s32.totalorder %v5928, %v5970
      %vm6188 = vcmp.ge.s32.totalorder %v5929, %v5970
      %vm6189 = vcmp.ge.s32.totalorder %v5930, %v5970
      %vm6190 = vcmp.ge.s32.totalorder %v5931, %v5970
      %vm6191 = vcmp.ge.s32.totalorder %v5932, %v5970
      %vm6192 = vcmp.ge.s32.totalorder %v5933, %v5970
      %vm6193 = vcmp.ge.s32.totalorder %v5934, %v5970
      %vm6194 = vcmp.ge.s32.totalorder %v5935, %v5970
      %vm6195 = vcmp.ge.s32.totalorder %v5936, %v5970
      %vm6196 = vcmp.ge.s32.totalorder %v5937, %v5970
      %vm6197 = vcmp.ge.s32.totalorder %v5938, %v5970
      %vm6198 = vcmp.ge.s32.totalorder %v5939, %v5970
      %vm6199 = vcmp.ge.s32.totalorder %v5940, %v5970
      %vm6200 = vcmp.ge.s32.totalorder %v5941, %v5970
      %vm6201 = vcmp.ge.s32.totalorder %v5942, %v5970
      %vm6202 = vcmp.ge.s32.totalorder %v5943, %v5970
      %vm6203 = vcmp.ge.s32.totalorder %v5944, %v5970
      %vm6204 = vcmp.ge.s32.totalorder %v5945, %v5970
      %vm6205 = vcmp.ge.s32.totalorder %v5946, %v5970
      %vm6206 = vcmp.ge.s32.totalorder %v5947, %v5970
      %vm6207 = vcmp.ge.s32.totalorder %v5948, %v5970
      %vm6208 = vcmp.ge.s32.totalorder %v5949, %v5970
      %vm6209 = vcmp.ge.s32.totalorder %v5950, %v5970
      %vm6210 = vcmp.ge.s32.totalorder %v5951, %v5970
      %vm6211 = vcmp.ge.s32.totalorder %v5952, %v5970
      %vm6212 = vcmp.ge.s32.totalorder %v5953, %v5970
      %vm6213 = vcmp.ge.s32.totalorder %v5954, %v5970
      %vm6214 = vcmp.ge.s32.totalorder %v5955, %v5970
      %vm6215 = vcmp.ge.s32.totalorder %v5956, %v5970
      %vm6216 = vcmp.ge.s32.totalorder %v5957, %v5970
      %vm6217 = vcmp.ge.s32.totalorder %v5958, %v5970
      %vm6218 = vcmp.ge.s32.totalorder %v5959, %v5970
      %vm6219 = vcmp.ge.s32.totalorder %v5960, %v5970
      %vm6220 = vcmp.ge.s32.totalorder %v5961, %v5970
      %vm6221 = vcmp.ge.s32.totalorder %v5962, %v5970
      %vm6222 = vcmp.ge.s32.totalorder %v5963, %v5970
      %vm6223 = vcmp.ge.s32.totalorder %v5964, %v5970
      %vm6224 = vcmp.ge.s32.totalorder %v5965, %v5970
      %vm6225 = vcmp.ge.s32.totalorder %v5966, %v5970
      %vm6226 = vcmp.ge.s32.totalorder %v5967, %v5970
      %v6227 = vstv %s5969
      %vm6228 = vcmp.lt.s32.totalorder %v5712, %v6227
      %vm6229 = vcmp.lt.s32.totalorder %v5713, %v6227
      %vm6230 = vcmp.lt.s32.totalorder %v5714, %v6227
      %vm6231 = vcmp.lt.s32.totalorder %v5715, %v6227
      %vm6232 = vcmp.lt.s32.totalorder %v5716, %v6227
      %vm6233 = vcmp.lt.s32.totalorder %v5717, %v6227
      %vm6234 = vcmp.lt.s32.totalorder %v5718, %v6227
      %vm6235 = vcmp.lt.s32.totalorder %v5719, %v6227
      %vm6236 = vcmp.lt.s32.totalorder %v5720, %v6227
      %vm6237 = vcmp.lt.s32.totalorder %v5721, %v6227
      %vm6238 = vcmp.lt.s32.totalorder %v5722, %v6227
      %vm6239 = vcmp.lt.s32.totalorder %v5723, %v6227
      %vm6240 = vcmp.lt.s32.totalorder %v5724, %v6227
      %vm6241 = vcmp.lt.s32.totalorder %v5725, %v6227
      %vm6242 = vcmp.lt.s32.totalorder %v5726, %v6227
      %vm6243 = vcmp.lt.s32.totalorder %v5727, %v6227
      %vm6244 = vcmp.lt.s32.totalorder %v5728, %v6227
      %vm6245 = vcmp.lt.s32.totalorder %v5729, %v6227
      %vm6246 = vcmp.lt.s32.totalorder %v5730, %v6227
      %vm6247 = vcmp.lt.s32.totalorder %v5731, %v6227
      %vm6248 = vcmp.lt.s32.totalorder %v5732, %v6227
      %vm6249 = vcmp.lt.s32.totalorder %v5733, %v6227
      %vm6250 = vcmp.lt.s32.totalorder %v5734, %v6227
      %vm6251 = vcmp.lt.s32.totalorder %v5735, %v6227
      %vm6252 = vcmp.lt.s32.totalorder %v5736, %v6227
      %vm6253 = vcmp.lt.s32.totalorder %v5737, %v6227
      %vm6254 = vcmp.lt.s32.totalorder %v5738, %v6227
      %vm6255 = vcmp.lt.s32.totalorder %v5739, %v6227
      %vm6256 = vcmp.lt.s32.totalorder %v5740, %v6227
      %vm6257 = vcmp.lt.s32.totalorder %v5741, %v6227
      %vm6258 = vcmp.lt.s32.totalorder %v5742, %v6227
      %vm6259 = vcmp.lt.s32.totalorder %v5743, %v6227
      %vm6260 = vcmp.lt.s32.totalorder %v5744, %v6227
      %vm6261 = vcmp.lt.s32.totalorder %v5745, %v6227
      %vm6262 = vcmp.lt.s32.totalorder %v5746, %v6227
      %vm6263 = vcmp.lt.s32.totalorder %v5747, %v6227
      %vm6264 = vcmp.lt.s32.totalorder %v5748, %v6227
      %vm6265 = vcmp.lt.s32.totalorder %v5749, %v6227
      %vm6266 = vcmp.lt.s32.totalorder %v5750, %v6227
      %vm6267 = vcmp.lt.s32.totalorder %v5751, %v6227
      %vm6268 = vcmp.lt.s32.totalorder %v5752, %v6227
      %vm6269 = vcmp.lt.s32.totalorder %v5753, %v6227
      %vm6270 = vcmp.lt.s32.totalorder %v5754, %v6227
      %vm6271 = vcmp.lt.s32.totalorder %v5755, %v6227
      %vm6272 = vcmp.lt.s32.totalorder %v5756, %v6227
      %vm6273 = vcmp.lt.s32.totalorder %v5757, %v6227
      %vm6274 = vcmp.lt.s32.totalorder %v5758, %v6227
      %vm6275 = vcmp.lt.s32.totalorder %v5759, %v6227
      %vm6276 = vcmp.lt.s32.totalorder %v5760, %v6227
      %vm6277 = vcmp.lt.s32.totalorder %v5761, %v6227
      %vm6278 = vcmp.lt.s32.totalorder %v5762, %v6227
      %vm6279 = vcmp.lt.s32.totalorder %v5763, %v6227
      %vm6280 = vcmp.lt.s32.totalorder %v5764, %v6227
      %vm6281 = vcmp.lt.s32.totalorder %v5765, %v6227
      %vm6282 = vcmp.lt.s32.totalorder %v5766, %v6227
      %vm6283 = vcmp.lt.s32.totalorder %v5767, %v6227
      %vm6284 = vcmp.lt.s32.totalorder %v5768, %v6227
      %vm6285 = vcmp.lt.s32.totalorder %v5769, %v6227
      %vm6286 = vcmp.lt.s32.totalorder %v5770, %v6227
      %vm6287 = vcmp.lt.s32.totalorder %v5771, %v6227
      %vm6288 = vcmp.lt.s32.totalorder %v5772, %v6227
      %vm6289 = vcmp.lt.s32.totalorder %v5773, %v6227
      %vm6290 = vcmp.lt.s32.totalorder %v5774, %v6227
      %vm6291 = vcmp.lt.s32.totalorder %v5775, %v6227
      %vm6292 = vcmp.lt.s32.totalorder %v5776, %v6227
      %vm6293 = vcmp.lt.s32.totalorder %v5777, %v6227
      %vm6294 = vcmp.lt.s32.totalorder %v5778, %v6227
      %vm6295 = vcmp.lt.s32.totalorder %v5779, %v6227
      %vm6296 = vcmp.lt.s32.totalorder %v5780, %v6227
      %vm6297 = vcmp.lt.s32.totalorder %v5781, %v6227
      %vm6298 = vcmp.lt.s32.totalorder %v5782, %v6227
      %vm6299 = vcmp.lt.s32.totalorder %v5783, %v6227
      %vm6300 = vcmp.lt.s32.totalorder %v5784, %v6227
      %vm6301 = vcmp.lt.s32.totalorder %v5785, %v6227
      %vm6302 = vcmp.lt.s32.totalorder %v5786, %v6227
      %vm6303 = vcmp.lt.s32.totalorder %v5787, %v6227
      %vm6304 = vcmp.lt.s32.totalorder %v5788, %v6227
      %vm6305 = vcmp.lt.s32.totalorder %v5789, %v6227
      %vm6306 = vcmp.lt.s32.totalorder %v5790, %v6227
      %vm6307 = vcmp.lt.s32.totalorder %v5791, %v6227
      %vm6308 = vcmp.lt.s32.totalorder %v5792, %v6227
      %vm6309 = vcmp.lt.s32.totalorder %v5793, %v6227
      %vm6310 = vcmp.lt.s32.totalorder %v5794, %v6227
      %vm6311 = vcmp.lt.s32.totalorder %v5795, %v6227
      %vm6312 = vcmp.lt.s32.totalorder %v5796, %v6227
      %vm6313 = vcmp.lt.s32.totalorder %v5797, %v6227
      %vm6314 = vcmp.lt.s32.totalorder %v5798, %v6227
      %vm6315 = vcmp.lt.s32.totalorder %v5799, %v6227
      %vm6316 = vcmp.lt.s32.totalorder %v5800, %v6227
      %vm6317 = vcmp.lt.s32.totalorder %v5801, %v6227
      %vm6318 = vcmp.lt.s32.totalorder %v5802, %v6227
      %vm6319 = vcmp.lt.s32.totalorder %v5803, %v6227
      %vm6320 = vcmp.lt.s32.totalorder %v5804, %v6227
      %vm6321 = vcmp.lt.s32.totalorder %v5805, %v6227
      %vm6322 = vcmp.lt.s32.totalorder %v5806, %v6227
      %vm6323 = vcmp.lt.s32.totalorder %v5807, %v6227
      %vm6324 = vcmp.lt.s32.totalorder %v5808, %v6227
      %vm6325 = vcmp.lt.s32.totalorder %v5809, %v6227
      %vm6326 = vcmp.lt.s32.totalorder %v5810, %v6227
      %vm6327 = vcmp.lt.s32.totalorder %v5811, %v6227
      %vm6328 = vcmp.lt.s32.totalorder %v5812, %v6227
      %vm6329 = vcmp.lt.s32.totalorder %v5813, %v6227
      %vm6330 = vcmp.lt.s32.totalorder %v5814, %v6227
      %vm6331 = vcmp.lt.s32.totalorder %v5815, %v6227
      %vm6332 = vcmp.lt.s32.totalorder %v5816, %v6227
      %vm6333 = vcmp.lt.s32.totalorder %v5817, %v6227
      %vm6334 = vcmp.lt.s32.totalorder %v5818, %v6227
      %vm6335 = vcmp.lt.s32.totalorder %v5819, %v6227
      %vm6336 = vcmp.lt.s32.totalorder %v5820, %v6227
      %vm6337 = vcmp.lt.s32.totalorder %v5821, %v6227
      %vm6338 = vcmp.lt.s32.totalorder %v5822, %v6227
      %vm6339 = vcmp.lt.s32.totalorder %v5823, %v6227
      %vm6340 = vcmp.lt.s32.totalorder %v5824, %v6227
      %vm6341 = vcmp.lt.s32.totalorder %v5825, %v6227
      %vm6342 = vcmp.lt.s32.totalorder %v5826, %v6227
      %vm6343 = vcmp.lt.s32.totalorder %v5827, %v6227
      %vm6344 = vcmp.lt.s32.totalorder %v5828, %v6227
      %vm6345 = vcmp.lt.s32.totalorder %v5829, %v6227
      %vm6346 = vcmp.lt.s32.totalorder %v5830, %v6227
      %vm6347 = vcmp.lt.s32.totalorder %v5831, %v6227
      %vm6348 = vcmp.lt.s32.totalorder %v5832, %v6227
      %vm6349 = vcmp.lt.s32.totalorder %v5833, %v6227
      %vm6350 = vcmp.lt.s32.totalorder %v5834, %v6227
      %vm6351 = vcmp.lt.s32.totalorder %v5835, %v6227
      %vm6352 = vcmp.lt.s32.totalorder %v5836, %v6227
      %vm6353 = vcmp.lt.s32.totalorder %v5837, %v6227
      %vm6354 = vcmp.lt.s32.totalorder %v5838, %v6227
      %vm6355 = vcmp.lt.s32.totalorder %v5839, %v6227
      %vm6356 = vcmp.lt.s32.totalorder %v5840, %v6227
      %vm6357 = vcmp.lt.s32.totalorder %v5841, %v6227
      %vm6358 = vcmp.lt.s32.totalorder %v5842, %v6227
      %vm6359 = vcmp.lt.s32.totalorder %v5843, %v6227
      %vm6360 = vcmp.lt.s32.totalorder %v5844, %v6227
      %vm6361 = vcmp.lt.s32.totalorder %v5845, %v6227
      %vm6362 = vcmp.lt.s32.totalorder %v5846, %v6227
      %vm6363 = vcmp.lt.s32.totalorder %v5847, %v6227
      %vm6364 = vcmp.lt.s32.totalorder %v5848, %v6227
      %vm6365 = vcmp.lt.s32.totalorder %v5849, %v6227
      %vm6366 = vcmp.lt.s32.totalorder %v5850, %v6227
      %vm6367 = vcmp.lt.s32.totalorder %v5851, %v6227
      %vm6368 = vcmp.lt.s32.totalorder %v5852, %v6227
      %vm6369 = vcmp.lt.s32.totalorder %v5853, %v6227
      %vm6370 = vcmp.lt.s32.totalorder %v5854, %v6227
      %vm6371 = vcmp.lt.s32.totalorder %v5855, %v6227
      %vm6372 = vcmp.lt.s32.totalorder %v5856, %v6227
      %vm6373 = vcmp.lt.s32.totalorder %v5857, %v6227
      %vm6374 = vcmp.lt.s32.totalorder %v5858, %v6227
      %vm6375 = vcmp.lt.s32.totalorder %v5859, %v6227
      %vm6376 = vcmp.lt.s32.totalorder %v5860, %v6227
      %vm6377 = vcmp.lt.s32.totalorder %v5861, %v6227
      %vm6378 = vcmp.lt.s32.totalorder %v5862, %v6227
      %vm6379 = vcmp.lt.s32.totalorder %v5863, %v6227
      %vm6380 = vcmp.lt.s32.totalorder %v5864, %v6227
      %vm6381 = vcmp.lt.s32.totalorder %v5865, %v6227
      %vm6382 = vcmp.lt.s32.totalorder %v5866, %v6227
      %vm6383 = vcmp.lt.s32.totalorder %v5867, %v6227
      %vm6384 = vcmp.lt.s32.totalorder %v5868, %v6227
      %vm6385 = vcmp.lt.s32.totalorder %v5869, %v6227
      %vm6386 = vcmp.lt.s32.totalorder %v5870, %v6227
      %vm6387 = vcmp.lt.s32.totalorder %v5871, %v6227
      %vm6388 = vcmp.lt.s32.totalorder %v5872, %v6227
      %vm6389 = vcmp.lt.s32.totalorder %v5873, %v6227
      %vm6390 = vcmp.lt.s32.totalorder %v5874, %v6227
      %vm6391 = vcmp.lt.s32.totalorder %v5875, %v6227
      %vm6392 = vcmp.lt.s32.totalorder %v5876, %v6227
      %vm6393 = vcmp.lt.s32.totalorder %v5877, %v6227
      %vm6394 = vcmp.lt.s32.totalorder %v5878, %v6227
      %vm6395 = vcmp.lt.s32.totalorder %v5879, %v6227
      %vm6396 = vcmp.lt.s32.totalorder %v5880, %v6227
      %vm6397 = vcmp.lt.s32.totalorder %v5881, %v6227
      %vm6398 = vcmp.lt.s32.totalorder %v5882, %v6227
      %vm6399 = vcmp.lt.s32.totalorder %v5883, %v6227
      %vm6400 = vcmp.lt.s32.totalorder %v5884, %v6227
      %vm6401 = vcmp.lt.s32.totalorder %v5885, %v6227
      %vm6402 = vcmp.lt.s32.totalorder %v5886, %v6227
      %vm6403 = vcmp.lt.s32.totalorder %v5887, %v6227
      %vm6404 = vcmp.lt.s32.totalorder %v5888, %v6227
      %vm6405 = vcmp.lt.s32.totalorder %v5889, %v6227
      %vm6406 = vcmp.lt.s32.totalorder %v5890, %v6227
      %vm6407 = vcmp.lt.s32.totalorder %v5891, %v6227
      %vm6408 = vcmp.lt.s32.totalorder %v5892, %v6227
      %vm6409 = vcmp.lt.s32.totalorder %v5893, %v6227
      %vm6410 = vcmp.lt.s32.totalorder %v5894, %v6227
      %vm6411 = vcmp.lt.s32.totalorder %v5895, %v6227
      %vm6412 = vcmp.lt.s32.totalorder %v5896, %v6227
      %vm6413 = vcmp.lt.s32.totalorder %v5897, %v6227
      %vm6414 = vcmp.lt.s32.totalorder %v5898, %v6227
      %vm6415 = vcmp.lt.s32.totalorder %v5899, %v6227
      %vm6416 = vcmp.lt.s32.totalorder %v5900, %v6227
      %vm6417 = vcmp.lt.s32.totalorder %v5901, %v6227
      %vm6418 = vcmp.lt.s32.totalorder %v5902, %v6227
      %vm6419 = vcmp.lt.s32.totalorder %v5903, %v6227
      %vm6420 = vcmp.lt.s32.totalorder %v5904, %v6227
      %vm6421 = vcmp.lt.s32.totalorder %v5905, %v6227
      %vm6422 = vcmp.lt.s32.totalorder %v5906, %v6227
      %vm6423 = vcmp.lt.s32.totalorder %v5907, %v6227
      %vm6424 = vcmp.lt.s32.totalorder %v5908, %v6227
      %vm6425 = vcmp.lt.s32.totalorder %v5909, %v6227
      %vm6426 = vcmp.lt.s32.totalorder %v5910, %v6227
      %vm6427 = vcmp.lt.s32.totalorder %v5911, %v6227
      %vm6428 = vcmp.lt.s32.totalorder %v5912, %v6227
      %vm6429 = vcmp.lt.s32.totalorder %v5913, %v6227
      %vm6430 = vcmp.lt.s32.totalorder %v5914, %v6227
      %vm6431 = vcmp.lt.s32.totalorder %v5915, %v6227
      %vm6432 = vcmp.lt.s32.totalorder %v5916, %v6227
      %vm6433 = vcmp.lt.s32.totalorder %v5917, %v6227
      %vm6434 = vcmp.lt.s32.totalorder %v5918, %v6227
      %vm6435 = vcmp.lt.s32.totalorder %v5919, %v6227
      %vm6436 = vcmp.lt.s32.totalorder %v5920, %v6227
      %vm6437 = vcmp.lt.s32.totalorder %v5921, %v6227
      %vm6438 = vcmp.lt.s32.totalorder %v5922, %v6227
      %vm6439 = vcmp.lt.s32.totalorder %v5923, %v6227
      %vm6440 = vcmp.lt.s32.totalorder %v5924, %v6227
      %vm6441 = vcmp.lt.s32.totalorder %v5925, %v6227
      %vm6442 = vcmp.lt.s32.totalorder %v5926, %v6227
      %vm6443 = vcmp.lt.s32.totalorder %v5927, %v6227
      %vm6444 = vcmp.lt.s32.totalorder %v5928, %v6227
      %vm6445 = vcmp.lt.s32.totalorder %v5929, %v6227
      %vm6446 = vcmp.lt.s32.totalorder %v5930, %v6227
      %vm6447 = vcmp.lt.s32.totalorder %v5931, %v6227
      %vm6448 = vcmp.lt.s32.totalorder %v5932, %v6227
      %vm6449 = vcmp.lt.s32.totalorder %v5933, %v6227
      %vm6450 = vcmp.lt.s32.totalorder %v5934, %v6227
      %vm6451 = vcmp.lt.s32.totalorder %v5935, %v6227
      %vm6452 = vcmp.lt.s32.totalorder %v5936, %v6227
      %vm6453 = vcmp.lt.s32.totalorder %v5937, %v6227
      %vm6454 = vcmp.lt.s32.totalorder %v5938, %v6227
      %vm6455 = vcmp.lt.s32.totalorder %v5939, %v6227
      %vm6456 = vcmp.lt.s32.totalorder %v5940, %v6227
      %vm6457 = vcmp.lt.s32.totalorder %v5941, %v6227
      %vm6458 = vcmp.lt.s32.totalorder %v5942, %v6227
      %vm6459 = vcmp.lt.s32.totalorder %v5943, %v6227
      %vm6460 = vcmp.lt.s32.totalorder %v5944, %v6227
      %vm6461 = vcmp.lt.s32.totalorder %v5945, %v6227
      %vm6462 = vcmp.lt.s32.totalorder %v5946, %v6227
      %vm6463 = vcmp.lt.s32.totalorder %v5947, %v6227
      %vm6464 = vcmp.lt.s32.totalorder %v5948, %v6227
      %vm6465 = vcmp.lt.s32.totalorder %v5949, %v6227
      %vm6466 = vcmp.lt.s32.totalorder %v5950, %v6227
      %vm6467 = vcmp.lt.s32.totalorder %v5951, %v6227
      %vm6468 = vcmp.lt.s32.totalorder %v5952, %v6227
      %vm6469 = vcmp.lt.s32.totalorder %v5953, %v6227
      %vm6470 = vcmp.lt.s32.totalorder %v5954, %v6227
      %vm6471 = vcmp.lt.s32.totalorder %v5955, %v6227
      %vm6472 = vcmp.lt.s32.totalorder %v5956, %v6227
      %vm6473 = vcmp.lt.s32.totalorder %v5957, %v6227
      %vm6474 = vcmp.lt.s32.totalorder %v5958, %v6227
      %vm6475 = vcmp.lt.s32.totalorder %v5959, %v6227
      %vm6476 = vcmp.lt.s32.totalorder %v5960, %v6227
      %vm6477 = vcmp.lt.s32.totalorder %v5961, %v6227
      %vm6478 = vcmp.lt.s32.totalorder %v5962, %v6227
      %vm6479 = vcmp.lt.s32.totalorder %v5963, %v6227
      %vm6480 = vcmp.lt.s32.totalorder %v5964, %v6227
      %vm6481 = vcmp.lt.s32.totalorder %v5965, %v6227
      %vm6482 = vcmp.lt.s32.totalorder %v5966, %v6227
      %vm6483 = vcmp.lt.s32.totalorder %v5967, %v6227
      %vm6484 = vmand %vm5971, %vm6228
      %vm6485 = vmand %vm5972, %vm6229
      %vm6486 = vmand %vm5973, %vm6230
      %vm6487 = vmand %vm5974, %vm6231
      %vm6488 = vmand %vm5975, %vm6232
      %vm6489 = vmand %vm5976, %vm6233
      %vm6490 = vmand %vm5977, %vm6234
      %vm6491 = vmand %vm5978, %vm6235
      %vm6492 = vmand %vm5979, %vm6236
      %vm6493 = vmand %vm5980, %vm6237
      %vm6494 = vmand %vm5981, %vm6238
      %vm6495 = vmand %vm5982, %vm6239
      %vm6496 = vmand %vm5983, %vm6240
      %vm6497 = vmand %vm5984, %vm6241
      %vm6498 = vmand %vm5985, %vm6242
      %vm6499 = vmand %vm5986, %vm6243
      %vm6500 = vmand %vm5987, %vm6244
      %vm6501 = vmand %vm5988, %vm6245
      %vm6502 = vmand %vm5989, %vm6246
      %vm6503 = vmand %vm5990, %vm6247
      %vm6504 = vmand %vm5991, %vm6248
      %vm6505 = vmand %vm5992, %vm6249
      %vm6506 = vmand %vm5993, %vm6250
      %vm6507 = vmand %vm5994, %vm6251
      %vm6508 = vmand %vm5995, %vm6252
      %vm6509 = vmand %vm5996, %vm6253
      %vm6510 = vmand %vm5997, %vm6254
      %vm6511 = vmand %vm5998, %vm6255
      %vm6512 = vmand %vm5999, %vm6256
      %vm6513 = vmand %vm6000, %vm6257
      %vm6514 = vmand %vm6001, %vm6258
      %vm6515 = vmand %vm6002, %vm6259
      %vm6516 = vmand %vm6003, %vm6260
      %vm6517 = vmand %vm6004, %vm6261
      %vm6518 = vmand %vm6005, %vm6262
      %vm6519 = vmand %vm6006, %vm6263
      %vm6520 = vmand %vm6007, %vm6264
      %vm6521 = vmand %vm6008, %vm6265
      %vm6522 = vmand %vm6009, %vm6266
      %vm6523 = vmand %vm6010, %vm6267
      %vm6524 = vmand %vm6011, %vm6268
      %vm6525 = vmand %vm6012, %vm6269
      %vm6526 = vmand %vm6013, %vm6270
      %vm6527 = vmand %vm6014, %vm6271
      %vm6528 = vmand %vm6015, %vm6272
      %vm6529 = vmand %vm6016, %vm6273
      %vm6530 = vmand %vm6017, %vm6274
      %vm6531 = vmand %vm6018, %vm6275
      %vm6532 = vmand %vm6019, %vm6276
      %vm6533 = vmand %vm6020, %vm6277
      %vm6534 = vmand %vm6021, %vm6278
      %vm6535 = vmand %vm6022, %vm6279
      %vm6536 = vmand %vm6023, %vm6280
      %vm6537 = vmand %vm6024, %vm6281
      %vm6538 = vmand %vm6025, %vm6282
      %vm6539 = vmand %vm6026, %vm6283
      %vm6540 = vmand %vm6027, %vm6284
      %vm6541 = vmand %vm6028, %vm6285
      %vm6542 = vmand %vm6029, %vm6286
      %vm6543 = vmand %vm6030, %vm6287
      %vm6544 = vmand %vm6031, %vm6288
      %vm6545 = vmand %vm6032, %vm6289
      %vm6546 = vmand %vm6033, %vm6290
      %vm6547 = vmand %vm6034, %vm6291
      %vm6548 = vmand %vm6035, %vm6292
      %vm6549 = vmand %vm6036, %vm6293
      %vm6550 = vmand %vm6037, %vm6294
      %vm6551 = vmand %vm6038, %vm6295
      %vm6552 = vmand %vm6039, %vm6296
      %vm6553 = vmand %vm6040, %vm6297
      %vm6554 = vmand %vm6041, %vm6298
      %vm6555 = vmand %vm6042, %vm6299
      %vm6556 = vmand %vm6043, %vm6300
      %vm6557 = vmand %vm6044, %vm6301
      %vm6558 = vmand %vm6045, %vm6302
      %vm6559 = vmand %vm6046, %vm6303
      %vm6560 = vmand %vm6047, %vm6304
      %vm6561 = vmand %vm6048, %vm6305
      %vm6562 = vmand %vm6049, %vm6306
      %vm6563 = vmand %vm6050, %vm6307
      %vm6564 = vmand %vm6051, %vm6308
      %vm6565 = vmand %vm6052, %vm6309
      %vm6566 = vmand %vm6053, %vm6310
      %vm6567 = vmand %vm6054, %vm6311
      %vm6568 = vmand %vm6055, %vm6312
      %vm6569 = vmand %vm6056, %vm6313
      %vm6570 = vmand %vm6057, %vm6314
      %vm6571 = vmand %vm6058, %vm6315
      %vm6572 = vmand %vm6059, %vm6316
      %vm6573 = vmand %vm6060, %vm6317
      %vm6574 = vmand %vm6061, %vm6318
      %vm6575 = vmand %vm6062, %vm6319
      %vm6576 = vmand %vm6063, %vm6320
      %vm6577 = vmand %vm6064, %vm6321
      %vm6578 = vmand %vm6065, %vm6322
      %vm6579 = vmand %vm6066, %vm6323
      %vm6580 = vmand %vm6067, %vm6324
      %vm6581 = vmand %vm6068, %vm6325
      %vm6582 = vmand %vm6069, %vm6326
      %vm6583 = vmand %vm6070, %vm6327
      %vm6584 = vmand %vm6071, %vm6328
      %vm6585 = vmand %vm6072, %vm6329
      %vm6586 = vmand %vm6073, %vm6330
      %vm6587 = vmand %vm6074, %vm6331
      %vm6588 = vmand %vm6075, %vm6332
      %vm6589 = vmand %vm6076, %vm6333
      %vm6590 = vmand %vm6077, %vm6334
      %vm6591 = vmand %vm6078, %vm6335
      %vm6592 = vmand %vm6079, %vm6336
      %vm6593 = vmand %vm6080, %vm6337
      %vm6594 = vmand %vm6081, %vm6338
      %vm6595 = vmand %vm6082, %vm6339
      %vm6596 = vmand %vm6083, %vm6340
      %vm6597 = vmand %vm6084, %vm6341
      %vm6598 = vmand %vm6085, %vm6342
      %vm6599 = vmand %vm6086, %vm6343
      %vm6600 = vmand %vm6087, %vm6344
      %vm6601 = vmand %vm6088, %vm6345
      %vm6602 = vmand %vm6089, %vm6346
      %vm6603 = vmand %vm6090, %vm6347
      %vm6604 = vmand %vm6091, %vm6348
      %vm6605 = vmand %vm6092, %vm6349
      %vm6606 = vmand %vm6093, %vm6350
      %vm6607 = vmand %vm6094, %vm6351
      %vm6608 = vmand %vm6095, %vm6352
      %vm6609 = vmand %vm6096, %vm6353
      %vm6610 = vmand %vm6097, %vm6354
      %vm6611 = vmand %vm6098, %vm6355
      %vm6612 = vmand %vm6099, %vm6356
      %vm6613 = vmand %vm6100, %vm6357
      %vm6614 = vmand %vm6101, %vm6358
      %vm6615 = vmand %vm6102, %vm6359
      %vm6616 = vmand %vm6103, %vm6360
      %vm6617 = vmand %vm6104, %vm6361
      %vm6618 = vmand %vm6105, %vm6362
      %vm6619 = vmand %vm6106, %vm6363
      %vm6620 = vmand %vm6107, %vm6364
      %vm6621 = vmand %vm6108, %vm6365
      %vm6622 = vmand %vm6109, %vm6366
      %vm6623 = vmand %vm6110, %vm6367
      %vm6624 = vmand %vm6111, %vm6368
      %vm6625 = vmand %vm6112, %vm6369
      %vm6626 = vmand %vm6113, %vm6370
      %vm6627 = vmand %vm6114, %vm6371
      %vm6628 = vmand %vm6115, %vm6372
      %vm6629 = vmand %vm6116, %vm6373
      %vm6630 = vmand %vm6117, %vm6374
      %vm6631 = vmand %vm6118, %vm6375
      %vm6632 = vmand %vm6119, %vm6376
      %vm6633 = vmand %vm6120, %vm6377
      %vm6634 = vmand %vm6121, %vm6378
      %vm6635 = vmand %vm6122, %vm6379
      %vm6636 = vmand %vm6123, %vm6380
      %vm6637 = vmand %vm6124, %vm6381
      %vm6638 = vmand %vm6125, %vm6382
      %vm6639 = vmand %vm6126, %vm6383
      %vm6640 = vmand %vm6127, %vm6384
      %vm6641 = vmand %vm6128, %vm6385
      %vm6642 = vmand %vm6129, %vm6386
      %vm6643 = vmand %vm6130, %vm6387
      %vm6644 = vmand %vm6131, %vm6388
      %vm6645 = vmand %vm6132, %vm6389
      %vm6646 = vmand %vm6133, %vm6390
      %vm6647 = vmand %vm6134, %vm6391
      %vm6648 = vmand %vm6135, %vm6392
      %vm6649 = vmand %vm6136, %vm6393
      %vm6650 = vmand %vm6137, %vm6394
      %vm6651 = vmand %vm6138, %vm6395
      %vm6652 = vmand %vm6139, %vm6396
      %vm6653 = vmand %vm6140, %vm6397
      %vm6654 = vmand %vm6141, %vm6398
      %vm6655 = vmand %vm6142, %vm6399
      %vm6656 = vmand %vm6143, %vm6400
      %vm6657 = vmand %vm6144, %vm6401
      %vm6658 = vmand %vm6145, %vm6402
      %vm6659 = vmand %vm6146, %vm6403
      %vm6660 = vmand %vm6147, %vm6404
      %vm6661 = vmand %vm6148, %vm6405
      %vm6662 = vmand %vm6149, %vm6406
      %vm6663 = vmand %vm6150, %vm6407
      %vm6664 = vmand %vm6151, %vm6408
      %vm6665 = vmand %vm6152, %vm6409
      %vm6666 = vmand %vm6153, %vm6410
      %vm6667 = vmand %vm6154, %vm6411
      %vm6668 = vmand %vm6155, %vm6412
      %vm6669 = vmand %vm6156, %vm6413
      %vm6670 = vmand %vm6157, %vm6414
      %vm6671 = vmand %vm6158, %vm6415
      %vm6672 = vmand %vm6159, %vm6416
      %vm6673 = vmand %vm6160, %vm6417
      %vm6674 = vmand %vm6161, %vm6418
      %vm6675 = vmand %vm6162, %vm6419
      %vm6676 = vmand %vm6163, %vm6420
      %vm6677 = vmand %vm6164, %vm6421
      %vm6678 = vmand %vm6165, %vm6422
      %vm6679 = vmand %vm6166, %vm6423
      %vm6680 = vmand %vm6167, %vm6424
      %vm6681 = vmand %vm6168, %vm6425
      %vm6682 = vmand %vm6169, %vm6426
      %vm6683 = vmand %vm6170, %vm6427
      %vm6684 = vmand %vm6171, %vm6428
      %vm6685 = vmand %vm6172, %vm6429
      %vm6686 = vmand %vm6173, %vm6430
      %vm6687 = vmand %vm6174, %vm6431
      %vm6688 = vmand %vm6175, %vm6432
      %vm6689 = vmand %vm6176, %vm6433
      %vm6690 = vmand %vm6177, %vm6434
      %vm6691 = vmand %vm6178, %vm6435
      %vm6692 = vmand %vm6179, %vm6436
      %vm6693 = vmand %vm6180, %vm6437
      %vm6694 = vmand %vm6181, %vm6438
      %vm6695 = vmand %vm6182, %vm6439
      %vm6696 = vmand %vm6183, %vm6440
      %vm6697 = vmand %vm6184, %vm6441
      %vm6698 = vmand %vm6185, %vm6442
      %vm6699 = vmand %vm6186, %vm6443
      %vm6700 = vmand %vm6187, %vm6444
      %vm6701 = vmand %vm6188, %vm6445
      %vm6702 = vmand %vm6189, %vm6446
      %vm6703 = vmand %vm6190, %vm6447
      %vm6704 = vmand %vm6191, %vm6448
      %vm6705 = vmand %vm6192, %vm6449
      %vm6706 = vmand %vm6193, %vm6450
      %vm6707 = vmand %vm6194, %vm6451
      %vm6708 = vmand %vm6195, %vm6452
      %vm6709 = vmand %vm6196, %vm6453
      %vm6710 = vmand %vm6197, %vm6454
      %vm6711 = vmand %vm6198, %vm6455
      %vm6712 = vmand %vm6199, %vm6456
      %vm6713 = vmand %vm6200, %vm6457
      %vm6714 = vmand %vm6201, %vm6458
      %vm6715 = vmand %vm6202, %vm6459
      %vm6716 = vmand %vm6203, %vm6460
      %vm6717 = vmand %vm6204, %vm6461
      %vm6718 = vmand %vm6205, %vm6462
      %vm6719 = vmand %vm6206, %vm6463
      %vm6720 = vmand %vm6207, %vm6464
      %vm6721 = vmand %vm6208, %vm6465
      %vm6722 = vmand %vm6209, %vm6466
      %vm6723 = vmand %vm6210, %vm6467
      %vm6724 = vmand %vm6211, %vm6468
      %vm6725 = vmand %vm6212, %vm6469
      %vm6726 = vmand %vm6213, %vm6470
      %vm6727 = vmand %vm6214, %vm6471
      %vm6728 = vmand %vm6215, %vm6472
      %vm6729 = vmand %vm6216, %vm6473
      %vm6730 = vmand %vm6217, %vm6474
      %vm6731 = vmand %vm6218, %vm6475
      %vm6732 = vmand %vm6219, %vm6476
      %vm6733 = vmand %vm6220, %vm6477
      %vm6734 = vmand %vm6221, %vm6478
      %vm6735 = vmand %vm6222, %vm6479
      %vm6736 = vmand %vm6223, %vm6480
      %vm6737 = vmand %vm6224, %vm6481
      %vm6738 = vmand %vm6225, %vm6482
      %vm6739 = vmand %vm6226, %vm6483
      %vm6740 = vcmp.lt.s32.totalorder %v5712, %v5970
      %vm6741 = vcmp.lt.s32.totalorder %v5713, %v5970
      %vm6742 = vcmp.lt.s32.totalorder %v5714, %v5970
      %vm6743 = vcmp.lt.s32.totalorder %v5715, %v5970
      %vm6744 = vcmp.lt.s32.totalorder %v5716, %v5970
      %vm6745 = vcmp.lt.s32.totalorder %v5717, %v5970
      %vm6746 = vcmp.lt.s32.totalorder %v5718, %v5970
      %vm6747 = vcmp.lt.s32.totalorder %v5719, %v5970
      %vm6748 = vcmp.lt.s32.totalorder %v5720, %v5970
      %vm6749 = vcmp.lt.s32.totalorder %v5721, %v5970
      %vm6750 = vcmp.lt.s32.totalorder %v5722, %v5970
      %vm6751 = vcmp.lt.s32.totalorder %v5723, %v5970
      %vm6752 = vcmp.lt.s32.totalorder %v5724, %v5970
      %vm6753 = vcmp.lt.s32.totalorder %v5725, %v5970
      %vm6754 = vcmp.lt.s32.totalorder %v5726, %v5970
      %vm6755 = vcmp.lt.s32.totalorder %v5727, %v5970
      %vm6756 = vcmp.lt.s32.totalorder %v5728, %v5970
      %vm6757 = vcmp.lt.s32.totalorder %v5729, %v5970
      %vm6758 = vcmp.lt.s32.totalorder %v5730, %v5970
      %vm6759 = vcmp.lt.s32.totalorder %v5731, %v5970
      %vm6760 = vcmp.lt.s32.totalorder %v5732, %v5970
      %vm6761 = vcmp.lt.s32.totalorder %v5733, %v5970
      %vm6762 = vcmp.lt.s32.totalorder %v5734, %v5970
      %vm6763 = vcmp.lt.s32.totalorder %v5735, %v5970
      %vm6764 = vcmp.lt.s32.totalorder %v5736, %v5970
      %vm6765 = vcmp.lt.s32.totalorder %v5737, %v5970
      %vm6766 = vcmp.lt.s32.totalorder %v5738, %v5970
      %vm6767 = vcmp.lt.s32.totalorder %v5739, %v5970
      %vm6768 = vcmp.lt.s32.totalorder %v5740, %v5970
      %vm6769 = vcmp.lt.s32.totalorder %v5741, %v5970
      %vm6770 = vcmp.lt.s32.totalorder %v5742, %v5970
      %vm6771 = vcmp.lt.s32.totalorder %v5743, %v5970
      %vm6772 = vcmp.lt.s32.totalorder %v5744, %v5970
      %vm6773 = vcmp.lt.s32.totalorder %v5745, %v5970
      %vm6774 = vcmp.lt.s32.totalorder %v5746, %v5970
      %vm6775 = vcmp.lt.s32.totalorder %v5747, %v5970
      %vm6776 = vcmp.lt.s32.totalorder %v5748, %v5970
      %vm6777 = vcmp.lt.s32.totalorder %v5749, %v5970
      %vm6778 = vcmp.lt.s32.totalorder %v5750, %v5970
      %vm6779 = vcmp.lt.s32.totalorder %v5751, %v5970
      %vm6780 = vcmp.lt.s32.totalorder %v5752, %v5970
      %vm6781 = vcmp.lt.s32.totalorder %v5753, %v5970
      %vm6782 = vcmp.lt.s32.totalorder %v5754, %v5970
      %vm6783 = vcmp.lt.s32.totalorder %v5755, %v5970
      %vm6784 = vcmp.lt.s32.totalorder %v5756, %v5970
      %vm6785 = vcmp.lt.s32.totalorder %v5757, %v5970
      %vm6786 = vcmp.lt.s32.totalorder %v5758, %v5970
      %vm6787 = vcmp.lt.s32.totalorder %v5759, %v5970
      %vm6788 = vcmp.lt.s32.totalorder %v5760, %v5970
      %vm6789 = vcmp.lt.s32.totalorder %v5761, %v5970
      %vm6790 = vcmp.lt.s32.totalorder %v5762, %v5970
      %vm6791 = vcmp.lt.s32.totalorder %v5763, %v5970
      %vm6792 = vcmp.lt.s32.totalorder %v5764, %v5970
      %vm6793 = vcmp.lt.s32.totalorder %v5765, %v5970
      %vm6794 = vcmp.lt.s32.totalorder %v5766, %v5970
      %vm6795 = vcmp.lt.s32.totalorder %v5767, %v5970
      %vm6796 = vcmp.lt.s32.totalorder %v5768, %v5970
      %vm6797 = vcmp.lt.s32.totalorder %v5769, %v5970
      %vm6798 = vcmp.lt.s32.totalorder %v5770, %v5970
      %vm6799 = vcmp.lt.s32.totalorder %v5771, %v5970
      %vm6800 = vcmp.lt.s32.totalorder %v5772, %v5970
      %vm6801 = vcmp.lt.s32.totalorder %v5773, %v5970
      %vm6802 = vcmp.lt.s32.totalorder %v5774, %v5970
      %vm6803 = vcmp.lt.s32.totalorder %v5775, %v5970
      %vm6804 = vcmp.lt.s32.totalorder %v5776, %v5970
      %vm6805 = vcmp.lt.s32.totalorder %v5777, %v5970
      %vm6806 = vcmp.lt.s32.totalorder %v5778, %v5970
      %vm6807 = vcmp.lt.s32.totalorder %v5779, %v5970
      %vm6808 = vcmp.lt.s32.totalorder %v5780, %v5970
      %vm6809 = vcmp.lt.s32.totalorder %v5781, %v5970
      %vm6810 = vcmp.lt.s32.totalorder %v5782, %v5970
      %vm6811 = vcmp.lt.s32.totalorder %v5783, %v5970
      %vm6812 = vcmp.lt.s32.totalorder %v5784, %v5970
      %vm6813 = vcmp.lt.s32.totalorder %v5785, %v5970
      %vm6814 = vcmp.lt.s32.totalorder %v5786, %v5970
      %vm6815 = vcmp.lt.s32.totalorder %v5787, %v5970
      %vm6816 = vcmp.lt.s32.totalorder %v5788, %v5970
      %vm6817 = vcmp.lt.s32.totalorder %v5789, %v5970
      %vm6818 = vcmp.lt.s32.totalorder %v5790, %v5970
      %vm6819 = vcmp.lt.s32.totalorder %v5791, %v5970
      %vm6820 = vcmp.lt.s32.totalorder %v5792, %v5970
      %vm6821 = vcmp.lt.s32.totalorder %v5793, %v5970
      %vm6822 = vcmp.lt.s32.totalorder %v5794, %v5970
      %vm6823 = vcmp.lt.s32.totalorder %v5795, %v5970
      %vm6824 = vcmp.lt.s32.totalorder %v5796, %v5970
      %vm6825 = vcmp.lt.s32.totalorder %v5797, %v5970
      %vm6826 = vcmp.lt.s32.totalorder %v5798, %v5970
      %vm6827 = vcmp.lt.s32.totalorder %v5799, %v5970
      %vm6828 = vcmp.lt.s32.totalorder %v5800, %v5970
      %vm6829 = vcmp.lt.s32.totalorder %v5801, %v5970
      %vm6830 = vcmp.lt.s32.totalorder %v5802, %v5970
      %vm6831 = vcmp.lt.s32.totalorder %v5803, %v5970
      %vm6832 = vcmp.lt.s32.totalorder %v5804, %v5970
      %vm6833 = vcmp.lt.s32.totalorder %v5805, %v5970
      %vm6834 = vcmp.lt.s32.totalorder %v5806, %v5970
      %vm6835 = vcmp.lt.s32.totalorder %v5807, %v5970
      %vm6836 = vcmp.lt.s32.totalorder %v5808, %v5970
      %vm6837 = vcmp.lt.s32.totalorder %v5809, %v5970
      %vm6838 = vcmp.lt.s32.totalorder %v5810, %v5970
      %vm6839 = vcmp.lt.s32.totalorder %v5811, %v5970
      %vm6840 = vcmp.lt.s32.totalorder %v5812, %v5970
      %vm6841 = vcmp.lt.s32.totalorder %v5813, %v5970
      %vm6842 = vcmp.lt.s32.totalorder %v5814, %v5970
      %vm6843 = vcmp.lt.s32.totalorder %v5815, %v5970
      %vm6844 = vcmp.lt.s32.totalorder %v5816, %v5970
      %vm6845 = vcmp.lt.s32.totalorder %v5817, %v5970
      %vm6846 = vcmp.lt.s32.totalorder %v5818, %v5970
      %vm6847 = vcmp.lt.s32.totalorder %v5819, %v5970
      %vm6848 = vcmp.lt.s32.totalorder %v5820, %v5970
      %vm6849 = vcmp.lt.s32.totalorder %v5821, %v5970
      %vm6850 = vcmp.lt.s32.totalorder %v5822, %v5970
      %vm6851 = vcmp.lt.s32.totalorder %v5823, %v5970
      %vm6852 = vcmp.lt.s32.totalorder %v5824, %v5970
      %vm6853 = vcmp.lt.s32.totalorder %v5825, %v5970
      %vm6854 = vcmp.lt.s32.totalorder %v5826, %v5970
      %vm6855 = vcmp.lt.s32.totalorder %v5827, %v5970
      %vm6856 = vcmp.lt.s32.totalorder %v5828, %v5970
      %vm6857 = vcmp.lt.s32.totalorder %v5829, %v5970
      %vm6858 = vcmp.lt.s32.totalorder %v5830, %v5970
      %vm6859 = vcmp.lt.s32.totalorder %v5831, %v5970
      %vm6860 = vcmp.lt.s32.totalorder %v5832, %v5970
      %vm6861 = vcmp.lt.s32.totalorder %v5833, %v5970
      %vm6862 = vcmp.lt.s32.totalorder %v5834, %v5970
      %vm6863 = vcmp.lt.s32.totalorder %v5835, %v5970
      %vm6864 = vcmp.lt.s32.totalorder %v5836, %v5970
      %vm6865 = vcmp.lt.s32.totalorder %v5837, %v5970
      %vm6866 = vcmp.lt.s32.totalorder %v5838, %v5970
      %vm6867 = vcmp.lt.s32.totalorder %v5839, %v5970
      %vm6868 = vcmp.lt.s32.totalorder %v5840, %v5970
      %vm6869 = vcmp.lt.s32.totalorder %v5841, %v5970
      %vm6870 = vcmp.lt.s32.totalorder %v5842, %v5970
      %vm6871 = vcmp.lt.s32.totalorder %v5843, %v5970
      %vm6872 = vcmp.lt.s32.totalorder %v5844, %v5970
      %vm6873 = vcmp.lt.s32.totalorder %v5845, %v5970
      %vm6874 = vcmp.lt.s32.totalorder %v5846, %v5970
      %vm6875 = vcmp.lt.s32.totalorder %v5847, %v5970
      %vm6876 = vcmp.lt.s32.totalorder %v5848, %v5970
      %vm6877 = vcmp.lt.s32.totalorder %v5849, %v5970
      %vm6878 = vcmp.lt.s32.totalorder %v5850, %v5970
      %vm6879 = vcmp.lt.s32.totalorder %v5851, %v5970
      %vm6880 = vcmp.lt.s32.totalorder %v5852, %v5970
      %vm6881 = vcmp.lt.s32.totalorder %v5853, %v5970
      %vm6882 = vcmp.lt.s32.totalorder %v5854, %v5970
      %vm6883 = vcmp.lt.s32.totalorder %v5855, %v5970
      %vm6884 = vcmp.lt.s32.totalorder %v5856, %v5970
      %vm6885 = vcmp.lt.s32.totalorder %v5857, %v5970
      %vm6886 = vcmp.lt.s32.totalorder %v5858, %v5970
      %vm6887 = vcmp.lt.s32.totalorder %v5859, %v5970
      %vm6888 = vcmp.lt.s32.totalorder %v5860, %v5970
      %vm6889 = vcmp.lt.s32.totalorder %v5861, %v5970
      %vm6890 = vcmp.lt.s32.totalorder %v5862, %v5970
      %vm6891 = vcmp.lt.s32.totalorder %v5863, %v5970
      %vm6892 = vcmp.lt.s32.totalorder %v5864, %v5970
      %vm6893 = vcmp.lt.s32.totalorder %v5865, %v5970
      %vm6894 = vcmp.lt.s32.totalorder %v5866, %v5970
      %vm6895 = vcmp.lt.s32.totalorder %v5867, %v5970
      %vm6896 = vcmp.lt.s32.totalorder %v5868, %v5970
      %vm6897 = vcmp.lt.s32.totalorder %v5869, %v5970
      %vm6898 = vcmp.lt.s32.totalorder %v5870, %v5970
      %vm6899 = vcmp.lt.s32.totalorder %v5871, %v5970
      %vm6900 = vcmp.lt.s32.totalorder %v5872, %v5970
      %vm6901 = vcmp.lt.s32.totalorder %v5873, %v5970
      %vm6902 = vcmp.lt.s32.totalorder %v5874, %v5970
      %vm6903 = vcmp.lt.s32.totalorder %v5875, %v5970
      %vm6904 = vcmp.lt.s32.totalorder %v5876, %v5970
      %vm6905 = vcmp.lt.s32.totalorder %v5877, %v5970
      %vm6906 = vcmp.lt.s32.totalorder %v5878, %v5970
      %vm6907 = vcmp.lt.s32.totalorder %v5879, %v5970
      %vm6908 = vcmp.lt.s32.totalorder %v5880, %v5970
      %vm6909 = vcmp.lt.s32.totalorder %v5881, %v5970
      %vm6910 = vcmp.lt.s32.totalorder %v5882, %v5970
      %vm6911 = vcmp.lt.s32.totalorder %v5883, %v5970
      %vm6912 = vcmp.lt.s32.totalorder %v5884, %v5970
      %vm6913 = vcmp.lt.s32.totalorder %v5885, %v5970
      %vm6914 = vcmp.lt.s32.totalorder %v5886, %v5970
      %vm6915 = vcmp.lt.s32.totalorder %v5887, %v5970
      %vm6916 = vcmp.lt.s32.totalorder %v5888, %v5970
      %vm6917 = vcmp.lt.s32.totalorder %v5889, %v5970
      %vm6918 = vcmp.lt.s32.totalorder %v5890, %v5970
      %vm6919 = vcmp.lt.s32.totalorder %v5891, %v5970
      %vm6920 = vcmp.lt.s32.totalorder %v5892, %v5970
      %vm6921 = vcmp.lt.s32.totalorder %v5893, %v5970
      %vm6922 = vcmp.lt.s32.totalorder %v5894, %v5970
      %vm6923 = vcmp.lt.s32.totalorder %v5895, %v5970
      %vm6924 = vcmp.lt.s32.totalorder %v5896, %v5970
      %vm6925 = vcmp.lt.s32.totalorder %v5897, %v5970
      %vm6926 = vcmp.lt.s32.totalorder %v5898, %v5970
      %vm6927 = vcmp.lt.s32.totalorder %v5899, %v5970
      %vm6928 = vcmp.lt.s32.totalorder %v5900, %v5970
      %vm6929 = vcmp.lt.s32.totalorder %v5901, %v5970
      %vm6930 = vcmp.lt.s32.totalorder %v5902, %v5970
      %vm6931 = vcmp.lt.s32.totalorder %v5903, %v5970
      %vm6932 = vcmp.lt.s32.totalorder %v5904, %v5970
      %vm6933 = vcmp.lt.s32.totalorder %v5905, %v5970
      %vm6934 = vcmp.lt.s32.totalorder %v5906, %v5970
      %vm6935 = vcmp.lt.s32.totalorder %v5907, %v5970
      %vm6936 = vcmp.lt.s32.totalorder %v5908, %v5970
      %vm6937 = vcmp.lt.s32.totalorder %v5909, %v5970
      %vm6938 = vcmp.lt.s32.totalorder %v5910, %v5970
      %vm6939 = vcmp.lt.s32.totalorder %v5911, %v5970
      %vm6940 = vcmp.lt.s32.totalorder %v5912, %v5970
      %vm6941 = vcmp.lt.s32.totalorder %v5913, %v5970
      %vm6942 = vcmp.lt.s32.totalorder %v5914, %v5970
      %vm6943 = vcmp.lt.s32.totalorder %v5915, %v5970
      %vm6944 = vcmp.lt.s32.totalorder %v5916, %v5970
      %vm6945 = vcmp.lt.s32.totalorder %v5917, %v5970
      %vm6946 = vcmp.lt.s32.totalorder %v5918, %v5970
      %vm6947 = vcmp.lt.s32.totalorder %v5919, %v5970
      %vm6948 = vcmp.lt.s32.totalorder %v5920, %v5970
      %vm6949 = vcmp.lt.s32.totalorder %v5921, %v5970
      %vm6950 = vcmp.lt.s32.totalorder %v5922, %v5970
      %vm6951 = vcmp.lt.s32.totalorder %v5923, %v5970
      %vm6952 = vcmp.lt.s32.totalorder %v5924, %v5970
      %vm6953 = vcmp.lt.s32.totalorder %v5925, %v5970
      %vm6954 = vcmp.lt.s32.totalorder %v5926, %v5970
      %vm6955 = vcmp.lt.s32.totalorder %v5927, %v5970
      %vm6956 = vcmp.lt.s32.totalorder %v5928, %v5970
      %vm6957 = vcmp.lt.s32.totalorder %v5929, %v5970
      %vm6958 = vcmp.lt.s32.totalorder %v5930, %v5970
      %vm6959 = vcmp.lt.s32.totalorder %v5931, %v5970
      %vm6960 = vcmp.lt.s32.totalorder %v5932, %v5970
      %vm6961 = vcmp.lt.s32.totalorder %v5933, %v5970
      %vm6962 = vcmp.lt.s32.totalorder %v5934, %v5970
      %vm6963 = vcmp.lt.s32.totalorder %v5935, %v5970
      %vm6964 = vcmp.lt.s32.totalorder %v5936, %v5970
      %vm6965 = vcmp.lt.s32.totalorder %v5937, %v5970
      %vm6966 = vcmp.lt.s32.totalorder %v5938, %v5970
      %vm6967 = vcmp.lt.s32.totalorder %v5939, %v5970
      %vm6968 = vcmp.lt.s32.totalorder %v5940, %v5970
      %vm6969 = vcmp.lt.s32.totalorder %v5941, %v5970
      %vm6970 = vcmp.lt.s32.totalorder %v5942, %v5970
      %vm6971 = vcmp.lt.s32.totalorder %v5943, %v5970
      %vm6972 = vcmp.lt.s32.totalorder %v5944, %v5970
      %vm6973 = vcmp.lt.s32.totalorder %v5945, %v5970
      %vm6974 = vcmp.lt.s32.totalorder %v5946, %v5970
      %vm6975 = vcmp.lt.s32.totalorder %v5947, %v5970
      %vm6976 = vcmp.lt.s32.totalorder %v5948, %v5970
      %vm6977 = vcmp.lt.s32.totalorder %v5949, %v5970
      %vm6978 = vcmp.lt.s32.totalorder %v5950, %v5970
      %vm6979 = vcmp.lt.s32.totalorder %v5951, %v5970
      %vm6980 = vcmp.lt.s32.totalorder %v5952, %v5970
      %vm6981 = vcmp.lt.s32.totalorder %v5953, %v5970
      %vm6982 = vcmp.lt.s32.totalorder %v5954, %v5970
      %vm6983 = vcmp.lt.s32.totalorder %v5955, %v5970
      %vm6984 = vcmp.lt.s32.totalorder %v5956, %v5970
      %vm6985 = vcmp.lt.s32.totalorder %v5957, %v5970
      %vm6986 = vcmp.lt.s32.totalorder %v5958, %v5970
      %vm6987 = vcmp.lt.s32.totalorder %v5959, %v5970
      %vm6988 = vcmp.lt.s32.totalorder %v5960, %v5970
      %vm6989 = vcmp.lt.s32.totalorder %v5961, %v5970
      %vm6990 = vcmp.lt.s32.totalorder %v5962, %v5970
      %vm6991 = vcmp.lt.s32.totalorder %v5963, %v5970
      %vm6992 = vcmp.lt.s32.totalorder %v5964, %v5970
      %vm6993 = vcmp.lt.s32.totalorder %v5965, %v5970
      %vm6994 = vcmp.lt.s32.totalorder %v5966, %v5970
      %vm6995 = vcmp.lt.s32.totalorder %v5967, %v5970
      %v6996 = vld [vmem:[%s2] sm:$0xff]
      %v6997 = vsel %vm6484, %v4160, 0.0
      %v6998 = vsel %vm6485, %v4161, 0.0
      %v6999 = vsel %vm6486, %v4162, 0.0
      %v7000 = vsel %vm6487, %v4163, 0.0
      %v7001 = vsel %vm6488, %v4164, 0.0
      %v7002 = vsel %vm6489, %v4165, 0.0
      %v7003 = vsel %vm6490, %v4166, 0.0
      %v7004 = vsel %vm6491, %v4167, 0.0
      %v7005 = vsel %vm6492, %v4168, 0.0
      %v7006 = vsel %vm6493, %v4169, 0.0
      %v7007 = vsel %vm6494, %v4170, 0.0
      %v7008 = vsel %vm6495, %v4171, 0.0
      %v7009 = vsel %vm6496, %v4172, 0.0
      %v7010 = vsel %vm6497, %v4173, 0.0
      %v7011 = vsel %vm6498, %v4174, 0.0
      %v7012 = vsel %vm6499, %v4175, 0.0
      %v7013 = vsel %vm6500, %v4176, 0.0
      %v7014 = vsel %vm6501, %v4177, 0.0
      %v7015 = vsel %vm6502, %v4178, 0.0
      %v7016 = vsel %vm6503, %v4179, 0.0
      %v7017 = vsel %vm6504, %v4180, 0.0
      %v7018 = vsel %vm6505, %v4181, 0.0
      %v7019 = vsel %vm6506, %v4182, 0.0
      %v7020 = vsel %vm6507, %v4183, 0.0
      %v7021 = vsel %vm6508, %v4184, 0.0
      %v7022 = vsel %vm6509, %v4185, 0.0
      %v7023 = vsel %vm6510, %v4186, 0.0
      %v7024 = vsel %vm6511, %v4187, 0.0
      %v7025 = vsel %vm6512, %v4188, 0.0
      %v7026 = vsel %vm6513, %v4189, 0.0
      %v7027 = vsel %vm6514, %v4190, 0.0
      %v7028 = vsel %vm6515, %v4191, 0.0
      %v7029 = vsel %vm6516, %v4192, 0.0
      %v7030 = vsel %vm6517, %v4193, 0.0
      %v7031 = vsel %vm6518, %v4194, 0.0
      %v7032 = vsel %vm6519, %v4195, 0.0
      %v7033 = vsel %vm6520, %v4196, 0.0
      %v7034 = vsel %vm6521, %v4197, 0.0
      %v7035 = vsel %vm6522, %v4198, 0.0
      %v7036 = vsel %vm6523, %v4199, 0.0
      %v7037 = vsel %vm6524, %v4200, 0.0
      %v7038 = vsel %vm6525, %v4201, 0.0
      %v7039 = vsel %vm6526, %v4202, 0.0
      %v7040 = vsel %vm6527, %v4203, 0.0
      %v7041 = vsel %vm6528, %v4204, 0.0
      %v7042 = vsel %vm6529, %v4205, 0.0
      %v7043 = vsel %vm6530, %v4206, 0.0
      %v7044 = vsel %vm6531, %v4207, 0.0
      %v7045 = vsel %vm6532, %v4208, 0.0
      %v7046 = vsel %vm6533, %v4209, 0.0
      %v7047 = vsel %vm6534, %v4210, 0.0
      %v7048 = vsel %vm6535, %v4211, 0.0
      %v7049 = vsel %vm6536, %v4212, 0.0
      %v7050 = vsel %vm6537, %v4213, 0.0
      %v7051 = vsel %vm6538, %v4214, 0.0
      %v7052 = vsel %vm6539, %v4215, 0.0
      %v7053 = vsel %vm6540, %v4216, 0.0
      %v7054 = vsel %vm6541, %v4217, 0.0
      %v7055 = vsel %vm6542, %v4218, 0.0
      %v7056 = vsel %vm6543, %v4219, 0.0
      %v7057 = vsel %vm6544, %v4220, 0.0
      %v7058 = vsel %vm6545, %v4221, 0.0
      %v7059 = vsel %vm6546, %v4222, 0.0
      %v7060 = vsel %vm6547, %v4223, 0.0
      %v7061 = vsel %vm6548, %v4224, 0.0
      %v7062 = vsel %vm6549, %v4225, 0.0
      %v7063 = vsel %vm6550, %v4226, 0.0
      %v7064 = vsel %vm6551, %v4227, 0.0
      %v7065 = vsel %vm6552, %v4228, 0.0
      %v7066 = vsel %vm6553, %v4229, 0.0
      %v7067 = vsel %vm6554, %v4230, 0.0
      %v7068 = vsel %vm6555, %v4231, 0.0
      %v7069 = vsel %vm6556, %v4232, 0.0
      %v7070 = vsel %vm6557, %v4233, 0.0
      %v7071 = vsel %vm6558, %v4234, 0.0
      %v7072 = vsel %vm6559, %v4235, 0.0
      %v7073 = vsel %vm6560, %v4236, 0.0
      %v7074 = vsel %vm6561, %v4237, 0.0
      %v7075 = vsel %vm6562, %v4238, 0.0
      %v7076 = vsel %vm6563, %v4239, 0.0
      %v7077 = vsel %vm6564, %v4240, 0.0
      %v7078 = vsel %vm6565, %v4241, 0.0
      %v7079 = vsel %vm6566, %v4242, 0.0
      %v7080 = vsel %vm6567, %v4243, 0.0
      %v7081 = vsel %vm6568, %v4244, 0.0
      %v7082 = vsel %vm6569, %v4245, 0.0
      %v7083 = vsel %vm6570, %v4246, 0.0
      %v7084 = vsel %vm6571, %v4247, 0.0
      %v7085 = vsel %vm6572, %v4248, 0.0
      %v7086 = vsel %vm6573, %v4249, 0.0
      %v7087 = vsel %vm6574, %v4250, 0.0
      %v7088 = vsel %vm6575, %v4251, 0.0
      %v7089 = vsel %vm6576, %v4252, 0.0
      %v7090 = vsel %vm6577, %v4253, 0.0
      %v7091 = vsel %vm6578, %v4254, 0.0
      %v7092 = vsel %vm6579, %v4255, 0.0
      %v7093 = vsel %vm6580, %v4256, 0.0
      %v7094 = vsel %vm6581, %v4257, 0.0
      %v7095 = vsel %vm6582, %v4258, 0.0
      %v7096 = vsel %vm6583, %v4259, 0.0
      %v7097 = vsel %vm6584, %v4260, 0.0
      %v7098 = vsel %vm6585, %v4261, 0.0
      %v7099 = vsel %vm6586, %v4262, 0.0
      %v7100 = vsel %vm6587, %v4263, 0.0
      %v7101 = vsel %vm6588, %v4264, 0.0
      %v7102 = vsel %vm6589, %v4265, 0.0
      %v7103 = vsel %vm6590, %v4266, 0.0
      %v7104 = vsel %vm6591, %v4267, 0.0
      %v7105 = vsel %vm6592, %v4268, 0.0
      %v7106 = vsel %vm6593, %v4269, 0.0
      %v7107 = vsel %vm6594, %v4270, 0.0
      %v7108 = vsel %vm6595, %v4271, 0.0
      %v7109 = vsel %vm6596, %v4272, 0.0
      %v7110 = vsel %vm6597, %v4273, 0.0
      %v7111 = vsel %vm6598, %v4274, 0.0
      %v7112 = vsel %vm6599, %v4275, 0.0
      %v7113 = vsel %vm6600, %v4276, 0.0
      %v7114 = vsel %vm6601, %v4277, 0.0
      %v7115 = vsel %vm6602, %v4278, 0.0
      %v7116 = vsel %vm6603, %v4279, 0.0
      %v7117 = vsel %vm6604, %v4280, 0.0
      %v7118 = vsel %vm6605, %v4281, 0.0
      %v7119 = vsel %vm6606, %v4282, 0.0
      %v7120 = vsel %vm6607, %v4283, 0.0
      %v7121 = vsel %vm6608, %v4284, 0.0
      %v7122 = vsel %vm6609, %v4285, 0.0
      %v7123 = vsel %vm6610, %v4286, 0.0
      %v7124 = vsel %vm6611, %v4287, 0.0
      %v7125 = vsel %vm6612, %v4288, 0.0
      %v7126 = vsel %vm6613, %v4289, 0.0
      %v7127 = vsel %vm6614, %v4290, 0.0
      %v7128 = vsel %vm6615, %v4291, 0.0
      %v7129 = vsel %vm6616, %v4292, 0.0
      %v7130 = vsel %vm6617, %v4293, 0.0
      %v7131 = vsel %vm6618, %v4294, 0.0
      %v7132 = vsel %vm6619, %v4295, 0.0
      %v7133 = vsel %vm6620, %v4296, 0.0
      %v7134 = vsel %vm6621, %v4297, 0.0
      %v7135 = vsel %vm6622, %v4298, 0.0
      %v7136 = vsel %vm6623, %v4299, 0.0
      %v7137 = vsel %vm6624, %v4300, 0.0
      %v7138 = vsel %vm6625, %v4301, 0.0
      %v7139 = vsel %vm6626, %v4302, 0.0
      %v7140 = vsel %vm6627, %v4303, 0.0
      %v7141 = vsel %vm6628, %v4304, 0.0
      %v7142 = vsel %vm6629, %v4305, 0.0
      %v7143 = vsel %vm6630, %v4306, 0.0
      %v7144 = vsel %vm6631, %v4307, 0.0
      %v7145 = vsel %vm6632, %v4308, 0.0
      %v7146 = vsel %vm6633, %v4309, 0.0
      %v7147 = vsel %vm6634, %v4310, 0.0
      %v7148 = vsel %vm6635, %v4311, 0.0
      %v7149 = vsel %vm6636, %v4312, 0.0
      %v7150 = vsel %vm6637, %v4313, 0.0
      %v7151 = vsel %vm6638, %v4314, 0.0
      %v7152 = vsel %vm6639, %v4315, 0.0
      %v7153 = vsel %vm6640, %v4316, 0.0
      %v7154 = vsel %vm6641, %v4317, 0.0
      %v7155 = vsel %vm6642, %v4318, 0.0
      %v7156 = vsel %vm6643, %v4319, 0.0
      %v7157 = vsel %vm6644, %v4320, 0.0
      %v7158 = vsel %vm6645, %v4321, 0.0
      %v7159 = vsel %vm6646, %v4322, 0.0
      %v7160 = vsel %vm6647, %v4323, 0.0
      %v7161 = vsel %vm6648, %v4324, 0.0
      %v7162 = vsel %vm6649, %v4325, 0.0
      %v7163 = vsel %vm6650, %v4326, 0.0
      %v7164 = vsel %vm6651, %v4327, 0.0
      %v7165 = vsel %vm6652, %v4328, 0.0
      %v7166 = vsel %vm6653, %v4329, 0.0
      %v7167 = vsel %vm6654, %v4330, 0.0
      %v7168 = vsel %vm6655, %v4331, 0.0
      %v7169 = vsel %vm6656, %v4332, 0.0
      %v7170 = vsel %vm6657, %v4333, 0.0
      %v7171 = vsel %vm6658, %v4334, 0.0
      %v7172 = vsel %vm6659, %v4335, 0.0
      %v7173 = vsel %vm6660, %v4336, 0.0
      %v7174 = vsel %vm6661, %v4337, 0.0
      %v7175 = vsel %vm6662, %v4338, 0.0
      %v7176 = vsel %vm6663, %v4339, 0.0
      %v7177 = vsel %vm6664, %v4340, 0.0
      %v7178 = vsel %vm6665, %v4341, 0.0
      %v7179 = vsel %vm6666, %v4342, 0.0
      %v7180 = vsel %vm6667, %v4343, 0.0
      %v7181 = vsel %vm6668, %v4344, 0.0
      %v7182 = vsel %vm6669, %v4345, 0.0
      %v7183 = vsel %vm6670, %v4346, 0.0
      %v7184 = vsel %vm6671, %v4347, 0.0
      %v7185 = vsel %vm6672, %v4348, 0.0
      %v7186 = vsel %vm6673, %v4349, 0.0
      %v7187 = vsel %vm6674, %v4350, 0.0
      %v7188 = vsel %vm6675, %v4351, 0.0
      %v7189 = vsel %vm6676, %v4352, 0.0
      %v7190 = vsel %vm6677, %v4353, 0.0
      %v7191 = vsel %vm6678, %v4354, 0.0
      %v7192 = vsel %vm6679, %v4355, 0.0
      %v7193 = vsel %vm6680, %v4356, 0.0
      %v7194 = vsel %vm6681, %v4357, 0.0
      %v7195 = vsel %vm6682, %v4358, 0.0
      %v7196 = vsel %vm6683, %v4359, 0.0
      %v7197 = vsel %vm6684, %v4360, 0.0
      %v7198 = vsel %vm6685, %v4361, 0.0
      %v7199 = vsel %vm6686, %v4362, 0.0
      %v7200 = vsel %vm6687, %v4363, 0.0
      %v7201 = vsel %vm6688, %v4364, 0.0
      %v7202 = vsel %vm6689, %v4365, 0.0
      %v7203 = vsel %vm6690, %v4366, 0.0
      %v7204 = vsel %vm6691, %v4367, 0.0
      %v7205 = vsel %vm6692, %v4368, 0.0
      %v7206 = vsel %vm6693, %v4369, 0.0
      %v7207 = vsel %vm6694, %v4370, 0.0
      %v7208 = vsel %vm6695, %v4371, 0.0
      %v7209 = vsel %vm6696, %v4372, 0.0
      %v7210 = vsel %vm6697, %v4373, 0.0
      %v7211 = vsel %vm6698, %v4374, 0.0
      %v7212 = vsel %vm6699, %v4375, 0.0
      %v7213 = vsel %vm6700, %v4376, 0.0
      %v7214 = vsel %vm6701, %v4377, 0.0
      %v7215 = vsel %vm6702, %v4378, 0.0
      %v7216 = vsel %vm6703, %v4379, 0.0
      %v7217 = vsel %vm6704, %v4380, 0.0
      %v7218 = vsel %vm6705, %v4381, 0.0
      %v7219 = vsel %vm6706, %v4382, 0.0
      %v7220 = vsel %vm6707, %v4383, 0.0
      %v7221 = vsel %vm6708, %v4384, 0.0
      %v7222 = vsel %vm6709, %v4385, 0.0
      %v7223 = vsel %vm6710, %v4386, 0.0
      %v7224 = vsel %vm6711, %v4387, 0.0
      %v7225 = vsel %vm6712, %v4388, 0.0
      %v7226 = vsel %vm6713, %v4389, 0.0
      %v7227 = vsel %vm6714, %v4390, 0.0
      %v7228 = vsel %vm6715, %v4391, 0.0
      %v7229 = vsel %vm6716, %v4392, 0.0
      %v7230 = vsel %vm6717, %v4393, 0.0
      %v7231 = vsel %vm6718, %v4394, 0.0
      %v7232 = vsel %vm6719, %v4395, 0.0
      %v7233 = vsel %vm6720, %v4396, 0.0
      %v7234 = vsel %vm6721, %v4397, 0.0
      %v7235 = vsel %vm6722, %v4398, 0.0
      %v7236 = vsel %vm6723, %v4399, 0.0
      %v7237 = vsel %vm6724, %v4400, 0.0
      %v7238 = vsel %vm6725, %v4401, 0.0
      %v7239 = vsel %vm6726, %v4402, 0.0
      %v7240 = vsel %vm6727, %v4403, 0.0
      %v7241 = vsel %vm6728, %v4404, 0.0
      %v7242 = vsel %vm6729, %v4405, 0.0
      %v7243 = vsel %vm6730, %v4406, 0.0
      %v7244 = vsel %vm6731, %v4407, 0.0
      %v7245 = vsel %vm6732, %v4408, 0.0
      %v7246 = vsel %vm6733, %v4409, 0.0
      %v7247 = vsel %vm6734, %v4410, 0.0
      %v7248 = vsel %vm6735, %v4411, 0.0
      %v7249 = vsel %vm6736, %v4412, 0.0
      %v7250 = vsel %vm6737, %v4413, 0.0
      %v7251 = vsel %vm6738, %v4414, 0.0
      %v7252 = vsel %vm6739, %v4415, 0.0
      %v7253 = vadd.f32 %v6997, %v6998
      %v7254 = vadd.f32 %v7253, %v6999
      %v7255 = vadd.f32 %v7254, %v7000
      %v7256 = vadd.f32 %v7255, %v7001
      %v7257 = vadd.f32 %v7256, %v7002
      %v7258 = vadd.f32 %v7257, %v7003
      %v7259 = vadd.f32 %v7258, %v7004
      %v7260 = vadd.f32 %v7259, %v7005
      %v7261 = vadd.f32 %v7260, %v7006
      %v7262 = vadd.f32 %v7261, %v7007
      %v7263 = vadd.f32 %v7262, %v7008
      %v7264 = vadd.f32 %v7263, %v7009
      %v7265 = vadd.f32 %v7264, %v7010
      %v7266 = vadd.f32 %v7265, %v7011
      %v7267 = vadd.f32 %v7266, %v7012
      %v7268 = vadd.f32 %v7267, %v7013
      %v7269 = vadd.f32 %v7268, %v7014
      %v7270 = vadd.f32 %v7269, %v7015
      %v7271 = vadd.f32 %v7270, %v7016
      %v7272 = vadd.f32 %v7271, %v7017
      %v7273 = vadd.f32 %v7272, %v7018
      %v7274 = vadd.f32 %v7273, %v7019
      %v7275 = vadd.f32 %v7274, %v7020
      %v7276 = vadd.f32 %v7275, %v7021
      %v7277 = vadd.f32 %v7276, %v7022
      %v7278 = vadd.f32 %v7277, %v7023
      %v7279 = vadd.f32 %v7278, %v7024
      %v7280 = vadd.f32 %v7279, %v7025
      %v7281 = vadd.f32 %v7280, %v7026
      %v7282 = vadd.f32 %v7281, %v7027
      %v7283 = vadd.f32 %v7282, %v7028
      %v7284 = vadd.f32 %v7283, %v7029
      %v7285 = vadd.f32 %v7284, %v7030
      %v7286 = vadd.f32 %v7285, %v7031
      %v7287 = vadd.f32 %v7286, %v7032
      %v7288 = vadd.f32 %v7287, %v7033
      %v7289 = vadd.f32 %v7288, %v7034
      %v7290 = vadd.f32 %v7289, %v7035
      %v7291 = vadd.f32 %v7290, %v7036
      %v7292 = vadd.f32 %v7291, %v7037
      %v7293 = vadd.f32 %v7292, %v7038
      %v7294 = vadd.f32 %v7293, %v7039
      %v7295 = vadd.f32 %v7294, %v7040
      %v7296 = vadd.f32 %v7295, %v7041
      %v7297 = vadd.f32 %v7296, %v7042
      %v7298 = vadd.f32 %v7297, %v7043
      %v7299 = vadd.f32 %v7298, %v7044
      %v7300 = vadd.f32 %v7299, %v7045
      %v7301 = vadd.f32 %v7300, %v7046
      %v7302 = vadd.f32 %v7301, %v7047
      %v7303 = vadd.f32 %v7302, %v7048
      %v7304 = vadd.f32 %v7303, %v7049
      %v7305 = vadd.f32 %v7304, %v7050
      %v7306 = vadd.f32 %v7305, %v7051
      %v7307 = vadd.f32 %v7306, %v7052
      %v7308 = vadd.f32 %v7307, %v7053
      %v7309 = vadd.f32 %v7308, %v7054
      %v7310 = vadd.f32 %v7309, %v7055
      %v7311 = vadd.f32 %v7310, %v7056
      %v7312 = vadd.f32 %v7311, %v7057
      %v7313 = vadd.f32 %v7312, %v7058
      %v7314 = vadd.f32 %v7313, %v7059
      %v7315 = vadd.f32 %v7314, %v7060
      %v7316 = vadd.f32 %v7315, %v7061
      %v7317 = vadd.f32 %v7316, %v7062
      %v7318 = vadd.f32 %v7317, %v7063
      %v7319 = vadd.f32 %v7318, %v7064
      %v7320 = vadd.f32 %v7319, %v7065
      %v7321 = vadd.f32 %v7320, %v7066
      %v7322 = vadd.f32 %v7321, %v7067
      %v7323 = vadd.f32 %v7322, %v7068
      %v7324 = vadd.f32 %v7323, %v7069
      %v7325 = vadd.f32 %v7324, %v7070
      %v7326 = vadd.f32 %v7325, %v7071
      %v7327 = vadd.f32 %v7326, %v7072
      %v7328 = vadd.f32 %v7327, %v7073
      %v7329 = vadd.f32 %v7328, %v7074
      %v7330 = vadd.f32 %v7329, %v7075
      %v7331 = vadd.f32 %v7330, %v7076
      %v7332 = vadd.f32 %v7331, %v7077
      %v7333 = vadd.f32 %v7332, %v7078
      %v7334 = vadd.f32 %v7333, %v7079
      %v7335 = vadd.f32 %v7334, %v7080
      %v7336 = vadd.f32 %v7335, %v7081
      %v7337 = vadd.f32 %v7336, %v7082
      %v7338 = vadd.f32 %v7337, %v7083
      %v7339 = vadd.f32 %v7338, %v7084
      %v7340 = vadd.f32 %v7339, %v7085
      %v7341 = vadd.f32 %v7340, %v7086
      %v7342 = vadd.f32 %v7341, %v7087
      %v7343 = vadd.f32 %v7342, %v7088
      %v7344 = vadd.f32 %v7343, %v7089
      %v7345 = vadd.f32 %v7344, %v7090
      %v7346 = vadd.f32 %v7345, %v7091
      %v7347 = vadd.f32 %v7346, %v7092
      %v7348 = vadd.f32 %v7347, %v7093
      %v7349 = vadd.f32 %v7348, %v7094
      %v7350 = vadd.f32 %v7349, %v7095
      %v7351 = vadd.f32 %v7350, %v7096
      %v7352 = vadd.f32 %v7351, %v7097
      %v7353 = vadd.f32 %v7352, %v7098
      %v7354 = vadd.f32 %v7353, %v7099
      %v7355 = vadd.f32 %v7354, %v7100
      %v7356 = vadd.f32 %v7355, %v7101
      %v7357 = vadd.f32 %v7356, %v7102
      %v7358 = vadd.f32 %v7357, %v7103
      %v7359 = vadd.f32 %v7358, %v7104
      %v7360 = vadd.f32 %v7359, %v7105
      %v7361 = vadd.f32 %v7360, %v7106
      %v7362 = vadd.f32 %v7361, %v7107
      %v7363 = vadd.f32 %v7362, %v7108
      %v7364 = vadd.f32 %v7363, %v7109
      %v7365 = vadd.f32 %v7364, %v7110
      %v7366 = vadd.f32 %v7365, %v7111
      %v7367 = vadd.f32 %v7366, %v7112
      %v7368 = vadd.f32 %v7367, %v7113
      %v7369 = vadd.f32 %v7368, %v7114
      %v7370 = vadd.f32 %v7369, %v7115
      %v7371 = vadd.f32 %v7370, %v7116
      %v7372 = vadd.f32 %v7371, %v7117
      %v7373 = vadd.f32 %v7372, %v7118
      %v7374 = vadd.f32 %v7373, %v7119
      %v7375 = vadd.f32 %v7374, %v7120
      %v7376 = vadd.f32 %v7375, %v7121
      %v7377 = vadd.f32 %v7376, %v7122
      %v7378 = vadd.f32 %v7377, %v7123
      %v7379 = vadd.f32 %v7378, %v7124
      %v7380 = vadd.f32 %v7379, %v7125
      %v7381 = vadd.f32 %v7380, %v7126
      %v7382 = vadd.f32 %v7381, %v7127
      %v7383 = vadd.f32 %v7382, %v7128
      %v7384 = vadd.f32 %v7383, %v7129
      %v7385 = vadd.f32 %v7384, %v7130
      %v7386 = vadd.f32 %v7385, %v7131
      %v7387 = vadd.f32 %v7386, %v7132
      %v7388 = vadd.f32 %v7387, %v7133
      %v7389 = vadd.f32 %v7388, %v7134
      %v7390 = vadd.f32 %v7389, %v7135
      %v7391 = vadd.f32 %v7390, %v7136
      %v7392 = vadd.f32 %v7391, %v7137
      %v7393 = vadd.f32 %v7392, %v7138
      %v7394 = vadd.f32 %v7393, %v7139
      %v7395 = vadd.f32 %v7394, %v7140
      %v7396 = vadd.f32 %v7395, %v7141
      %v7397 = vadd.f32 %v7396, %v7142
      %v7398 = vadd.f32 %v7397, %v7143
      %v7399 = vadd.f32 %v7398, %v7144
      %v7400 = vadd.f32 %v7399, %v7145
      %v7401 = vadd.f32 %v7400, %v7146
      %v7402 = vadd.f32 %v7401, %v7147
      %v7403 = vadd.f32 %v7402, %v7148
      %v7404 = vadd.f32 %v7403, %v7149
      %v7405 = vadd.f32 %v7404, %v7150
      %v7406 = vadd.f32 %v7405, %v7151
      %v7407 = vadd.f32 %v7406, %v7152
      %v7408 = vadd.f32 %v7407, %v7153
      %v7409 = vadd.f32 %v7408, %v7154
      %v7410 = vadd.f32 %v7409, %v7155
      %v7411 = vadd.f32 %v7410, %v7156
      %v7412 = vadd.f32 %v7411, %v7157
      %v7413 = vadd.f32 %v7412, %v7158
      %v7414 = vadd.f32 %v7413, %v7159
      %v7415 = vadd.f32 %v7414, %v7160
      %v7416 = vadd.f32 %v7415, %v7161
      %v7417 = vadd.f32 %v7416, %v7162
      %v7418 = vadd.f32 %v7417, %v7163
      %v7419 = vadd.f32 %v7418, %v7164
      %v7420 = vadd.f32 %v7419, %v7165
      %v7421 = vadd.f32 %v7420, %v7166
      %v7422 = vadd.f32 %v7421, %v7167
      %v7423 = vadd.f32 %v7422, %v7168
      %v7424 = vadd.f32 %v7423, %v7169
      %v7425 = vadd.f32 %v7424, %v7170
      %v7426 = vadd.f32 %v7425, %v7171
      %v7427 = vadd.f32 %v7426, %v7172
      %v7428 = vadd.f32 %v7427, %v7173
      %v7429 = vadd.f32 %v7428, %v7174
      %v7430 = vadd.f32 %v7429, %v7175
      %v7431 = vadd.f32 %v7430, %v7176
      %v7432 = vadd.f32 %v7431, %v7177
      %v7433 = vadd.f32 %v7432, %v7178
      %v7434 = vadd.f32 %v7433, %v7179
      %v7435 = vadd.f32 %v7434, %v7180
      %v7436 = vadd.f32 %v7435, %v7181
      %v7437 = vadd.f32 %v7436, %v7182
      %v7438 = vadd.f32 %v7437, %v7183
      %v7439 = vadd.f32 %v7438, %v7184
      %v7440 = vadd.f32 %v7439, %v7185
      %v7441 = vadd.f32 %v7440, %v7186
      %v7442 = vadd.f32 %v7441, %v7187
      %v7443 = vadd.f32 %v7442, %v7188
      %v7444 = vadd.f32 %v7443, %v7189
      %v7445 = vadd.f32 %v7444, %v7190
      %v7446 = vadd.f32 %v7445, %v7191
      %v7447 = vadd.f32 %v7446, %v7192
      %v7448 = vadd.f32 %v7447, %v7193
      %v7449 = vadd.f32 %v7448, %v7194
      %v7450 = vadd.f32 %v7449, %v7195
      %v7451 = vadd.f32 %v7450, %v7196
      %v7452 = vadd.f32 %v7451, %v7197
      %v7453 = vadd.f32 %v7452, %v7198
      %v7454 = vadd.f32 %v7453, %v7199
      %v7455 = vadd.f32 %v7454, %v7200
      %v7456 = vadd.f32 %v7455, %v7201
      %v7457 = vadd.f32 %v7456, %v7202
      %v7458 = vadd.f32 %v7457, %v7203
      %v7459 = vadd.f32 %v7458, %v7204
      %v7460 = vadd.f32 %v7459, %v7205
      %v7461 = vadd.f32 %v7460, %v7206
      %v7462 = vadd.f32 %v7461, %v7207
      %v7463 = vadd.f32 %v7462, %v7208
      %v7464 = vadd.f32 %v7463, %v7209
      %v7465 = vadd.f32 %v7464, %v7210
      %v7466 = vadd.f32 %v7465, %v7211
      %v7467 = vadd.f32 %v7466, %v7212
      %v7468 = vadd.f32 %v7467, %v7213
      %v7469 = vadd.f32 %v7468, %v7214
      %v7470 = vadd.f32 %v7469, %v7215
      %v7471 = vadd.f32 %v7470, %v7216
      %v7472 = vadd.f32 %v7471, %v7217
      %v7473 = vadd.f32 %v7472, %v7218
      %v7474 = vadd.f32 %v7473, %v7219
      %v7475 = vadd.f32 %v7474, %v7220
      %v7476 = vadd.f32 %v7475, %v7221
      %v7477 = vadd.f32 %v7476, %v7222
      %v7478 = vadd.f32 %v7477, %v7223
      %v7479 = vadd.f32 %v7478, %v7224
      %v7480 = vadd.f32 %v7479, %v7225
      %v7481 = vadd.f32 %v7480, %v7226
      %v7482 = vadd.f32 %v7481, %v7227
      %v7483 = vadd.f32 %v7482, %v7228
      %v7484 = vadd.f32 %v7483, %v7229
      %v7485 = vadd.f32 %v7484, %v7230
      %v7486 = vadd.f32 %v7485, %v7231
      %v7487 = vadd.f32 %v7486, %v7232
      %v7488 = vadd.f32 %v7487, %v7233
      %v7489 = vadd.f32 %v7488, %v7234
      %v7490 = vadd.f32 %v7489, %v7235
      %v7491 = vadd.f32 %v7490, %v7236
      %v7492 = vadd.f32 %v7491, %v7237
      %v7493 = vadd.f32 %v7492, %v7238
      %v7494 = vadd.f32 %v7493, %v7239
      %v7495 = vadd.f32 %v7494, %v7240
      %v7496 = vadd.f32 %v7495, %v7241
      %v7497 = vadd.f32 %v7496, %v7242
      %v7498 = vadd.f32 %v7497, %v7243
      %v7499 = vadd.f32 %v7498, %v7244
      %v7500 = vadd.f32 %v7499, %v7245
      %v7501 = vadd.f32 %v7500, %v7246
      %v7502 = vadd.f32 %v7501, %v7247
      %v7503 = vadd.f32 %v7502, %v7248
      %v7504 = vadd.f32 %v7503, %v7249
      %v7505 = vadd.f32 %v7504, %v7250
      %v7506 = vadd.f32 %v7505, %v7251
      %v7507 = vadd.f32 %v7506, %v7252
      %v7508 = vadd.f32 %v6996, %v7507
      %7509 = vst [vmem:[%s2] sm:$0xff] %v7508
      %v7510 = vld [vmem:[%s2 + $0x8] sm:$0xff]
      %v7511 = vsel %vm6484, %v320, 0.0
      %v7512 = vsel %vm6485, %v321, 0.0
      %v7513 = vsel %vm6486, %v322, 0.0
      %v7514 = vsel %vm6487, %v323, 0.0
      %v7515 = vsel %vm6488, %v324, 0.0
      %v7516 = vsel %vm6489, %v325, 0.0
      %v7517 = vsel %vm6490, %v326, 0.0
      %v7518 = vsel %vm6491, %v327, 0.0
      %v7519 = vsel %vm6492, %v328, 0.0
      %v7520 = vsel %vm6493, %v329, 0.0
      %v7521 = vsel %vm6494, %v330, 0.0
      %v7522 = vsel %vm6495, %v331, 0.0
      %v7523 = vsel %vm6496, %v332, 0.0
      %v7524 = vsel %vm6497, %v333, 0.0
      %v7525 = vsel %vm6498, %v334, 0.0
      %v7526 = vsel %vm6499, %v335, 0.0
      %v7527 = vsel %vm6500, %v336, 0.0
      %v7528 = vsel %vm6501, %v337, 0.0
      %v7529 = vsel %vm6502, %v338, 0.0
      %v7530 = vsel %vm6503, %v339, 0.0
      %v7531 = vsel %vm6504, %v340, 0.0
      %v7532 = vsel %vm6505, %v341, 0.0
      %v7533 = vsel %vm6506, %v342, 0.0
      %v7534 = vsel %vm6507, %v343, 0.0
      %v7535 = vsel %vm6508, %v344, 0.0
      %v7536 = vsel %vm6509, %v345, 0.0
      %v7537 = vsel %vm6510, %v346, 0.0
      %v7538 = vsel %vm6511, %v347, 0.0
      %v7539 = vsel %vm6512, %v348, 0.0
      %v7540 = vsel %vm6513, %v349, 0.0
      %v7541 = vsel %vm6514, %v350, 0.0
      %v7542 = vsel %vm6515, %v351, 0.0
      %v7543 = vsel %vm6516, %v352, 0.0
      %v7544 = vsel %vm6517, %v353, 0.0
      %v7545 = vsel %vm6518, %v354, 0.0
      %v7546 = vsel %vm6519, %v355, 0.0
      %v7547 = vsel %vm6520, %v356, 0.0
      %v7548 = vsel %vm6521, %v357, 0.0
      %v7549 = vsel %vm6522, %v358, 0.0
      %v7550 = vsel %vm6523, %v359, 0.0
      %v7551 = vsel %vm6524, %v360, 0.0
      %v7552 = vsel %vm6525, %v361, 0.0
      %v7553 = vsel %vm6526, %v362, 0.0
      %v7554 = vsel %vm6527, %v363, 0.0
      %v7555 = vsel %vm6528, %v364, 0.0
      %v7556 = vsel %vm6529, %v365, 0.0
      %v7557 = vsel %vm6530, %v366, 0.0
      %v7558 = vsel %vm6531, %v367, 0.0
      %v7559 = vsel %vm6532, %v368, 0.0
      %v7560 = vsel %vm6533, %v369, 0.0
      %v7561 = vsel %vm6534, %v370, 0.0
      %v7562 = vsel %vm6535, %v371, 0.0
      %v7563 = vsel %vm6536, %v372, 0.0
      %v7564 = vsel %vm6537, %v373, 0.0
      %v7565 = vsel %vm6538, %v374, 0.0
      %v7566 = vsel %vm6539, %v375, 0.0
      %v7567 = vsel %vm6540, %v376, 0.0
      %v7568 = vsel %vm6541, %v377, 0.0
      %v7569 = vsel %vm6542, %v378, 0.0
      %v7570 = vsel %vm6543, %v379, 0.0
      %v7571 = vsel %vm6544, %v380, 0.0
      %v7572 = vsel %vm6545, %v381, 0.0
      %v7573 = vsel %vm6546, %v382, 0.0
      %v7574 = vsel %vm6547, %v383, 0.0
      %v7575 = vsel %vm6548, %v384, 0.0
      %v7576 = vsel %vm6549, %v385, 0.0
      %v7577 = vsel %vm6550, %v386, 0.0
      %v7578 = vsel %vm6551, %v387, 0.0
      %v7579 = vsel %vm6552, %v388, 0.0
      %v7580 = vsel %vm6553, %v389, 0.0
      %v7581 = vsel %vm6554, %v390, 0.0
      %v7582 = vsel %vm6555, %v391, 0.0
      %v7583 = vsel %vm6556, %v392, 0.0
      %v7584 = vsel %vm6557, %v393, 0.0
      %v7585 = vsel %vm6558, %v394, 0.0
      %v7586 = vsel %vm6559, %v395, 0.0
      %v7587 = vsel %vm6560, %v396, 0.0
      %v7588 = vsel %vm6561, %v397, 0.0
      %v7589 = vsel %vm6562, %v398, 0.0
      %v7590 = vsel %vm6563, %v399, 0.0
      %v7591 = vsel %vm6564, %v400, 0.0
      %v7592 = vsel %vm6565, %v401, 0.0
      %v7593 = vsel %vm6566, %v402, 0.0
      %v7594 = vsel %vm6567, %v403, 0.0
      %v7595 = vsel %vm6568, %v404, 0.0
      %v7596 = vsel %vm6569, %v405, 0.0
      %v7597 = vsel %vm6570, %v406, 0.0
      %v7598 = vsel %vm6571, %v407, 0.0
      %v7599 = vsel %vm6572, %v408, 0.0
      %v7600 = vsel %vm6573, %v409, 0.0
      %v7601 = vsel %vm6574, %v410, 0.0
      %v7602 = vsel %vm6575, %v411, 0.0
      %v7603 = vsel %vm6576, %v412, 0.0
      %v7604 = vsel %vm6577, %v413, 0.0
      %v7605 = vsel %vm6578, %v414, 0.0
      %v7606 = vsel %vm6579, %v415, 0.0
      %v7607 = vsel %vm6580, %v416, 0.0
      %v7608 = vsel %vm6581, %v417, 0.0
      %v7609 = vsel %vm6582, %v418, 0.0
      %v7610 = vsel %vm6583, %v419, 0.0
      %v7611 = vsel %vm6584, %v420, 0.0
      %v7612 = vsel %vm6585, %v421, 0.0
      %v7613 = vsel %vm6586, %v422, 0.0
      %v7614 = vsel %vm6587, %v423, 0.0
      %v7615 = vsel %vm6588, %v424, 0.0
      %v7616 = vsel %vm6589, %v425, 0.0
      %v7617 = vsel %vm6590, %v426, 0.0
      %v7618 = vsel %vm6591, %v427, 0.0
      %v7619 = vsel %vm6592, %v428, 0.0
      %v7620 = vsel %vm6593, %v429, 0.0
      %v7621 = vsel %vm6594, %v430, 0.0
      %v7622 = vsel %vm6595, %v431, 0.0
      %v7623 = vsel %vm6596, %v432, 0.0
      %v7624 = vsel %vm6597, %v433, 0.0
      %v7625 = vsel %vm6598, %v434, 0.0
      %v7626 = vsel %vm6599, %v435, 0.0
      %v7627 = vsel %vm6600, %v436, 0.0
      %v7628 = vsel %vm6601, %v437, 0.0
      %v7629 = vsel %vm6602, %v438, 0.0
      %v7630 = vsel %vm6603, %v439, 0.0
      %v7631 = vsel %vm6604, %v440, 0.0
      %v7632 = vsel %vm6605, %v441, 0.0
      %v7633 = vsel %vm6606, %v442, 0.0
      %v7634 = vsel %vm6607, %v443, 0.0
      %v7635 = vsel %vm6608, %v444, 0.0
      %v7636 = vsel %vm6609, %v445, 0.0
      %v7637 = vsel %vm6610, %v446, 0.0
      %v7638 = vsel %vm6611, %v447, 0.0
      %v7639 = vsel %vm6612, %v448, 0.0
      %v7640 = vsel %vm6613, %v449, 0.0
      %v7641 = vsel %vm6614, %v450, 0.0
      %v7642 = vsel %vm6615, %v451, 0.0
      %v7643 = vsel %vm6616, %v452, 0.0
      %v7644 = vsel %vm6617, %v453, 0.0
      %v7645 = vsel %vm6618, %v454, 0.0
      %v7646 = vsel %vm6619, %v455, 0.0
      %v7647 = vsel %vm6620, %v456, 0.0
      %v7648 = vsel %vm6621, %v457, 0.0
      %v7649 = vsel %vm6622, %v458, 0.0
      %v7650 = vsel %vm6623, %v459, 0.0
      %v7651 = vsel %vm6624, %v460, 0.0
      %v7652 = vsel %vm6625, %v461, 0.0
      %v7653 = vsel %vm6626, %v462, 0.0
      %v7654 = vsel %vm6627, %v463, 0.0
      %v7655 = vsel %vm6628, %v464, 0.0
      %v7656 = vsel %vm6629, %v465, 0.0
      %v7657 = vsel %vm6630, %v466, 0.0
      %v7658 = vsel %vm6631, %v467, 0.0
      %v7659 = vsel %vm6632, %v468, 0.0
      %v7660 = vsel %vm6633, %v469, 0.0
      %v7661 = vsel %vm6634, %v470, 0.0
      %v7662 = vsel %vm6635, %v471, 0.0
      %v7663 = vsel %vm6636, %v472, 0.0
      %v7664 = vsel %vm6637, %v473, 0.0
      %v7665 = vsel %vm6638, %v474, 0.0
      %v7666 = vsel %vm6639, %v475, 0.0
      %v7667 = vsel %vm6640, %v476, 0.0
      %v7668 = vsel %vm6641, %v477, 0.0
      %v7669 = vsel %vm6642, %v478, 0.0
      %v7670 = vsel %vm6643, %v479, 0.0
      %v7671 = vsel %vm6644, %v480, 0.0
      %v7672 = vsel %vm6645, %v481, 0.0
      %v7673 = vsel %vm6646, %v482, 0.0
      %v7674 = vsel %vm6647, %v483, 0.0
      %v7675 = vsel %vm6648, %v484, 0.0
      %v7676 = vsel %vm6649, %v485, 0.0
      %v7677 = vsel %vm6650, %v486, 0.0
      %v7678 = vsel %vm6651, %v487, 0.0
      %v7679 = vsel %vm6652, %v488, 0.0
      %v7680 = vsel %vm6653, %v489, 0.0
      %v7681 = vsel %vm6654, %v490, 0.0
      %v7682 = vsel %vm6655, %v491, 0.0
      %v7683 = vsel %vm6656, %v492, 0.0
      %v7684 = vsel %vm6657, %v493, 0.0
      %v7685 = vsel %vm6658, %v494, 0.0
      %v7686 = vsel %vm6659, %v495, 0.0
      %v7687 = vsel %vm6660, %v496, 0.0
      %v7688 = vsel %vm6661, %v497, 0.0
      %v7689 = vsel %vm6662, %v498, 0.0
      %v7690 = vsel %vm6663, %v499, 0.0
      %v7691 = vsel %vm6664, %v500, 0.0
      %v7692 = vsel %vm6665, %v501, 0.0
      %v7693 = vsel %vm6666, %v502, 0.0
      %v7694 = vsel %vm6667, %v503, 0.0
      %v7695 = vsel %vm6668, %v504, 0.0
      %v7696 = vsel %vm6669, %v505, 0.0
      %v7697 = vsel %vm6670, %v506, 0.0
      %v7698 = vsel %vm6671, %v507, 0.0
      %v7699 = vsel %vm6672, %v508, 0.0
      %v7700 = vsel %vm6673, %v509, 0.0
      %v7701 = vsel %vm6674, %v510, 0.0
      %v7702 = vsel %vm6675, %v511, 0.0
      %v7703 = vsel %vm6676, %v512, 0.0
      %v7704 = vsel %vm6677, %v513, 0.0
      %v7705 = vsel %vm6678, %v514, 0.0
      %v7706 = vsel %vm6679, %v515, 0.0
      %v7707 = vsel %vm6680, %v516, 0.0
      %v7708 = vsel %vm6681, %v517, 0.0
      %v7709 = vsel %vm6682, %v518, 0.0
      %v7710 = vsel %vm6683, %v519, 0.0
      %v7711 = vsel %vm6684, %v520, 0.0
      %v7712 = vsel %vm6685, %v521, 0.0
      %v7713 = vsel %vm6686, %v522, 0.0
      %v7714 = vsel %vm6687, %v523, 0.0
      %v7715 = vsel %vm6688, %v524, 0.0
      %v7716 = vsel %vm6689, %v525, 0.0
      %v7717 = vsel %vm6690, %v526, 0.0
      %v7718 = vsel %vm6691, %v527, 0.0
      %v7719 = vsel %vm6692, %v528, 0.0
      %v7720 = vsel %vm6693, %v529, 0.0
      %v7721 = vsel %vm6694, %v530, 0.0
      %v7722 = vsel %vm6695, %v531, 0.0
      %v7723 = vsel %vm6696, %v532, 0.0
      %v7724 = vsel %vm6697, %v533, 0.0
      %v7725 = vsel %vm6698, %v534, 0.0
      %v7726 = vsel %vm6699, %v535, 0.0
      %v7727 = vsel %vm6700, %v536, 0.0
      %v7728 = vsel %vm6701, %v537, 0.0
      %v7729 = vsel %vm6702, %v538, 0.0
      %v7730 = vsel %vm6703, %v539, 0.0
      %v7731 = vsel %vm6704, %v540, 0.0
      %v7732 = vsel %vm6705, %v541, 0.0
      %v7733 = vsel %vm6706, %v542, 0.0
      %v7734 = vsel %vm6707, %v543, 0.0
      %v7735 = vsel %vm6708, %v544, 0.0
      %v7736 = vsel %vm6709, %v545, 0.0
      %v7737 = vsel %vm6710, %v546, 0.0
      %v7738 = vsel %vm6711, %v547, 0.0
      %v7739 = vsel %vm6712, %v548, 0.0
      %v7740 = vsel %vm6713, %v549, 0.0
      %v7741 = vsel %vm6714, %v550, 0.0
      %v7742 = vsel %vm6715, %v551, 0.0
      %v7743 = vsel %vm6716, %v552, 0.0
      %v7744 = vsel %vm6717, %v553, 0.0
      %v7745 = vsel %vm6718, %v554, 0.0
      %v7746 = vsel %vm6719, %v555, 0.0
      %v7747 = vsel %vm6720, %v556, 0.0
      %v7748 = vsel %vm6721, %v557, 0.0
      %v7749 = vsel %vm6722, %v558, 0.0
      %v7750 = vsel %vm6723, %v559, 0.0
      %v7751 = vsel %vm6724, %v560, 0.0
      %v7752 = vsel %vm6725, %v561, 0.0
      %v7753 = vsel %vm6726, %v562, 0.0
      %v7754 = vsel %vm6727, %v563, 0.0
      %v7755 = vsel %vm6728, %v564, 0.0
      %v7756 = vsel %vm6729, %v565, 0.0
      %v7757 = vsel %vm6730, %v566, 0.0
      %v7758 = vsel %vm6731, %v567, 0.0
      %v7759 = vsel %vm6732, %v568, 0.0
      %v7760 = vsel %vm6733, %v569, 0.0
      %v7761 = vsel %vm6734, %v570, 0.0
      %v7762 = vsel %vm6735, %v571, 0.0
      %v7763 = vsel %vm6736, %v572, 0.0
      %v7764 = vsel %vm6737, %v573, 0.0
      %v7765 = vsel %vm6738, %v574, 0.0
      %v7766 = vsel %vm6739, %v575, 0.0
      %v7767 = vadd.f32 %v7511, %v7512
      %v7768 = vadd.f32 %v7767, %v7513
      %v7769 = vadd.f32 %v7768, %v7514
      %v7770 = vadd.f32 %v7769, %v7515
      %v7771 = vadd.f32 %v7770, %v7516
      %v7772 = vadd.f32 %v7771, %v7517
      %v7773 = vadd.f32 %v7772, %v7518
      %v7774 = vadd.f32 %v7773, %v7519
      %v7775 = vadd.f32 %v7774, %v7520
      %v7776 = vadd.f32 %v7775, %v7521
      %v7777 = vadd.f32 %v7776, %v7522
      %v7778 = vadd.f32 %v7777, %v7523
      %v7779 = vadd.f32 %v7778, %v7524
      %v7780 = vadd.f32 %v7779, %v7525
      %v7781 = vadd.f32 %v7780, %v7526
      %v7782 = vadd.f32 %v7781, %v7527
      %v7783 = vadd.f32 %v7782, %v7528
      %v7784 = vadd.f32 %v7783, %v7529
      %v7785 = vadd.f32 %v7784, %v7530
      %v7786 = vadd.f32 %v7785, %v7531
      %v7787 = vadd.f32 %v7786, %v7532
      %v7788 = vadd.f32 %v7787, %v7533
      %v7789 = vadd.f32 %v7788, %v7534
      %v7790 = vadd.f32 %v7789, %v7535
      %v7791 = vadd.f32 %v7790, %v7536
      %v7792 = vadd.f32 %v7791, %v7537
      %v7793 = vadd.f32 %v7792, %v7538
      %v7794 = vadd.f32 %v7793, %v7539
      %v7795 = vadd.f32 %v7794, %v7540
      %v7796 = vadd.f32 %v7795, %v7541
      %v7797 = vadd.f32 %v7796, %v7542
      %v7798 = vadd.f32 %v7797, %v7543
      %v7799 = vadd.f32 %v7798, %v7544
      %v7800 = vadd.f32 %v7799, %v7545
      %v7801 = vadd.f32 %v7800, %v7546
      %v7802 = vadd.f32 %v7801, %v7547
      %v7803 = vadd.f32 %v7802, %v7548
      %v7804 = vadd.f32 %v7803, %v7549
      %v7805 = vadd.f32 %v7804, %v7550
      %v7806 = vadd.f32 %v7805, %v7551
      %v7807 = vadd.f32 %v7806, %v7552
      %v7808 = vadd.f32 %v7807, %v7553
      %v7809 = vadd.f32 %v7808, %v7554
      %v7810 = vadd.f32 %v7809, %v7555
      %v7811 = vadd.f32 %v7810, %v7556
      %v7812 = vadd.f32 %v7811, %v7557
      %v7813 = vadd.f32 %v7812, %v7558
      %v7814 = vadd.f32 %v7813, %v7559
      %v7815 = vadd.f32 %v7814, %v7560
      %v7816 = vadd.f32 %v7815, %v7561
      %v7817 = vadd.f32 %v7816, %v7562
      %v7818 = vadd.f32 %v7817, %v7563
      %v7819 = vadd.f32 %v7818, %v7564
      %v7820 = vadd.f32 %v7819, %v7565
      %v7821 = vadd.f32 %v7820, %v7566
      %v7822 = vadd.f32 %v7821, %v7567
      %v7823 = vadd.f32 %v7822, %v7568
      %v7824 = vadd.f32 %v7823, %v7569
      %v7825 = vadd.f32 %v7824, %v7570
      %v7826 = vadd.f32 %v7825, %v7571
      %v7827 = vadd.f32 %v7826, %v7572
      %v7828 = vadd.f32 %v7827, %v7573
      %v7829 = vadd.f32 %v7828, %v7574
      %v7830 = vadd.f32 %v7829, %v7575
      %v7831 = vadd.f32 %v7830, %v7576
      %v7832 = vadd.f32 %v7831, %v7577
      %v7833 = vadd.f32 %v7832, %v7578
      %v7834 = vadd.f32 %v7833, %v7579
      %v7835 = vadd.f32 %v7834, %v7580
      %v7836 = vadd.f32 %v7835, %v7581
      %v7837 = vadd.f32 %v7836, %v7582
      %v7838 = vadd.f32 %v7837, %v7583
      %v7839 = vadd.f32 %v7838, %v7584
      %v7840 = vadd.f32 %v7839, %v7585
      %v7841 = vadd.f32 %v7840, %v7586
      %v7842 = vadd.f32 %v7841, %v7587
      %v7843 = vadd.f32 %v7842, %v7588
      %v7844 = vadd.f32 %v7843, %v7589
      %v7845 = vadd.f32 %v7844, %v7590
      %v7846 = vadd.f32 %v7845, %v7591
      %v7847 = vadd.f32 %v7846, %v7592
      %v7848 = vadd.f32 %v7847, %v7593
      %v7849 = vadd.f32 %v7848, %v7594
      %v7850 = vadd.f32 %v7849, %v7595
      %v7851 = vadd.f32 %v7850, %v7596
      %v7852 = vadd.f32 %v7851, %v7597
      %v7853 = vadd.f32 %v7852, %v7598
      %v7854 = vadd.f32 %v7853, %v7599
      %v7855 = vadd.f32 %v7854, %v7600
      %v7856 = vadd.f32 %v7855, %v7601
      %v7857 = vadd.f32 %v7856, %v7602
      %v7858 = vadd.f32 %v7857, %v7603
      %v7859 = vadd.f32 %v7858, %v7604
      %v7860 = vadd.f32 %v7859, %v7605
      %v7861 = vadd.f32 %v7860, %v7606
      %v7862 = vadd.f32 %v7861, %v7607
      %v7863 = vadd.f32 %v7862, %v7608
      %v7864 = vadd.f32 %v7863, %v7609
      %v7865 = vadd.f32 %v7864, %v7610
      %v7866 = vadd.f32 %v7865, %v7611
      %v7867 = vadd.f32 %v7866, %v7612
      %v7868 = vadd.f32 %v7867, %v7613
      %v7869 = vadd.f32 %v7868, %v7614
      %v7870 = vadd.f32 %v7869, %v7615
      %v7871 = vadd.f32 %v7870, %v7616
      %v7872 = vadd.f32 %v7871, %v7617
      %v7873 = vadd.f32 %v7872, %v7618
      %v7874 = vadd.f32 %v7873, %v7619
      %v7875 = vadd.f32 %v7874, %v7620
      %v7876 = vadd.f32 %v7875, %v7621
      %v7877 = vadd.f32 %v7876, %v7622
      %v7878 = vadd.f32 %v7877, %v7623
      %v7879 = vadd.f32 %v7878, %v7624
      %v7880 = vadd.f32 %v7879, %v7625
      %v7881 = vadd.f32 %v7880, %v7626
      %v7882 = vadd.f32 %v7881, %v7627
      %v7883 = vadd.f32 %v7882, %v7628
      %v7884 = vadd.f32 %v7883, %v7629
      %v7885 = vadd.f32 %v7884, %v7630
      %v7886 = vadd.f32 %v7885, %v7631
      %v7887 = vadd.f32 %v7886, %v7632
      %v7888 = vadd.f32 %v7887, %v7633
      %v7889 = vadd.f32 %v7888, %v7634
      %v7890 = vadd.f32 %v7889, %v7635
      %v7891 = vadd.f32 %v7890, %v7636
      %v7892 = vadd.f32 %v7891, %v7637
      %v7893 = vadd.f32 %v7892, %v7638
      %v7894 = vadd.f32 %v7893, %v7639
      %v7895 = vadd.f32 %v7894, %v7640
      %v7896 = vadd.f32 %v7895, %v7641
      %v7897 = vadd.f32 %v7896, %v7642
      %v7898 = vadd.f32 %v7897, %v7643
      %v7899 = vadd.f32 %v7898, %v7644
      %v7900 = vadd.f32 %v7899, %v7645
      %v7901 = vadd.f32 %v7900, %v7646
      %v7902 = vadd.f32 %v7901, %v7647
      %v7903 = vadd.f32 %v7902, %v7648
      %v7904 = vadd.f32 %v7903, %v7649
      %v7905 = vadd.f32 %v7904, %v7650
      %v7906 = vadd.f32 %v7905, %v7651
      %v7907 = vadd.f32 %v7906, %v7652
      %v7908 = vadd.f32 %v7907, %v7653
      %v7909 = vadd.f32 %v7908, %v7654
      %v7910 = vadd.f32 %v7909, %v7655
      %v7911 = vadd.f32 %v7910, %v7656
      %v7912 = vadd.f32 %v7911, %v7657
      %v7913 = vadd.f32 %v7912, %v7658
      %v7914 = vadd.f32 %v7913, %v7659
      %v7915 = vadd.f32 %v7914, %v7660
      %v7916 = vadd.f32 %v7915, %v7661
      %v7917 = vadd.f32 %v7916, %v7662
      %v7918 = vadd.f32 %v7917, %v7663
      %v7919 = vadd.f32 %v7918, %v7664
      %v7920 = vadd.f32 %v7919, %v7665
      %v7921 = vadd.f32 %v7920, %v7666
      %v7922 = vadd.f32 %v7921, %v7667
      %v7923 = vadd.f32 %v7922, %v7668
      %v7924 = vadd.f32 %v7923, %v7669
      %v7925 = vadd.f32 %v7924, %v7670
      %v7926 = vadd.f32 %v7925, %v7671
      %v7927 = vadd.f32 %v7926, %v7672
      %v7928 = vadd.f32 %v7927, %v7673
      %v7929 = vadd.f32 %v7928, %v7674
      %v7930 = vadd.f32 %v7929, %v7675
      %v7931 = vadd.f32 %v7930, %v7676
      %v7932 = vadd.f32 %v7931, %v7677
      %v7933 = vadd.f32 %v7932, %v7678
      %v7934 = vadd.f32 %v7933, %v7679
      %v7935 = vadd.f32 %v7934, %v7680
      %v7936 = vadd.f32 %v7935, %v7681
      %v7937 = vadd.f32 %v7936, %v7682
      %v7938 = vadd.f32 %v7937, %v7683
      %v7939 = vadd.f32 %v7938, %v7684
      %v7940 = vadd.f32 %v7939, %v7685
      %v7941 = vadd.f32 %v7940, %v7686
      %v7942 = vadd.f32 %v7941, %v7687
      %v7943 = vadd.f32 %v7942, %v7688
      %v7944 = vadd.f32 %v7943, %v7689
      %v7945 = vadd.f32 %v7944, %v7690
      %v7946 = vadd.f32 %v7945, %v7691
      %v7947 = vadd.f32 %v7946, %v7692
      %v7948 = vadd.f32 %v7947, %v7693
      %v7949 = vadd.f32 %v7948, %v7694
      %v7950 = vadd.f32 %v7949, %v7695
      %v7951 = vadd.f32 %v7950, %v7696
      %v7952 = vadd.f32 %v7951, %v7697
      %v7953 = vadd.f32 %v7952, %v7698
      %v7954 = vadd.f32 %v7953, %v7699
      %v7955 = vadd.f32 %v7954, %v7700
      %v7956 = vadd.f32 %v7955, %v7701
      %v7957 = vadd.f32 %v7956, %v7702
      %v7958 = vadd.f32 %v7957, %v7703
      %v7959 = vadd.f32 %v7958, %v7704
      %v7960 = vadd.f32 %v7959, %v7705
      %v7961 = vadd.f32 %v7960, %v7706
      %v7962 = vadd.f32 %v7961, %v7707
      %v7963 = vadd.f32 %v7962, %v7708
      %v7964 = vadd.f32 %v7963, %v7709
      %v7965 = vadd.f32 %v7964, %v7710
      %v7966 = vadd.f32 %v7965, %v7711
      %v7967 = vadd.f32 %v7966, %v7712
      %v7968 = vadd.f32 %v7967, %v7713
      %v7969 = vadd.f32 %v7968, %v7714
      %v7970 = vadd.f32 %v7969, %v7715
      %v7971 = vadd.f32 %v7970, %v7716
      %v7972 = vadd.f32 %v7971, %v7717
      %v7973 = vadd.f32 %v7972, %v7718
      %v7974 = vadd.f32 %v7973, %v7719
      %v7975 = vadd.f32 %v7974, %v7720
      %v7976 = vadd.f32 %v7975, %v7721
      %v7977 = vadd.f32 %v7976, %v7722
      %v7978 = vadd.f32 %v7977, %v7723
      %v7979 = vadd.f32 %v7978, %v7724
      %v7980 = vadd.f32 %v7979, %v7725
      %v7981 = vadd.f32 %v7980, %v7726
      %v7982 = vadd.f32 %v7981, %v7727
      %v7983 = vadd.f32 %v7982, %v7728
      %v7984 = vadd.f32 %v7983, %v7729
      %v7985 = vadd.f32 %v7984, %v7730
      %v7986 = vadd.f32 %v7985, %v7731
      %v7987 = vadd.f32 %v7986, %v7732
      %v7988 = vadd.f32 %v7987, %v7733
      %v7989 = vadd.f32 %v7988, %v7734
      %v7990 = vadd.f32 %v7989, %v7735
      %v7991 = vadd.f32 %v7990, %v7736
      %v7992 = vadd.f32 %v7991, %v7737
      %v7993 = vadd.f32 %v7992, %v7738
      %v7994 = vadd.f32 %v7993, %v7739
      %v7995 = vadd.f32 %v7994, %v7740
      %v7996 = vadd.f32 %v7995, %v7741
      %v7997 = vadd.f32 %v7996, %v7742
      %v7998 = vadd.f32 %v7997, %v7743
      %v7999 = vadd.f32 %v7998, %v7744
      %v8000 = vadd.f32 %v7999, %v7745
      %v8001 = vadd.f32 %v8000, %v7746
      %v8002 = vadd.f32 %v8001, %v7747
      %v8003 = vadd.f32 %v8002, %v7748
      %v8004 = vadd.f32 %v8003, %v7749
      %v8005 = vadd.f32 %v8004, %v7750
      %v8006 = vadd.f32 %v8005, %v7751
      %v8007 = vadd.f32 %v8006, %v7752
      %v8008 = vadd.f32 %v8007, %v7753
      %v8009 = vadd.f32 %v8008, %v7754
      %v8010 = vadd.f32 %v8009, %v7755
      %v8011 = vadd.f32 %v8010, %v7756
      %v8012 = vadd.f32 %v8011, %v7757
      %v8013 = vadd.f32 %v8012, %v7758
      %v8014 = vadd.f32 %v8013, %v7759
      %v8015 = vadd.f32 %v8014, %v7760
      %v8016 = vadd.f32 %v8015, %v7761
      %v8017 = vadd.f32 %v8016, %v7762
      %v8018 = vadd.f32 %v8017, %v7763
      %v8019 = vadd.f32 %v8018, %v7764
      %v8020 = vadd.f32 %v8019, %v7765
      %v8021 = vadd.f32 %v8020, %v7766
      %v8022 = vadd.f32 %v7510, %v8021
      %8023 = vst [vmem:[%s2 + $0x8] sm:$0xff] %v8022
      %v8024 = vld [vmem:[%s2 + $0x10] sm:$0xff]
      %v8025 = vsel %vm6740, %v4160, 0.0
      %v8026 = vsel %vm6741, %v4161, 0.0
      %v8027 = vsel %vm6742, %v4162, 0.0
      %v8028 = vsel %vm6743, %v4163, 0.0
      %v8029 = vsel %vm6744, %v4164, 0.0
      %v8030 = vsel %vm6745, %v4165, 0.0
      %v8031 = vsel %vm6746, %v4166, 0.0
      %v8032 = vsel %vm6747, %v4167, 0.0
      %v8033 = vsel %vm6748, %v4168, 0.0
      %v8034 = vsel %vm6749, %v4169, 0.0
      %v8035 = vsel %vm6750, %v4170, 0.0
      %v8036 = vsel %vm6751, %v4171, 0.0
      %v8037 = vsel %vm6752, %v4172, 0.0
      %v8038 = vsel %vm6753, %v4173, 0.0
      %v8039 = vsel %vm6754, %v4174, 0.0
      %v8040 = vsel %vm6755, %v4175, 0.0
      %v8041 = vsel %vm6756, %v4176, 0.0
      %v8042 = vsel %vm6757, %v4177, 0.0
      %v8043 = vsel %vm6758, %v4178, 0.0
      %v8044 = vsel %vm6759, %v4179, 0.0
      %v8045 = vsel %vm6760, %v4180, 0.0
      %v8046 = vsel %vm6761, %v4181, 0.0
      %v8047 = vsel %vm6762, %v4182, 0.0
      %v8048 = vsel %vm6763, %v4183, 0.0
      %v8049 = vsel %vm6764, %v4184, 0.0
      %v8050 = vsel %vm6765, %v4185, 0.0
      %v8051 = vsel %vm6766, %v4186, 0.0
      %v8052 = vsel %vm6767, %v4187, 0.0
      %v8053 = vsel %vm6768, %v4188, 0.0
      %v8054 = vsel %vm6769, %v4189, 0.0
      %v8055 = vsel %vm6770, %v4190, 0.0
      %v8056 = vsel %vm6771, %v4191, 0.0
      %v8057 = vsel %vm6772, %v4192, 0.0
      %v8058 = vsel %vm6773, %v4193, 0.0
      %v8059 = vsel %vm6774, %v4194, 0.0
      %v8060 = vsel %vm6775, %v4195, 0.0
      %v8061 = vsel %vm6776, %v4196, 0.0
      %v8062 = vsel %vm6777, %v4197, 0.0
      %v8063 = vsel %vm6778, %v4198, 0.0
      %v8064 = vsel %vm6779, %v4199, 0.0
      %v8065 = vsel %vm6780, %v4200, 0.0
      %v8066 = vsel %vm6781, %v4201, 0.0
      %v8067 = vsel %vm6782, %v4202, 0.0
      %v8068 = vsel %vm6783, %v4203, 0.0
      %v8069 = vsel %vm6784, %v4204, 0.0
      %v8070 = vsel %vm6785, %v4205, 0.0
      %v8071 = vsel %vm6786, %v4206, 0.0
      %v8072 = vsel %vm6787, %v4207, 0.0
      %v8073 = vsel %vm6788, %v4208, 0.0
      %v8074 = vsel %vm6789, %v4209, 0.0
      %v8075 = vsel %vm6790, %v4210, 0.0
      %v8076 = vsel %vm6791, %v4211, 0.0
      %v8077 = vsel %vm6792, %v4212, 0.0
      %v8078 = vsel %vm6793, %v4213, 0.0
      %v8079 = vsel %vm6794, %v4214, 0.0
      %v8080 = vsel %vm6795, %v4215, 0.0
      %v8081 = vsel %vm6796, %v4216, 0.0
      %v8082 = vsel %vm6797, %v4217, 0.0
      %v8083 = vsel %vm6798, %v4218, 0.0
      %v8084 = vsel %vm6799, %v4219, 0.0
      %v8085 = vsel %vm6800, %v4220, 0.0
      %v8086 = vsel %vm6801, %v4221, 0.0
      %v8087 = vsel %vm6802, %v4222, 0.0
      %v8088 = vsel %vm6803, %v4223, 0.0
      %v8089 = vsel %vm6804, %v4224, 0.0
      %v8090 = vsel %vm6805, %v4225, 0.0
      %v8091 = vsel %vm6806, %v4226, 0.0
      %v8092 = vsel %vm6807, %v4227, 0.0
      %v8093 = vsel %vm6808, %v4228, 0.0
      %v8094 = vsel %vm6809, %v4229, 0.0
      %v8095 = vsel %vm6810, %v4230, 0.0
      %v8096 = vsel %vm6811, %v4231, 0.0
      %v8097 = vsel %vm6812, %v4232, 0.0
      %v8098 = vsel %vm6813, %v4233, 0.0
      %v8099 = vsel %vm6814, %v4234, 0.0
      %v8100 = vsel %vm6815, %v4235, 0.0
      %v8101 = vsel %vm6816, %v4236, 0.0
      %v8102 = vsel %vm6817, %v4237, 0.0
      %v8103 = vsel %vm6818, %v4238, 0.0
      %v8104 = vsel %vm6819, %v4239, 0.0
      %v8105 = vsel %vm6820, %v4240, 0.0
      %v8106 = vsel %vm6821, %v4241, 0.0
      %v8107 = vsel %vm6822, %v4242, 0.0
      %v8108 = vsel %vm6823, %v4243, 0.0
      %v8109 = vsel %vm6824, %v4244, 0.0
      %v8110 = vsel %vm6825, %v4245, 0.0
      %v8111 = vsel %vm6826, %v4246, 0.0
      %v8112 = vsel %vm6827, %v4247, 0.0
      %v8113 = vsel %vm6828, %v4248, 0.0
      %v8114 = vsel %vm6829, %v4249, 0.0
      %v8115 = vsel %vm6830, %v4250, 0.0
      %v8116 = vsel %vm6831, %v4251, 0.0
      %v8117 = vsel %vm6832, %v4252, 0.0
      %v8118 = vsel %vm6833, %v4253, 0.0
      %v8119 = vsel %vm6834, %v4254, 0.0
      %v8120 = vsel %vm6835, %v4255, 0.0
      %v8121 = vsel %vm6836, %v4256, 0.0
      %v8122 = vsel %vm6837, %v4257, 0.0
      %v8123 = vsel %vm6838, %v4258, 0.0
      %v8124 = vsel %vm6839, %v4259, 0.0
      %v8125 = vsel %vm6840, %v4260, 0.0
      %v8126 = vsel %vm6841, %v4261, 0.0
      %v8127 = vsel %vm6842, %v4262, 0.0
      %v8128 = vsel %vm6843, %v4263, 0.0
      %v8129 = vsel %vm6844, %v4264, 0.0
      %v8130 = vsel %vm6845, %v4265, 0.0
      %v8131 = vsel %vm6846, %v4266, 0.0
      %v8132 = vsel %vm6847, %v4267, 0.0
      %v8133 = vsel %vm6848, %v4268, 0.0
      %v8134 = vsel %vm6849, %v4269, 0.0
      %v8135 = vsel %vm6850, %v4270, 0.0
      %v8136 = vsel %vm6851, %v4271, 0.0
      %v8137 = vsel %vm6852, %v4272, 0.0
      %v8138 = vsel %vm6853, %v4273, 0.0
      %v8139 = vsel %vm6854, %v4274, 0.0
      %v8140 = vsel %vm6855, %v4275, 0.0
      %v8141 = vsel %vm6856, %v4276, 0.0
      %v8142 = vsel %vm6857, %v4277, 0.0
      %v8143 = vsel %vm6858, %v4278, 0.0
      %v8144 = vsel %vm6859, %v4279, 0.0
      %v8145 = vsel %vm6860, %v4280, 0.0
      %v8146 = vsel %vm6861, %v4281, 0.0
      %v8147 = vsel %vm6862, %v4282, 0.0
      %v8148 = vsel %vm6863, %v4283, 0.0
      %v8149 = vsel %vm6864, %v4284, 0.0
      %v8150 = vsel %vm6865, %v4285, 0.0
      %v8151 = vsel %vm6866, %v4286, 0.0
      %v8152 = vsel %vm6867, %v4287, 0.0
      %v8153 = vsel %vm6868, %v4288, 0.0
      %v8154 = vsel %vm6869, %v4289, 0.0
      %v8155 = vsel %vm6870, %v4290, 0.0
      %v8156 = vsel %vm6871, %v4291, 0.0
      %v8157 = vsel %vm6872, %v4292, 0.0
      %v8158 = vsel %vm6873, %v4293, 0.0
      %v8159 = vsel %vm6874, %v4294, 0.0
      %v8160 = vsel %vm6875, %v4295, 0.0
      %v8161 = vsel %vm6876, %v4296, 0.0
      %v8162 = vsel %vm6877, %v4297, 0.0
      %v8163 = vsel %vm6878, %v4298, 0.0
      %v8164 = vsel %vm6879, %v4299, 0.0
      %v8165 = vsel %vm6880, %v4300, 0.0
      %v8166 = vsel %vm6881, %v4301, 0.0
      %v8167 = vsel %vm6882, %v4302, 0.0
      %v8168 = vsel %vm6883, %v4303, 0.0
      %v8169 = vsel %vm6884, %v4304, 0.0
      %v8170 = vsel %vm6885, %v4305, 0.0
      %v8171 = vsel %vm6886, %v4306, 0.0
      %v8172 = vsel %vm6887, %v4307, 0.0
      %v8173 = vsel %vm6888, %v4308, 0.0
      %v8174 = vsel %vm6889, %v4309, 0.0
      %v8175 = vsel %vm6890, %v4310, 0.0
      %v8176 = vsel %vm6891, %v4311, 0.0
      %v8177 = vsel %vm6892, %v4312, 0.0
      %v8178 = vsel %vm6893, %v4313, 0.0
      %v8179 = vsel %vm6894, %v4314, 0.0
      %v8180 = vsel %vm6895, %v4315, 0.0
      %v8181 = vsel %vm6896, %v4316, 0.0
      %v8182 = vsel %vm6897, %v4317, 0.0
      %v8183 = vsel %vm6898, %v4318, 0.0
      %v8184 = vsel %vm6899, %v4319, 0.0
      %v8185 = vsel %vm6900, %v4320, 0.0
      %v8186 = vsel %vm6901, %v4321, 0.0
      %v8187 = vsel %vm6902, %v4322, 0.0
      %v8188 = vsel %vm6903, %v4323, 0.0
      %v8189 = vsel %vm6904, %v4324, 0.0
      %v8190 = vsel %vm6905, %v4325, 0.0
      %v8191 = vsel %vm6906, %v4326, 0.0
      %v8192 = vsel %vm6907, %v4327, 0.0
      %v8193 = vsel %vm6908, %v4328, 0.0
      %v8194 = vsel %vm6909, %v4329, 0.0
      %v8195 = vsel %vm6910, %v4330, 0.0
      %v8196 = vsel %vm6911, %v4331, 0.0
      %v8197 = vsel %vm6912, %v4332, 0.0
      %v8198 = vsel %vm6913, %v4333, 0.0
      %v8199 = vsel %vm6914, %v4334, 0.0
      %v8200 = vsel %vm6915, %v4335, 0.0
      %v8201 = vsel %vm6916, %v4336, 0.0
      %v8202 = vsel %vm6917, %v4337, 0.0
      %v8203 = vsel %vm6918, %v4338, 0.0
      %v8204 = vsel %vm6919, %v4339, 0.0
      %v8205 = vsel %vm6920, %v4340, 0.0
      %v8206 = vsel %vm6921, %v4341, 0.0
      %v8207 = vsel %vm6922, %v4342, 0.0
      %v8208 = vsel %vm6923, %v4343, 0.0
      %v8209 = vsel %vm6924, %v4344, 0.0
      %v8210 = vsel %vm6925, %v4345, 0.0
      %v8211 = vsel %vm6926, %v4346, 0.0
      %v8212 = vsel %vm6927, %v4347, 0.0
      %v8213 = vsel %vm6928, %v4348, 0.0
      %v8214 = vsel %vm6929, %v4349, 0.0
      %v8215 = vsel %vm6930, %v4350, 0.0
      %v8216 = vsel %vm6931, %v4351, 0.0
      %v8217 = vsel %vm6932, %v4352, 0.0
      %v8218 = vsel %vm6933, %v4353, 0.0
      %v8219 = vsel %vm6934, %v4354, 0.0
      %v8220 = vsel %vm6935, %v4355, 0.0
      %v8221 = vsel %vm6936, %v4356, 0.0
      %v8222 = vsel %vm6937, %v4357, 0.0
      %v8223 = vsel %vm6938, %v4358, 0.0
      %v8224 = vsel %vm6939, %v4359, 0.0
      %v8225 = vsel %vm6940, %v4360, 0.0
      %v8226 = vsel %vm6941, %v4361, 0.0
      %v8227 = vsel %vm6942, %v4362, 0.0
      %v8228 = vsel %vm6943, %v4363, 0.0
      %v8229 = vsel %vm6944, %v4364, 0.0
      %v8230 = vsel %vm6945, %v4365, 0.0
      %v8231 = vsel %vm6946, %v4366, 0.0
      %v8232 = vsel %vm6947, %v4367, 0.0
      %v8233 = vsel %vm6948, %v4368, 0.0
      %v8234 = vsel %vm6949, %v4369, 0.0
      %v8235 = vsel %vm6950, %v4370, 0.0
      %v8236 = vsel %vm6951, %v4371, 0.0
      %v8237 = vsel %vm6952, %v4372, 0.0
      %v8238 = vsel %vm6953, %v4373, 0.0
      %v8239 = vsel %vm6954, %v4374, 0.0
      %v8240 = vsel %vm6955, %v4375, 0.0
      %v8241 = vsel %vm6956, %v4376, 0.0
      %v8242 = vsel %vm6957, %v4377, 0.0
      %v8243 = vsel %vm6958, %v4378, 0.0
      %v8244 = vsel %vm6959, %v4379, 0.0
      %v8245 = vsel %vm6960, %v4380, 0.0
      %v8246 = vsel %vm6961, %v4381, 0.0
      %v8247 = vsel %vm6962, %v4382, 0.0
      %v8248 = vsel %vm6963, %v4383, 0.0
      %v8249 = vsel %vm6964, %v4384, 0.0
      %v8250 = vsel %vm6965, %v4385, 0.0
      %v8251 = vsel %vm6966, %v4386, 0.0
      %v8252 = vsel %vm6967, %v4387, 0.0
      %v8253 = vsel %vm6968, %v4388, 0.0
      %v8254 = vsel %vm6969, %v4389, 0.0
      %v8255 = vsel %vm6970, %v4390, 0.0
      %v8256 = vsel %vm6971, %v4391, 0.0
      %v8257 = vsel %vm6972, %v4392, 0.0
      %v8258 = vsel %vm6973, %v4393, 0.0
      %v8259 = vsel %vm6974, %v4394, 0.0
      %v8260 = vsel %vm6975, %v4395, 0.0
      %v8261 = vsel %vm6976, %v4396, 0.0
      %v8262 = vsel %vm6977, %v4397, 0.0
      %v8263 = vsel %vm6978, %v4398, 0.0
      %v8264 = vsel %vm6979, %v4399, 0.0
      %v8265 = vsel %vm6980, %v4400, 0.0
      %v8266 = vsel %vm6981, %v4401, 0.0
      %v8267 = vsel %vm6982, %v4402, 0.0
      %v8268 = vsel %vm6983, %v4403, 0.0
      %v8269 = vsel %vm6984, %v4404, 0.0
      %v8270 = vsel %vm6985, %v4405, 0.0
      %v8271 = vsel %vm6986, %v4406, 0.0
      %v8272 = vsel %vm6987, %v4407, 0.0
      %v8273 = vsel %vm6988, %v4408, 0.0
      %v8274 = vsel %vm6989, %v4409, 0.0
      %v8275 = vsel %vm6990, %v4410, 0.0
      %v8276 = vsel %vm6991, %v4411, 0.0
      %v8277 = vsel %vm6992, %v4412, 0.0
      %v8278 = vsel %vm6993, %v4413, 0.0
      %v8279 = vsel %vm6994, %v4414, 0.0
      %v8280 = vsel %vm6995, %v4415, 0.0
      %v8281 = vadd.f32 %v8025, %v8026
      %v8282 = vadd.f32 %v8281, %v8027
      %v8283 = vadd.f32 %v8282, %v8028
      %v8284 = vadd.f32 %v8283, %v8029
      %v8285 = vadd.f32 %v8284, %v8030
      %v8286 = vadd.f32 %v8285, %v8031
      %v8287 = vadd.f32 %v8286, %v8032
      %v8288 = vadd.f32 %v8287, %v8033
      %v8289 = vadd.f32 %v8288, %v8034
      %v8290 = vadd.f32 %v8289, %v8035
      %v8291 = vadd.f32 %v8290, %v8036
      %v8292 = vadd.f32 %v8291, %v8037
      %v8293 = vadd.f32 %v8292, %v8038
      %v8294 = vadd.f32 %v8293, %v8039
      %v8295 = vadd.f32 %v8294, %v8040
      %v8296 = vadd.f32 %v8295, %v8041
      %v8297 = vadd.f32 %v8296, %v8042
      %v8298 = vadd.f32 %v8297, %v8043
      %v8299 = vadd.f32 %v8298, %v8044
      %v8300 = vadd.f32 %v8299, %v8045
      %v8301 = vadd.f32 %v8300, %v8046
      %v8302 = vadd.f32 %v8301, %v8047
      %v8303 = vadd.f32 %v8302, %v8048
      %v8304 = vadd.f32 %v8303, %v8049
      %v8305 = vadd.f32 %v8304, %v8050
      %v8306 = vadd.f32 %v8305, %v8051
      %v8307 = vadd.f32 %v8306, %v8052
      %v8308 = vadd.f32 %v8307, %v8053
      %v8309 = vadd.f32 %v8308, %v8054
      %v8310 = vadd.f32 %v8309, %v8055
      %v8311 = vadd.f32 %v8310, %v8056
      %v8312 = vadd.f32 %v8311, %v8057
      %v8313 = vadd.f32 %v8312, %v8058
      %v8314 = vadd.f32 %v8313, %v8059
      %v8315 = vadd.f32 %v8314, %v8060
      %v8316 = vadd.f32 %v8315, %v8061
      %v8317 = vadd.f32 %v8316, %v8062
      %v8318 = vadd.f32 %v8317, %v8063
      %v8319 = vadd.f32 %v8318, %v8064
      %v8320 = vadd.f32 %v8319, %v8065
      %v8321 = vadd.f32 %v8320, %v8066
      %v8322 = vadd.f32 %v8321, %v8067
      %v8323 = vadd.f32 %v8322, %v8068
      %v8324 = vadd.f32 %v8323, %v8069
      %v8325 = vadd.f32 %v8324, %v8070
      %v8326 = vadd.f32 %v8325, %v8071
      %v8327 = vadd.f32 %v8326, %v8072
      %v8328 = vadd.f32 %v8327, %v8073
      %v8329 = vadd.f32 %v8328, %v8074
      %v8330 = vadd.f32 %v8329, %v8075
      %v8331 = vadd.f32 %v8330, %v8076
      %v8332 = vadd.f32 %v8331, %v8077
      %v8333 = vadd.f32 %v8332, %v8078
      %v8334 = vadd.f32 %v8333, %v8079
      %v8335 = vadd.f32 %v8334, %v8080
      %v8336 = vadd.f32 %v8335, %v8081
      %v8337 = vadd.f32 %v8336, %v8082
      %v8338 = vadd.f32 %v8337, %v8083
      %v8339 = vadd.f32 %v8338, %v8084
      %v8340 = vadd.f32 %v8339, %v8085
      %v8341 = vadd.f32 %v8340, %v8086
      %v8342 = vadd.f32 %v8341, %v8087
      %v8343 = vadd.f32 %v8342, %v8088
      %v8344 = vadd.f32 %v8343, %v8089
      %v8345 = vadd.f32 %v8344, %v8090
      %v8346 = vadd.f32 %v8345, %v8091
      %v8347 = vadd.f32 %v8346, %v8092
      %v8348 = vadd.f32 %v8347, %v8093
      %v8349 = vadd.f32 %v8348, %v8094
      %v8350 = vadd.f32 %v8349, %v8095
      %v8351 = vadd.f32 %v8350, %v8096
      %v8352 = vadd.f32 %v8351, %v8097
      %v8353 = vadd.f32 %v8352, %v8098
      %v8354 = vadd.f32 %v8353, %v8099
      %v8355 = vadd.f32 %v8354, %v8100
      %v8356 = vadd.f32 %v8355, %v8101
      %v8357 = vadd.f32 %v8356, %v8102
      %v8358 = vadd.f32 %v8357, %v8103
      %v8359 = vadd.f32 %v8358, %v8104
      %v8360 = vadd.f32 %v8359, %v8105
      %v8361 = vadd.f32 %v8360, %v8106
      %v8362 = vadd.f32 %v8361, %v8107
      %v8363 = vadd.f32 %v8362, %v8108
      %v8364 = vadd.f32 %v8363, %v8109
      %v8365 = vadd.f32 %v8364, %v8110
      %v8366 = vadd.f32 %v8365, %v8111
      %v8367 = vadd.f32 %v8366, %v8112
      %v8368 = vadd.f32 %v8367, %v8113
      %v8369 = vadd.f32 %v8368, %v8114
      %v8370 = vadd.f32 %v8369, %v8115
      %v8371 = vadd.f32 %v8370, %v8116
      %v8372 = vadd.f32 %v8371, %v8117
      %v8373 = vadd.f32 %v8372, %v8118
      %v8374 = vadd.f32 %v8373, %v8119
      %v8375 = vadd.f32 %v8374, %v8120
      %v8376 = vadd.f32 %v8375, %v8121
      %v8377 = vadd.f32 %v8376, %v8122
      %v8378 = vadd.f32 %v8377, %v8123
      %v8379 = vadd.f32 %v8378, %v8124
      %v8380 = vadd.f32 %v8379, %v8125
      %v8381 = vadd.f32 %v8380, %v8126
      %v8382 = vadd.f32 %v8381, %v8127
      %v8383 = vadd.f32 %v8382, %v8128
      %v8384 = vadd.f32 %v8383, %v8129
      %v8385 = vadd.f32 %v8384, %v8130
      %v8386 = vadd.f32 %v8385, %v8131
      %v8387 = vadd.f32 %v8386, %v8132
      %v8388 = vadd.f32 %v8387, %v8133
      %v8389 = vadd.f32 %v8388, %v8134
      %v8390 = vadd.f32 %v8389, %v8135
      %v8391 = vadd.f32 %v8390, %v8136
      %v8392 = vadd.f32 %v8391, %v8137
      %v8393 = vadd.f32 %v8392, %v8138
      %v8394 = vadd.f32 %v8393, %v8139
      %v8395 = vadd.f32 %v8394, %v8140
      %v8396 = vadd.f32 %v8395, %v8141
      %v8397 = vadd.f32 %v8396, %v8142
      %v8398 = vadd.f32 %v8397, %v8143
      %v8399 = vadd.f32 %v8398, %v8144
      %v8400 = vadd.f32 %v8399, %v8145
      %v8401 = vadd.f32 %v8400, %v8146
      %v8402 = vadd.f32 %v8401, %v8147
      %v8403 = vadd.f32 %v8402, %v8148
      %v8404 = vadd.f32 %v8403, %v8149
      %v8405 = vadd.f32 %v8404, %v8150
      %v8406 = vadd.f32 %v8405, %v8151
      %v8407 = vadd.f32 %v8406, %v8152
      %v8408 = vadd.f32 %v8407, %v8153
      %v8409 = vadd.f32 %v8408, %v8154
      %v8410 = vadd.f32 %v8409, %v8155
      %v8411 = vadd.f32 %v8410, %v8156
      %v8412 = vadd.f32 %v8411, %v8157
      %v8413 = vadd.f32 %v8412, %v8158
      %v8414 = vadd.f32 %v8413, %v8159
      %v8415 = vadd.f32 %v8414, %v8160
      %v8416 = vadd.f32 %v8415, %v8161
      %v8417 = vadd.f32 %v8416, %v8162
      %v8418 = vadd.f32 %v8417, %v8163
      %v8419 = vadd.f32 %v8418, %v8164
      %v8420 = vadd.f32 %v8419, %v8165
      %v8421 = vadd.f32 %v8420, %v8166
      %v8422 = vadd.f32 %v8421, %v8167
      %v8423 = vadd.f32 %v8422, %v8168
      %v8424 = vadd.f32 %v8423, %v8169
      %v8425 = vadd.f32 %v8424, %v8170
      %v8426 = vadd.f32 %v8425, %v8171
      %v8427 = vadd.f32 %v8426, %v8172
      %v8428 = vadd.f32 %v8427, %v8173
      %v8429 = vadd.f32 %v8428, %v8174
      %v8430 = vadd.f32 %v8429, %v8175
      %v8431 = vadd.f32 %v8430, %v8176
      %v8432 = vadd.f32 %v8431, %v8177
      %v8433 = vadd.f32 %v8432, %v8178
      %v8434 = vadd.f32 %v8433, %v8179
      %v8435 = vadd.f32 %v8434, %v8180
      %v8436 = vadd.f32 %v8435, %v8181
      %v8437 = vadd.f32 %v8436, %v8182
      %v8438 = vadd.f32 %v8437, %v8183
      %v8439 = vadd.f32 %v8438, %v8184
      %v8440 = vadd.f32 %v8439, %v8185
      %v8441 = vadd.f32 %v8440, %v8186
      %v8442 = vadd.f32 %v8441, %v8187
      %v8443 = vadd.f32 %v8442, %v8188
      %v8444 = vadd.f32 %v8443, %v8189
      %v8445 = vadd.f32 %v8444, %v8190
      %v8446 = vadd.f32 %v8445, %v8191
      %v8447 = vadd.f32 %v8446, %v8192
      %v8448 = vadd.f32 %v8447, %v8193
      %v8449 = vadd.f32 %v8448, %v8194
      %v8450 = vadd.f32 %v8449, %v8195
      %v8451 = vadd.f32 %v8450, %v8196
      %v8452 = vadd.f32 %v8451, %v8197
      %v8453 = vadd.f32 %v8452, %v8198
      %v8454 = vadd.f32 %v8453, %v8199
      %v8455 = vadd.f32 %v8454, %v8200
      %v8456 = vadd.f32 %v8455, %v8201
      %v8457 = vadd.f32 %v8456, %v8202
      %v8458 = vadd.f32 %v8457, %v8203
      %v8459 = vadd.f32 %v8458, %v8204
      %v8460 = vadd.f32 %v8459, %v8205
      %v8461 = vadd.f32 %v8460, %v8206
      %v8462 = vadd.f32 %v8461, %v8207
      %v8463 = vadd.f32 %v8462, %v8208
      %v8464 = vadd.f32 %v8463, %v8209
      %v8465 = vadd.f32 %v8464, %v8210
      %v8466 = vadd.f32 %v8465, %v8211
      %v8467 = vadd.f32 %v8466, %v8212
      %v8468 = vadd.f32 %v8467, %v8213
      %v8469 = vadd.f32 %v8468, %v8214
      %v8470 = vadd.f32 %v8469, %v8215
      %v8471 = vadd.f32 %v8470, %v8216
      %v8472 = vadd.f32 %v8471, %v8217
      %v8473 = vadd.f32 %v8472, %v8218
      %v8474 = vadd.f32 %v8473, %v8219
      %v8475 = vadd.f32 %v8474, %v8220
      %v8476 = vadd.f32 %v8475, %v8221
      %v8477 = vadd.f32 %v8476, %v8222
      %v8478 = vadd.f32 %v8477, %v8223
      %v8479 = vadd.f32 %v8478, %v8224
      %v8480 = vadd.f32 %v8479, %v8225
      %v8481 = vadd.f32 %v8480, %v8226
      %v8482 = vadd.f32 %v8481, %v8227
      %v8483 = vadd.f32 %v8482, %v8228
      %v8484 = vadd.f32 %v8483, %v8229
      %v8485 = vadd.f32 %v8484, %v8230
      %v8486 = vadd.f32 %v8485, %v8231
      %v8487 = vadd.f32 %v8486, %v8232
      %v8488 = vadd.f32 %v8487, %v8233
      %v8489 = vadd.f32 %v8488, %v8234
      %v8490 = vadd.f32 %v8489, %v8235
      %v8491 = vadd.f32 %v8490, %v8236
      %v8492 = vadd.f32 %v8491, %v8237
      %v8493 = vadd.f32 %v8492, %v8238
      %v8494 = vadd.f32 %v8493, %v8239
      %v8495 = vadd.f32 %v8494, %v8240
      %v8496 = vadd.f32 %v8495, %v8241
      %v8497 = vadd.f32 %v8496, %v8242
      %v8498 = vadd.f32 %v8497, %v8243
      %v8499 = vadd.f32 %v8498, %v8244
      %v8500 = vadd.f32 %v8499, %v8245
      %v8501 = vadd.f32 %v8500, %v8246
      %v8502 = vadd.f32 %v8501, %v8247
      %v8503 = vadd.f32 %v8502, %v8248
      %v8504 = vadd.f32 %v8503, %v8249
      %v8505 = vadd.f32 %v8504, %v8250
      %v8506 = vadd.f32 %v8505, %v8251
      %v8507 = vadd.f32 %v8506, %v8252
      %v8508 = vadd.f32 %v8507, %v8253
      %v8509 = vadd.f32 %v8508, %v8254
      %v8510 = vadd.f32 %v8509, %v8255
      %v8511 = vadd.f32 %v8510, %v8256
      %v8512 = vadd.f32 %v8511, %v8257
      %v8513 = vadd.f32 %v8512, %v8258
      %v8514 = vadd.f32 %v8513, %v8259
      %v8515 = vadd.f32 %v8514, %v8260
      %v8516 = vadd.f32 %v8515, %v8261
      %v8517 = vadd.f32 %v8516, %v8262
      %v8518 = vadd.f32 %v8517, %v8263
      %v8519 = vadd.f32 %v8518, %v8264
      %v8520 = vadd.f32 %v8519, %v8265
      %v8521 = vadd.f32 %v8520, %v8266
      %v8522 = vadd.f32 %v8521, %v8267
      %v8523 = vadd.f32 %v8522, %v8268
      %v8524 = vadd.f32 %v8523, %v8269
      %v8525 = vadd.f32 %v8524, %v8270
      %v8526 = vadd.f32 %v8525, %v8271
      %v8527 = vadd.f32 %v8526, %v8272
      %v8528 = vadd.f32 %v8527, %v8273
      %v8529 = vadd.f32 %v8528, %v8274
      %v8530 = vadd.f32 %v8529, %v8275
      %v8531 = vadd.f32 %v8530, %v8276
      %v8532 = vadd.f32 %v8531, %v8277
      %v8533 = vadd.f32 %v8532, %v8278
      %v8534 = vadd.f32 %v8533, %v8279
      %v8535 = vadd.f32 %v8534, %v8280
      %v8536 = vadd.f32 %v8024, %v8535
      %8537 = vst [vmem:[%s2 + $0x10] sm:$0xff] %v8536
    $region25: #{_pu_loss_device.1} parent=12 // pred_fallthru
      _
  $region13: #{_pu_loss_device.1} parent=0 // pred_fallthru
    _
  // Predicated region
  $region26: #{_pu_loss_device.1} parent=0 // pred_check
    _
  $region27: #{_pu_loss_device.1} parent=0 // pred_check_branch
    %8539 = sbr.rel (0) target = $region29
  $region28: #{_pu_loss_device.1} parent=0 // pred_region
    _
  $region29: #{_pu_loss_device.1} parent=0 // pred_fallthru
    _
  // Predicated region
  $region30: #{_pu_loss_device.1} parent=0 // pred_check
    _
  $region31: #{_pu_loss_device.1} parent=0 // pred_check_branch
    %8541 = sbr.rel (0) target = $region33
  $region32: #{_pu_loss_device.1} parent=0 // pred_region
    _
  $region33: #{_pu_loss_device.1} parent=0 // pred_fallthru
    _

</llo_original>
